<compile_context>
chip_gen: v7x
topology: tpu7x:2x2x1
jax: 0.10.0
libtpu: 0.0.40
codegen_flags: <defaults>
</compile_context>

<pallas_src>
import functools

import jax
import jax.numpy as jnp
from jax.experimental import pallas as pl
from jax.experimental.pallas import tpu as pltpu

LANES = 128   # lane width: channel padding target
PAD_L = 8     # sublane-aligned column offset where conv1's activation is stored


def _round_up(x, m):
    return (x + m - 1) // m * m


# ----------------------------------------------------------------------------
# Fused Pallas kernel: one grid step == one batch element
# ----------------------------------------------------------------------------
def _basic_block_kernel(xpad_ref, w1_ref, b1_ref, w2_ref, b2_ref, o_ref, h_ref,
                        *, H, W, Cp):
    # xpad_ref : (1, H+2, W+2, Cp) f32  -- spatially zero-padded NHWC input
    # w1_ref   : (3, 3, Cp, Cp)    bf16 -- BN-folded conv1 weights (kh, kw, cin, cout)
    # b1_ref   : (1, Cp)           f32  -- BN-folded conv1 bias
    # w2_ref   : (3, 3, Cp, Cp)    bf16 -- BN-folded conv2 weights
    # b2_ref   : (1, Cp)           f32  -- BN-folded conv2 bias
    # o_ref    : (1, H, W, Cp)     f32  -- block output (NHWC, padded channels)
    # h_ref    : VMEM scratch (H+2, W+2*PAD_L, Cp) f32 -- zero-bordered conv1 output;
    #            interior stored at rows [1,1+H), cols [PAD_L, PAD_L+W) (aligned store)
    HW = H * W

    # ---- conv1 + bn1 + relu  (3x3, stride 1, padding 1) ----
    acc = jnp.zeros((HW, Cp), jnp.float32)
    for di in range(3):
        for dj in range(3):
            a = xpad_ref[0, di:di + H, dj:dj + W, :].reshape(HW, Cp)
            acc += jnp.dot(a.astype(jnp.bfloat16), w1_ref[di, dj],
                           preferred_element_type=jnp.float32)
    h = jnp.maximum(acc + b1_ref[...], 0.0)                       # (HW, Cp) f32

    # Store h into the zero-bordered scratch (column offset PAD_L keeps the store
    # sublane-aligned; the zero border supplies conv2's 'same' padding).
    h_ref[...] = jnp.zeros_like(h_ref)
    h_ref[1:1 + H, PAD_L:PAD_L + W, :] = h.reshape(H, W, Cp)

    # ---- conv2 + bn2 ----
    acc2 = jnp.zeros((HW, Cp), jnp.float32)
    for di in range(3):
        for dj in range(3):
            c0 = PAD_L - 1 + dj
            a = h_ref[di:di + H, c0:c0 + W, :].reshape(HW, Cp)
            acc2 += jnp.dot(a.astype(jnp.bfloat16), w2_ref[di, dj],
                            preferred_element_type=jnp.float32)
    y = acc2 + b2_ref[...]                                        # (HW, Cp) f32

    # ---- residual add + relu ----
    res = xpad_ref[0, 1:1 + H, 1:1 + W, :].reshape(HW, Cp)        # original x (f32)
    o_ref[...] = jnp.maximum(res + y, 0.0).reshape(1, H, W, Cp)


# ----------------------------------------------------------------------------
# Parameter preparation (BN folding, layout, padding, bf16) — done ONCE
# ----------------------------------------------------------------------------
def _fold_bn(conv_w, conv_b, gamma, beta, mean, var, eps):
    # Inference-mode BatchNorm folded into the preceding conv.
    scale = gamma / jnp.sqrt(var + eps)                    # (O,)
    w = conv_w * scale[:, None, None, None]                # (O, C, 3, 3)
    b = (conv_b - mean) * scale + beta                     # (O,)
    return w, b


def prepare_block_params(params, eps=1e-5):
    """Fold BN into the convs, pack weights to (kh, kw, cin_pad, cout_pad) bf16 and
    biases to (1, Cp) f32, with channels zero-padded to the 128-lane width."""
    O, C = params["conv1_w"].shape[0], params["conv1_w"].shape[1]
    Cp = max(LANES, _round_up(max(C, O), LANES))

    def pack(w, b, cin, cout):
        wk = jnp.transpose(w, (2, 3, 1, 0))                              # (3,3,C,O)
        wk = jnp.pad(wk, ((0, 0), (0, 0), (0, Cp - cin), (0, Cp - cout)))
        bk = jnp.pad(b, (0, Cp - cout)).reshape(1, Cp).astype(jnp.float32)
        return wk.astype(jnp.bfloat16), bk

    w1, b1 = _fold_bn(params["conv1_w"], params["conv1_b"], params["bn1_gamma"],
                      params["bn1_beta"], params["bn1_mean"], params["bn1_var"], eps)
    w2, b2 = _fold_bn(params["conv2_w"], params["conv2_b"], params["bn2_gamma"],
                      params["bn2_beta"], params["bn2_mean"], params["bn2_var"], eps)
    w1k, b1k = pack(w1, b1, C, O)
    w2k, b2k = pack(w2, b2, O, O)
    return w1k, b1k, w2k, b2k


# ----------------------------------------------------------------------------
# Forward wrapper (NCHW public interface)
# ----------------------------------------------------------------------------
def resnet_basic_block_forward(x, w1, b1, w2, b2):
    B, C, H, W = x.shape
    Cp = w1.shape[-1]

    # NCHW -> NHWC, zero-pad channels to Cp and spatial by 1 (conv 'same' padding).
    xh = jnp.transpose(x, (0, 2, 3, 1)).astype(jnp.float32)
    xh = jnp.pad(xh, ((0, 0), (1, 1), (1, 1), (0, Cp - C)))

    kernel = functools.partial(_basic_block_kernel, H=H, W=W, Cp=Cp)
    out = pl.pallas_call(
        kernel,
        out_shape=jax.ShapeDtypeStruct((B, H, W, Cp), jnp.float32),
        grid_spec=pltpu.PrefetchScalarGridSpec(
            num_scalar_prefetch=0,
            grid=(B,),
            in_specs=[
                pl.BlockSpec((1, H + 2, W + 2, Cp), lambda b: (b, 0, 0, 0)),
                pl.BlockSpec((3, 3, Cp, Cp), lambda b: (0, 0, 0, 0)),
                pl.BlockSpec((1, Cp), lambda b: (0, 0)),
                pl.BlockSpec((3, 3, Cp, Cp), lambda b: (0, 0, 0, 0)),
                pl.BlockSpec((1, Cp), lambda b: (0, 0)),
            ],
            out_specs=pl.BlockSpec((1, H, W, Cp), lambda b: (b, 0, 0, 0)),
            scratch_shapes=[pltpu.VMEM((H + 2, W + 2 * PAD_L, Cp), jnp.float32)],
        ),
        compiler_params=pltpu.CompilerParams(
            dimension_semantics=("parallel",)),
    )(xh, w1, b1, w2, b2)

    # Drop channel padding, back to NCHW.
    return jnp.transpose(out[:, :, :, :C], (0, 3, 1, 2))


# ----------------------------------------------------------------------------
# Pure-JAX reference (independent: un-folded BN, XLA conv) for a sanity check
# ----------------------------------------------------------------------------
def reference_forward(params, x, eps=1e-5):
    def conv(inp, w, b):
        y = jax.lax.conv_general_dilated(
            inp.astype(jnp.bfloat16), w.astype(jnp.bfloat16),
            window_strides=(1, 1), padding="SAME",
            dimension_numbers=("NCHW", "OIHW", "NCHW"),
            preferred_element_type=jnp.float32)
        return y + b[None, :, None, None]

    def bn(y, g, bt, m, v):
        return (y - m[None, :, None, None]) * (
            g[None, :, None, None] / jnp.sqrt(v[None, :, None, None] + eps)
        ) + bt[None, :, None, None]

    h = jax.nn.relu(bn(conv(x, params["conv1_w"], params["conv1_b"]),
                       params["bn1_gamma"], params["bn1_beta"],
                       params["bn1_mean"], params["bn1_var"]))
    y = bn(conv(h, params["conv2_w"], params["conv2_b"]),
           params["bn2_gamma"], params["bn2_beta"],
           params["bn2_mean"], params["bn2_var"])
    return jax.nn.relu(x + y)


def init_params(key, in_ch, out_ch):
    ks = jax.random.split(key, 12)

    def u(k, shape, fan_in):
        bound = 1.0 / jnp.sqrt(fan_in)
        return jax.random.uniform(k, shape, jnp.float32, -bound, bound)

    return {
        "conv1_w": u(ks[0], (out_ch, in_ch, 3, 3), in_ch * 9),
        "conv1_b": u(ks[1], (out_ch,), in_ch * 9),
        "bn1_gamma": jax.random.uniform(ks[2], (out_ch,), jnp.float32, 0.8, 1.2),
        "bn1_beta": 0.1 * jax.random.normal(ks[3], (out_ch,), jnp.float32),
        "bn1_mean": 0.1 * jax.random.normal(ks[4], (out_ch,), jnp.float32),
        "bn1_var": jax.random.uniform(ks[5], (out_ch,), jnp.float32, 0.5, 1.5),
        "conv2_w": u(ks[6], (out_ch, out_ch, 3, 3), out_ch * 9),
        "conv2_b": u(ks[7], (out_ch,), out_ch * 9),
        "bn2_gamma": jax.random.uniform(ks[8], (out_ch,), jnp.float32, 0.8, 1.2),
        "bn2_beta": 0.1 * jax.random.normal(ks[9], (out_ch,), jnp.float32),
        "bn2_mean": 0.1 * jax.random.normal(ks[10], (out_ch,), jnp.float32),
        "bn2_var": jax.random.uniform(ks[11], (out_ch,), jnp.float32, 0.5, 1.5),
    }


if __name__ == "__main__":
    key = jax.random.PRNGKey(0)
    # stride=1, in_channels == out_channels (required by the module's residual add).
    # TODO(synk): stride > 1 of the original module is shape-inconsistent with its
    #             un-downsampled residual add and is not implemented.
    B, C, H, W = 2, 16, 16, 16
    kp, kx = jax.random.split(key)
    params = init_params(kp, C, C)
    x = jax.random.normal(kx, (B, C, H, W), dtype=jnp.float32)

    # BN fold + weight packing once, outside the jitted hot path.
    w1, b1, w2, b2 = prepare_block_params(params)
    fwd = jax.jit(resnet_basic_block_forward)
    out = jax.block_until_ready(fwd(x, w1, b1, w2, b2))
    assert out.shape == (B, C, H, W), out.shape

    # Sanity check against an independent pure-JAX reference (bf16 MXU numerics, so
    # the tolerance is loose; a layout/indexing bug would be O(1) off).
    ref = jax.block_until_ready(jax.jit(reference_forward)(params, x))
    err = out - ref
    max_err = float(jnp.max(jnp.abs(err)))
    rel_rms = float(jnp.sqrt(jnp.mean(err * err) / (jnp.mean(ref * ref) + 1e-9)))
    assert max_err < 0.5 and rel_rms < 0.08, (max_err, rel_rms)

    print("KERNEL_OK")
</pallas_src>

<mosaic_0001>
module attributes {stable_mosaic.version = 11 : i64} {
  func.func @_basic_block_kernel(%arg0: i32, %arg1: memref<1x18x18x128xf32, #tpu.memory_space<vmem>>, %arg2: memref<3x3x128x128xbf16, #tpu.memory_space<vmem>>, %arg3: memref<1x128xf32, #tpu.memory_space<vmem>>, %arg4: memref<3x3x128x128xbf16, #tpu.memory_space<vmem>>, %arg5: memref<1x128xf32, #tpu.memory_space<vmem>>, %arg6: memref<1x16x16x128xf32, #tpu.memory_space<vmem>>, %arg7: memref<18x32x128xf32, #tpu.memory_space<vmem>>) attributes {dimension_semantics = [#tpu.dimension_semantics<parallel>], iteration_bounds = array<i64: 2>, scalar_prefetch = 0 : i64, scratch_operands = 1 : i64, tpu.core_type = #tpu.core_type<tc>, window_params = [{transform_indices = @transform_0, window_bounds = array<i64: 1, 18, 18, 128>}, {pipeline_mode = #tpu.pipeline_mode<synchronous>, transform_indices = @transform_1, window_bounds = array<i64: 3, 3, 128, 128>}, {pipeline_mode = #tpu.pipeline_mode<synchronous>, transform_indices = @transform_2, window_bounds = array<i64: 1, 128>}, {pipeline_mode = #tpu.pipeline_mode<synchronous>, transform_indices = @transform_3, window_bounds = array<i64: 3, 3, 128, 128>}, {pipeline_mode = #tpu.pipeline_mode<synchronous>, transform_indices = @transform_4, window_bounds = array<i64: 1, 128>}, {transform_indices = @transform_5, window_bounds = array<i64: 1, 16, 16, 128>}]} {
    %cst = arith.constant 0.000000e+00 : f32
    %0 = vector.broadcast %cst : f32 to vector<256x128xf32>
    %c0 = arith.constant 0 : index
    %c0_0 = arith.constant 0 : index
    %c0_1 = arith.constant 0 : index
    %c0_2 = arith.constant 0 : index
    %1 = vector.load %arg1[%c0, %c0_0, %c0_1, %c0_2] : memref<1x18x18x128xf32, #tpu.memory_space<vmem>>, vector<1x16x16x128xf32>
    %2 = vector.shape_cast %1 : vector<1x16x16x128xf32> to vector<16x16x128xf32>
    %3 = vector.shape_cast %2 : vector<16x16x128xf32> to vector<256x128xf32>
    %4 = arith.truncf %3 : vector<256x128xf32> to vector<256x128xbf16>
    %c0_3 = arith.constant 0 : index
    %c0_4 = arith.constant 0 : index
    %c0_5 = arith.constant 0 : index
    %c0_6 = arith.constant 0 : index
    %5 = vector.load %arg2[%c0_3, %c0_4, %c0_5, %c0_6] : memref<3x3x128x128xbf16, #tpu.memory_space<vmem>>, vector<1x1x128x128xbf16>
    %6 = vector.shape_cast %5 : vector<1x1x128x128xbf16> to vector<128x128xbf16>
    %cst_7 = arith.constant dense<0.000000e+00> : vector<256x128xf32>
    %7 = tpu.matmul %4, %6, %cst_7 {dimension_numbers = #tpu.dot_dimension_numbers<[1], [0], [0], [1], [0, 0, 1, 1], [], []>} : vector<256x128xbf16>, vector<128x128xbf16>, vector<256x128xf32> -> vector<256x128xf32>
    %8 = arith.addf %0, %7 : vector<256x128xf32>
    %c0_8 = arith.constant 0 : index
    %c0_9 = arith.constant 0 : index
    %c1 = arith.constant 1 : index
    %c0_10 = arith.constant 0 : index
    %9 = vector.load %arg1[%c0_8, %c0_9, %c1, %c0_10] : memref<1x18x18x128xf32, #tpu.memory_space<vmem>>, vector<1x16x16x128xf32>
    %10 = vector.shape_cast %9 : vector<1x16x16x128xf32> to vector<16x16x128xf32>
    %11 = vector.shape_cast %10 : vector<16x16x128xf32> to vector<256x128xf32>
    %12 = arith.truncf %11 : vector<256x128xf32> to vector<256x128xbf16>
    %c0_11 = arith.constant 0 : index
    %c1_12 = arith.constant 1 : index
    %c0_13 = arith.constant 0 : index
    %c0_14 = arith.constant 0 : index
    %13 = vector.load %arg2[%c0_11, %c1_12, %c0_13, %c0_14] : memref<3x3x128x128xbf16, #tpu.memory_space<vmem>>, vector<1x1x128x128xbf16>
    %14 = vector.shape_cast %13 : vector<1x1x128x128xbf16> to vector<128x128xbf16>
    %cst_15 = arith.constant dense<0.000000e+00> : vector<256x128xf32>
    %15 = tpu.matmul %12, %14, %cst_15 {dimension_numbers = #tpu.dot_dimension_numbers<[1], [0], [0], [1], [0, 0, 1, 1], [], []>} : vector<256x128xbf16>, vector<128x128xbf16>, vector<256x128xf32> -> vector<256x128xf32>
    %16 = arith.addf %8, %15 : vector<256x128xf32>
    %c0_16 = arith.constant 0 : index
    %c0_17 = arith.constant 0 : index
    %c2 = arith.constant 2 : index
    %c0_18 = arith.constant 0 : index
    %17 = vector.load %arg1[%c0_16, %c0_17, %c2, %c0_18] : memref<1x18x18x128xf32, #tpu.memory_space<vmem>>, vector<1x16x16x128xf32>
    %18 = vector.shape_cast %17 : vector<1x16x16x128xf32> to vector<16x16x128xf32>
    %19 = vector.shape_cast %18 : vector<16x16x128xf32> to vector<256x128xf32>
    %20 = arith.truncf %19 : vector<256x128xf32> to vector<256x128xbf16>
    %c0_19 = arith.constant 0 : index
    %c2_20 = arith.constant 2 : index
    %c0_21 = arith.constant 0 : index
    %c0_22 = arith.constant 0 : index
    %21 = vector.load %arg2[%c0_19, %c2_20, %c0_21, %c0_22] : memref<3x3x128x128xbf16, #tpu.memory_space<vmem>>, vector<1x1x128x128xbf16>
    %22 = vector.shape_cast %21 : vector<1x1x128x128xbf16> to vector<128x128xbf16>
    %cst_23 = arith.constant dense<0.000000e+00> : vector<256x128xf32>
    %23 = tpu.matmul %20, %22, %cst_23 {dimension_numbers = #tpu.dot_dimension_numbers<[1], [0], [0], [1], [0, 0, 1, 1], [], []>} : vector<256x128xbf16>, vector<128x128xbf16>, vector<256x128xf32> -> vector<256x128xf32>
    %24 = arith.addf %16, %23 : vector<256x128xf32>
    %c0_24 = arith.constant 0 : index
    %c1_25 = arith.constant 1 : index
    %c0_26 = arith.constant 0 : index
    %c0_27 = arith.constant 0 : index
    %25 = vector.load %arg1[%c0_24, %c1_25, %c0_26, %c0_27] : memref<1x18x18x128xf32, #tpu.memory_space<vmem>>, vector<1x16x16x128xf32>
    %26 = vector.shape_cast %25 : vector<1x16x16x128xf32> to vector<16x16x128xf32>
    %27 = vector.shape_cast %26 : vector<16x16x128xf32> to vector<256x128xf32>
    %28 = arith.truncf %27 : vector<256x128xf32> to vector<256x128xbf16>
    %c1_28 = arith.constant 1 : index
    %c0_29 = arith.constant 0 : index
    %c0_30 = arith.constant 0 : index
    %c0_31 = arith.constant 0 : index
    %29 = vector.load %arg2[%c1_28, %c0_29, %c0_30, %c0_31] : memref<3x3x128x128xbf16, #tpu.memory_space<vmem>>, vector<1x1x128x128xbf16>
    %30 = vector.shape_cast %29 : vector<1x1x128x128xbf16> to vector<128x128xbf16>
    %cst_32 = arith.constant dense<0.000000e+00> : vector<256x128xf32>
    %31 = tpu.matmul %28, %30, %cst_32 {dimension_numbers = #tpu.dot_dimension_numbers<[1], [0], [0], [1], [0, 0, 1, 1], [], []>} : vector<256x128xbf16>, vector<128x128xbf16>, vector<256x128xf32> -> vector<256x128xf32>
    %32 = arith.addf %24, %31 : vector<256x128xf32>
    %c0_33 = arith.constant 0 : index
    %c1_34 = arith.constant 1 : index
    %c1_35 = arith.constant 1 : index
    %c0_36 = arith.constant 0 : index
    %33 = vector.load %arg1[%c0_33, %c1_34, %c1_35, %c0_36] : memref<1x18x18x128xf32, #tpu.memory_space<vmem>>, vector<1x16x16x128xf32>
    %34 = vector.shape_cast %33 : vector<1x16x16x128xf32> to vector<16x16x128xf32>
    %35 = vector.shape_cast %34 : vector<16x16x128xf32> to vector<256x128xf32>
    %36 = arith.truncf %35 : vector<256x128xf32> to vector<256x128xbf16>
    %c1_37 = arith.constant 1 : index
    %c1_38 = arith.constant 1 : index
    %c0_39 = arith.constant 0 : index
    %c0_40 = arith.constant 0 : index
    %37 = vector.load %arg2[%c1_37, %c1_38, %c0_39, %c0_40] : memref<3x3x128x128xbf16, #tpu.memory_space<vmem>>, vector<1x1x128x128xbf16>
    %38 = vector.shape_cast %37 : vector<1x1x128x128xbf16> to vector<128x128xbf16>
    %cst_41 = arith.constant dense<0.000000e+00> : vector<256x128xf32>
    %39 = tpu.matmul %36, %38, %cst_41 {dimension_numbers = #tpu.dot_dimension_numbers<[1], [0], [0], [1], [0, 0, 1, 1], [], []>} : vector<256x128xbf16>, vector<128x128xbf16>, vector<256x128xf32> -> vector<256x128xf32>
    %40 = arith.addf %32, %39 : vector<256x128xf32>
    %c0_42 = arith.constant 0 : index
    %c1_43 = arith.constant 1 : index
    %c2_44 = arith.constant 2 : index
    %c0_45 = arith.constant 0 : index
    %41 = vector.load %arg1[%c0_42, %c1_43, %c2_44, %c0_45] : memref<1x18x18x128xf32, #tpu.memory_space<vmem>>, vector<1x16x16x128xf32>
    %42 = vector.shape_cast %41 : vector<1x16x16x128xf32> to vector<16x16x128xf32>
    %43 = vector.shape_cast %42 : vector<16x16x128xf32> to vector<256x128xf32>
    %44 = arith.truncf %43 : vector<256x128xf32> to vector<256x128xbf16>
    %c1_46 = arith.constant 1 : index
    %c2_47 = arith.constant 2 : index
    %c0_48 = arith.constant 0 : index
    %c0_49 = arith.constant 0 : index
    %45 = vector.load %arg2[%c1_46, %c2_47, %c0_48, %c0_49] : memref<3x3x128x128xbf16, #tpu.memory_space<vmem>>, vector<1x1x128x128xbf16>
    %46 = vector.shape_cast %45 : vector<1x1x128x128xbf16> to vector<128x128xbf16>
    %cst_50 = arith.constant dense<0.000000e+00> : vector<256x128xf32>
    %47 = tpu.matmul %44, %46, %cst_50 {dimension_numbers = #tpu.dot_dimension_numbers<[1], [0], [0], [1], [0, 0, 1, 1], [], []>} : vector<256x128xbf16>, vector<128x128xbf16>, vector<256x128xf32> -> vector<256x128xf32>
    %48 = arith.addf %40, %47 : vector<256x128xf32>
    %c0_51 = arith.constant 0 : index
    %c2_52 = arith.constant 2 : index
    %c0_53 = arith.constant 0 : index
    %c0_54 = arith.constant 0 : index
    %49 = vector.load %arg1[%c0_51, %c2_52, %c0_53, %c0_54] : memref<1x18x18x128xf32, #tpu.memory_space<vmem>>, vector<1x16x16x128xf32>
    %50 = vector.shape_cast %49 : vector<1x16x16x128xf32> to vector<16x16x128xf32>
    %51 = vector.shape_cast %50 : vector<16x16x128xf32> to vector<256x128xf32>
    %52 = arith.truncf %51 : vector<256x128xf32> to vector<256x128xbf16>
    %c2_55 = arith.constant 2 : index
    %c0_56 = arith.constant 0 : index
    %c0_57 = arith.constant 0 : index
    %c0_58 = arith.constant 0 : index
    %53 = vector.load %arg2[%c2_55, %c0_56, %c0_57, %c0_58] : memref<3x3x128x128xbf16, #tpu.memory_space<vmem>>, vector<1x1x128x128xbf16>
    %54 = vector.shape_cast %53 : vector<1x1x128x128xbf16> to vector<128x128xbf16>
    %cst_59 = arith.constant dense<0.000000e+00> : vector<256x128xf32>
    %55 = tpu.matmul %52, %54, %cst_59 {dimension_numbers = #tpu.dot_dimension_numbers<[1], [0], [0], [1], [0, 0, 1, 1], [], []>} : vector<256x128xbf16>, vector<128x128xbf16>, vector<256x128xf32> -> vector<256x128xf32>
    %56 = arith.addf %48, %55 : vector<256x128xf32>
    %c0_60 = arith.constant 0 : index
    %c2_61 = arith.constant 2 : index
    %c1_62 = arith.constant 1 : index
    %c0_63 = arith.constant 0 : index
    %57 = vector.load %arg1[%c0_60, %c2_61, %c1_62, %c0_63] : memref<1x18x18x128xf32, #tpu.memory_space<vmem>>, vector<1x16x16x128xf32>
    %58 = vector.shape_cast %57 : vector<1x16x16x128xf32> to vector<16x16x128xf32>
    %59 = vector.shape_cast %58 : vector<16x16x128xf32> to vector<256x128xf32>
    %60 = arith.truncf %59 : vector<256x128xf32> to vector<256x128xbf16>
    %c2_64 = arith.constant 2 : index
    %c1_65 = arith.constant 1 : index
    %c0_66 = arith.constant 0 : index
    %c0_67 = arith.constant 0 : index
    %61 = vector.load %arg2[%c2_64, %c1_65, %c0_66, %c0_67] : memref<3x3x128x128xbf16, #tpu.memory_space<vmem>>, vector<1x1x128x128xbf16>
    %62 = vector.shape_cast %61 : vector<1x1x128x128xbf16> to vector<128x128xbf16>
    %cst_68 = arith.constant dense<0.000000e+00> : vector<256x128xf32>
    %63 = tpu.matmul %60, %62, %cst_68 {dimension_numbers = #tpu.dot_dimension_numbers<[1], [0], [0], [1], [0, 0, 1, 1], [], []>} : vector<256x128xbf16>, vector<128x128xbf16>, vector<256x128xf32> -> vector<256x128xf32>
    %64 = arith.addf %56, %63 : vector<256x128xf32>
    %c0_69 = arith.constant 0 : index
    %c2_70 = arith.constant 2 : index
    %c2_71 = arith.constant 2 : index
    %c0_72 = arith.constant 0 : index
    %65 = vector.load %arg1[%c0_69, %c2_70, %c2_71, %c0_72] : memref<1x18x18x128xf32, #tpu.memory_space<vmem>>, vector<1x16x16x128xf32>
    %66 = vector.shape_cast %65 : vector<1x16x16x128xf32> to vector<16x16x128xf32>
    %67 = vector.shape_cast %66 : vector<16x16x128xf32> to vector<256x128xf32>
    %68 = arith.truncf %67 : vector<256x128xf32> to vector<256x128xbf16>
    %c2_73 = arith.constant 2 : index
    %c2_74 = arith.constant 2 : index
    %c0_75 = arith.constant 0 : index
    %c0_76 = arith.constant 0 : index
    %69 = vector.load %arg2[%c2_73, %c2_74, %c0_75, %c0_76] : memref<3x3x128x128xbf16, #tpu.memory_space<vmem>>, vector<1x1x128x128xbf16>
    %70 = vector.shape_cast %69 : vector<1x1x128x128xbf16> to vector<128x128xbf16>
    %cst_77 = arith.constant dense<0.000000e+00> : vector<256x128xf32>
    %71 = tpu.matmul %68, %70, %cst_77 {dimension_numbers = #tpu.dot_dimension_numbers<[1], [0], [0], [1], [0, 0, 1, 1], [], []>} : vector<256x128xbf16>, vector<128x128xbf16>, vector<256x128xf32> -> vector<256x128xf32>
    %72 = arith.addf %64, %71 : vector<256x128xf32>
    %c0_78 = arith.constant 0 : index
    %c0_79 = arith.constant 0 : index
    %73 = vector.load %arg3[%c0_78, %c0_79] : memref<1x128xf32, #tpu.memory_space<vmem>>, vector<1x128xf32>
    %74 = vector.broadcast %73 : vector<1x128xf32> to vector<256x128xf32>
    %75 = arith.addf %72, %74 : vector<256x128xf32>
    %cst_80 = arith.constant 0.000000e+00 : f32
    %76 = vector.broadcast %cst_80 : f32 to vector<256x128xf32>
    %77 = arith.maximumf %75, %76 : vector<256x128xf32>
    %cst_81 = arith.constant 0.000000e+00 : f32
    %78 = vector.broadcast %cst_81 : f32 to vector<18x32x128xf32>
    %c0_82 = arith.constant 0 : index
    %c0_83 = arith.constant 0 : index
    %c0_84 = arith.constant 0 : index
    %79 = vector.load %arg7[%c0_82, %c0_83, %c0_84] : memref<18x32x128xf32, #tpu.memory_space<vmem>>, vector<18x32x128xf32>
    tpu.vector_store %arg7[%c0_82, %c0_83, %c0_84], %78 {strides = array<i32>} : memref<18x32x128xf32, #tpu.memory_space<vmem>>, vector<18x32x128xf32>,
    %80 = vector.shape_cast %77 : vector<256x128xf32> to vector<16x16x128xf32>
    %c1_85 = arith.constant 1 : index
    %c8 = arith.constant 8 : index
    %c0_86 = arith.constant 0 : index
    %81 = vector.load %arg7[%c1_85, %c8, %c0_86] : memref<18x32x128xf32, #tpu.memory_space<vmem>>, vector<16x16x128xf32>
    tpu.vector_store %arg7[%c1_85, %c8, %c0_86], %80 {strides = array<i32>} : memref<18x32x128xf32, #tpu.memory_space<vmem>>, vector<16x16x128xf32>,
    %cst_87 = arith.constant 0.000000e+00 : f32
    %82 = vector.broadcast %cst_87 : f32 to vector<256x128xf32>
    %c0_88 = arith.constant 0 : index
    %c7 = arith.constant 7 : index
    %c0_89 = arith.constant 0 : index
    %83 = vector.load %arg7[%c0_88, %c7, %c0_89] : memref<18x32x128xf32, #tpu.memory_space<vmem>>, vector<16x16x128xf32>
    %84 = vector.shape_cast %83 : vector<16x16x128xf32> to vector<256x128xf32>
    %85 = arith.truncf %84 : vector<256x128xf32> to vector<256x128xbf16>
    %c0_90 = arith.constant 0 : index
    %c0_91 = arith.constant 0 : index
    %c0_92 = arith.constant 0 : index
    %c0_93 = arith.constant 0 : index
    %86 = vector.load %arg4[%c0_90, %c0_91, %c0_92, %c0_93] : memref<3x3x128x128xbf16, #tpu.memory_space<vmem>>, vector<1x1x128x128xbf16>
    %87 = vector.shape_cast %86 : vector<1x1x128x128xbf16> to vector<128x128xbf16>
    %cst_94 = arith.constant dense<0.000000e+00> : vector<256x128xf32>
    %88 = tpu.matmul %85, %87, %cst_94 {dimension_numbers = #tpu.dot_dimension_numbers<[1], [0], [0], [1], [0, 0, 1, 1], [], []>} : vector<256x128xbf16>, vector<128x128xbf16>, vector<256x128xf32> -> vector<256x128xf32>
    %89 = arith.addf %82, %88 : vector<256x128xf32>
    %c0_95 = arith.constant 0 : index
    %c8_96 = arith.constant 8 : index
    %c0_97 = arith.constant 0 : index
    %90 = vector.load %arg7[%c0_95, %c8_96, %c0_97] : memref<18x32x128xf32, #tpu.memory_space<vmem>>, vector<16x16x128xf32>
    %91 = vector.shape_cast %90 : vector<16x16x128xf32> to vector<256x128xf32>
    %92 = arith.truncf %91 : vector<256x128xf32> to vector<256x128xbf16>
    %c0_98 = arith.constant 0 : index
    %c1_99 = arith.constant 1 : index
    %c0_100 = arith.constant 0 : index
    %c0_101 = arith.constant 0 : index
    %93 = vector.load %arg4[%c0_98, %c1_99, %c0_100, %c0_101] : memref<3x3x128x128xbf16, #tpu.memory_space<vmem>>, vector<1x1x128x128xbf16>
    %94 = vector.shape_cast %93 : vector<1x1x128x128xbf16> to vector<128x128xbf16>
    %cst_102 = arith.constant dense<0.000000e+00> : vector<256x128xf32>
    %95 = tpu.matmul %92, %94, %cst_102 {dimension_numbers = #tpu.dot_dimension_numbers<[1], [0], [0], [1], [0, 0, 1, 1], [], []>} : vector<256x128xbf16>, vector<128x128xbf16>, vector<256x128xf32> -> vector<256x128xf32>
    %96 = arith.addf %89, %95 : vector<256x128xf32>
    %c0_103 = arith.constant 0 : index
    %c9 = arith.constant 9 : index
    %c0_104 = arith.constant 0 : index
    %97 = vector.load %arg7[%c0_103, %c9, %c0_104] : memref<18x32x128xf32, #tpu.memory_space<vmem>>, vector<16x16x128xf32>
    %98 = vector.shape_cast %97 : vector<16x16x128xf32> to vector<256x128xf32>
    %99 = arith.truncf %98 : vector<256x128xf32> to vector<256x128xbf16>
    %c0_105 = arith.constant 0 : index
    %c2_106 = arith.constant 2 : index
    %c0_107 = arith.constant 0 : index
    %c0_108 = arith.constant 0 : index
    %100 = vector.load %arg4[%c0_105, %c2_106, %c0_107, %c0_108] : memref<3x3x128x128xbf16, #tpu.memory_space<vmem>>, vector<1x1x128x128xbf16>
    %101 = vector.shape_cast %100 : vector<1x1x128x128xbf16> to vector<128x128xbf16>
    %cst_109 = arith.constant dense<0.000000e+00> : vector<256x128xf32>
    %102 = tpu.matmul %99, %101, %cst_109 {dimension_numbers = #tpu.dot_dimension_numbers<[1], [0], [0], [1], [0, 0, 1, 1], [], []>} : vector<256x128xbf16>, vector<128x128xbf16>, vector<256x128xf32> -> vector<256x128xf32>
    %103 = arith.addf %96, %102 : vector<256x128xf32>
    %c1_110 = arith.constant 1 : index
    %c7_111 = arith.constant 7 : index
    %c0_112 = arith.constant 0 : index
    %104 = vector.load %arg7[%c1_110, %c7_111, %c0_112] : memref<18x32x128xf32, #tpu.memory_space<vmem>>, vector<16x16x128xf32>
    %105 = vector.shape_cast %104 : vector<16x16x128xf32> to vector<256x128xf32>
    %106 = arith.truncf %105 : vector<256x128xf32> to vector<256x128xbf16>
    %c1_113 = arith.constant 1 : index
    %c0_114 = arith.constant 0 : index
    %c0_115 = arith.constant 0 : index
    %c0_116 = arith.constant 0 : index
    %107 = vector.load %arg4[%c1_113, %c0_114, %c0_115, %c0_116] : memref<3x3x128x128xbf16, #tpu.memory_space<vmem>>, vector<1x1x128x128xbf16>
    %108 = vector.shape_cast %107 : vector<1x1x128x128xbf16> to vector<128x128xbf16>
    %cst_117 = arith.constant dense<0.000000e+00> : vector<256x128xf32>
    %109 = tpu.matmul %106, %108, %cst_117 {dimension_numbers = #tpu.dot_dimension_numbers<[1], [0], [0], [1], [0, 0, 1, 1], [], []>} : vector<256x128xbf16>, vector<128x128xbf16>, vector<256x128xf32> -> vector<256x128xf32>
    %110 = arith.addf %103, %109 : vector<256x128xf32>
    %c1_118 = arith.constant 1 : index
    %c8_119 = arith.constant 8 : index
    %c0_120 = arith.constant 0 : index
    %111 = vector.load %arg7[%c1_118, %c8_119, %c0_120] : memref<18x32x128xf32, #tpu.memory_space<vmem>>, vector<16x16x128xf32>
    %112 = vector.shape_cast %111 : vector<16x16x128xf32> to vector<256x128xf32>
    %113 = arith.truncf %112 : vector<256x128xf32> to vector<256x128xbf16>
    %c1_121 = arith.constant 1 : index
    %c1_122 = arith.constant 1 : index
    %c0_123 = arith.constant 0 : index
    %c0_124 = arith.constant 0 : index
    %114 = vector.load %arg4[%c1_121, %c1_122, %c0_123, %c0_124] : memref<3x3x128x128xbf16, #tpu.memory_space<vmem>>, vector<1x1x128x128xbf16>
    %115 = vector.shape_cast %114 : vector<1x1x128x128xbf16> to vector<128x128xbf16>
    %cst_125 = arith.constant dense<0.000000e+00> : vector<256x128xf32>
    %116 = tpu.matmul %113, %115, %cst_125 {dimension_numbers = #tpu.dot_dimension_numbers<[1], [0], [0], [1], [0, 0, 1, 1], [], []>} : vector<256x128xbf16>, vector<128x128xbf16>, vector<256x128xf32> -> vector<256x128xf32>
    %117 = arith.addf %110, %116 : vector<256x128xf32>
    %c1_126 = arith.constant 1 : index
    %c9_127 = arith.constant 9 : index
    %c0_128 = arith.constant 0 : index
    %118 = vector.load %arg7[%c1_126, %c9_127, %c0_128] : memref<18x32x128xf32, #tpu.memory_space<vmem>>, vector<16x16x128xf32>
    %119 = vector.shape_cast %118 : vector<16x16x128xf32> to vector<256x128xf32>
    %120 = arith.truncf %119 : vector<256x128xf32> to vector<256x128xbf16>
    %c1_129 = arith.constant 1 : index
    %c2_130 = arith.constant 2 : index
    %c0_131 = arith.constant 0 : index
    %c0_132 = arith.constant 0 : index
    %121 = vector.load %arg4[%c1_129, %c2_130, %c0_131, %c0_132] : memref<3x3x128x128xbf16, #tpu.memory_space<vmem>>, vector<1x1x128x128xbf16>
    %122 = vector.shape_cast %121 : vector<1x1x128x128xbf16> to vector<128x128xbf16>
    %cst_133 = arith.constant dense<0.000000e+00> : vector<256x128xf32>
    %123 = tpu.matmul %120, %122, %cst_133 {dimension_numbers = #tpu.dot_dimension_numbers<[1], [0], [0], [1], [0, 0, 1, 1], [], []>} : vector<256x128xbf16>, vector<128x128xbf16>, vector<256x128xf32> -> vector<256x128xf32>
    %124 = arith.addf %117, %123 : vector<256x128xf32>
    %c2_134 = arith.constant 2 : index
    %c7_135 = arith.constant 7 : index
    %c0_136 = arith.constant 0 : index
    %125 = vector.load %arg7[%c2_134, %c7_135, %c0_136] : memref<18x32x128xf32, #tpu.memory_space<vmem>>, vector<16x16x128xf32>
    %126 = vector.shape_cast %125 : vector<16x16x128xf32> to vector<256x128xf32>
    %127 = arith.truncf %126 : vector<256x128xf32> to vector<256x128xbf16>
    %c2_137 = arith.constant 2 : index
    %c0_138 = arith.constant 0 : index
    %c0_139 = arith.constant 0 : index
    %c0_140 = arith.constant 0 : index
    %128 = vector.load %arg4[%c2_137, %c0_138, %c0_139, %c0_140] : memref<3x3x128x128xbf16, #tpu.memory_space<vmem>>, vector<1x1x128x128xbf16>
    %129 = vector.shape_cast %128 : vector<1x1x128x128xbf16> to vector<128x128xbf16>
    %cst_141 = arith.constant dense<0.000000e+00> : vector<256x128xf32>
    %130 = tpu.matmul %127, %129, %cst_141 {dimension_numbers = #tpu.dot_dimension_numbers<[1], [0], [0], [1], [0, 0, 1, 1], [], []>} : vector<256x128xbf16>, vector<128x128xbf16>, vector<256x128xf32> -> vector<256x128xf32>
    %131 = arith.addf %124, %130 : vector<256x128xf32>
    %c2_142 = arith.constant 2 : index
    %c8_143 = arith.constant 8 : index
    %c0_144 = arith.constant 0 : index
    %132 = vector.load %arg7[%c2_142, %c8_143, %c0_144] : memref<18x32x128xf32, #tpu.memory_space<vmem>>, vector<16x16x128xf32>
    %133 = vector.shape_cast %132 : vector<16x16x128xf32> to vector<256x128xf32>
    %134 = arith.truncf %133 : vector<256x128xf32> to vector<256x128xbf16>
    %c2_145 = arith.constant 2 : index
    %c1_146 = arith.constant 1 : index
    %c0_147 = arith.constant 0 : index
    %c0_148 = arith.constant 0 : index
    %135 = vector.load %arg4[%c2_145, %c1_146, %c0_147, %c0_148] : memref<3x3x128x128xbf16, #tpu.memory_space<vmem>>, vector<1x1x128x128xbf16>
    %136 = vector.shape_cast %135 : vector<1x1x128x128xbf16> to vector<128x128xbf16>
    %cst_149 = arith.constant dense<0.000000e+00> : vector<256x128xf32>
    %137 = tpu.matmul %134, %136, %cst_149 {dimension_numbers = #tpu.dot_dimension_numbers<[1], [0], [0], [1], [0, 0, 1, 1], [], []>} : vector<256x128xbf16>, vector<128x128xbf16>, vector<256x128xf32> -> vector<256x128xf32>
    %138 = arith.addf %131, %137 : vector<256x128xf32>
    %c2_150 = arith.constant 2 : index
    %c9_151 = arith.constant 9 : index
    %c0_152 = arith.constant 0 : index
    %139 = vector.load %arg7[%c2_150, %c9_151, %c0_152] : memref<18x32x128xf32, #tpu.memory_space<vmem>>, vector<16x16x128xf32>
    %140 = vector.shape_cast %139 : vector<16x16x128xf32> to vector<256x128xf32>
    %141 = arith.truncf %140 : vector<256x128xf32> to vector<256x128xbf16>
    %c2_153 = arith.constant 2 : index
    %c2_154 = arith.constant 2 : index
    %c0_155 = arith.constant 0 : index
    %c0_156 = arith.constant 0 : index
    %142 = vector.load %arg4[%c2_153, %c2_154, %c0_155, %c0_156] : memref<3x3x128x128xbf16, #tpu.memory_space<vmem>>, vector<1x1x128x128xbf16>
    %143 = vector.shape_cast %142 : vector<1x1x128x128xbf16> to vector<128x128xbf16>
    %cst_157 = arith.constant dense<0.000000e+00> : vector<256x128xf32>
    %144 = tpu.matmul %141, %143, %cst_157 {dimension_numbers = #tpu.dot_dimension_numbers<[1], [0], [0], [1], [0, 0, 1, 1], [], []>} : vector<256x128xbf16>, vector<128x128xbf16>, vector<256x128xf32> -> vector<256x128xf32>
    %145 = arith.addf %138, %144 : vector<256x128xf32>
    %c0_158 = arith.constant 0 : index
    %c0_159 = arith.constant 0 : index
    %146 = vector.load %arg5[%c0_158, %c0_159] : memref<1x128xf32, #tpu.memory_space<vmem>>, vector<1x128xf32>
    %147 = vector.broadcast %146 : vector<1x128xf32> to vector<256x128xf32>
    %148 = arith.addf %145, %147 : vector<256x128xf32>
    %c0_160 = arith.constant 0 : index
    %c1_161 = arith.constant 1 : index
    %c1_162 = arith.constant 1 : index
    %c0_163 = arith.constant 0 : index
    %149 = vector.load %arg1[%c0_160, %c1_161, %c1_162, %c0_163] : memref<1x18x18x128xf32, #tpu.memory_space<vmem>>, vector<1x16x16x128xf32>
    %150 = vector.shape_cast %149 : vector<1x16x16x128xf32> to vector<16x16x128xf32>
    %151 = vector.shape_cast %150 : vector<16x16x128xf32> to vector<256x128xf32>
    %152 = arith.addf %151, %148 : vector<256x128xf32>
    %cst_164 = arith.constant 0.000000e+00 : f32
    %153 = vector.broadcast %cst_164 : f32 to vector<256x128xf32>
    %154 = arith.maximumf %152, %153 : vector<256x128xf32>
    %155 = vector.shape_cast %154 : vector<256x128xf32> to vector<1x16x16x128xf32>
    %c0_165 = arith.constant 0 : index
    %c0_166 = arith.constant 0 : index
    %c0_167 = arith.constant 0 : index
    %c0_168 = arith.constant 0 : index
    %156 = vector.load %arg6[%c0_165, %c0_166, %c0_167, %c0_168] : memref<1x16x16x128xf32, #tpu.memory_space<vmem>>, vector<1x16x16x128xf32>
    tpu.vector_store %arg6[%c0_165, %c0_166, %c0_167, %c0_168], %155 {strides = array<i32>} : memref<1x16x16x128xf32, #tpu.memory_space<vmem>>, vector<1x16x16x128xf32>,
    return
  }
  func.func @transform_0(%arg0: i32) -> (i32, i32, i32, i32) {
    %c0_i32 = arith.constant 0 : i32
    %c0_i32_0 = arith.constant 0 : i32
    %c0_i32_1 = arith.constant 0 : i32
    %c0_i32_2 = arith.constant 0 : i32
    return %arg0, %c0_i32, %c0_i32_0, %c0_i32_1 : i32, i32, i32, i32
  }
  func.func @transform_1(%arg0: i32) -> (i32, i32, i32, i32) {
    %c0_i32 = arith.constant 0 : i32
    %c0_i32_0 = arith.constant 0 : i32
    %c0_i32_1 = arith.constant 0 : i32
    %c0_i32_2 = arith.constant 0 : i32
    %c0_i32_3 = arith.constant 0 : i32
    return %c0_i32, %c0_i32_0, %c0_i32_1, %c0_i32_2 : i32, i32, i32, i32
  }
  func.func @transform_2(%arg0: i32) -> (i32, i32) {
    %c0_i32 = arith.constant 0 : i32
    %c0_i32_0 = arith.constant 0 : i32
    %c0_i32_1 = arith.constant 0 : i32
    return %c0_i32, %c0_i32_0 : i32, i32
  }
  func.func @transform_3(%arg0: i32) -> (i32, i32, i32, i32) {
    %c0_i32 = arith.constant 0 : i32
    %c0_i32_0 = arith.constant 0 : i32
    %c0_i32_1 = arith.constant 0 : i32
    %c0_i32_2 = arith.constant 0 : i32
    %c0_i32_3 = arith.constant 0 : i32
    return %c0_i32, %c0_i32_0, %c0_i32_1, %c0_i32_2 : i32, i32, i32, i32
  }
  func.func @transform_4(%arg0: i32) -> (i32, i32) {
    %c0_i32 = arith.constant 0 : i32
    %c0_i32_0 = arith.constant 0 : i32
    %c0_i32_1 = arith.constant 0 : i32
    return %c0_i32, %c0_i32_0 : i32, i32
  }
  func.func @transform_5(%arg0: i32) -> (i32, i32, i32, i32) {
    %c0_i32 = arith.constant 0 : i32
    %c0_i32_0 = arith.constant 0 : i32
    %c0_i32_1 = arith.constant 0 : i32
    %c0_i32_2 = arith.constant 0 : i32
    return %arg0, %c0_i32, %c0_i32_0, %c0_i32_1 : i32, i32, i32, i32
  }
}

</mosaic_0001>

<llo_original>
// kernel: resnet_basic_block_forward.1
$region0: #{resnet_basic_block_forward.1}
  #allocation0 [shape = 'u32[]', space=smem, size = 0x4, offset = 0x4, fixed_abs, tag = 'smem constant byte address 0x4 - core index']
  #allocation1 [shape = 'u32[144,128]{1,0:T(1,128)}', space=vmem, size = 0x12000, scoped, tag = 'internal scratch']
  #allocation2 [shape = 'f32[18,32,128]{2,1,0:T(8,128)}', space=vmem, size = 0x48000, scoped, tag = 'scratch operand']
  %s0 = inlined_call_operand.vmem [shape: f32[2,18,18,128], index: 0, kind: input, shape index: {}]
  %s1 = inlined_call_operand.vmem [shape: bf16[3,3,128,128], index: 1, kind: input, shape index: {}]
  %s2 = inlined_call_operand.vmem [shape: f32[1,128], index: 2, kind: input, shape index: {}]
  %s3 = inlined_call_operand.vmem [shape: bf16[3,3,128,128], index: 3, kind: input, shape index: {}]
  %s4 = inlined_call_operand.vmem [shape: f32[1,128], index: 4, kind: input, shape index: {}]
  %s5 = inlined_call_operand.vmem [shape: f32[2,16,16,128], index: 5, kind: output, shape index: {}]
  %s6 = sld [smem:[#allocation0]]
  $region53: #{resnet_basic_block_forward.1} parent=0
    _
  %s8 = ssub.s32 1, %s6
  %s9 = scalar_select 0, %s8, %s6
  loop: start=0, step=1, limit=4
  $region2: #{resnet_basic_block_forward.1} parent=0 // loop_pre_header
    _
  $region3: #{resnet_basic_block_forward.1} parent=0 // loop_header
    %s11 = sphi 0, %s15
    %p12 = scmp.ge.s32.totalorder %s11, 4
    %s21 = sphi 0, %s23
    %s24 = sphi 0, %s21
    %s25 = sphi 0, %s24
    %s41 = sphi 0, %s25
    %s45 = sphi 0, %s45
    %s47 = sphi 0, %s45
    %s48 = sphi 0, %s47
    %s62 = sphi 0, %s48
    %s66 = sphi 0, %s66
    %s68 = sphi 0, %s66
    %s69 = sphi 0, %s68
    %s83 = sphi 0, %s69
    %s87 = sphi 0, %s87
    %s89 = sphi 0, %s87
    %s90 = sphi 0, %s89
    %s104 = sphi 0, %s90
    %s108 = sphi 0, %s108
    %s110 = sphi 0, %s108
    %s111 = sphi 0, %s110
    %s125 = sphi 0, %s111
    %s131 = sphi 0, %s133
    %s134 = sphi 0, %s131
    %s135 = sphi 0, %s134
    %s151 = sphi 0, %s135
  $region4: #{resnet_basic_block_forward.1} parent=0 // loop_header_branch
    %14 = sbr.rel (%p12) target = $region8
  $region5: #{resnet_basic_block_forward.1} parent=0 // loop_body
    %s16 = ssub.s32 %s11, 1
    %s17 = ssub.s32 %s11, 2
    %s18 = sadd.s32 %s11, 1
    %s19 = ssub.s32 %s11, %s18
    %p20 = scmp.eq.s32.totalorder %s19, 0
    %s22 = sadd.s32 %s21, 1
    %s23 = scalar_select %p20, %s21, %s22
    %p26 = pneg %p20
    %p27 = scmp.eq.s32.totalorder %s11, 1
    %p28 = por %p26, %p27
    %p29 = scmp.ne.s32.totalorder %s21, %s24
    %p30 = scmp.eq.s32.totalorder %s11, 0
    %p31 = por %p29, %p30
    %p32 = scmp.ne.s32.totalorder %s21, %s24
    %p33 = scmp.eq.s32.totalorder %s16, 1
    %p34 = por %p32, %p33
    %p35 = scmp.ne.s32.totalorder %s24, %s25
    %p36 = scmp.eq.s32.totalorder %s16, 0
    %p37 = por %p35, %p36
    %p38 = scmp.ne.s32.totalorder %s24, %s25
    %p39 = scmp.eq.s32.totalorder %s17, 1
    %p40 = por %p38, %p39
    %p42 = scmp.ne.s32.totalorder %s25, %s41
    %p43 = scmp.eq.s32.totalorder %s17, 0
    %p44 = por %p42, %p43
    %s46 = sadd.s32 %s45, 1
    %p49 = scmp.eq.s32.totalorder %s11, 1
    %p50 = scmp.ne.s32.totalorder %s45, %s47
    %p51 = scmp.eq.s32.totalorder %s11, 0
    %p52 = por %p50, %p51
    %p53 = scmp.ne.s32.totalorder %s45, %s47
    %p54 = scmp.eq.s32.totalorder %s16, 1
    %p55 = por %p53, %p54
    %p56 = scmp.ne.s32.totalorder %s47, %s48
    %p57 = scmp.eq.s32.totalorder %s16, 0
    %p58 = por %p56, %p57
    %p59 = scmp.ne.s32.totalorder %s47, %s48
    %p60 = scmp.eq.s32.totalorder %s17, 1
    %p61 = por %p59, %p60
    %p63 = scmp.ne.s32.totalorder %s48, %s62
    %p64 = scmp.eq.s32.totalorder %s17, 0
    %p65 = por %p63, %p64
    %s67 = sadd.s32 %s66, 1
    %p70 = scmp.eq.s32.totalorder %s11, 1
    %p71 = scmp.ne.s32.totalorder %s66, %s68
    %p72 = scmp.eq.s32.totalorder %s11, 0
    %p73 = por %p71, %p72
    %p74 = scmp.ne.s32.totalorder %s66, %s68
    %p75 = scmp.eq.s32.totalorder %s16, 1
    %p76 = por %p74, %p75
    %p77 = scmp.ne.s32.totalorder %s68, %s69
    %p78 = scmp.eq.s32.totalorder %s16, 0
    %p79 = por %p77, %p78
    %p80 = scmp.ne.s32.totalorder %s68, %s69
    %p81 = scmp.eq.s32.totalorder %s17, 1
    %p82 = por %p80, %p81
    %p84 = scmp.ne.s32.totalorder %s69, %s83
    %p85 = scmp.eq.s32.totalorder %s17, 0
    %p86 = por %p84, %p85
    %s88 = sadd.s32 %s87, 1
    %p91 = scmp.eq.s32.totalorder %s11, 1
    %p92 = scmp.ne.s32.totalorder %s87, %s89
    %p93 = scmp.eq.s32.totalorder %s11, 0
    %p94 = por %p92, %p93
    %p95 = scmp.ne.s32.totalorder %s87, %s89
    %p96 = scmp.eq.s32.totalorder %s16, 1
    %p97 = por %p95, %p96
    %p98 = scmp.ne.s32.totalorder %s89, %s90
    %p99 = scmp.eq.s32.totalorder %s16, 0
    %p100 = por %p98, %p99
    %p101 = scmp.ne.s32.totalorder %s89, %s90
    %p102 = scmp.eq.s32.totalorder %s17, 1
    %p103 = por %p101, %p102
    %p105 = scmp.ne.s32.totalorder %s90, %s104
    %p106 = scmp.eq.s32.totalorder %s17, 0
    %p107 = por %p105, %p106
    %s109 = sadd.s32 %s108, 1
    %p112 = scmp.eq.s32.totalorder %s11, 1
    %p113 = scmp.ne.s32.totalorder %s108, %s110
    %p114 = scmp.eq.s32.totalorder %s11, 0
    %p115 = por %p113, %p114
    %p116 = scmp.ne.s32.totalorder %s108, %s110
    %p117 = scmp.eq.s32.totalorder %s16, 1
    %p118 = por %p116, %p117
    %p119 = scmp.ne.s32.totalorder %s110, %s111
    %p120 = scmp.eq.s32.totalorder %s16, 0
    %p121 = por %p119, %p120
    %p122 = scmp.ne.s32.totalorder %s110, %s111
    %p123 = scmp.eq.s32.totalorder %s17, 1
    %p124 = por %p122, %p123
    %p126 = scmp.ne.s32.totalorder %s111, %s125
    %p127 = scmp.eq.s32.totalorder %s17, 0
    %p128 = por %p126, %p127
    %s129 = ssub.s32 %s11, %s18
    %p130 = scmp.eq.s32.totalorder %s129, 0
    %s132 = sadd.s32 %s131, 1
    %s133 = scalar_select %p130, %s131, %s132
    %p136 = pneg %p130
    %p137 = scmp.eq.s32.totalorder %s11, 1
    %p138 = por %p136, %p137
    %p139 = scmp.ne.s32.totalorder %s131, %s134
    %p140 = scmp.eq.s32.totalorder %s11, 0
    %p141 = por %p139, %p140
    %p142 = scmp.ne.s32.totalorder %s131, %s134
    %p143 = scmp.eq.s32.totalorder %s16, 1
    %p144 = por %p142, %p143
    %p145 = scmp.ne.s32.totalorder %s134, %s135
    %p146 = scmp.eq.s32.totalorder %s16, 0
    %p147 = por %p145, %p146
    %p148 = scmp.ne.s32.totalorder %s134, %s135
    %p149 = scmp.eq.s32.totalorder %s17, 1
    %p150 = por %p148, %p149
    %p152 = scmp.ne.s32.totalorder %s135, %s151
    %p153 = scmp.eq.s32.totalorder %s17, 0
    %p154 = por %p152, %p153
    %p155 = scmp.le.s32.totalorder 1, %s11
    %p156 = scmp.lt.s32.totalorder %s11, 3
    %p157 = pnand %p155, %p156
    %p158 = pneg %p157
    // Predicated region
    $region9: #{resnet_basic_block_forward.1} parent=5 // pred_check
      _
    $region10: #{resnet_basic_block_forward.1} parent=5 // pred_check_branch
      %160 = sbr.rel (%p157) target = $region12
    $region11: #{resnet_basic_block_forward.1} parent=5 // pred_region
      %s161 = ssub.s32 %s11, 1
      // Predicated region
      $region13: #{resnet_basic_block_forward.1} parent=11 // pred_check
        %p162 = pneg %p58
      $region14: #{resnet_basic_block_forward.1} parent=11 // pred_check_branch
        %164 = sbr.rel (%p162) target = $region16
      $region15: #{resnet_basic_block_forward.1} parent=11 // pred_region
        _
      $region16: #{resnet_basic_block_forward.1} parent=11 // pred_fallthru
        _
      // Predicated region
      $region17: #{resnet_basic_block_forward.1} parent=11 // pred_check
        %p165 = pneg %p79
      $region18: #{resnet_basic_block_forward.1} parent=11 // pred_check_branch
        %167 = sbr.rel (%p165) target = $region20
      $region19: #{resnet_basic_block_forward.1} parent=11 // pred_region
        _
      $region20: #{resnet_basic_block_forward.1} parent=11 // pred_fallthru
        _
      // Predicated region
      $region21: #{resnet_basic_block_forward.1} parent=11 // pred_check
        %p168 = pneg %p100
      $region22: #{resnet_basic_block_forward.1} parent=11 // pred_check_branch
        %170 = sbr.rel (%p168) target = $region24
      $region23: #{resnet_basic_block_forward.1} parent=11 // pred_region
        _
      $region24: #{resnet_basic_block_forward.1} parent=11 // pred_fallthru
        _
      // Predicated region
      $region25: #{resnet_basic_block_forward.1} parent=11 // pred_check
        %p171 = pneg %p121
      $region26: #{resnet_basic_block_forward.1} parent=11 // pred_check_branch
        %173 = sbr.rel (%p171) target = $region28
      $region27: #{resnet_basic_block_forward.1} parent=11 // pred_region
        _
      $region28: #{resnet_basic_block_forward.1} parent=11 // pred_fallthru
        _
    $region12: #{resnet_basic_block_forward.1} parent=5 // pred_fallthru
      _
    %p174 = scmp.lt.s32.totalorder %s11, 2
    // Predicated region
    $region29: #{resnet_basic_block_forward.1} parent=5 // pred_check
      %p175 = pneg %p174
    $region30: #{resnet_basic_block_forward.1} parent=5 // pred_check_branch
      %177 = sbr.rel (%p175) target = $region32
    $region31: #{resnet_basic_block_forward.1} parent=5 // pred_region
      // Predicated region
      $region33: #{resnet_basic_block_forward.1} parent=31 // pred_check
        %p178 = pneg %p31
      $region34: #{resnet_basic_block_forward.1} parent=31 // pred_check_branch
        %180 = sbr.rel (%p178) target = $region36
      $region35: #{resnet_basic_block_forward.1} parent=31 // pred_region
        %p181 = scmp.lt.s32.totalorder %s11, 1
        %s182 = scalar_select %p181, %s11, 1
        %s183 = smul.addr %s182, 54
        %s184 = smul.addr %s183, 8
        %s185 = scalar_lea.vmem %s0, %s184
      $region36: #{resnet_basic_block_forward.1} parent=31 // pred_fallthru
        _
    $region32: #{resnet_basic_block_forward.1} parent=5 // pred_fallthru
      _
    %p186 = scmp.le.s32.totalorder 1, %s11
    %p187 = scmp.lt.s32.totalorder %s11, 3
    %p188 = pnand %p186, %p187
    %p189 = pneg %p188
    // Predicated region
    $region37: #{resnet_basic_block_forward.1} parent=5 // pred_check
      _
    $region38: #{resnet_basic_block_forward.1} parent=5 // pred_check_branch
      %191 = sbr.rel (%p188) target = $region40
    $region39: #{resnet_basic_block_forward.1} parent=5 // pred_region
      %s192 = ssub.s32 %s11, 1
      %p193 = scmp.lt.s32.totalorder %s16, 1
      %s194 = scalar_select %p193, %s16, 1
      %s195 = smul.addr %s194, 54
      %s196 = smul.addr %s195, 8
      %s197 = scalar_lea.vmem %s0, %s196
      %p198 = pneg %p37
      %p199 = pneg %p34
      %p200 = pneg %p58
      %p201 = pneg %p55
      %p202 = pneg %p79
      %p203 = pneg %p76
      %p204 = pneg %p100
      %p205 = pneg %p97
      %p206 = pneg %p121
      %p207 = pneg %p118
      %p208 = pneg %p147
      %p209 = pneg %p144
      %p210 = scmp.lt.s32.totalorder %s16, 1
      %s211 = scalar_select %p210, %s16, 1
      %s212 = smul.addr %s211, 32
      %s213 = smul.addr %s212, 8
      %s214 = scalar_lea.vmem %s5, %s213
      %p215 = scmp.lt.s32.totalorder %s16, 1
      %s216 = scalar_select %p215, %s16, 1
      %s217 = smul.addr %s216, 54
      %s218 = smul.addr %s217, 8
      %s219 = scalar_lea.vmem %s0, %s218
      %p220 = scmp.lt.s32.totalorder %s16, 1
      %s221 = scalar_select %p220, %s16, 1
      %s222 = smul.addr %s221, 32
      %s223 = smul.addr %s222, 8
      %s224 = scalar_lea.vmem %s5, %s223
      %v226 = vld [vmem:[%s219] sm:$0xff]
      %v227 = vld [vmem:[%s219 + $0x8] sm:$0xff]
      %v228 = vld [vmem:[%s219 + $0x18] sm:$0xff]
      %v229 = vld [vmem:[%s219 + $0x20] sm:$0xff]
      %v230 = vld [vmem:[%s219 + $0x30] sm:$0xff]
      %v231 = vld [vmem:[%s219 + $0x38] sm:$0xff]
      %v232 = vld [vmem:[%s219 + $0x48] sm:$0xff]
      %v233 = vld [vmem:[%s219 + $0x50] sm:$0xff]
      %v234 = vld [vmem:[%s219 + $0x60] sm:$0xff]
      %v235 = vld [vmem:[%s219 + $0x68] sm:$0xff]
      %v236 = vld [vmem:[%s219 + $0x78] sm:$0xff]
      %v237 = vld [vmem:[%s219 + $0x80] sm:$0xff]
      %v238 = vld [vmem:[%s219 + $0x90] sm:$0xff]
      %v239 = vld [vmem:[%s219 + $0x98] sm:$0xff]
      %v240 = vld [vmem:[%s219 + $0xa8] sm:$0xff]
      %v241 = vld [vmem:[%s219 + $0xb0] sm:$0xff]
      %v242 = vld [vmem:[%s219 + $0xc0] sm:$0xff]
      %v243 = vld [vmem:[%s219 + $0xc8] sm:$0xff]
      %v244 = vld [vmem:[%s219 + $0xd8] sm:$0xff]
      %v245 = vld [vmem:[%s219 + $0xe0] sm:$0xff]
      %v246 = vld [vmem:[%s219 + $0xf0] sm:$0xff]
      %v247 = vld [vmem:[%s219 + $0xf8] sm:$0xff]
      %v248 = vld [vmem:[%s219 + $0x108] sm:$0xff]
      %v249 = vld [vmem:[%s219 + $0x110] sm:$0xff]
      %v250 = vld [vmem:[%s219 + $0x120] sm:$0xff]
      %v251 = vld [vmem:[%s219 + $0x128] sm:$0xff]
      %v252 = vld [vmem:[%s219 + $0x138] sm:$0xff]
      %v253 = vld [vmem:[%s219 + $0x140] sm:$0xff]
      %v254 = vld [vmem:[%s219 + $0x150] sm:$0xff]
      %v255 = vld [vmem:[%s219 + $0x158] sm:$0xff]
      %v256 = vld [vmem:[%s219 + $0x168] sm:$0xff]
      %v257 = vld [vmem:[%s219 + $0x170] sm:$0xff]
      %v258 = vpack.c.bf16 %v227, %v226
      %v259 = vpack.c.bf16 %v229, %v228
      %v260 = vpack.c.bf16 %v231, %v230
      %v261 = vpack.c.bf16 %v233, %v232
      %v262 = vpack.c.bf16 %v235, %v234
      %v263 = vpack.c.bf16 %v237, %v236
      %v264 = vpack.c.bf16 %v239, %v238
      %v265 = vpack.c.bf16 %v241, %v240
      %v266 = vpack.c.bf16 %v243, %v242
      %v267 = vpack.c.bf16 %v245, %v244
      %v268 = vpack.c.bf16 %v247, %v246
      %v269 = vpack.c.bf16 %v249, %v248
      %v270 = vpack.c.bf16 %v251, %v250
      %v271 = vpack.c.bf16 %v253, %v252
      %v272 = vpack.c.bf16 %v255, %v254
      %v273 = vpack.c.bf16 %v257, %v256
      %v274 = vld [vmem:[%s1] sm:$0xf]
      %v275 = vld [vmem:[%s1 + $0x4] sm:$0xf]
      %v276 = vld [vmem:[%s1 + $0x8] sm:$0xf]
      %v277 = vld [vmem:[%s1 + $0xc] sm:$0xf]
      %v278 = vld [vmem:[%s1 + $0x10] sm:$0xf]
      %v279 = vld [vmem:[%s1 + $0x14] sm:$0xf]
      %v280 = vld [vmem:[%s1 + $0x18] sm:$0xf]
      %v281 = vld [vmem:[%s1 + $0x1c] sm:$0xf]
      %v282 = vld [vmem:[%s1 + $0x20] sm:$0xf]
      %v283 = vld [vmem:[%s1 + $0x24] sm:$0xf]
      %v284 = vld [vmem:[%s1 + $0x28] sm:$0xf]
      %v285 = vld [vmem:[%s1 + $0x2c] sm:$0xf]
      %v286 = vld [vmem:[%s1 + $0x30] sm:$0xf]
      %v287 = vld [vmem:[%s1 + $0x34] sm:$0xf]
      %v288 = vld [vmem:[%s1 + $0x38] sm:$0xf]
      %v289 = vld [vmem:[%s1 + $0x3c] sm:$0xf]
      %v290 = vld [vmem:[%s219 + $0x1] sm:$0xff]
      %v291 = vld [vmem:[%s219 + $0x9] sm:$0xff]
      %v292 = vld [vmem:[%s219 + $0x19] sm:$0xff]
      %v293 = vld [vmem:[%s219 + $0x21] sm:$0xff]
      %v294 = vld [vmem:[%s219 + $0x31] sm:$0xff]
      %v295 = vld [vmem:[%s219 + $0x39] sm:$0xff]
      %v296 = vld [vmem:[%s219 + $0x49] sm:$0xff]
      %v297 = vld [vmem:[%s219 + $0x51] sm:$0xff]
      %v298 = vld [vmem:[%s219 + $0x61] sm:$0xff]
      %v299 = vld [vmem:[%s219 + $0x69] sm:$0xff]
      %v300 = vld [vmem:[%s219 + $0x79] sm:$0xff]
      %v301 = vld [vmem:[%s219 + $0x81] sm:$0xff]
      %v302 = vld [vmem:[%s219 + $0x91] sm:$0xff]
      %v303 = vld [vmem:[%s219 + $0x99] sm:$0xff]
      %v304 = vld [vmem:[%s219 + $0xa9] sm:$0xff]
      %v305 = vld [vmem:[%s219 + $0xb1] sm:$0xff]
      %v306 = vld [vmem:[%s219 + $0xc1] sm:$0xff]
      %v307 = vld [vmem:[%s219 + $0xc9] sm:$0xff]
      %v308 = vld [vmem:[%s219 + $0xd9] sm:$0xff]
      %v309 = vld [vmem:[%s219 + $0xe1] sm:$0xff]
      %v310 = vld [vmem:[%s219 + $0xf1] sm:$0xff]
      %v311 = vld [vmem:[%s219 + $0xf9] sm:$0xff]
      %v312 = vld [vmem:[%s219 + $0x109] sm:$0xff]
      %v313 = vld [vmem:[%s219 + $0x111] sm:$0xff]
      %v314 = vld [vmem:[%s219 + $0x121] sm:$0xff]
      %v315 = vld [vmem:[%s219 + $0x129] sm:$0xff]
      %v316 = vld [vmem:[%s219 + $0x139] sm:$0xff]
      %v317 = vld [vmem:[%s219 + $0x141] sm:$0xff]
      %v318 = vld [vmem:[%s219 + $0x151] sm:$0xff]
      %v319 = vld [vmem:[%s219 + $0x159] sm:$0xff]
      %v320 = vld [vmem:[%s219 + $0x169] sm:$0xff]
      %v321 = vld [vmem:[%s219 + $0x171] sm:$0xff]
      %v322 = vpack.c.bf16 %v291, %v290
      %v323 = vpack.c.bf16 %v293, %v292
      %v324 = vpack.c.bf16 %v295, %v294
      %v325 = vpack.c.bf16 %v297, %v296
      %v326 = vpack.c.bf16 %v299, %v298
      %v327 = vpack.c.bf16 %v301, %v300
      %v328 = vpack.c.bf16 %v303, %v302
      %v329 = vpack.c.bf16 %v305, %v304
      %v330 = vpack.c.bf16 %v307, %v306
      %v331 = vpack.c.bf16 %v309, %v308
      %v332 = vpack.c.bf16 %v311, %v310
      %v333 = vpack.c.bf16 %v313, %v312
      %v334 = vpack.c.bf16 %v315, %v314
      %v335 = vpack.c.bf16 %v317, %v316
      %v336 = vpack.c.bf16 %v319, %v318
      %v337 = vpack.c.bf16 %v321, %v320
      %s338 = scalar_lea.vmem %s1, 64
      %v339 = vld [vmem:[%s338] sm:$0xf]
      %v340 = vld [vmem:[%s338 + $0x4] sm:$0xf]
      %v341 = vld [vmem:[%s338 + $0x8] sm:$0xf]
      %v342 = vld [vmem:[%s338 + $0xc] sm:$0xf]
      %v343 = vld [vmem:[%s338 + $0x10] sm:$0xf]
      %v344 = vld [vmem:[%s338 + $0x14] sm:$0xf]
      %v345 = vld [vmem:[%s338 + $0x18] sm:$0xf]
      %v346 = vld [vmem:[%s338 + $0x1c] sm:$0xf]
      %v347 = vld [vmem:[%s338 + $0x20] sm:$0xf]
      %v348 = vld [vmem:[%s338 + $0x24] sm:$0xf]
      %v349 = vld [vmem:[%s338 + $0x28] sm:$0xf]
      %v350 = vld [vmem:[%s338 + $0x2c] sm:$0xf]
      %v351 = vld [vmem:[%s338 + $0x30] sm:$0xf]
      %v352 = vld [vmem:[%s338 + $0x34] sm:$0xf]
      %v353 = vld [vmem:[%s338 + $0x38] sm:$0xf]
      %v354 = vld [vmem:[%s338 + $0x3c] sm:$0xf]
      %v371 = vunpack.c.l.b16 %v339
      %v372 = vunpack.c.l.b16 %v340
      %v373 = vunpack.c.l.b16 %v341
      %v374 = vunpack.c.l.b16 %v342
      %v375 = vunpack.c.l.b16 %v343
      %v376 = vunpack.c.l.b16 %v344
      %v377 = vunpack.c.l.b16 %v345
      %v378 = vunpack.c.l.b16 %v346
      %v379 = vunpack.c.l.b16 %v347
      %v380 = vunpack.c.l.b16 %v348
      %v381 = vunpack.c.l.b16 %v349
      %v382 = vunpack.c.l.b16 %v350
      %v383 = vunpack.c.l.b16 %v351
      %v384 = vunpack.c.l.b16 %v352
      %v385 = vunpack.c.l.b16 %v353
      %v386 = vunpack.c.l.b16 %v354
      %v387 = vpack.c.b16 %v372, %v371
      %v388 = vpack.c.b16 %v374, %v373
      %v389 = vpack.c.b16 %v376, %v375
      %v390 = vpack.c.b16 %v378, %v377
      %v391 = vpack.c.b16 %v380, %v379
      %v392 = vpack.c.b16 %v382, %v381
      %v393 = vpack.c.b16 %v384, %v383
      %v394 = vpack.c.b16 %v386, %v385
      %403 = vmatprep.subr.bf16.mxu0 0
      %404 = vmatpush1.bf16.msra.mxu0 %v387
      %405 = vmatprep.subr.bf16.mxu0 0
      %406 = vmatpush1.bf16.msra.mxu0 %v388
      %407 = vmatprep.subr.bf16.mxu0 0
      %408 = vmatpush1.bf16.msra.mxu0 %v389
      %409 = vmatprep.subr.bf16.mxu0 0
      %410 = vmatpush1.bf16.msra.mxu0 %v390
      %411 = vmatprep.subr.bf16.mxu0 0
      %412 = vmatpush1.bf16.msra.mxu0 %v391
      %413 = vmatprep.subr.bf16.mxu0 0
      %414 = vmatpush1.bf16.msra.mxu0 %v392
      %415 = vmatprep.subr.bf16.mxu0 0
      %416 = vmatpush1.bf16.msra.mxu0 %v393
      %417 = vmatprep.subr.bf16.mxu0 0
      %418 = vmatpush1.bf16.msra.mxu0 %v394
      %419 = vmatprep.subr.bf16.mxu0 0
      %420 = vmatpush1.bf16.msra.mxu0 0
      %421 = vmatprep.subr.bf16.mxu0 0
      %422 = vmatpush1.bf16.msra.mxu0 0
      %423 = vmatprep.subr.bf16.mxu0 0
      %424 = vmatpush1.bf16.msra.mxu0 0
      %425 = vmatprep.subr.bf16.mxu0 0
      %426 = vmatpush1.bf16.msra.mxu0 0
      %427 = vmatprep.subr.bf16.mxu0 0
      %428 = vmatpush1.bf16.msra.mxu0 0
      %429 = vmatprep.subr.bf16.mxu0 0
      %430 = vmatpush1.bf16.msra.mxu0 0
      %431 = vmatprep.subr.bf16.mxu0 0
      %432 = vmatpush1.bf16.msra.mxu0 0
      %433 = vmatprep.subr.bf16.mxu0 0
      %434 = vmatpush1.bf16.msra.mxu0 0
      %435 = vmatprep.mubr.bf16.mxu0 0
      %436 = vmatmul.mubr.bf16.gmra.mrb[0].mxu0 %v322
      %v437 = vpop.f32.mrb[0].mxu0
      %v438 = vadd.f32 0.0, %v437
      %v439 = vpop.f32.mrb[0].mxu0
      %v440 = vpop.f32.mrb[0].mxu0
      %v441 = vadd.f32 0.0, %v440
      %v442 = vpop.f32.mrb[0].mxu0
      %443 = vmatprep.mubr.bf16.mxu0 0
      %444 = vmatmul.mubr.bf16.gmra.mrb[0].mxu0 %v323
      %v445 = vpop.f32.mrb[0].mxu0
      %v446 = vadd.f32 0.0, %v445
      %v447 = vpop.f32.mrb[0].mxu0
      %v448 = vpop.f32.mrb[0].mxu0
      %v449 = vadd.f32 0.0, %v448
      %v450 = vpop.f32.mrb[0].mxu0
      %451 = vmatprep.mubr.bf16.mxu0 0
      %452 = vmatmul.mubr.bf16.gmra.mrb[0].mxu0 %v324
      %v453 = vpop.f32.mrb[0].mxu0
      %v454 = vadd.f32 0.0, %v453
      %v455 = vpop.f32.mrb[0].mxu0
      %v456 = vpop.f32.mrb[0].mxu0
      %v457 = vadd.f32 0.0, %v456
      %v458 = vpop.f32.mrb[0].mxu0
      %459 = vmatprep.mubr.bf16.mxu0 0
      %460 = vmatmul.mubr.bf16.gmra.mrb[0].mxu0 %v325
      %v461 = vpop.f32.mrb[0].mxu0
      %v462 = vadd.f32 0.0, %v461
      %v463 = vpop.f32.mrb[0].mxu0
      %v464 = vpop.f32.mrb[0].mxu0
      %v465 = vadd.f32 0.0, %v464
      %v466 = vpop.f32.mrb[0].mxu0
      %467 = vmatprep.mubr.bf16.mxu0 0
      %468 = vmatmul.mubr.bf16.gmra.mrb[0].mxu0 %v326
      %v469 = vpop.f32.mrb[0].mxu0
      %v470 = vadd.f32 0.0, %v469
      %v471 = vpop.f32.mrb[0].mxu0
      %v472 = vpop.f32.mrb[0].mxu0
      %v473 = vadd.f32 0.0, %v472
      %v474 = vpop.f32.mrb[0].mxu0
      %475 = vmatprep.mubr.bf16.mxu0 0
      %476 = vmatmul.mubr.bf16.gmra.mrb[0].mxu0 %v327
      %v477 = vpop.f32.mrb[0].mxu0
      %v478 = vadd.f32 0.0, %v477
      %v479 = vpop.f32.mrb[0].mxu0
      %v480 = vpop.f32.mrb[0].mxu0
      %v481 = vadd.f32 0.0, %v480
      %v482 = vpop.f32.mrb[0].mxu0
      %483 = vmatprep.mubr.bf16.mxu0 0
      %484 = vmatmul.mubr.bf16.gmra.mrb[0].mxu0 %v328
      %v485 = vpop.f32.mrb[0].mxu0
      %v486 = vadd.f32 0.0, %v485
      %v487 = vpop.f32.mrb[0].mxu0
      %v488 = vpop.f32.mrb[0].mxu0
      %v489 = vadd.f32 0.0, %v488
      %v490 = vpop.f32.mrb[0].mxu0
      %491 = vmatprep.mubr.bf16.mxu0 0
      %492 = vmatmul.mubr.bf16.gmra.mrb[0].mxu0 %v329
      %v493 = vpop.f32.mrb[0].mxu0
      %v494 = vadd.f32 0.0, %v493
      %v495 = vpop.f32.mrb[0].mxu0
      %v496 = vpop.f32.mrb[0].mxu0
      %v497 = vadd.f32 0.0, %v496
      %v498 = vpop.f32.mrb[0].mxu0
      %499 = vmatprep.mubr.bf16.mxu0 0
      %500 = vmatmul.mubr.bf16.gmra.mrb[0].mxu0 %v330
      %v501 = vpop.f32.mrb[0].mxu0
      %v502 = vadd.f32 0.0, %v501
      %v503 = vpop.f32.mrb[0].mxu0
      %v504 = vpop.f32.mrb[0].mxu0
      %v505 = vadd.f32 0.0, %v504
      %v506 = vpop.f32.mrb[0].mxu0
      %507 = vmatprep.mubr.bf16.mxu0 0
      %508 = vmatmul.mubr.bf16.gmra.mrb[0].mxu0 %v331
      %v509 = vpop.f32.mrb[0].mxu0
      %v510 = vadd.f32 0.0, %v509
      %v511 = vpop.f32.mrb[0].mxu0
      %v512 = vpop.f32.mrb[0].mxu0
      %v513 = vadd.f32 0.0, %v512
      %v514 = vpop.f32.mrb[0].mxu0
      %515 = vmatprep.mubr.bf16.mxu0 0
      %516 = vmatmul.mubr.bf16.gmra.mrb[0].mxu0 %v332
      %v517 = vpop.f32.mrb[0].mxu0
      %v518 = vadd.f32 0.0, %v517
      %v519 = vpop.f32.mrb[0].mxu0
      %v520 = vpop.f32.mrb[0].mxu0
      %v521 = vadd.f32 0.0, %v520
      %v522 = vpop.f32.mrb[0].mxu0
      %523 = vmatprep.mubr.bf16.mxu0 0
      %524 = vmatmul.mubr.bf16.gmra.mrb[0].mxu0 %v333
      %v525 = vpop.f32.mrb[0].mxu0
      %v526 = vadd.f32 0.0, %v525
      %v527 = vpop.f32.mrb[0].mxu0
      %v528 = vpop.f32.mrb[0].mxu0
      %v529 = vadd.f32 0.0, %v528
      %v530 = vpop.f32.mrb[0].mxu0
      %531 = vmatprep.mubr.bf16.mxu0 0
      %532 = vmatmul.mubr.bf16.gmra.mrb[0].mxu0 %v334
      %v533 = vpop.f32.mrb[0].mxu0
      %v534 = vadd.f32 0.0, %v533
      %v535 = vpop.f32.mrb[0].mxu0
      %v536 = vpop.f32.mrb[0].mxu0
      %v537 = vadd.f32 0.0, %v536
      %v538 = vpop.f32.mrb[0].mxu0
      %539 = vmatprep.mubr.bf16.mxu0 0
      %540 = vmatmul.mubr.bf16.gmra.mrb[0].mxu0 %v335
      %v541 = vpop.f32.mrb[0].mxu0
      %v542 = vadd.f32 0.0, %v541
      %v543 = vpop.f32.mrb[0].mxu0
      %v544 = vpop.f32.mrb[0].mxu0
      %v545 = vadd.f32 0.0, %v544
      %v546 = vpop.f32.mrb[0].mxu0
      %547 = vmatprep.mubr.bf16.mxu0 0
      %548 = vmatmul.mubr.bf16.gmra.mrb[0].mxu0 %v336
      %v549 = vpop.f32.mrb[0].mxu0
      %v550 = vadd.f32 0.0, %v549
      %v551 = vpop.f32.mrb[0].mxu0
      %v552 = vpop.f32.mrb[0].mxu0
      %v553 = vadd.f32 0.0, %v552
      %v554 = vpop.f32.mrb[0].mxu0
      %555 = vmatprep.mubr.bf16.mxu0 0
      %556 = vmatmul.mubr.bf16.gmra.mrb[0].mxu0 %v337
      %v557 = vpop.f32.mrb[0].mxu0
      %v558 = vadd.f32 0.0, %v557
      %v559 = vpop.f32.mrb[0].mxu0
      %v560 = vpop.f32.mrb[0].mxu0
      %v561 = vadd.f32 0.0, %v560
      %v562 = vpop.f32.mrb[0].mxu0
      %563 = vdwg.mxu0
      %v580 = vunpack.c.l.b16 %v274
      %v581 = vunpack.c.l.b16 %v275
      %v582 = vunpack.c.l.b16 %v276
      %v583 = vunpack.c.l.b16 %v277
      %v584 = vunpack.c.l.b16 %v278
      %v585 = vunpack.c.l.b16 %v279
      %v586 = vunpack.c.l.b16 %v280
      %v587 = vunpack.c.l.b16 %v281
      %v588 = vunpack.c.l.b16 %v282
      %v589 = vunpack.c.l.b16 %v283
      %v590 = vunpack.c.l.b16 %v284
      %v591 = vunpack.c.l.b16 %v285
      %v592 = vunpack.c.l.b16 %v286
      %v593 = vunpack.c.l.b16 %v287
      %v594 = vunpack.c.l.b16 %v288
      %v595 = vunpack.c.l.b16 %v289
      %v596 = vpack.c.b16 %v581, %v580
      %v597 = vpack.c.b16 %v583, %v582
      %v598 = vpack.c.b16 %v585, %v584
      %v599 = vpack.c.b16 %v587, %v586
      %v600 = vpack.c.b16 %v589, %v588
      %v601 = vpack.c.b16 %v591, %v590
      %v602 = vpack.c.b16 %v593, %v592
      %v603 = vpack.c.b16 %v595, %v594
      %612 = vmatprep.subr.bf16.mxu0 0
      %613 = vmatpush1.bf16.msra.mxu0 %v596
      %614 = vmatprep.subr.bf16.mxu0 0
      %615 = vmatpush1.bf16.msra.mxu0 %v597
      %616 = vmatprep.subr.bf16.mxu0 0
      %617 = vmatpush1.bf16.msra.mxu0 %v598
      %618 = vmatprep.subr.bf16.mxu0 0
      %619 = vmatpush1.bf16.msra.mxu0 %v599
      %620 = vmatprep.subr.bf16.mxu0 0
      %621 = vmatpush1.bf16.msra.mxu0 %v600
      %622 = vmatprep.subr.bf16.mxu0 0
      %623 = vmatpush1.bf16.msra.mxu0 %v601
      %624 = vmatprep.subr.bf16.mxu0 0
      %625 = vmatpush1.bf16.msra.mxu0 %v602
      %626 = vmatprep.subr.bf16.mxu0 0
      %627 = vmatpush1.bf16.msra.mxu0 %v603
      %628 = vmatprep.subr.bf16.mxu0 0
      %629 = vmatpush1.bf16.msra.mxu0 0
      %630 = vmatprep.subr.bf16.mxu0 0
      %631 = vmatpush1.bf16.msra.mxu0 0
      %632 = vmatprep.subr.bf16.mxu0 0
      %633 = vmatpush1.bf16.msra.mxu0 0
      %634 = vmatprep.subr.bf16.mxu0 0
      %635 = vmatpush1.bf16.msra.mxu0 0
      %636 = vmatprep.subr.bf16.mxu0 0
      %637 = vmatpush1.bf16.msra.mxu0 0
      %638 = vmatprep.subr.bf16.mxu0 0
      %639 = vmatpush1.bf16.msra.mxu0 0
      %640 = vmatprep.subr.bf16.mxu0 0
      %641 = vmatpush1.bf16.msra.mxu0 0
      %642 = vmatprep.subr.bf16.mxu0 0
      %643 = vmatpush1.bf16.msra.mxu0 0
      %644 = vmatprep.mubr.bf16.mxu0 0
      %645 = vmatmul.mubr.bf16.gmra.mrb[0].mxu0 %v258
      %v646 = vpop.f32.mrb[0].mxu0
      %v647 = vadd.f32 %v438, %v646
      %v648 = vpop.f32.mrb[0].mxu0
      %v649 = vpop.f32.mrb[0].mxu0
      %v650 = vadd.f32 %v441, %v649
      %v651 = vpop.f32.mrb[0].mxu0
      %652 = vmatprep.mubr.bf16.mxu0 0
      %653 = vmatmul.mubr.bf16.gmra.mrb[0].mxu0 %v259
      %v654 = vpop.f32.mrb[0].mxu0
      %v655 = vadd.f32 %v446, %v654
      %v656 = vpop.f32.mrb[0].mxu0
      %v657 = vpop.f32.mrb[0].mxu0
      %v658 = vadd.f32 %v449, %v657
      %v659 = vpop.f32.mrb[0].mxu0
      %660 = vmatprep.mubr.bf16.mxu0 0
      %661 = vmatmul.mubr.bf16.gmra.mrb[0].mxu0 %v260
      %v662 = vpop.f32.mrb[0].mxu0
      %v663 = vadd.f32 %v454, %v662
      %v664 = vpop.f32.mrb[0].mxu0
      %v665 = vpop.f32.mrb[0].mxu0
      %v666 = vadd.f32 %v457, %v665
      %v667 = vpop.f32.mrb[0].mxu0
      %668 = vmatprep.mubr.bf16.mxu0 0
      %669 = vmatmul.mubr.bf16.gmra.mrb[0].mxu0 %v261
      %v670 = vpop.f32.mrb[0].mxu0
      %v671 = vadd.f32 %v462, %v670
      %v672 = vpop.f32.mrb[0].mxu0
      %v673 = vpop.f32.mrb[0].mxu0
      %v674 = vadd.f32 %v465, %v673
      %v675 = vpop.f32.mrb[0].mxu0
      %676 = vmatprep.mubr.bf16.mxu0 0
      %677 = vmatmul.mubr.bf16.gmra.mrb[0].mxu0 %v262
      %v678 = vpop.f32.mrb[0].mxu0
      %v679 = vadd.f32 %v470, %v678
      %v680 = vpop.f32.mrb[0].mxu0
      %v681 = vpop.f32.mrb[0].mxu0
      %v682 = vadd.f32 %v473, %v681
      %v683 = vpop.f32.mrb[0].mxu0
      %684 = vmatprep.mubr.bf16.mxu0 0
      %685 = vmatmul.mubr.bf16.gmra.mrb[0].mxu0 %v263
      %v686 = vpop.f32.mrb[0].mxu0
      %v687 = vadd.f32 %v478, %v686
      %v688 = vpop.f32.mrb[0].mxu0
      %v689 = vpop.f32.mrb[0].mxu0
      %v690 = vadd.f32 %v481, %v689
      %v691 = vpop.f32.mrb[0].mxu0
      %692 = vmatprep.mubr.bf16.mxu0 0
      %693 = vmatmul.mubr.bf16.gmra.mrb[0].mxu0 %v264
      %v694 = vpop.f32.mrb[0].mxu0
      %v695 = vadd.f32 %v486, %v694
      %v696 = vpop.f32.mrb[0].mxu0
      %v697 = vpop.f32.mrb[0].mxu0
      %v698 = vadd.f32 %v489, %v697
      %v699 = vpop.f32.mrb[0].mxu0
      %700 = vmatprep.mubr.bf16.mxu0 0
      %701 = vmatmul.mubr.bf16.gmra.mrb[0].mxu0 %v265
      %v702 = vpop.f32.mrb[0].mxu0
      %v703 = vadd.f32 %v494, %v702
      %v704 = vpop.f32.mrb[0].mxu0
      %v705 = vpop.f32.mrb[0].mxu0
      %v706 = vadd.f32 %v497, %v705
      %v707 = vpop.f32.mrb[0].mxu0
      %708 = vmatprep.mubr.bf16.mxu0 0
      %709 = vmatmul.mubr.bf16.gmra.mrb[0].mxu0 %v266
      %v710 = vpop.f32.mrb[0].mxu0
      %v711 = vadd.f32 %v502, %v710
      %v712 = vpop.f32.mrb[0].mxu0
      %v713 = vpop.f32.mrb[0].mxu0
      %v714 = vadd.f32 %v505, %v713
      %v715 = vpop.f32.mrb[0].mxu0
      %716 = vmatprep.mubr.bf16.mxu0 0
      %717 = vmatmul.mubr.bf16.gmra.mrb[0].mxu0 %v267
      %v718 = vpop.f32.mrb[0].mxu0
      %v719 = vadd.f32 %v510, %v718
      %v720 = vpop.f32.mrb[0].mxu0
      %v721 = vpop.f32.mrb[0].mxu0
      %v722 = vadd.f32 %v513, %v721
      %v723 = vpop.f32.mrb[0].mxu0
      %724 = vmatprep.mubr.bf16.mxu0 0
      %725 = vmatmul.mubr.bf16.gmra.mrb[0].mxu0 %v268
      %v726 = vpop.f32.mrb[0].mxu0
      %v727 = vadd.f32 %v518, %v726
      %v728 = vpop.f32.mrb[0].mxu0
      %v729 = vpop.f32.mrb[0].mxu0
      %v730 = vadd.f32 %v521, %v729
      %v731 = vpop.f32.mrb[0].mxu0
      %732 = vmatprep.mubr.bf16.mxu0 0
      %733 = vmatmul.mubr.bf16.gmra.mrb[0].mxu0 %v269
      %v734 = vpop.f32.mrb[0].mxu0
      %v735 = vadd.f32 %v526, %v734
      %v736 = vpop.f32.mrb[0].mxu0
      %v737 = vpop.f32.mrb[0].mxu0
      %v738 = vadd.f32 %v529, %v737
      %v739 = vpop.f32.mrb[0].mxu0
      %740 = vmatprep.mubr.bf16.mxu0 0
      %741 = vmatmul.mubr.bf16.gmra.mrb[0].mxu0 %v270
      %v742 = vpop.f32.mrb[0].mxu0
      %v743 = vadd.f32 %v534, %v742
      %v744 = vpop.f32.mrb[0].mxu0
      %v745 = vpop.f32.mrb[0].mxu0
      %v746 = vadd.f32 %v537, %v745
      %v747 = vpop.f32.mrb[0].mxu0
      %748 = vmatprep.mubr.bf16.mxu0 0
      %749 = vmatmul.mubr.bf16.gmra.mrb[0].mxu0 %v271
      %v750 = vpop.f32.mrb[0].mxu0
      %v751 = vadd.f32 %v542, %v750
      %v752 = vpop.f32.mrb[0].mxu0
      %v753 = vpop.f32.mrb[0].mxu0
      %v754 = vadd.f32 %v545, %v753
      %v755 = vpop.f32.mrb[0].mxu0
      %756 = vmatprep.mubr.bf16.mxu0 0
      %757 = vmatmul.mubr.bf16.gmra.mrb[0].mxu0 %v272
      %v758 = vpop.f32.mrb[0].mxu0
      %v759 = vadd.f32 %v550, %v758
      %v760 = vpop.f32.mrb[0].mxu0
      %v761 = vpop.f32.mrb[0].mxu0
      %v762 = vadd.f32 %v553, %v761
      %v763 = vpop.f32.mrb[0].mxu0
      %764 = vmatprep.mubr.bf16.mxu0 0
      %765 = vmatmul.mubr.bf16.gmra.mrb[0].mxu0 %v273
      %v766 = vpop.f32.mrb[0].mxu0
      %v767 = vadd.f32 %v558, %v766
      %v768 = vpop.f32.mrb[0].mxu0
      %v769 = vpop.f32.mrb[0].mxu0
      %v770 = vadd.f32 %v561, %v769
      %v771 = vpop.f32.mrb[0].mxu0
      %772 = vdwg.mxu0
      %v773 = vld [vmem:[%s219 + $0x2] sm:$0xff]
      %v774 = vld [vmem:[%s219 + $0xa] sm:$0xff]
      %v775 = vld [vmem:[%s219 + $0x1a] sm:$0xff]
      %v776 = vld [vmem:[%s219 + $0x22] sm:$0xff]
      %v777 = vld [vmem:[%s219 + $0x32] sm:$0xff]
      %v778 = vld [vmem:[%s219 + $0x3a] sm:$0xff]
      %v779 = vld [vmem:[%s219 + $0x4a] sm:$0xff]
      %v780 = vld [vmem:[%s219 + $0x52] sm:$0xff]
      %v781 = vld [vmem:[%s219 + $0x62] sm:$0xff]
      %v782 = vld [vmem:[%s219 + $0x6a] sm:$0xff]
      %v783 = vld [vmem:[%s219 + $0x7a] sm:$0xff]
      %v784 = vld [vmem:[%s219 + $0x82] sm:$0xff]
      %v785 = vld [vmem:[%s219 + $0x92] sm:$0xff]
      %v786 = vld [vmem:[%s219 + $0x9a] sm:$0xff]
      %v787 = vld [vmem:[%s219 + $0xaa] sm:$0xff]
      %v788 = vld [vmem:[%s219 + $0xb2] sm:$0xff]
      %v789 = vld [vmem:[%s219 + $0xc2] sm:$0xff]
      %v790 = vld [vmem:[%s219 + $0xca] sm:$0xff]
      %v791 = vld [vmem:[%s219 + $0xda] sm:$0xff]
      %v792 = vld [vmem:[%s219 + $0xe2] sm:$0xff]
      %v793 = vld [vmem:[%s219 + $0xf2] sm:$0xff]
      %v794 = vld [vmem:[%s219 + $0xfa] sm:$0xff]
      %v795 = vld [vmem:[%s219 + $0x10a] sm:$0xff]
      %v796 = vld [vmem:[%s219 + $0x112] sm:$0xff]
      %v797 = vld [vmem:[%s219 + $0x122] sm:$0xff]
      %v798 = vld [vmem:[%s219 + $0x12a] sm:$0xff]
      %v799 = vld [vmem:[%s219 + $0x13a] sm:$0xff]
      %v800 = vld [vmem:[%s219 + $0x142] sm:$0xff]
      %v801 = vld [vmem:[%s219 + $0x152] sm:$0xff]
      %v802 = vld [vmem:[%s219 + $0x15a] sm:$0xff]
      %v803 = vld [vmem:[%s219 + $0x16a] sm:$0xff]
      %v804 = vld [vmem:[%s219 + $0x172] sm:$0xff]
      %v805 = vpack.c.bf16 %v774, %v773
      %v806 = vpack.c.bf16 %v776, %v775
      %v807 = vpack.c.bf16 %v778, %v777
      %v808 = vpack.c.bf16 %v780, %v779
      %v809 = vpack.c.bf16 %v782, %v781
      %v810 = vpack.c.bf16 %v784, %v783
      %v811 = vpack.c.bf16 %v786, %v785
      %v812 = vpack.c.bf16 %v788, %v787
      %v813 = vpack.c.bf16 %v790, %v789
      %v814 = vpack.c.bf16 %v792, %v791
      %v815 = vpack.c.bf16 %v794, %v793
      %v816 = vpack.c.bf16 %v796, %v795
      %v817 = vpack.c.bf16 %v798, %v797
      %v818 = vpack.c.bf16 %v800, %v799
      %v819 = vpack.c.bf16 %v802, %v801
      %v820 = vpack.c.bf16 %v804, %v803
      %s821 = scalar_lea.vmem %s1, 128
      %v822 = vld [vmem:[%s821] sm:$0xf]
      %v823 = vld [vmem:[%s821 + $0x4] sm:$0xf]
      %v824 = vld [vmem:[%s821 + $0x8] sm:$0xf]
      %v825 = vld [vmem:[%s821 + $0xc] sm:$0xf]
      %v826 = vld [vmem:[%s821 + $0x10] sm:$0xf]
      %v827 = vld [vmem:[%s821 + $0x14] sm:$0xf]
      %v828 = vld [vmem:[%s821 + $0x18] sm:$0xf]
      %v829 = vld [vmem:[%s821 + $0x1c] sm:$0xf]
      %v830 = vld [vmem:[%s821 + $0x20] sm:$0xf]
      %v831 = vld [vmem:[%s821 + $0x24] sm:$0xf]
      %v832 = vld [vmem:[%s821 + $0x28] sm:$0xf]
      %v833 = vld [vmem:[%s821 + $0x2c] sm:$0xf]
      %v834 = vld [vmem:[%s821 + $0x30] sm:$0xf]
      %v835 = vld [vmem:[%s821 + $0x34] sm:$0xf]
      %v836 = vld [vmem:[%s821 + $0x38] sm:$0xf]
      %v837 = vld [vmem:[%s821 + $0x3c] sm:$0xf]
      %v854 = vunpack.c.l.b16 %v822
      %v855 = vunpack.c.l.b16 %v823
      %v856 = vunpack.c.l.b16 %v824
      %v857 = vunpack.c.l.b16 %v825
      %v858 = vunpack.c.l.b16 %v826
      %v859 = vunpack.c.l.b16 %v827
      %v860 = vunpack.c.l.b16 %v828
      %v861 = vunpack.c.l.b16 %v829
      %v862 = vunpack.c.l.b16 %v830
      %v863 = vunpack.c.l.b16 %v831
      %v864 = vunpack.c.l.b16 %v832
      %v865 = vunpack.c.l.b16 %v833
      %v866 = vunpack.c.l.b16 %v834
      %v867 = vunpack.c.l.b16 %v835
      %v868 = vunpack.c.l.b16 %v836
      %v869 = vunpack.c.l.b16 %v837
      %v870 = vpack.c.b16 %v855, %v854
      %v871 = vpack.c.b16 %v857, %v856
      %v872 = vpack.c.b16 %v859, %v858
      %v873 = vpack.c.b16 %v861, %v860
      %v874 = vpack.c.b16 %v863, %v862
      %v875 = vpack.c.b16 %v865, %v864
      %v876 = vpack.c.b16 %v867, %v866
      %v877 = vpack.c.b16 %v869, %v868
      %886 = vmatprep.subr.bf16.mxu0 0
      %887 = vmatpush1.bf16.msra.mxu0 %v870
      %888 = vmatprep.subr.bf16.mxu0 0
      %889 = vmatpush1.bf16.msra.mxu0 %v871
      %890 = vmatprep.subr.bf16.mxu0 0
      %891 = vmatpush1.bf16.msra.mxu0 %v872
      %892 = vmatprep.subr.bf16.mxu0 0
      %893 = vmatpush1.bf16.msra.mxu0 %v873
      %894 = vmatprep.subr.bf16.mxu0 0
      %895 = vmatpush1.bf16.msra.mxu0 %v874
      %896 = vmatprep.subr.bf16.mxu0 0
      %897 = vmatpush1.bf16.msra.mxu0 %v875
      %898 = vmatprep.subr.bf16.mxu0 0
      %899 = vmatpush1.bf16.msra.mxu0 %v876
      %900 = vmatprep.subr.bf16.mxu0 0
      %901 = vmatpush1.bf16.msra.mxu0 %v877
      %902 = vmatprep.subr.bf16.mxu0 0
      %903 = vmatpush1.bf16.msra.mxu0 0
      %904 = vmatprep.subr.bf16.mxu0 0
      %905 = vmatpush1.bf16.msra.mxu0 0
      %906 = vmatprep.subr.bf16.mxu0 0
      %907 = vmatpush1.bf16.msra.mxu0 0
      %908 = vmatprep.subr.bf16.mxu0 0
      %909 = vmatpush1.bf16.msra.mxu0 0
      %910 = vmatprep.subr.bf16.mxu0 0
      %911 = vmatpush1.bf16.msra.mxu0 0
      %912 = vmatprep.subr.bf16.mxu0 0
      %913 = vmatpush1.bf16.msra.mxu0 0
      %914 = vmatprep.subr.bf16.mxu0 0
      %915 = vmatpush1.bf16.msra.mxu0 0
      %916 = vmatprep.subr.bf16.mxu0 0
      %917 = vmatpush1.bf16.msra.mxu0 0
      %918 = vmatprep.mubr.bf16.mxu0 0
      %919 = vmatmul.mubr.bf16.gmra.mrb[0].mxu0 %v805
      %v920 = vpop.f32.mrb[0].mxu0
      %v921 = vadd.f32 0.0, %v920
      %v922 = vpop.f32.mrb[0].mxu0
      %v923 = vpop.f32.mrb[0].mxu0
      %v924 = vadd.f32 0.0, %v923
      %v925 = vpop.f32.mrb[0].mxu0
      %926 = vmatprep.mubr.bf16.mxu0 0
      %927 = vmatmul.mubr.bf16.gmra.mrb[0].mxu0 %v806
      %v928 = vpop.f32.mrb[0].mxu0
      %v929 = vadd.f32 0.0, %v928
      %v930 = vpop.f32.mrb[0].mxu0
      %v931 = vpop.f32.mrb[0].mxu0
      %v932 = vadd.f32 0.0, %v931
      %v933 = vpop.f32.mrb[0].mxu0
      %934 = vmatprep.mubr.bf16.mxu0 0
      %935 = vmatmul.mubr.bf16.gmra.mrb[0].mxu0 %v807
      %v936 = vpop.f32.mrb[0].mxu0
      %v937 = vadd.f32 0.0, %v936
      %v938 = vpop.f32.mrb[0].mxu0
      %v939 = vpop.f32.mrb[0].mxu0
      %v940 = vadd.f32 0.0, %v939
      %v941 = vpop.f32.mrb[0].mxu0
      %942 = vmatprep.mubr.bf16.mxu0 0
      %943 = vmatmul.mubr.bf16.gmra.mrb[0].mxu0 %v808
      %v944 = vpop.f32.mrb[0].mxu0
      %v945 = vadd.f32 0.0, %v944
      %v946 = vpop.f32.mrb[0].mxu0
      %v947 = vpop.f32.mrb[0].mxu0
      %v948 = vadd.f32 0.0, %v947
      %v949 = vpop.f32.mrb[0].mxu0
      %950 = vmatprep.mubr.bf16.mxu0 0
      %951 = vmatmul.mubr.bf16.gmra.mrb[0].mxu0 %v809
      %v952 = vpop.f32.mrb[0].mxu0
      %v953 = vadd.f32 0.0, %v952
      %v954 = vpop.f32.mrb[0].mxu0
      %v955 = vpop.f32.mrb[0].mxu0
      %v956 = vadd.f32 0.0, %v955
      %v957 = vpop.f32.mrb[0].mxu0
      %958 = vmatprep.mubr.bf16.mxu0 0
      %959 = vmatmul.mubr.bf16.gmra.mrb[0].mxu0 %v810
      %v960 = vpop.f32.mrb[0].mxu0
      %v961 = vadd.f32 0.0, %v960
      %v962 = vpop.f32.mrb[0].mxu0
      %v963 = vpop.f32.mrb[0].mxu0
      %v964 = vadd.f32 0.0, %v963
      %v965 = vpop.f32.mrb[0].mxu0
      %966 = vmatprep.mubr.bf16.mxu0 0
      %967 = vmatmul.mubr.bf16.gmra.mrb[0].mxu0 %v811
      %v968 = vpop.f32.mrb[0].mxu0
      %v969 = vadd.f32 0.0, %v968
      %v970 = vpop.f32.mrb[0].mxu0
      %v971 = vpop.f32.mrb[0].mxu0
      %v972 = vadd.f32 0.0, %v971
      %v973 = vpop.f32.mrb[0].mxu0
      %974 = vmatprep.mubr.bf16.mxu0 0
      %975 = vmatmul.mubr.bf16.gmra.mrb[0].mxu0 %v812
      %v976 = vpop.f32.mrb[0].mxu0
      %v977 = vadd.f32 0.0, %v976
      %v978 = vpop.f32.mrb[0].mxu0
      %v979 = vpop.f32.mrb[0].mxu0
      %v980 = vadd.f32 0.0, %v979
      %v981 = vpop.f32.mrb[0].mxu0
      %982 = vmatprep.mubr.bf16.mxu0 0
      %983 = vmatmul.mubr.bf16.gmra.mrb[0].mxu0 %v813
      %v984 = vpop.f32.mrb[0].mxu0
      %v985 = vadd.f32 0.0, %v984
      %v986 = vpop.f32.mrb[0].mxu0
      %v987 = vpop.f32.mrb[0].mxu0
      %v988 = vadd.f32 0.0, %v987
      %v989 = vpop.f32.mrb[0].mxu0
      %990 = vmatprep.mubr.bf16.mxu0 0
      %991 = vmatmul.mubr.bf16.gmra.mrb[0].mxu0 %v814
      %v992 = vpop.f32.mrb[0].mxu0
      %v993 = vadd.f32 0.0, %v992
      %v994 = vpop.f32.mrb[0].mxu0
      %v995 = vpop.f32.mrb[0].mxu0
      %v996 = vadd.f32 0.0, %v995
      %v997 = vpop.f32.mrb[0].mxu0
      %998 = vmatprep.mubr.bf16.mxu0 0
      %999 = vmatmul.mubr.bf16.gmra.mrb[0].mxu0 %v815
      %v1000 = vpop.f32.mrb[0].mxu0
      %v1001 = vadd.f32 0.0, %v1000
      %v1002 = vpop.f32.mrb[0].mxu0
      %v1003 = vpop.f32.mrb[0].mxu0
      %v1004 = vadd.f32 0.0, %v1003
      %v1005 = vpop.f32.mrb[0].mxu0
      %1006 = vmatprep.mubr.bf16.mxu0 0
      %1007 = vmatmul.mubr.bf16.gmra.mrb[0].mxu0 %v816
      %v1008 = vpop.f32.mrb[0].mxu0
      %v1009 = vadd.f32 0.0, %v1008
      %v1010 = vpop.f32.mrb[0].mxu0
      %v1011 = vpop.f32.mrb[0].mxu0
      %v1012 = vadd.f32 0.0, %v1011
      %v1013 = vpop.f32.mrb[0].mxu0
      %1014 = vmatprep.mubr.bf16.mxu0 0
      %1015 = vmatmul.mubr.bf16.gmra.mrb[0].mxu0 %v817
      %v1016 = vpop.f32.mrb[0].mxu0
      %v1017 = vadd.f32 0.0, %v1016
      %v1018 = vpop.f32.mrb[0].mxu0
      %v1019 = vpop.f32.mrb[0].mxu0
      %v1020 = vadd.f32 0.0, %v1019
      %v1021 = vpop.f32.mrb[0].mxu0
      %1022 = vmatprep.mubr.bf16.mxu0 0
      %1023 = vmatmul.mubr.bf16.gmra.mrb[0].mxu0 %v818
      %v1024 = vpop.f32.mrb[0].mxu0
      %v1025 = vadd.f32 0.0, %v1024
      %v1026 = vpop.f32.mrb[0].mxu0
      %v1027 = vpop.f32.mrb[0].mxu0
      %v1028 = vadd.f32 0.0, %v1027
      %v1029 = vpop.f32.mrb[0].mxu0
      %1030 = vmatprep.mubr.bf16.mxu0 0
      %1031 = vmatmul.mubr.bf16.gmra.mrb[0].mxu0 %v819
      %v1032 = vpop.f32.mrb[0].mxu0
      %v1033 = vadd.f32 0.0, %v1032
      %v1034 = vpop.f32.mrb[0].mxu0
      %v1035 = vpop.f32.mrb[0].mxu0
      %v1036 = vadd.f32 0.0, %v1035
      %v1037 = vpop.f32.mrb[0].mxu0
      %1038 = vmatprep.mubr.bf16.mxu0 0
      %1039 = vmatmul.mubr.bf16.gmra.mrb[0].mxu0 %v820
      %v1040 = vpop.f32.mrb[0].mxu0
      %v1041 = vadd.f32 0.0, %v1040
      %v1042 = vpop.f32.mrb[0].mxu0
      %v1043 = vpop.f32.mrb[0].mxu0
      %v1044 = vadd.f32 0.0, %v1043
      %v1045 = vpop.f32.mrb[0].mxu0
      %1046 = vdwg.mxu0
      %v1047 = vadd.f32 %v647, %v921
      %v1048 = vadd.f32 %v650, %v924
      %v1049 = vadd.f32 %v655, %v929
      %v1050 = vadd.f32 %v658, %v932
      %v1051 = vadd.f32 %v663, %v937
      %v1052 = vadd.f32 %v666, %v940
      %v1053 = vadd.f32 %v671, %v945
      %v1054 = vadd.f32 %v674, %v948
      %v1055 = vadd.f32 %v679, %v953
      %v1056 = vadd.f32 %v682, %v956
      %v1057 = vadd.f32 %v687, %v961
      %v1058 = vadd.f32 %v690, %v964
      %v1059 = vadd.f32 %v695, %v969
      %v1060 = vadd.f32 %v698, %v972
      %v1061 = vadd.f32 %v703, %v977
      %v1062 = vadd.f32 %v706, %v980
      %v1063 = vadd.f32 %v711, %v985
      %v1064 = vadd.f32 %v714, %v988
      %v1065 = vadd.f32 %v719, %v993
      %v1066 = vadd.f32 %v722, %v996
      %v1067 = vadd.f32 %v727, %v1001
      %v1068 = vadd.f32 %v730, %v1004
      %v1069 = vadd.f32 %v735, %v1009
      %v1070 = vadd.f32 %v738, %v1012
      %v1071 = vadd.f32 %v743, %v1017
      %v1072 = vadd.f32 %v746, %v1020
      %v1073 = vadd.f32 %v751, %v1025
      %v1074 = vadd.f32 %v754, %v1028
      %v1075 = vadd.f32 %v759, %v1033
      %v1076 = vadd.f32 %v762, %v1036
      %v1077 = vadd.f32 %v767, %v1041
      %v1078 = vadd.f32 %v770, %v1044
      %s1079 = scalar_lea.vmem %s219, 24
      %v1080 = vld [vmem:[%s1079] sm:$0xff]
      %v1081 = vld [vmem:[%s1079 + $0x8] sm:$0xff]
      %v1082 = vld [vmem:[%s1079 + $0x18] sm:$0xff]
      %v1083 = vld [vmem:[%s1079 + $0x20] sm:$0xff]
      %v1084 = vld [vmem:[%s1079 + $0x30] sm:$0xff]
      %v1085 = vld [vmem:[%s1079 + $0x38] sm:$0xff]
      %v1086 = vld [vmem:[%s1079 + $0x48] sm:$0xff]
      %v1087 = vld [vmem:[%s1079 + $0x50] sm:$0xff]
      %v1088 = vld [vmem:[%s1079 + $0x60] sm:$0xff]
      %v1089 = vld [vmem:[%s1079 + $0x68] sm:$0xff]
      %v1090 = vld [vmem:[%s1079 + $0x78] sm:$0xff]
      %v1091 = vld [vmem:[%s1079 + $0x80] sm:$0xff]
      %v1092 = vld [vmem:[%s1079 + $0x90] sm:$0xff]
      %v1093 = vld [vmem:[%s1079 + $0x98] sm:$0xff]
      %v1094 = vld [vmem:[%s1079 + $0xa8] sm:$0xff]
      %v1095 = vld [vmem:[%s1079 + $0xb0] sm:$0xff]
      %v1096 = vld [vmem:[%s1079 + $0xc0] sm:$0xff]
      %v1097 = vld [vmem:[%s1079 + $0xc8] sm:$0xff]
      %v1098 = vld [vmem:[%s1079 + $0xd8] sm:$0xff]
      %v1099 = vld [vmem:[%s1079 + $0xe0] sm:$0xff]
      %v1100 = vld [vmem:[%s1079 + $0xf0] sm:$0xff]
      %v1101 = vld [vmem:[%s1079 + $0xf8] sm:$0xff]
      %v1102 = vld [vmem:[%s1079 + $0x108] sm:$0xff]
      %v1103 = vld [vmem:[%s1079 + $0x110] sm:$0xff]
      %v1104 = vld [vmem:[%s1079 + $0x120] sm:$0xff]
      %v1105 = vld [vmem:[%s1079 + $0x128] sm:$0xff]
      %v1106 = vld [vmem:[%s1079 + $0x138] sm:$0xff]
      %v1107 = vld [vmem:[%s1079 + $0x140] sm:$0xff]
      %v1108 = vld [vmem:[%s1079 + $0x150] sm:$0xff]
      %v1109 = vld [vmem:[%s1079 + $0x158] sm:$0xff]
      %v1110 = vld [vmem:[%s1079 + $0x168] sm:$0xff]
      %v1111 = vld [vmem:[%s1079 + $0x170] sm:$0xff]
      %v1112 = vpack.c.bf16 %v1081, %v1080
      %v1113 = vpack.c.bf16 %v1083, %v1082
      %v1114 = vpack.c.bf16 %v1085, %v1084
      %v1115 = vpack.c.bf16 %v1087, %v1086
      %v1116 = vpack.c.bf16 %v1089, %v1088
      %v1117 = vpack.c.bf16 %v1091, %v1090
      %v1118 = vpack.c.bf16 %v1093, %v1092
      %v1119 = vpack.c.bf16 %v1095, %v1094
      %v1120 = vpack.c.bf16 %v1097, %v1096
      %v1121 = vpack.c.bf16 %v1099, %v1098
      %v1122 = vpack.c.bf16 %v1101, %v1100
      %v1123 = vpack.c.bf16 %v1103, %v1102
      %v1124 = vpack.c.bf16 %v1105, %v1104
      %v1125 = vpack.c.bf16 %v1107, %v1106
      %v1126 = vpack.c.bf16 %v1109, %v1108
      %v1127 = vpack.c.bf16 %v1111, %v1110
      %s1128 = scalar_lea.vmem %s1, 192
      %v1129 = vld [vmem:[%s1128] sm:$0xf]
      %v1130 = vld [vmem:[%s1128 + $0x4] sm:$0xf]
      %v1131 = vld [vmem:[%s1128 + $0x8] sm:$0xf]
      %v1132 = vld [vmem:[%s1128 + $0xc] sm:$0xf]
      %v1133 = vld [vmem:[%s1128 + $0x10] sm:$0xf]
      %v1134 = vld [vmem:[%s1128 + $0x14] sm:$0xf]
      %v1135 = vld [vmem:[%s1128 + $0x18] sm:$0xf]
      %v1136 = vld [vmem:[%s1128 + $0x1c] sm:$0xf]
      %v1137 = vld [vmem:[%s1128 + $0x20] sm:$0xf]
      %v1138 = vld [vmem:[%s1128 + $0x24] sm:$0xf]
      %v1139 = vld [vmem:[%s1128 + $0x28] sm:$0xf]
      %v1140 = vld [vmem:[%s1128 + $0x2c] sm:$0xf]
      %v1141 = vld [vmem:[%s1128 + $0x30] sm:$0xf]
      %v1142 = vld [vmem:[%s1128 + $0x34] sm:$0xf]
      %v1143 = vld [vmem:[%s1128 + $0x38] sm:$0xf]
      %v1144 = vld [vmem:[%s1128 + $0x3c] sm:$0xf]
      %v1161 = vunpack.c.l.b16 %v1129
      %v1162 = vunpack.c.l.b16 %v1130
      %v1163 = vunpack.c.l.b16 %v1131
      %v1164 = vunpack.c.l.b16 %v1132
      %v1165 = vunpack.c.l.b16 %v1133
      %v1166 = vunpack.c.l.b16 %v1134
      %v1167 = vunpack.c.l.b16 %v1135
      %v1168 = vunpack.c.l.b16 %v1136
      %v1169 = vunpack.c.l.b16 %v1137
      %v1170 = vunpack.c.l.b16 %v1138
      %v1171 = vunpack.c.l.b16 %v1139
      %v1172 = vunpack.c.l.b16 %v1140
      %v1173 = vunpack.c.l.b16 %v1141
      %v1174 = vunpack.c.l.b16 %v1142
      %v1175 = vunpack.c.l.b16 %v1143
      %v1176 = vunpack.c.l.b16 %v1144
      %v1177 = vpack.c.b16 %v1162, %v1161
      %v1178 = vpack.c.b16 %v1164, %v1163
      %v1179 = vpack.c.b16 %v1166, %v1165
      %v1180 = vpack.c.b16 %v1168, %v1167
      %v1181 = vpack.c.b16 %v1170, %v1169
      %v1182 = vpack.c.b16 %v1172, %v1171
      %v1183 = vpack.c.b16 %v1174, %v1173
      %v1184 = vpack.c.b16 %v1176, %v1175
      %1193 = vmatprep.subr.bf16.mxu0 0
      %1194 = vmatpush1.bf16.msra.mxu0 %v1177
      %1195 = vmatprep.subr.bf16.mxu0 0
      %1196 = vmatpush1.bf16.msra.mxu0 %v1178
      %1197 = vmatprep.subr.bf16.mxu0 0
      %1198 = vmatpush1.bf16.msra.mxu0 %v1179
      %1199 = vmatprep.subr.bf16.mxu0 0
      %1200 = vmatpush1.bf16.msra.mxu0 %v1180
      %1201 = vmatprep.subr.bf16.mxu0 0
      %1202 = vmatpush1.bf16.msra.mxu0 %v1181
      %1203 = vmatprep.subr.bf16.mxu0 0
      %1204 = vmatpush1.bf16.msra.mxu0 %v1182
      %1205 = vmatprep.subr.bf16.mxu0 0
      %1206 = vmatpush1.bf16.msra.mxu0 %v1183
      %1207 = vmatprep.subr.bf16.mxu0 0
      %1208 = vmatpush1.bf16.msra.mxu0 %v1184
      %1209 = vmatprep.subr.bf16.mxu0 0
      %1210 = vmatpush1.bf16.msra.mxu0 0
      %1211 = vmatprep.subr.bf16.mxu0 0
      %1212 = vmatpush1.bf16.msra.mxu0 0
      %1213 = vmatprep.subr.bf16.mxu0 0
      %1214 = vmatpush1.bf16.msra.mxu0 0
      %1215 = vmatprep.subr.bf16.mxu0 0
      %1216 = vmatpush1.bf16.msra.mxu0 0
      %1217 = vmatprep.subr.bf16.mxu0 0
      %1218 = vmatpush1.bf16.msra.mxu0 0
      %1219 = vmatprep.subr.bf16.mxu0 0
      %1220 = vmatpush1.bf16.msra.mxu0 0
      %1221 = vmatprep.subr.bf16.mxu0 0
      %1222 = vmatpush1.bf16.msra.mxu0 0
      %1223 = vmatprep.subr.bf16.mxu0 0
      %1224 = vmatpush1.bf16.msra.mxu0 0
      %1225 = vmatprep.mubr.bf16.mxu0 0
      %1226 = vmatmul.mubr.bf16.gmra.mrb[0].mxu0 %v1112
      %v1227 = vpop.f32.mrb[0].mxu0
      %v1228 = vadd.f32 0.0, %v1227
      %v1229 = vpop.f32.mrb[0].mxu0
      %v1230 = vpop.f32.mrb[0].mxu0
      %v1231 = vadd.f32 0.0, %v1230
      %v1232 = vpop.f32.mrb[0].mxu0
      %1233 = vmatprep.mubr.bf16.mxu0 0
      %1234 = vmatmul.mubr.bf16.gmra.mrb[0].mxu0 %v1113
      %v1235 = vpop.f32.mrb[0].mxu0
      %v1236 = vadd.f32 0.0, %v1235
      %v1237 = vpop.f32.mrb[0].mxu0
      %v1238 = vpop.f32.mrb[0].mxu0
      %v1239 = vadd.f32 0.0, %v1238
      %v1240 = vpop.f32.mrb[0].mxu0
      %1241 = vmatprep.mubr.bf16.mxu0 0
      %1242 = vmatmul.mubr.bf16.gmra.mrb[0].mxu0 %v1114
      %v1243 = vpop.f32.mrb[0].mxu0
      %v1244 = vadd.f32 0.0, %v1243
      %v1245 = vpop.f32.mrb[0].mxu0
      %v1246 = vpop.f32.mrb[0].mxu0
      %v1247 = vadd.f32 0.0, %v1246
      %v1248 = vpop.f32.mrb[0].mxu0
      %1249 = vmatprep.mubr.bf16.mxu0 0
      %1250 = vmatmul.mubr.bf16.gmra.mrb[0].mxu0 %v1115
      %v1251 = vpop.f32.mrb[0].mxu0
      %v1252 = vadd.f32 0.0, %v1251
      %v1253 = vpop.f32.mrb[0].mxu0
      %v1254 = vpop.f32.mrb[0].mxu0
      %v1255 = vadd.f32 0.0, %v1254
      %v1256 = vpop.f32.mrb[0].mxu0
      %1257 = vmatprep.mubr.bf16.mxu0 0
      %1258 = vmatmul.mubr.bf16.gmra.mrb[0].mxu0 %v1116
      %v1259 = vpop.f32.mrb[0].mxu0
      %v1260 = vadd.f32 0.0, %v1259
      %v1261 = vpop.f32.mrb[0].mxu0
      %v1262 = vpop.f32.mrb[0].mxu0
      %v1263 = vadd.f32 0.0, %v1262
      %v1264 = vpop.f32.mrb[0].mxu0
      %1265 = vmatprep.mubr.bf16.mxu0 0
      %1266 = vmatmul.mubr.bf16.gmra.mrb[0].mxu0 %v1117
      %v1267 = vpop.f32.mrb[0].mxu0
      %v1268 = vadd.f32 0.0, %v1267
      %v1269 = vpop.f32.mrb[0].mxu0
      %v1270 = vpop.f32.mrb[0].mxu0
      %v1271 = vadd.f32 0.0, %v1270
      %v1272 = vpop.f32.mrb[0].mxu0
      %1273 = vmatprep.mubr.bf16.mxu0 0
      %1274 = vmatmul.mubr.bf16.gmra.mrb[0].mxu0 %v1118
      %v1275 = vpop.f32.mrb[0].mxu0
      %v1276 = vadd.f32 0.0, %v1275
      %v1277 = vpop.f32.mrb[0].mxu0
      %v1278 = vpop.f32.mrb[0].mxu0
      %v1279 = vadd.f32 0.0, %v1278
      %v1280 = vpop.f32.mrb[0].mxu0
      %1281 = vmatprep.mubr.bf16.mxu0 0
      %1282 = vmatmul.mubr.bf16.gmra.mrb[0].mxu0 %v1119
      %v1283 = vpop.f32.mrb[0].mxu0
      %v1284 = vadd.f32 0.0, %v1283
      %v1285 = vpop.f32.mrb[0].mxu0
      %v1286 = vpop.f32.mrb[0].mxu0
      %v1287 = vadd.f32 0.0, %v1286
      %v1288 = vpop.f32.mrb[0].mxu0
      %1289 = vmatprep.mubr.bf16.mxu0 0
      %1290 = vmatmul.mubr.bf16.gmra.mrb[0].mxu0 %v1120
      %v1291 = vpop.f32.mrb[0].mxu0
      %v1292 = vadd.f32 0.0, %v1291
      %v1293 = vpop.f32.mrb[0].mxu0
      %v1294 = vpop.f32.mrb[0].mxu0
      %v1295 = vadd.f32 0.0, %v1294
      %v1296 = vpop.f32.mrb[0].mxu0
      %1297 = vmatprep.mubr.bf16.mxu0 0
      %1298 = vmatmul.mubr.bf16.gmra.mrb[0].mxu0 %v1121
      %v1299 = vpop.f32.mrb[0].mxu0
      %v1300 = vadd.f32 0.0, %v1299
      %v1301 = vpop.f32.mrb[0].mxu0
      %v1302 = vpop.f32.mrb[0].mxu0
      %v1303 = vadd.f32 0.0, %v1302
      %v1304 = vpop.f32.mrb[0].mxu0
      %1305 = vmatprep.mubr.bf16.mxu0 0
      %1306 = vmatmul.mubr.bf16.gmra.mrb[0].mxu0 %v1122
      %v1307 = vpop.f32.mrb[0].mxu0
      %v1308 = vadd.f32 0.0, %v1307
      %v1309 = vpop.f32.mrb[0].mxu0
      %v1310 = vpop.f32.mrb[0].mxu0
      %v1311 = vadd.f32 0.0, %v1310
      %v1312 = vpop.f32.mrb[0].mxu0
      %1313 = vmatprep.mubr.bf16.mxu0 0
      %1314 = vmatmul.mubr.bf16.gmra.mrb[0].mxu0 %v1123
      %v1315 = vpop.f32.mrb[0].mxu0
      %v1316 = vadd.f32 0.0, %v1315
      %v1317 = vpop.f32.mrb[0].mxu0
      %v1318 = vpop.f32.mrb[0].mxu0
      %v1319 = vadd.f32 0.0, %v1318
      %v1320 = vpop.f32.mrb[0].mxu0
      %1321 = vmatprep.mubr.bf16.mxu0 0
      %1322 = vmatmul.mubr.bf16.gmra.mrb[0].mxu0 %v1124
      %v1323 = vpop.f32.mrb[0].mxu0
      %v1324 = vadd.f32 0.0, %v1323
      %v1325 = vpop.f32.mrb[0].mxu0
      %v1326 = vpop.f32.mrb[0].mxu0
      %v1327 = vadd.f32 0.0, %v1326
      %v1328 = vpop.f32.mrb[0].mxu0
      %1329 = vmatprep.mubr.bf16.mxu0 0
      %1330 = vmatmul.mubr.bf16.gmra.mrb[0].mxu0 %v1125
      %v1331 = vpop.f32.mrb[0].mxu0
      %v1332 = vadd.f32 0.0, %v1331
      %v1333 = vpop.f32.mrb[0].mxu0
      %v1334 = vpop.f32.mrb[0].mxu0
      %v1335 = vadd.f32 0.0, %v1334
      %v1336 = vpop.f32.mrb[0].mxu0
      %1337 = vmatprep.mubr.bf16.mxu0 0
      %1338 = vmatmul.mubr.bf16.gmra.mrb[0].mxu0 %v1126
      %v1339 = vpop.f32.mrb[0].mxu0
      %v1340 = vadd.f32 0.0, %v1339
      %v1341 = vpop.f32.mrb[0].mxu0
      %v1342 = vpop.f32.mrb[0].mxu0
      %v1343 = vadd.f32 0.0, %v1342
      %v1344 = vpop.f32.mrb[0].mxu0
      %1345 = vmatprep.mubr.bf16.mxu0 0
      %1346 = vmatmul.mubr.bf16.gmra.mrb[0].mxu0 %v1127
      %v1347 = vpop.f32.mrb[0].mxu0
      %v1348 = vadd.f32 0.0, %v1347
      %v1349 = vpop.f32.mrb[0].mxu0
      %v1350 = vpop.f32.mrb[0].mxu0
      %v1351 = vadd.f32 0.0, %v1350
      %v1352 = vpop.f32.mrb[0].mxu0
      %1353 = vdwg.mxu0
      %v1354 = vadd.f32 %v1047, %v1228
      %v1355 = vadd.f32 %v1048, %v1231
      %v1356 = vadd.f32 %v1049, %v1236
      %v1357 = vadd.f32 %v1050, %v1239
      %v1358 = vadd.f32 %v1051, %v1244
      %v1359 = vadd.f32 %v1052, %v1247
      %v1360 = vadd.f32 %v1053, %v1252
      %v1361 = vadd.f32 %v1054, %v1255
      %v1362 = vadd.f32 %v1055, %v1260
      %v1363 = vadd.f32 %v1056, %v1263
      %v1364 = vadd.f32 %v1057, %v1268
      %v1365 = vadd.f32 %v1058, %v1271
      %v1366 = vadd.f32 %v1059, %v1276
      %v1367 = vadd.f32 %v1060, %v1279
      %v1368 = vadd.f32 %v1061, %v1284
      %v1369 = vadd.f32 %v1062, %v1287
      %v1370 = vadd.f32 %v1063, %v1292
      %v1371 = vadd.f32 %v1064, %v1295
      %v1372 = vadd.f32 %v1065, %v1300
      %v1373 = vadd.f32 %v1066, %v1303
      %v1374 = vadd.f32 %v1067, %v1308
      %v1375 = vadd.f32 %v1068, %v1311
      %v1376 = vadd.f32 %v1069, %v1316
      %v1377 = vadd.f32 %v1070, %v1319
      %v1378 = vadd.f32 %v1071, %v1324
      %v1379 = vadd.f32 %v1072, %v1327
      %v1380 = vadd.f32 %v1073, %v1332
      %v1381 = vadd.f32 %v1074, %v1335
      %v1382 = vadd.f32 %v1075, %v1340
      %v1383 = vadd.f32 %v1076, %v1343
      %v1384 = vadd.f32 %v1077, %v1348
      %v1385 = vadd.f32 %v1078, %v1351
      %v1386 = vld [vmem:[%s1079 + $0x1] sm:$0xff]
      %v1387 = vld [vmem:[%s1079 + $0x9] sm:$0xff]
      %v1388 = vld [vmem:[%s1079 + $0x19] sm:$0xff]
      %v1389 = vld [vmem:[%s1079 + $0x21] sm:$0xff]
      %v1390 = vld [vmem:[%s1079 + $0x31] sm:$0xff]
      %v1391 = vld [vmem:[%s1079 + $0x39] sm:$0xff]
      %v1392 = vld [vmem:[%s1079 + $0x49] sm:$0xff]
      %v1393 = vld [vmem:[%s1079 + $0x51] sm:$0xff]
      %v1394 = vld [vmem:[%s1079 + $0x61] sm:$0xff]
      %v1395 = vld [vmem:[%s1079 + $0x69] sm:$0xff]
      %v1396 = vld [vmem:[%s1079 + $0x79] sm:$0xff]
      %v1397 = vld [vmem:[%s1079 + $0x81] sm:$0xff]
      %v1398 = vld [vmem:[%s1079 + $0x91] sm:$0xff]
      %v1399 = vld [vmem:[%s1079 + $0x99] sm:$0xff]
      %v1400 = vld [vmem:[%s1079 + $0xa9] sm:$0xff]
      %v1401 = vld [vmem:[%s1079 + $0xb1] sm:$0xff]
      %v1402 = vld [vmem:[%s1079 + $0xc1] sm:$0xff]
      %v1403 = vld [vmem:[%s1079 + $0xc9] sm:$0xff]
      %v1404 = vld [vmem:[%s1079 + $0xd9] sm:$0xff]
      %v1405 = vld [vmem:[%s1079 + $0xe1] sm:$0xff]
      %v1406 = vld [vmem:[%s1079 + $0xf1] sm:$0xff]
      %v1407 = vld [vmem:[%s1079 + $0xf9] sm:$0xff]
      %v1408 = vld [vmem:[%s1079 + $0x109] sm:$0xff]
      %v1409 = vld [vmem:[%s1079 + $0x111] sm:$0xff]
      %v1410 = vld [vmem:[%s1079 + $0x121] sm:$0xff]
      %v1411 = vld [vmem:[%s1079 + $0x129] sm:$0xff]
      %v1412 = vld [vmem:[%s1079 + $0x139] sm:$0xff]
      %v1413 = vld [vmem:[%s1079 + $0x141] sm:$0xff]
      %v1414 = vld [vmem:[%s1079 + $0x151] sm:$0xff]
      %v1415 = vld [vmem:[%s1079 + $0x159] sm:$0xff]
      %v1416 = vld [vmem:[%s1079 + $0x169] sm:$0xff]
      %v1417 = vld [vmem:[%s1079 + $0x171] sm:$0xff]
      %v1418 = vpack.c.bf16 %v1387, %v1386
      %v1419 = vpack.c.bf16 %v1389, %v1388
      %v1420 = vpack.c.bf16 %v1391, %v1390
      %v1421 = vpack.c.bf16 %v1393, %v1392
      %v1422 = vpack.c.bf16 %v1395, %v1394
      %v1423 = vpack.c.bf16 %v1397, %v1396
      %v1424 = vpack.c.bf16 %v1399, %v1398
      %v1425 = vpack.c.bf16 %v1401, %v1400
      %v1426 = vpack.c.bf16 %v1403, %v1402
      %v1427 = vpack.c.bf16 %v1405, %v1404
      %v1428 = vpack.c.bf16 %v1407, %v1406
      %v1429 = vpack.c.bf16 %v1409, %v1408
      %v1430 = vpack.c.bf16 %v1411, %v1410
      %v1431 = vpack.c.bf16 %v1413, %v1412
      %v1432 = vpack.c.bf16 %v1415, %v1414
      %v1433 = vpack.c.bf16 %v1417, %v1416
      %s1434 = scalar_lea.vmem %s1, 256
      %v1435 = vld [vmem:[%s1434] sm:$0xf]
      %v1436 = vld [vmem:[%s1434 + $0x4] sm:$0xf]
      %v1437 = vld [vmem:[%s1434 + $0x8] sm:$0xf]
      %v1438 = vld [vmem:[%s1434 + $0xc] sm:$0xf]
      %v1439 = vld [vmem:[%s1434 + $0x10] sm:$0xf]
      %v1440 = vld [vmem:[%s1434 + $0x14] sm:$0xf]
      %v1441 = vld [vmem:[%s1434 + $0x18] sm:$0xf]
      %v1442 = vld [vmem:[%s1434 + $0x1c] sm:$0xf]
      %v1443 = vld [vmem:[%s1434 + $0x20] sm:$0xf]
      %v1444 = vld [vmem:[%s1434 + $0x24] sm:$0xf]
      %v1445 = vld [vmem:[%s1434 + $0x28] sm:$0xf]
      %v1446 = vld [vmem:[%s1434 + $0x2c] sm:$0xf]
      %v1447 = vld [vmem:[%s1434 + $0x30] sm:$0xf]
      %v1448 = vld [vmem:[%s1434 + $0x34] sm:$0xf]
      %v1449 = vld [vmem:[%s1434 + $0x38] sm:$0xf]
      %v1450 = vld [vmem:[%s1434 + $0x3c] sm:$0xf]
      %v1467 = vunpack.c.l.b16 %v1435
      %v1468 = vunpack.c.l.b16 %v1436
      %v1469 = vunpack.c.l.b16 %v1437
      %v1470 = vunpack.c.l.b16 %v1438
      %v1471 = vunpack.c.l.b16 %v1439
      %v1472 = vunpack.c.l.b16 %v1440
      %v1473 = vunpack.c.l.b16 %v1441
      %v1474 = vunpack.c.l.b16 %v1442
      %v1475 = vunpack.c.l.b16 %v1443
      %v1476 = vunpack.c.l.b16 %v1444
      %v1477 = vunpack.c.l.b16 %v1445
      %v1478 = vunpack.c.l.b16 %v1446
      %v1479 = vunpack.c.l.b16 %v1447
      %v1480 = vunpack.c.l.b16 %v1448
      %v1481 = vunpack.c.l.b16 %v1449
      %v1482 = vunpack.c.l.b16 %v1450
      %v1483 = vpack.c.b16 %v1468, %v1467
      %v1484 = vpack.c.b16 %v1470, %v1469
      %v1485 = vpack.c.b16 %v1472, %v1471
      %v1486 = vpack.c.b16 %v1474, %v1473
      %v1487 = vpack.c.b16 %v1476, %v1475
      %v1488 = vpack.c.b16 %v1478, %v1477
      %v1489 = vpack.c.b16 %v1480, %v1479
      %v1490 = vpack.c.b16 %v1482, %v1481
      %1499 = vmatprep.subr.bf16.mxu0 0
      %1500 = vmatpush1.bf16.msra.mxu0 %v1483
      %1501 = vmatprep.subr.bf16.mxu0 0
      %1502 = vmatpush1.bf16.msra.mxu0 %v1484
      %1503 = vmatprep.subr.bf16.mxu0 0
      %1504 = vmatpush1.bf16.msra.mxu0 %v1485
      %1505 = vmatprep.subr.bf16.mxu0 0
      %1506 = vmatpush1.bf16.msra.mxu0 %v1486
      %1507 = vmatprep.subr.bf16.mxu0 0
      %1508 = vmatpush1.bf16.msra.mxu0 %v1487
      %1509 = vmatprep.subr.bf16.mxu0 0
      %1510 = vmatpush1.bf16.msra.mxu0 %v1488
      %1511 = vmatprep.subr.bf16.mxu0 0
      %1512 = vmatpush1.bf16.msra.mxu0 %v1489
      %1513 = vmatprep.subr.bf16.mxu0 0
      %1514 = vmatpush1.bf16.msra.mxu0 %v1490
      %1515 = vmatprep.subr.bf16.mxu0 0
      %1516 = vmatpush1.bf16.msra.mxu0 0
      %1517 = vmatprep.subr.bf16.mxu0 0
      %1518 = vmatpush1.bf16.msra.mxu0 0
      %1519 = vmatprep.subr.bf16.mxu0 0
      %1520 = vmatpush1.bf16.msra.mxu0 0
      %1521 = vmatprep.subr.bf16.mxu0 0
      %1522 = vmatpush1.bf16.msra.mxu0 0
      %1523 = vmatprep.subr.bf16.mxu0 0
      %1524 = vmatpush1.bf16.msra.mxu0 0
      %1525 = vmatprep.subr.bf16.mxu0 0
      %1526 = vmatpush1.bf16.msra.mxu0 0
      %1527 = vmatprep.subr.bf16.mxu0 0
      %1528 = vmatpush1.bf16.msra.mxu0 0
      %1529 = vmatprep.subr.bf16.mxu0 0
      %1530 = vmatpush1.bf16.msra.mxu0 0
      %1531 = vmatprep.mubr.bf16.mxu0 0
      %1532 = vmatmul.mubr.bf16.gmra.mrb[0].mxu0 %v1418
      %v1533 = vpop.f32.mrb[0].mxu0
      %v1534 = vadd.f32 0.0, %v1533
      %v1535 = vpop.f32.mrb[0].mxu0
      %v1536 = vpop.f32.mrb[0].mxu0
      %v1537 = vadd.f32 0.0, %v1536
      %v1538 = vpop.f32.mrb[0].mxu0
      %1539 = vmatprep.mubr.bf16.mxu0 0
      %1540 = vmatmul.mubr.bf16.gmra.mrb[0].mxu0 %v1419
      %v1541 = vpop.f32.mrb[0].mxu0
      %v1542 = vadd.f32 0.0, %v1541
      %v1543 = vpop.f32.mrb[0].mxu0
      %v1544 = vpop.f32.mrb[0].mxu0
      %v1545 = vadd.f32 0.0, %v1544
      %v1546 = vpop.f32.mrb[0].mxu0
      %1547 = vmatprep.mubr.bf16.mxu0 0
      %1548 = vmatmul.mubr.bf16.gmra.mrb[0].mxu0 %v1420
      %v1549 = vpop.f32.mrb[0].mxu0
      %v1550 = vadd.f32 0.0, %v1549
      %v1551 = vpop.f32.mrb[0].mxu0
      %v1552 = vpop.f32.mrb[0].mxu0
      %v1553 = vadd.f32 0.0, %v1552
      %v1554 = vpop.f32.mrb[0].mxu0
      %1555 = vmatprep.mubr.bf16.mxu0 0
      %1556 = vmatmul.mubr.bf16.gmra.mrb[0].mxu0 %v1421
      %v1557 = vpop.f32.mrb[0].mxu0
      %v1558 = vadd.f32 0.0, %v1557
      %v1559 = vpop.f32.mrb[0].mxu0
      %v1560 = vpop.f32.mrb[0].mxu0
      %v1561 = vadd.f32 0.0, %v1560
      %v1562 = vpop.f32.mrb[0].mxu0
      %1563 = vmatprep.mubr.bf16.mxu0 0
      %1564 = vmatmul.mubr.bf16.gmra.mrb[0].mxu0 %v1422
      %v1565 = vpop.f32.mrb[0].mxu0
      %v1566 = vadd.f32 0.0, %v1565
      %v1567 = vpop.f32.mrb[0].mxu0
      %v1568 = vpop.f32.mrb[0].mxu0
      %v1569 = vadd.f32 0.0, %v1568
      %v1570 = vpop.f32.mrb[0].mxu0
      %1571 = vmatprep.mubr.bf16.mxu0 0
      %1572 = vmatmul.mubr.bf16.gmra.mrb[0].mxu0 %v1423
      %v1573 = vpop.f32.mrb[0].mxu0
      %v1574 = vadd.f32 0.0, %v1573
      %v1575 = vpop.f32.mrb[0].mxu0
      %v1576 = vpop.f32.mrb[0].mxu0
      %v1577 = vadd.f32 0.0, %v1576
      %v1578 = vpop.f32.mrb[0].mxu0
      %1579 = vmatprep.mubr.bf16.mxu0 0
      %1580 = vmatmul.mubr.bf16.gmra.mrb[0].mxu0 %v1424
      %v1581 = vpop.f32.mrb[0].mxu0
      %v1582 = vadd.f32 0.0, %v1581
      %v1583 = vpop.f32.mrb[0].mxu0
      %v1584 = vpop.f32.mrb[0].mxu0
      %v1585 = vadd.f32 0.0, %v1584
      %v1586 = vpop.f32.mrb[0].mxu0
      %1587 = vmatprep.mubr.bf16.mxu0 0
      %1588 = vmatmul.mubr.bf16.gmra.mrb[0].mxu0 %v1425
      %v1589 = vpop.f32.mrb[0].mxu0
      %v1590 = vadd.f32 0.0, %v1589
      %v1591 = vpop.f32.mrb[0].mxu0
      %v1592 = vpop.f32.mrb[0].mxu0
      %v1593 = vadd.f32 0.0, %v1592
      %v1594 = vpop.f32.mrb[0].mxu0
      %1595 = vmatprep.mubr.bf16.mxu0 0
      %1596 = vmatmul.mubr.bf16.gmra.mrb[0].mxu0 %v1426
      %v1597 = vpop.f32.mrb[0].mxu0
      %v1598 = vadd.f32 0.0, %v1597
      %v1599 = vpop.f32.mrb[0].mxu0
      %v1600 = vpop.f32.mrb[0].mxu0
      %v1601 = vadd.f32 0.0, %v1600
      %v1602 = vpop.f32.mrb[0].mxu0
      %1603 = vmatprep.mubr.bf16.mxu0 0
      %1604 = vmatmul.mubr.bf16.gmra.mrb[0].mxu0 %v1427
      %v1605 = vpop.f32.mrb[0].mxu0
      %v1606 = vadd.f32 0.0, %v1605
      %v1607 = vpop.f32.mrb[0].mxu0
      %v1608 = vpop.f32.mrb[0].mxu0
      %v1609 = vadd.f32 0.0, %v1608
      %v1610 = vpop.f32.mrb[0].mxu0
      %1611 = vmatprep.mubr.bf16.mxu0 0
      %1612 = vmatmul.mubr.bf16.gmra.mrb[0].mxu0 %v1428
      %v1613 = vpop.f32.mrb[0].mxu0
      %v1614 = vadd.f32 0.0, %v1613
      %v1615 = vpop.f32.mrb[0].mxu0
      %v1616 = vpop.f32.mrb[0].mxu0
      %v1617 = vadd.f32 0.0, %v1616
      %v1618 = vpop.f32.mrb[0].mxu0
      %1619 = vmatprep.mubr.bf16.mxu0 0
      %1620 = vmatmul.mubr.bf16.gmra.mrb[0].mxu0 %v1429
      %v1621 = vpop.f32.mrb[0].mxu0
      %v1622 = vadd.f32 0.0, %v1621
      %v1623 = vpop.f32.mrb[0].mxu0
      %v1624 = vpop.f32.mrb[0].mxu0
      %v1625 = vadd.f32 0.0, %v1624
      %v1626 = vpop.f32.mrb[0].mxu0
      %1627 = vmatprep.mubr.bf16.mxu0 0
      %1628 = vmatmul.mubr.bf16.gmra.mrb[0].mxu0 %v1430
      %v1629 = vpop.f32.mrb[0].mxu0
      %v1630 = vadd.f32 0.0, %v1629
      %v1631 = vpop.f32.mrb[0].mxu0
      %v1632 = vpop.f32.mrb[0].mxu0
      %v1633 = vadd.f32 0.0, %v1632
      %v1634 = vpop.f32.mrb[0].mxu0
      %1635 = vmatprep.mubr.bf16.mxu0 0
      %1636 = vmatmul.mubr.bf16.gmra.mrb[0].mxu0 %v1431
      %v1637 = vpop.f32.mrb[0].mxu0
      %v1638 = vadd.f32 0.0, %v1637
      %v1639 = vpop.f32.mrb[0].mxu0
      %v1640 = vpop.f32.mrb[0].mxu0
      %v1641 = vadd.f32 0.0, %v1640
      %v1642 = vpop.f32.mrb[0].mxu0
      %1643 = vmatprep.mubr.bf16.mxu0 0
      %1644 = vmatmul.mubr.bf16.gmra.mrb[0].mxu0 %v1432
      %v1645 = vpop.f32.mrb[0].mxu0
      %v1646 = vadd.f32 0.0, %v1645
      %v1647 = vpop.f32.mrb[0].mxu0
      %v1648 = vpop.f32.mrb[0].mxu0
      %v1649 = vadd.f32 0.0, %v1648
      %v1650 = vpop.f32.mrb[0].mxu0
      %1651 = vmatprep.mubr.bf16.mxu0 0
      %1652 = vmatmul.mubr.bf16.gmra.mrb[0].mxu0 %v1433
      %v1653 = vpop.f32.mrb[0].mxu0
      %v1654 = vadd.f32 0.0, %v1653
      %v1655 = vpop.f32.mrb[0].mxu0
      %v1656 = vpop.f32.mrb[0].mxu0
      %v1657 = vadd.f32 0.0, %v1656
      %v1658 = vpop.f32.mrb[0].mxu0
      %1659 = vdwg.mxu0
      %v1660 = vadd.f32 %v1354, %v1534
      %v1661 = vadd.f32 %v1355, %v1537
      %v1662 = vadd.f32 %v1356, %v1542
      %v1663 = vadd.f32 %v1357, %v1545
      %v1664 = vadd.f32 %v1358, %v1550
      %v1665 = vadd.f32 %v1359, %v1553
      %v1666 = vadd.f32 %v1360, %v1558
      %v1667 = vadd.f32 %v1361, %v1561
      %v1668 = vadd.f32 %v1362, %v1566
      %v1669 = vadd.f32 %v1363, %v1569
      %v1670 = vadd.f32 %v1364, %v1574
      %v1671 = vadd.f32 %v1365, %v1577
      %v1672 = vadd.f32 %v1366, %v1582
      %v1673 = vadd.f32 %v1367, %v1585
      %v1674 = vadd.f32 %v1368, %v1590
      %v1675 = vadd.f32 %v1369, %v1593
      %v1676 = vadd.f32 %v1370, %v1598
      %v1677 = vadd.f32 %v1371, %v1601
      %v1678 = vadd.f32 %v1372, %v1606
      %v1679 = vadd.f32 %v1373, %v1609
      %v1680 = vadd.f32 %v1374, %v1614
      %v1681 = vadd.f32 %v1375, %v1617
      %v1682 = vadd.f32 %v1376, %v1622
      %v1683 = vadd.f32 %v1377, %v1625
      %v1684 = vadd.f32 %v1378, %v1630
      %v1685 = vadd.f32 %v1379, %v1633
      %v1686 = vadd.f32 %v1380, %v1638
      %v1687 = vadd.f32 %v1381, %v1641
      %v1688 = vadd.f32 %v1382, %v1646
      %v1689 = vadd.f32 %v1383, %v1649
      %v1690 = vadd.f32 %v1384, %v1654
      %v1691 = vadd.f32 %v1385, %v1657
      %v1692 = vld [vmem:[%s1079 + $0x2] sm:$0xff]
      %v1693 = vld [vmem:[%s1079 + $0xa] sm:$0xff]
      %v1694 = vld [vmem:[%s1079 + $0x1a] sm:$0xff]
      %v1695 = vld [vmem:[%s1079 + $0x22] sm:$0xff]
      %v1696 = vld [vmem:[%s1079 + $0x32] sm:$0xff]
      %v1697 = vld [vmem:[%s1079 + $0x3a] sm:$0xff]
      %v1698 = vld [vmem:[%s1079 + $0x4a] sm:$0xff]
      %v1699 = vld [vmem:[%s1079 + $0x52] sm:$0xff]
      %v1700 = vld [vmem:[%s1079 + $0x62] sm:$0xff]
      %v1701 = vld [vmem:[%s1079 + $0x6a] sm:$0xff]
      %v1702 = vld [vmem:[%s1079 + $0x7a] sm:$0xff]
      %v1703 = vld [vmem:[%s1079 + $0x82] sm:$0xff]
      %v1704 = vld [vmem:[%s1079 + $0x92] sm:$0xff]
      %v1705 = vld [vmem:[%s1079 + $0x9a] sm:$0xff]
      %v1706 = vld [vmem:[%s1079 + $0xaa] sm:$0xff]
      %v1707 = vld [vmem:[%s1079 + $0xb2] sm:$0xff]
      %v1708 = vld [vmem:[%s1079 + $0xc2] sm:$0xff]
      %v1709 = vld [vmem:[%s1079 + $0xca] sm:$0xff]
      %v1710 = vld [vmem:[%s1079 + $0xda] sm:$0xff]
      %v1711 = vld [vmem:[%s1079 + $0xe2] sm:$0xff]
      %v1712 = vld [vmem:[%s1079 + $0xf2] sm:$0xff]
      %v1713 = vld [vmem:[%s1079 + $0xfa] sm:$0xff]
      %v1714 = vld [vmem:[%s1079 + $0x10a] sm:$0xff]
      %v1715 = vld [vmem:[%s1079 + $0x112] sm:$0xff]
      %v1716 = vld [vmem:[%s1079 + $0x122] sm:$0xff]
      %v1717 = vld [vmem:[%s1079 + $0x12a] sm:$0xff]
      %v1718 = vld [vmem:[%s1079 + $0x13a] sm:$0xff]
      %v1719 = vld [vmem:[%s1079 + $0x142] sm:$0xff]
      %v1720 = vld [vmem:[%s1079 + $0x152] sm:$0xff]
      %v1721 = vld [vmem:[%s1079 + $0x15a] sm:$0xff]
      %v1722 = vld [vmem:[%s1079 + $0x16a] sm:$0xff]
      %v1723 = vld [vmem:[%s1079 + $0x172] sm:$0xff]
      %v1724 = vpack.c.bf16 %v1693, %v1692
      %v1725 = vpack.c.bf16 %v1695, %v1694
      %v1726 = vpack.c.bf16 %v1697, %v1696
      %v1727 = vpack.c.bf16 %v1699, %v1698
      %v1728 = vpack.c.bf16 %v1701, %v1700
      %v1729 = vpack.c.bf16 %v1703, %v1702
      %v1730 = vpack.c.bf16 %v1705, %v1704
      %v1731 = vpack.c.bf16 %v1707, %v1706
      %v1732 = vpack.c.bf16 %v1709, %v1708
      %v1733 = vpack.c.bf16 %v1711, %v1710
      %v1734 = vpack.c.bf16 %v1713, %v1712
      %v1735 = vpack.c.bf16 %v1715, %v1714
      %v1736 = vpack.c.bf16 %v1717, %v1716
      %v1737 = vpack.c.bf16 %v1719, %v1718
      %v1738 = vpack.c.bf16 %v1721, %v1720
      %v1739 = vpack.c.bf16 %v1723, %v1722
      %s1740 = scalar_lea.vmem %s1, 320
      %v1741 = vld [vmem:[%s1740] sm:$0xf]
      %v1742 = vld [vmem:[%s1740 + $0x4] sm:$0xf]
      %v1743 = vld [vmem:[%s1740 + $0x8] sm:$0xf]
      %v1744 = vld [vmem:[%s1740 + $0xc] sm:$0xf]
      %v1745 = vld [vmem:[%s1740 + $0x10] sm:$0xf]
      %v1746 = vld [vmem:[%s1740 + $0x14] sm:$0xf]
      %v1747 = vld [vmem:[%s1740 + $0x18] sm:$0xf]
      %v1748 = vld [vmem:[%s1740 + $0x1c] sm:$0xf]
      %v1749 = vld [vmem:[%s1740 + $0x20] sm:$0xf]
      %v1750 = vld [vmem:[%s1740 + $0x24] sm:$0xf]
      %v1751 = vld [vmem:[%s1740 + $0x28] sm:$0xf]
      %v1752 = vld [vmem:[%s1740 + $0x2c] sm:$0xf]
      %v1753 = vld [vmem:[%s1740 + $0x30] sm:$0xf]
      %v1754 = vld [vmem:[%s1740 + $0x34] sm:$0xf]
      %v1755 = vld [vmem:[%s1740 + $0x38] sm:$0xf]
      %v1756 = vld [vmem:[%s1740 + $0x3c] sm:$0xf]
      %v1773 = vunpack.c.l.b16 %v1741
      %v1774 = vunpack.c.l.b16 %v1742
      %v1775 = vunpack.c.l.b16 %v1743
      %v1776 = vunpack.c.l.b16 %v1744
      %v1777 = vunpack.c.l.b16 %v1745
      %v1778 = vunpack.c.l.b16 %v1746
      %v1779 = vunpack.c.l.b16 %v1747
      %v1780 = vunpack.c.l.b16 %v1748
      %v1781 = vunpack.c.l.b16 %v1749
      %v1782 = vunpack.c.l.b16 %v1750
      %v1783 = vunpack.c.l.b16 %v1751
      %v1784 = vunpack.c.l.b16 %v1752
      %v1785 = vunpack.c.l.b16 %v1753
      %v1786 = vunpack.c.l.b16 %v1754
      %v1787 = vunpack.c.l.b16 %v1755
      %v1788 = vunpack.c.l.b16 %v1756
      %v1789 = vpack.c.b16 %v1774, %v1773
      %v1790 = vpack.c.b16 %v1776, %v1775
      %v1791 = vpack.c.b16 %v1778, %v1777
      %v1792 = vpack.c.b16 %v1780, %v1779
      %v1793 = vpack.c.b16 %v1782, %v1781
      %v1794 = vpack.c.b16 %v1784, %v1783
      %v1795 = vpack.c.b16 %v1786, %v1785
      %v1796 = vpack.c.b16 %v1788, %v1787
      %1805 = vmatprep.subr.bf16.mxu0 0
      %1806 = vmatpush1.bf16.msra.mxu0 %v1789
      %1807 = vmatprep.subr.bf16.mxu0 0
      %1808 = vmatpush1.bf16.msra.mxu0 %v1790
      %1809 = vmatprep.subr.bf16.mxu0 0
      %1810 = vmatpush1.bf16.msra.mxu0 %v1791
      %1811 = vmatprep.subr.bf16.mxu0 0
      %1812 = vmatpush1.bf16.msra.mxu0 %v1792
      %1813 = vmatprep.subr.bf16.mxu0 0
      %1814 = vmatpush1.bf16.msra.mxu0 %v1793
      %1815 = vmatprep.subr.bf16.mxu0 0
      %1816 = vmatpush1.bf16.msra.mxu0 %v1794
      %1817 = vmatprep.subr.bf16.mxu0 0
      %1818 = vmatpush1.bf16.msra.mxu0 %v1795
      %1819 = vmatprep.subr.bf16.mxu0 0
      %1820 = vmatpush1.bf16.msra.mxu0 %v1796
      %1821 = vmatprep.subr.bf16.mxu0 0
      %1822 = vmatpush1.bf16.msra.mxu0 0
      %1823 = vmatprep.subr.bf16.mxu0 0
      %1824 = vmatpush1.bf16.msra.mxu0 0
      %1825 = vmatprep.subr.bf16.mxu0 0
      %1826 = vmatpush1.bf16.msra.mxu0 0
      %1827 = vmatprep.subr.bf16.mxu0 0
      %1828 = vmatpush1.bf16.msra.mxu0 0
      %1829 = vmatprep.subr.bf16.mxu0 0
      %1830 = vmatpush1.bf16.msra.mxu0 0
      %1831 = vmatprep.subr.bf16.mxu0 0
      %1832 = vmatpush1.bf16.msra.mxu0 0
      %1833 = vmatprep.subr.bf16.mxu0 0
      %1834 = vmatpush1.bf16.msra.mxu0 0
      %1835 = vmatprep.subr.bf16.mxu0 0
      %1836 = vmatpush1.bf16.msra.mxu0 0
      %1837 = vmatprep.mubr.bf16.mxu0 0
      %1838 = vmatmul.mubr.bf16.gmra.mrb[0].mxu0 %v1724
      %v1839 = vpop.f32.mrb[0].mxu0
      %v1840 = vadd.f32 0.0, %v1839
      %v1841 = vpop.f32.mrb[0].mxu0
      %v1842 = vpop.f32.mrb[0].mxu0
      %v1843 = vadd.f32 0.0, %v1842
      %v1844 = vpop.f32.mrb[0].mxu0
      %1845 = vmatprep.mubr.bf16.mxu0 0
      %1846 = vmatmul.mubr.bf16.gmra.mrb[0].mxu0 %v1725
      %v1847 = vpop.f32.mrb[0].mxu0
      %v1848 = vadd.f32 0.0, %v1847
      %v1849 = vpop.f32.mrb[0].mxu0
      %v1850 = vpop.f32.mrb[0].mxu0
      %v1851 = vadd.f32 0.0, %v1850
      %v1852 = vpop.f32.mrb[0].mxu0
      %1853 = vmatprep.mubr.bf16.mxu0 0
      %1854 = vmatmul.mubr.bf16.gmra.mrb[0].mxu0 %v1726
      %v1855 = vpop.f32.mrb[0].mxu0
      %v1856 = vadd.f32 0.0, %v1855
      %v1857 = vpop.f32.mrb[0].mxu0
      %v1858 = vpop.f32.mrb[0].mxu0
      %v1859 = vadd.f32 0.0, %v1858
      %v1860 = vpop.f32.mrb[0].mxu0
      %1861 = vmatprep.mubr.bf16.mxu0 0
      %1862 = vmatmul.mubr.bf16.gmra.mrb[0].mxu0 %v1727
      %v1863 = vpop.f32.mrb[0].mxu0
      %v1864 = vadd.f32 0.0, %v1863
      %v1865 = vpop.f32.mrb[0].mxu0
      %v1866 = vpop.f32.mrb[0].mxu0
      %v1867 = vadd.f32 0.0, %v1866
      %v1868 = vpop.f32.mrb[0].mxu0
      %1869 = vmatprep.mubr.bf16.mxu0 0
      %1870 = vmatmul.mubr.bf16.gmra.mrb[0].mxu0 %v1728
      %v1871 = vpop.f32.mrb[0].mxu0
      %v1872 = vadd.f32 0.0, %v1871
      %v1873 = vpop.f32.mrb[0].mxu0
      %v1874 = vpop.f32.mrb[0].mxu0
      %v1875 = vadd.f32 0.0, %v1874
      %v1876 = vpop.f32.mrb[0].mxu0
      %1877 = vmatprep.mubr.bf16.mxu0 0
      %1878 = vmatmul.mubr.bf16.gmra.mrb[0].mxu0 %v1729
      %v1879 = vpop.f32.mrb[0].mxu0
      %v1880 = vadd.f32 0.0, %v1879
      %v1881 = vpop.f32.mrb[0].mxu0
      %v1882 = vpop.f32.mrb[0].mxu0
      %v1883 = vadd.f32 0.0, %v1882
      %v1884 = vpop.f32.mrb[0].mxu0
      %1885 = vmatprep.mubr.bf16.mxu0 0
      %1886 = vmatmul.mubr.bf16.gmra.mrb[0].mxu0 %v1730
      %v1887 = vpop.f32.mrb[0].mxu0
      %v1888 = vadd.f32 0.0, %v1887
      %v1889 = vpop.f32.mrb[0].mxu0
      %v1890 = vpop.f32.mrb[0].mxu0
      %v1891 = vadd.f32 0.0, %v1890
      %v1892 = vpop.f32.mrb[0].mxu0
      %1893 = vmatprep.mubr.bf16.mxu0 0
      %1894 = vmatmul.mubr.bf16.gmra.mrb[0].mxu0 %v1731
      %v1895 = vpop.f32.mrb[0].mxu0
      %v1896 = vadd.f32 0.0, %v1895
      %v1897 = vpop.f32.mrb[0].mxu0
      %v1898 = vpop.f32.mrb[0].mxu0
      %v1899 = vadd.f32 0.0, %v1898
      %v1900 = vpop.f32.mrb[0].mxu0
      %1901 = vmatprep.mubr.bf16.mxu0 0
      %1902 = vmatmul.mubr.bf16.gmra.mrb[0].mxu0 %v1732
      %v1903 = vpop.f32.mrb[0].mxu0
      %v1904 = vadd.f32 0.0, %v1903
      %v1905 = vpop.f32.mrb[0].mxu0
      %v1906 = vpop.f32.mrb[0].mxu0
      %v1907 = vadd.f32 0.0, %v1906
      %v1908 = vpop.f32.mrb[0].mxu0
      %1909 = vmatprep.mubr.bf16.mxu0 0
      %1910 = vmatmul.mubr.bf16.gmra.mrb[0].mxu0 %v1733
      %v1911 = vpop.f32.mrb[0].mxu0
      %v1912 = vadd.f32 0.0, %v1911
      %v1913 = vpop.f32.mrb[0].mxu0
      %v1914 = vpop.f32.mrb[0].mxu0
      %v1915 = vadd.f32 0.0, %v1914
      %v1916 = vpop.f32.mrb[0].mxu0
      %1917 = vmatprep.mubr.bf16.mxu0 0
      %1918 = vmatmul.mubr.bf16.gmra.mrb[0].mxu0 %v1734
      %v1919 = vpop.f32.mrb[0].mxu0
      %v1920 = vadd.f32 0.0, %v1919
      %v1921 = vpop.f32.mrb[0].mxu0
      %v1922 = vpop.f32.mrb[0].mxu0
      %v1923 = vadd.f32 0.0, %v1922
      %v1924 = vpop.f32.mrb[0].mxu0
      %1925 = vmatprep.mubr.bf16.mxu0 0
      %1926 = vmatmul.mubr.bf16.gmra.mrb[0].mxu0 %v1735
      %v1927 = vpop.f32.mrb[0].mxu0
      %v1928 = vadd.f32 0.0, %v1927
      %v1929 = vpop.f32.mrb[0].mxu0
      %v1930 = vpop.f32.mrb[0].mxu0
      %v1931 = vadd.f32 0.0, %v1930
      %v1932 = vpop.f32.mrb[0].mxu0
      %1933 = vmatprep.mubr.bf16.mxu0 0
      %1934 = vmatmul.mubr.bf16.gmra.mrb[0].mxu0 %v1736
      %v1935 = vpop.f32.mrb[0].mxu0
      %v1936 = vadd.f32 0.0, %v1935
      %v1937 = vpop.f32.mrb[0].mxu0
      %v1938 = vpop.f32.mrb[0].mxu0
      %v1939 = vadd.f32 0.0, %v1938
      %v1940 = vpop.f32.mrb[0].mxu0
      %1941 = vmatprep.mubr.bf16.mxu0 0
      %1942 = vmatmul.mubr.bf16.gmra.mrb[0].mxu0 %v1737
      %v1943 = vpop.f32.mrb[0].mxu0
      %v1944 = vadd.f32 0.0, %v1943
      %v1945 = vpop.f32.mrb[0].mxu0
      %v1946 = vpop.f32.mrb[0].mxu0
      %v1947 = vadd.f32 0.0, %v1946
      %v1948 = vpop.f32.mrb[0].mxu0
      %1949 = vmatprep.mubr.bf16.mxu0 0
      %1950 = vmatmul.mubr.bf16.gmra.mrb[0].mxu0 %v1738
      %v1951 = vpop.f32.mrb[0].mxu0
      %v1952 = vadd.f32 0.0, %v1951
      %v1953 = vpop.f32.mrb[0].mxu0
      %v1954 = vpop.f32.mrb[0].mxu0
      %v1955 = vadd.f32 0.0, %v1954
      %v1956 = vpop.f32.mrb[0].mxu0
      %1957 = vmatprep.mubr.bf16.mxu0 0
      %1958 = vmatmul.mubr.bf16.gmra.mrb[0].mxu0 %v1739
      %v1959 = vpop.f32.mrb[0].mxu0
      %v1960 = vadd.f32 0.0, %v1959
      %v1961 = vpop.f32.mrb[0].mxu0
      %v1962 = vpop.f32.mrb[0].mxu0
      %v1963 = vadd.f32 0.0, %v1962
      %v1964 = vpop.f32.mrb[0].mxu0
      %1965 = vdwg.mxu0
      %v1966 = vadd.f32 %v1660, %v1840
      %v1967 = vadd.f32 %v1661, %v1843
      %v1968 = vadd.f32 %v1662, %v1848
      %v1969 = vadd.f32 %v1663, %v1851
      %v1970 = vadd.f32 %v1664, %v1856
      %v1971 = vadd.f32 %v1665, %v1859
      %v1972 = vadd.f32 %v1666, %v1864
      %v1973 = vadd.f32 %v1667, %v1867
      %v1974 = vadd.f32 %v1668, %v1872
      %v1975 = vadd.f32 %v1669, %v1875
      %v1976 = vadd.f32 %v1670, %v1880
      %v1977 = vadd.f32 %v1671, %v1883
      %v1978 = vadd.f32 %v1672, %v1888
      %v1979 = vadd.f32 %v1673, %v1891
      %v1980 = vadd.f32 %v1674, %v1896
      %v1981 = vadd.f32 %v1675, %v1899
      %v1982 = vadd.f32 %v1676, %v1904
      %v1983 = vadd.f32 %v1677, %v1907
      %v1984 = vadd.f32 %v1678, %v1912
      %v1985 = vadd.f32 %v1679, %v1915
      %v1986 = vadd.f32 %v1680, %v1920
      %v1987 = vadd.f32 %v1681, %v1923
      %v1988 = vadd.f32 %v1682, %v1928
      %v1989 = vadd.f32 %v1683, %v1931
      %v1990 = vadd.f32 %v1684, %v1936
      %v1991 = vadd.f32 %v1685, %v1939
      %v1992 = vadd.f32 %v1686, %v1944
      %v1993 = vadd.f32 %v1687, %v1947
      %v1994 = vadd.f32 %v1688, %v1952
      %v1995 = vadd.f32 %v1689, %v1955
      %v1996 = vadd.f32 %v1690, %v1960
      %v1997 = vadd.f32 %v1691, %v1963
      %s1998 = scalar_lea.vmem %s219, 48
      %v1999 = vld [vmem:[%s1998] sm:$0xff]
      %v2000 = vld [vmem:[%s1998 + $0x8] sm:$0xff]
      %v2001 = vld [vmem:[%s1998 + $0x18] sm:$0xff]
      %v2002 = vld [vmem:[%s1998 + $0x20] sm:$0xff]
      %v2003 = vld [vmem:[%s1998 + $0x30] sm:$0xff]
      %v2004 = vld [vmem:[%s1998 + $0x38] sm:$0xff]
      %v2005 = vld [vmem:[%s1998 + $0x48] sm:$0xff]
      %v2006 = vld [vmem:[%s1998 + $0x50] sm:$0xff]
      %v2007 = vld [vmem:[%s1998 + $0x60] sm:$0xff]
      %v2008 = vld [vmem:[%s1998 + $0x68] sm:$0xff]
      %v2009 = vld [vmem:[%s1998 + $0x78] sm:$0xff]
      %v2010 = vld [vmem:[%s1998 + $0x80] sm:$0xff]
      %v2011 = vld [vmem:[%s1998 + $0x90] sm:$0xff]
      %v2012 = vld [vmem:[%s1998 + $0x98] sm:$0xff]
      %v2013 = vld [vmem:[%s1998 + $0xa8] sm:$0xff]
      %v2014 = vld [vmem:[%s1998 + $0xb0] sm:$0xff]
      %v2015 = vld [vmem:[%s1998 + $0xc0] sm:$0xff]
      %v2016 = vld [vmem:[%s1998 + $0xc8] sm:$0xff]
      %v2017 = vld [vmem:[%s1998 + $0xd8] sm:$0xff]
      %v2018 = vld [vmem:[%s1998 + $0xe0] sm:$0xff]
      %v2019 = vld [vmem:[%s1998 + $0xf0] sm:$0xff]
      %v2020 = vld [vmem:[%s1998 + $0xf8] sm:$0xff]
      %v2021 = vld [vmem:[%s1998 + $0x108] sm:$0xff]
      %v2022 = vld [vmem:[%s1998 + $0x110] sm:$0xff]
      %v2023 = vld [vmem:[%s1998 + $0x120] sm:$0xff]
      %v2024 = vld [vmem:[%s1998 + $0x128] sm:$0xff]
      %v2025 = vld [vmem:[%s1998 + $0x138] sm:$0xff]
      %v2026 = vld [vmem:[%s1998 + $0x140] sm:$0xff]
      %v2027 = vld [vmem:[%s1998 + $0x150] sm:$0xff]
      %v2028 = vld [vmem:[%s1998 + $0x158] sm:$0xff]
      %v2029 = vld [vmem:[%s1998 + $0x168] sm:$0xff]
      %v2030 = vld [vmem:[%s1998 + $0x170] sm:$0xff]
      %v2031 = vpack.c.bf16 %v2000, %v1999
      %v2032 = vpack.c.bf16 %v2002, %v2001
      %v2033 = vpack.c.bf16 %v2004, %v2003
      %v2034 = vpack.c.bf16 %v2006, %v2005
      %v2035 = vpack.c.bf16 %v2008, %v2007
      %v2036 = vpack.c.bf16 %v2010, %v2009
      %v2037 = vpack.c.bf16 %v2012, %v2011
      %v2038 = vpack.c.bf16 %v2014, %v2013
      %v2039 = vpack.c.bf16 %v2016, %v2015
      %v2040 = vpack.c.bf16 %v2018, %v2017
      %v2041 = vpack.c.bf16 %v2020, %v2019
      %v2042 = vpack.c.bf16 %v2022, %v2021
      %v2043 = vpack.c.bf16 %v2024, %v2023
      %v2044 = vpack.c.bf16 %v2026, %v2025
      %v2045 = vpack.c.bf16 %v2028, %v2027
      %v2046 = vpack.c.bf16 %v2030, %v2029
      %s2047 = scalar_lea.vmem %s1, 384
      %v2048 = vld [vmem:[%s2047] sm:$0xf]
      %v2049 = vld [vmem:[%s2047 + $0x4] sm:$0xf]
      %v2050 = vld [vmem:[%s2047 + $0x8] sm:$0xf]
      %v2051 = vld [vmem:[%s2047 + $0xc] sm:$0xf]
      %v2052 = vld [vmem:[%s2047 + $0x10] sm:$0xf]
      %v2053 = vld [vmem:[%s2047 + $0x14] sm:$0xf]
      %v2054 = vld [vmem:[%s2047 + $0x18] sm:$0xf]
      %v2055 = vld [vmem:[%s2047 + $0x1c] sm:$0xf]
      %v2056 = vld [vmem:[%s2047 + $0x20] sm:$0xf]
      %v2057 = vld [vmem:[%s2047 + $0x24] sm:$0xf]
      %v2058 = vld [vmem:[%s2047 + $0x28] sm:$0xf]
      %v2059 = vld [vmem:[%s2047 + $0x2c] sm:$0xf]
      %v2060 = vld [vmem:[%s2047 + $0x30] sm:$0xf]
      %v2061 = vld [vmem:[%s2047 + $0x34] sm:$0xf]
      %v2062 = vld [vmem:[%s2047 + $0x38] sm:$0xf]
      %v2063 = vld [vmem:[%s2047 + $0x3c] sm:$0xf]
      %v2080 = vunpack.c.l.b16 %v2048
      %v2081 = vunpack.c.l.b16 %v2049
      %v2082 = vunpack.c.l.b16 %v2050
      %v2083 = vunpack.c.l.b16 %v2051
      %v2084 = vunpack.c.l.b16 %v2052
      %v2085 = vunpack.c.l.b16 %v2053
      %v2086 = vunpack.c.l.b16 %v2054
      %v2087 = vunpack.c.l.b16 %v2055
      %v2088 = vunpack.c.l.b16 %v2056
      %v2089 = vunpack.c.l.b16 %v2057
      %v2090 = vunpack.c.l.b16 %v2058
      %v2091 = vunpack.c.l.b16 %v2059
      %v2092 = vunpack.c.l.b16 %v2060
      %v2093 = vunpack.c.l.b16 %v2061
      %v2094 = vunpack.c.l.b16 %v2062
      %v2095 = vunpack.c.l.b16 %v2063
      %v2096 = vpack.c.b16 %v2081, %v2080
      %v2097 = vpack.c.b16 %v2083, %v2082
      %v2098 = vpack.c.b16 %v2085, %v2084
      %v2099 = vpack.c.b16 %v2087, %v2086
      %v2100 = vpack.c.b16 %v2089, %v2088
      %v2101 = vpack.c.b16 %v2091, %v2090
      %v2102 = vpack.c.b16 %v2093, %v2092
      %v2103 = vpack.c.b16 %v2095, %v2094
      %2112 = vmatprep.subr.bf16.mxu0 0
      %2113 = vmatpush1.bf16.msra.mxu0 %v2096
      %2114 = vmatprep.subr.bf16.mxu0 0
      %2115 = vmatpush1.bf16.msra.mxu0 %v2097
      %2116 = vmatprep.subr.bf16.mxu0 0
      %2117 = vmatpush1.bf16.msra.mxu0 %v2098
      %2118 = vmatprep.subr.bf16.mxu0 0
      %2119 = vmatpush1.bf16.msra.mxu0 %v2099
      %2120 = vmatprep.subr.bf16.mxu0 0
      %2121 = vmatpush1.bf16.msra.mxu0 %v2100
      %2122 = vmatprep.subr.bf16.mxu0 0
      %2123 = vmatpush1.bf16.msra.mxu0 %v2101
      %2124 = vmatprep.subr.bf16.mxu0 0
      %2125 = vmatpush1.bf16.msra.mxu0 %v2102
      %2126 = vmatprep.subr.bf16.mxu0 0
      %2127 = vmatpush1.bf16.msra.mxu0 %v2103
      %2128 = vmatprep.subr.bf16.mxu0 0
      %2129 = vmatpush1.bf16.msra.mxu0 0
      %2130 = vmatprep.subr.bf16.mxu0 0
      %2131 = vmatpush1.bf16.msra.mxu0 0
      %2132 = vmatprep.subr.bf16.mxu0 0
      %2133 = vmatpush1.bf16.msra.mxu0 0
      %2134 = vmatprep.subr.bf16.mxu0 0
      %2135 = vmatpush1.bf16.msra.mxu0 0
      %2136 = vmatprep.subr.bf16.mxu0 0
      %2137 = vmatpush1.bf16.msra.mxu0 0
      %2138 = vmatprep.subr.bf16.mxu0 0
      %2139 = vmatpush1.bf16.msra.mxu0 0
      %2140 = vmatprep.subr.bf16.mxu0 0
      %2141 = vmatpush1.bf16.msra.mxu0 0
      %2142 = vmatprep.subr.bf16.mxu0 0
      %2143 = vmatpush1.bf16.msra.mxu0 0
      %2144 = vmatprep.mubr.bf16.mxu0 0
      %2145 = vmatmul.mubr.bf16.gmra.mrb[0].mxu0 %v2031
      %v2146 = vpop.f32.mrb[0].mxu0
      %v2147 = vadd.f32 0.0, %v2146
      %v2148 = vpop.f32.mrb[0].mxu0
      %v2149 = vpop.f32.mrb[0].mxu0
      %v2150 = vadd.f32 0.0, %v2149
      %v2151 = vpop.f32.mrb[0].mxu0
      %2152 = vmatprep.mubr.bf16.mxu0 0
      %2153 = vmatmul.mubr.bf16.gmra.mrb[0].mxu0 %v2032
      %v2154 = vpop.f32.mrb[0].mxu0
      %v2155 = vadd.f32 0.0, %v2154
      %v2156 = vpop.f32.mrb[0].mxu0
      %v2157 = vpop.f32.mrb[0].mxu0
      %v2158 = vadd.f32 0.0, %v2157
      %v2159 = vpop.f32.mrb[0].mxu0
      %2160 = vmatprep.mubr.bf16.mxu0 0
      %2161 = vmatmul.mubr.bf16.gmra.mrb[0].mxu0 %v2033
      %v2162 = vpop.f32.mrb[0].mxu0
      %v2163 = vadd.f32 0.0, %v2162
      %v2164 = vpop.f32.mrb[0].mxu0
      %v2165 = vpop.f32.mrb[0].mxu0
      %v2166 = vadd.f32 0.0, %v2165
      %v2167 = vpop.f32.mrb[0].mxu0
      %2168 = vmatprep.mubr.bf16.mxu0 0
      %2169 = vmatmul.mubr.bf16.gmra.mrb[0].mxu0 %v2034
      %v2170 = vpop.f32.mrb[0].mxu0
      %v2171 = vadd.f32 0.0, %v2170
      %v2172 = vpop.f32.mrb[0].mxu0
      %v2173 = vpop.f32.mrb[0].mxu0
      %v2174 = vadd.f32 0.0, %v2173
      %v2175 = vpop.f32.mrb[0].mxu0
      %2176 = vmatprep.mubr.bf16.mxu0 0
      %2177 = vmatmul.mubr.bf16.gmra.mrb[0].mxu0 %v2035
      %v2178 = vpop.f32.mrb[0].mxu0
      %v2179 = vadd.f32 0.0, %v2178
      %v2180 = vpop.f32.mrb[0].mxu0
      %v2181 = vpop.f32.mrb[0].mxu0
      %v2182 = vadd.f32 0.0, %v2181
      %v2183 = vpop.f32.mrb[0].mxu0
      %2184 = vmatprep.mubr.bf16.mxu0 0
      %2185 = vmatmul.mubr.bf16.gmra.mrb[0].mxu0 %v2036
      %v2186 = vpop.f32.mrb[0].mxu0
      %v2187 = vadd.f32 0.0, %v2186
      %v2188 = vpop.f32.mrb[0].mxu0
      %v2189 = vpop.f32.mrb[0].mxu0
      %v2190 = vadd.f32 0.0, %v2189
      %v2191 = vpop.f32.mrb[0].mxu0
      %2192 = vmatprep.mubr.bf16.mxu0 0
      %2193 = vmatmul.mubr.bf16.gmra.mrb[0].mxu0 %v2037
      %v2194 = vpop.f32.mrb[0].mxu0
      %v2195 = vadd.f32 0.0, %v2194
      %v2196 = vpop.f32.mrb[0].mxu0
      %v2197 = vpop.f32.mrb[0].mxu0
      %v2198 = vadd.f32 0.0, %v2197
      %v2199 = vpop.f32.mrb[0].mxu0
      %2200 = vmatprep.mubr.bf16.mxu0 0
      %2201 = vmatmul.mubr.bf16.gmra.mrb[0].mxu0 %v2038
      %v2202 = vpop.f32.mrb[0].mxu0
      %v2203 = vadd.f32 0.0, %v2202
      %v2204 = vpop.f32.mrb[0].mxu0
      %v2205 = vpop.f32.mrb[0].mxu0
      %v2206 = vadd.f32 0.0, %v2205
      %v2207 = vpop.f32.mrb[0].mxu0
      %2208 = vmatprep.mubr.bf16.mxu0 0
      %2209 = vmatmul.mubr.bf16.gmra.mrb[0].mxu0 %v2039
      %v2210 = vpop.f32.mrb[0].mxu0
      %v2211 = vadd.f32 0.0, %v2210
      %v2212 = vpop.f32.mrb[0].mxu0
      %v2213 = vpop.f32.mrb[0].mxu0
      %v2214 = vadd.f32 0.0, %v2213
      %v2215 = vpop.f32.mrb[0].mxu0
      %2216 = vmatprep.mubr.bf16.mxu0 0
      %2217 = vmatmul.mubr.bf16.gmra.mrb[0].mxu0 %v2040
      %v2218 = vpop.f32.mrb[0].mxu0
      %v2219 = vadd.f32 0.0, %v2218
      %v2220 = vpop.f32.mrb[0].mxu0
      %v2221 = vpop.f32.mrb[0].mxu0
      %v2222 = vadd.f32 0.0, %v2221
      %v2223 = vpop.f32.mrb[0].mxu0
      %2224 = vmatprep.mubr.bf16.mxu0 0
      %2225 = vmatmul.mubr.bf16.gmra.mrb[0].mxu0 %v2041
      %v2226 = vpop.f32.mrb[0].mxu0
      %v2227 = vadd.f32 0.0, %v2226
      %v2228 = vpop.f32.mrb[0].mxu0
      %v2229 = vpop.f32.mrb[0].mxu0
      %v2230 = vadd.f32 0.0, %v2229
      %v2231 = vpop.f32.mrb[0].mxu0
      %2232 = vmatprep.mubr.bf16.mxu0 0
      %2233 = vmatmul.mubr.bf16.gmra.mrb[0].mxu0 %v2042
      %v2234 = vpop.f32.mrb[0].mxu0
      %v2235 = vadd.f32 0.0, %v2234
      %v2236 = vpop.f32.mrb[0].mxu0
      %v2237 = vpop.f32.mrb[0].mxu0
      %v2238 = vadd.f32 0.0, %v2237
      %v2239 = vpop.f32.mrb[0].mxu0
      %2240 = vmatprep.mubr.bf16.mxu0 0
      %2241 = vmatmul.mubr.bf16.gmra.mrb[0].mxu0 %v2043
      %v2242 = vpop.f32.mrb[0].mxu0
      %v2243 = vadd.f32 0.0, %v2242
      %v2244 = vpop.f32.mrb[0].mxu0
      %v2245 = vpop.f32.mrb[0].mxu0
      %v2246 = vadd.f32 0.0, %v2245
      %v2247 = vpop.f32.mrb[0].mxu0
      %2248 = vmatprep.mubr.bf16.mxu0 0
      %2249 = vmatmul.mubr.bf16.gmra.mrb[0].mxu0 %v2044
      %v2250 = vpop.f32.mrb[0].mxu0
      %v2251 = vadd.f32 0.0, %v2250
      %v2252 = vpop.f32.mrb[0].mxu0
      %v2253 = vpop.f32.mrb[0].mxu0
      %v2254 = vadd.f32 0.0, %v2253
      %v2255 = vpop.f32.mrb[0].mxu0
      %2256 = vmatprep.mubr.bf16.mxu0 0
      %2257 = vmatmul.mubr.bf16.gmra.mrb[0].mxu0 %v2045
      %v2258 = vpop.f32.mrb[0].mxu0
      %v2259 = vadd.f32 0.0, %v2258
      %v2260 = vpop.f32.mrb[0].mxu0
      %v2261 = vpop.f32.mrb[0].mxu0
      %v2262 = vadd.f32 0.0, %v2261
      %v2263 = vpop.f32.mrb[0].mxu0
      %2264 = vmatprep.mubr.bf16.mxu0 0
      %2265 = vmatmul.mubr.bf16.gmra.mrb[0].mxu0 %v2046
      %v2266 = vpop.f32.mrb[0].mxu0
      %v2267 = vadd.f32 0.0, %v2266
      %v2268 = vpop.f32.mrb[0].mxu0
      %v2269 = vpop.f32.mrb[0].mxu0
      %v2270 = vadd.f32 0.0, %v2269
      %v2271 = vpop.f32.mrb[0].mxu0
      %2272 = vdwg.mxu0
      %v2273 = vadd.f32 %v1966, %v2147
      %v2274 = vadd.f32 %v1967, %v2150
      %v2275 = vadd.f32 %v1968, %v2155
      %v2276 = vadd.f32 %v1969, %v2158
      %v2277 = vadd.f32 %v1970, %v2163
      %v2278 = vadd.f32 %v1971, %v2166
      %v2279 = vadd.f32 %v1972, %v2171
      %v2280 = vadd.f32 %v1973, %v2174
      %v2281 = vadd.f32 %v1974, %v2179
      %v2282 = vadd.f32 %v1975, %v2182
      %v2283 = vadd.f32 %v1976, %v2187
      %v2284 = vadd.f32 %v1977, %v2190
      %v2285 = vadd.f32 %v1978, %v2195
      %v2286 = vadd.f32 %v1979, %v2198
      %v2287 = vadd.f32 %v1980, %v2203
      %v2288 = vadd.f32 %v1981, %v2206
      %v2289 = vadd.f32 %v1982, %v2211
      %v2290 = vadd.f32 %v1983, %v2214
      %v2291 = vadd.f32 %v1984, %v2219
      %v2292 = vadd.f32 %v1985, %v2222
      %v2293 = vadd.f32 %v1986, %v2227
      %v2294 = vadd.f32 %v1987, %v2230
      %v2295 = vadd.f32 %v1988, %v2235
      %v2296 = vadd.f32 %v1989, %v2238
      %v2297 = vadd.f32 %v1990, %v2243
      %v2298 = vadd.f32 %v1991, %v2246
      %v2299 = vadd.f32 %v1992, %v2251
      %v2300 = vadd.f32 %v1993, %v2254
      %v2301 = vadd.f32 %v1994, %v2259
      %v2302 = vadd.f32 %v1995, %v2262
      %v2303 = vadd.f32 %v1996, %v2267
      %v2304 = vadd.f32 %v1997, %v2270
      %v2305 = vld [vmem:[%s1998 + $0x1] sm:$0xff]
      %v2306 = vld [vmem:[%s1998 + $0x9] sm:$0xff]
      %v2307 = vld [vmem:[%s1998 + $0x19] sm:$0xff]
      %v2308 = vld [vmem:[%s1998 + $0x21] sm:$0xff]
      %v2309 = vld [vmem:[%s1998 + $0x31] sm:$0xff]
      %v2310 = vld [vmem:[%s1998 + $0x39] sm:$0xff]
      %v2311 = vld [vmem:[%s1998 + $0x49] sm:$0xff]
      %v2312 = vld [vmem:[%s1998 + $0x51] sm:$0xff]
      %v2313 = vld [vmem:[%s1998 + $0x61] sm:$0xff]
      %v2314 = vld [vmem:[%s1998 + $0x69] sm:$0xff]
      %v2315 = vld [vmem:[%s1998 + $0x79] sm:$0xff]
      %v2316 = vld [vmem:[%s1998 + $0x81] sm:$0xff]
      %v2317 = vld [vmem:[%s1998 + $0x91] sm:$0xff]
      %v2318 = vld [vmem:[%s1998 + $0x99] sm:$0xff]
      %v2319 = vld [vmem:[%s1998 + $0xa9] sm:$0xff]
      %v2320 = vld [vmem:[%s1998 + $0xb1] sm:$0xff]
      %v2321 = vld [vmem:[%s1998 + $0xc1] sm:$0xff]
      %v2322 = vld [vmem:[%s1998 + $0xc9] sm:$0xff]
      %v2323 = vld [vmem:[%s1998 + $0xd9] sm:$0xff]
      %v2324 = vld [vmem:[%s1998 + $0xe1] sm:$0xff]
      %v2325 = vld [vmem:[%s1998 + $0xf1] sm:$0xff]
      %v2326 = vld [vmem:[%s1998 + $0xf9] sm:$0xff]
      %v2327 = vld [vmem:[%s1998 + $0x109] sm:$0xff]
      %v2328 = vld [vmem:[%s1998 + $0x111] sm:$0xff]
      %v2329 = vld [vmem:[%s1998 + $0x121] sm:$0xff]
      %v2330 = vld [vmem:[%s1998 + $0x129] sm:$0xff]
      %v2331 = vld [vmem:[%s1998 + $0x139] sm:$0xff]
      %v2332 = vld [vmem:[%s1998 + $0x141] sm:$0xff]
      %v2333 = vld [vmem:[%s1998 + $0x151] sm:$0xff]
      %v2334 = vld [vmem:[%s1998 + $0x159] sm:$0xff]
      %v2335 = vld [vmem:[%s1998 + $0x169] sm:$0xff]
      %v2336 = vld [vmem:[%s1998 + $0x171] sm:$0xff]
      %v2337 = vpack.c.bf16 %v2306, %v2305
      %v2338 = vpack.c.bf16 %v2308, %v2307
      %v2339 = vpack.c.bf16 %v2310, %v2309
      %v2340 = vpack.c.bf16 %v2312, %v2311
      %v2341 = vpack.c.bf16 %v2314, %v2313
      %v2342 = vpack.c.bf16 %v2316, %v2315
      %v2343 = vpack.c.bf16 %v2318, %v2317
      %v2344 = vpack.c.bf16 %v2320, %v2319
      %v2345 = vpack.c.bf16 %v2322, %v2321
      %v2346 = vpack.c.bf16 %v2324, %v2323
      %v2347 = vpack.c.bf16 %v2326, %v2325
      %v2348 = vpack.c.bf16 %v2328, %v2327
      %v2349 = vpack.c.bf16 %v2330, %v2329
      %v2350 = vpack.c.bf16 %v2332, %v2331
      %v2351 = vpack.c.bf16 %v2334, %v2333
      %v2352 = vpack.c.bf16 %v2336, %v2335
      %s2353 = scalar_lea.vmem %s1, 448
      %v2354 = vld [vmem:[%s2353] sm:$0xf]
      %v2355 = vld [vmem:[%s2353 + $0x4] sm:$0xf]
      %v2356 = vld [vmem:[%s2353 + $0x8] sm:$0xf]
      %v2357 = vld [vmem:[%s2353 + $0xc] sm:$0xf]
      %v2358 = vld [vmem:[%s2353 + $0x10] sm:$0xf]
      %v2359 = vld [vmem:[%s2353 + $0x14] sm:$0xf]
      %v2360 = vld [vmem:[%s2353 + $0x18] sm:$0xf]
      %v2361 = vld [vmem:[%s2353 + $0x1c] sm:$0xf]
      %v2362 = vld [vmem:[%s2353 + $0x20] sm:$0xf]
      %v2363 = vld [vmem:[%s2353 + $0x24] sm:$0xf]
      %v2364 = vld [vmem:[%s2353 + $0x28] sm:$0xf]
      %v2365 = vld [vmem:[%s2353 + $0x2c] sm:$0xf]
      %v2366 = vld [vmem:[%s2353 + $0x30] sm:$0xf]
      %v2367 = vld [vmem:[%s2353 + $0x34] sm:$0xf]
      %v2368 = vld [vmem:[%s2353 + $0x38] sm:$0xf]
      %v2369 = vld [vmem:[%s2353 + $0x3c] sm:$0xf]
      %v2386 = vunpack.c.l.b16 %v2354
      %v2387 = vunpack.c.l.b16 %v2355
      %v2388 = vunpack.c.l.b16 %v2356
      %v2389 = vunpack.c.l.b16 %v2357
      %v2390 = vunpack.c.l.b16 %v2358
      %v2391 = vunpack.c.l.b16 %v2359
      %v2392 = vunpack.c.l.b16 %v2360
      %v2393 = vunpack.c.l.b16 %v2361
      %v2394 = vunpack.c.l.b16 %v2362
      %v2395 = vunpack.c.l.b16 %v2363
      %v2396 = vunpack.c.l.b16 %v2364
      %v2397 = vunpack.c.l.b16 %v2365
      %v2398 = vunpack.c.l.b16 %v2366
      %v2399 = vunpack.c.l.b16 %v2367
      %v2400 = vunpack.c.l.b16 %v2368
      %v2401 = vunpack.c.l.b16 %v2369
      %v2402 = vpack.c.b16 %v2387, %v2386
      %v2403 = vpack.c.b16 %v2389, %v2388
      %v2404 = vpack.c.b16 %v2391, %v2390
      %v2405 = vpack.c.b16 %v2393, %v2392
      %v2406 = vpack.c.b16 %v2395, %v2394
      %v2407 = vpack.c.b16 %v2397, %v2396
      %v2408 = vpack.c.b16 %v2399, %v2398
      %v2409 = vpack.c.b16 %v2401, %v2400
      %2418 = vmatprep.subr.bf16.mxu0 0
      %2419 = vmatpush1.bf16.msra.mxu0 %v2402
      %2420 = vmatprep.subr.bf16.mxu0 0
      %2421 = vmatpush1.bf16.msra.mxu0 %v2403
      %2422 = vmatprep.subr.bf16.mxu0 0
      %2423 = vmatpush1.bf16.msra.mxu0 %v2404
      %2424 = vmatprep.subr.bf16.mxu0 0
      %2425 = vmatpush1.bf16.msra.mxu0 %v2405
      %2426 = vmatprep.subr.bf16.mxu0 0
      %2427 = vmatpush1.bf16.msra.mxu0 %v2406
      %2428 = vmatprep.subr.bf16.mxu0 0
      %2429 = vmatpush1.bf16.msra.mxu0 %v2407
      %2430 = vmatprep.subr.bf16.mxu0 0
      %2431 = vmatpush1.bf16.msra.mxu0 %v2408
      %2432 = vmatprep.subr.bf16.mxu0 0
      %2433 = vmatpush1.bf16.msra.mxu0 %v2409
      %2434 = vmatprep.subr.bf16.mxu0 0
      %2435 = vmatpush1.bf16.msra.mxu0 0
      %2436 = vmatprep.subr.bf16.mxu0 0
      %2437 = vmatpush1.bf16.msra.mxu0 0
      %2438 = vmatprep.subr.bf16.mxu0 0
      %2439 = vmatpush1.bf16.msra.mxu0 0
      %2440 = vmatprep.subr.bf16.mxu0 0
      %2441 = vmatpush1.bf16.msra.mxu0 0
      %2442 = vmatprep.subr.bf16.mxu0 0
      %2443 = vmatpush1.bf16.msra.mxu0 0
      %2444 = vmatprep.subr.bf16.mxu0 0
      %2445 = vmatpush1.bf16.msra.mxu0 0
      %2446 = vmatprep.subr.bf16.mxu0 0
      %2447 = vmatpush1.bf16.msra.mxu0 0
      %2448 = vmatprep.subr.bf16.mxu0 0
      %2449 = vmatpush1.bf16.msra.mxu0 0
      %2450 = vmatprep.mubr.bf16.mxu0 0
      %2451 = vmatmul.mubr.bf16.gmra.mrb[0].mxu0 %v2337
      %v2452 = vpop.f32.mrb[0].mxu0
      %v2453 = vadd.f32 0.0, %v2452
      %v2454 = vpop.f32.mrb[0].mxu0
      %v2455 = vpop.f32.mrb[0].mxu0
      %v2456 = vadd.f32 0.0, %v2455
      %v2457 = vpop.f32.mrb[0].mxu0
      %2458 = vmatprep.mubr.bf16.mxu0 0
      %2459 = vmatmul.mubr.bf16.gmra.mrb[0].mxu0 %v2338
      %v2460 = vpop.f32.mrb[0].mxu0
      %v2461 = vadd.f32 0.0, %v2460
      %v2462 = vpop.f32.mrb[0].mxu0
      %v2463 = vpop.f32.mrb[0].mxu0
      %v2464 = vadd.f32 0.0, %v2463
      %v2465 = vpop.f32.mrb[0].mxu0
      %2466 = vmatprep.mubr.bf16.mxu0 0
      %2467 = vmatmul.mubr.bf16.gmra.mrb[0].mxu0 %v2339
      %v2468 = vpop.f32.mrb[0].mxu0
      %v2469 = vadd.f32 0.0, %v2468
      %v2470 = vpop.f32.mrb[0].mxu0
      %v2471 = vpop.f32.mrb[0].mxu0
      %v2472 = vadd.f32 0.0, %v2471
      %v2473 = vpop.f32.mrb[0].mxu0
      %2474 = vmatprep.mubr.bf16.mxu0 0
      %2475 = vmatmul.mubr.bf16.gmra.mrb[0].mxu0 %v2340
      %v2476 = vpop.f32.mrb[0].mxu0
      %v2477 = vadd.f32 0.0, %v2476
      %v2478 = vpop.f32.mrb[0].mxu0
      %v2479 = vpop.f32.mrb[0].mxu0
      %v2480 = vadd.f32 0.0, %v2479
      %v2481 = vpop.f32.mrb[0].mxu0
      %2482 = vmatprep.mubr.bf16.mxu0 0
      %2483 = vmatmul.mubr.bf16.gmra.mrb[0].mxu0 %v2341
      %v2484 = vpop.f32.mrb[0].mxu0
      %v2485 = vadd.f32 0.0, %v2484
      %v2486 = vpop.f32.mrb[0].mxu0
      %v2487 = vpop.f32.mrb[0].mxu0
      %v2488 = vadd.f32 0.0, %v2487
      %v2489 = vpop.f32.mrb[0].mxu0
      %2490 = vmatprep.mubr.bf16.mxu0 0
      %2491 = vmatmul.mubr.bf16.gmra.mrb[0].mxu0 %v2342
      %v2492 = vpop.f32.mrb[0].mxu0
      %v2493 = vadd.f32 0.0, %v2492
      %v2494 = vpop.f32.mrb[0].mxu0
      %v2495 = vpop.f32.mrb[0].mxu0
      %v2496 = vadd.f32 0.0, %v2495
      %v2497 = vpop.f32.mrb[0].mxu0
      %2498 = vmatprep.mubr.bf16.mxu0 0
      %2499 = vmatmul.mubr.bf16.gmra.mrb[0].mxu0 %v2343
      %v2500 = vpop.f32.mrb[0].mxu0
      %v2501 = vadd.f32 0.0, %v2500
      %v2502 = vpop.f32.mrb[0].mxu0
      %v2503 = vpop.f32.mrb[0].mxu0
      %v2504 = vadd.f32 0.0, %v2503
      %v2505 = vpop.f32.mrb[0].mxu0
      %2506 = vmatprep.mubr.bf16.mxu0 0
      %2507 = vmatmul.mubr.bf16.gmra.mrb[0].mxu0 %v2344
      %v2508 = vpop.f32.mrb[0].mxu0
      %v2509 = vadd.f32 0.0, %v2508
      %v2510 = vpop.f32.mrb[0].mxu0
      %v2511 = vpop.f32.mrb[0].mxu0
      %v2512 = vadd.f32 0.0, %v2511
      %v2513 = vpop.f32.mrb[0].mxu0
      %2514 = vmatprep.mubr.bf16.mxu0 0
      %2515 = vmatmul.mubr.bf16.gmra.mrb[0].mxu0 %v2345
      %v2516 = vpop.f32.mrb[0].mxu0
      %v2517 = vadd.f32 0.0, %v2516
      %v2518 = vpop.f32.mrb[0].mxu0
      %v2519 = vpop.f32.mrb[0].mxu0
      %v2520 = vadd.f32 0.0, %v2519
      %v2521 = vpop.f32.mrb[0].mxu0
      %2522 = vmatprep.mubr.bf16.mxu0 0
      %2523 = vmatmul.mubr.bf16.gmra.mrb[0].mxu0 %v2346
      %v2524 = vpop.f32.mrb[0].mxu0
      %v2525 = vadd.f32 0.0, %v2524
      %v2526 = vpop.f32.mrb[0].mxu0
      %v2527 = vpop.f32.mrb[0].mxu0
      %v2528 = vadd.f32 0.0, %v2527
      %v2529 = vpop.f32.mrb[0].mxu0
      %2530 = vmatprep.mubr.bf16.mxu0 0
      %2531 = vmatmul.mubr.bf16.gmra.mrb[0].mxu0 %v2347
      %v2532 = vpop.f32.mrb[0].mxu0
      %v2533 = vadd.f32 0.0, %v2532
      %v2534 = vpop.f32.mrb[0].mxu0
      %v2535 = vpop.f32.mrb[0].mxu0
      %v2536 = vadd.f32 0.0, %v2535
      %v2537 = vpop.f32.mrb[0].mxu0
      %2538 = vmatprep.mubr.bf16.mxu0 0
      %2539 = vmatmul.mubr.bf16.gmra.mrb[0].mxu0 %v2348
      %v2540 = vpop.f32.mrb[0].mxu0
      %v2541 = vadd.f32 0.0, %v2540
      %v2542 = vpop.f32.mrb[0].mxu0
      %v2543 = vpop.f32.mrb[0].mxu0
      %v2544 = vadd.f32 0.0, %v2543
      %v2545 = vpop.f32.mrb[0].mxu0
      %2546 = vmatprep.mubr.bf16.mxu0 0
      %2547 = vmatmul.mubr.bf16.gmra.mrb[0].mxu0 %v2349
      %v2548 = vpop.f32.mrb[0].mxu0
      %v2549 = vadd.f32 0.0, %v2548
      %v2550 = vpop.f32.mrb[0].mxu0
      %v2551 = vpop.f32.mrb[0].mxu0
      %v2552 = vadd.f32 0.0, %v2551
      %v2553 = vpop.f32.mrb[0].mxu0
      %2554 = vmatprep.mubr.bf16.mxu0 0
      %2555 = vmatmul.mubr.bf16.gmra.mrb[0].mxu0 %v2350
      %v2556 = vpop.f32.mrb[0].mxu0
      %v2557 = vadd.f32 0.0, %v2556
      %v2558 = vpop.f32.mrb[0].mxu0
      %v2559 = vpop.f32.mrb[0].mxu0
      %v2560 = vadd.f32 0.0, %v2559
      %v2561 = vpop.f32.mrb[0].mxu0
      %2562 = vmatprep.mubr.bf16.mxu0 0
      %2563 = vmatmul.mubr.bf16.gmra.mrb[0].mxu0 %v2351
      %v2564 = vpop.f32.mrb[0].mxu0
      %v2565 = vadd.f32 0.0, %v2564
      %v2566 = vpop.f32.mrb[0].mxu0
      %v2567 = vpop.f32.mrb[0].mxu0
      %v2568 = vadd.f32 0.0, %v2567
      %v2569 = vpop.f32.mrb[0].mxu0
      %2570 = vmatprep.mubr.bf16.mxu0 0
      %2571 = vmatmul.mubr.bf16.gmra.mrb[0].mxu0 %v2352
      %v2572 = vpop.f32.mrb[0].mxu0
      %v2573 = vadd.f32 0.0, %v2572
      %v2574 = vpop.f32.mrb[0].mxu0
      %v2575 = vpop.f32.mrb[0].mxu0
      %v2576 = vadd.f32 0.0, %v2575
      %v2577 = vpop.f32.mrb[0].mxu0
      %2578 = vdwg.mxu0
      %v2579 = vadd.f32 %v2273, %v2453
      %v2580 = vadd.f32 %v2274, %v2456
      %v2581 = vadd.f32 %v2275, %v2461
      %v2582 = vadd.f32 %v2276, %v2464
      %v2583 = vadd.f32 %v2277, %v2469
      %v2584 = vadd.f32 %v2278, %v2472
      %v2585 = vadd.f32 %v2279, %v2477
      %v2586 = vadd.f32 %v2280, %v2480
      %v2587 = vadd.f32 %v2281, %v2485
      %v2588 = vadd.f32 %v2282, %v2488
      %v2589 = vadd.f32 %v2283, %v2493
      %v2590 = vadd.f32 %v2284, %v2496
      %v2591 = vadd.f32 %v2285, %v2501
      %v2592 = vadd.f32 %v2286, %v2504
      %v2593 = vadd.f32 %v2287, %v2509
      %v2594 = vadd.f32 %v2288, %v2512
      %v2595 = vadd.f32 %v2289, %v2517
      %v2596 = vadd.f32 %v2290, %v2520
      %v2597 = vadd.f32 %v2291, %v2525
      %v2598 = vadd.f32 %v2292, %v2528
      %v2599 = vadd.f32 %v2293, %v2533
      %v2600 = vadd.f32 %v2294, %v2536
      %v2601 = vadd.f32 %v2295, %v2541
      %v2602 = vadd.f32 %v2296, %v2544
      %v2603 = vadd.f32 %v2297, %v2549
      %v2604 = vadd.f32 %v2298, %v2552
      %v2605 = vadd.f32 %v2299, %v2557
      %v2606 = vadd.f32 %v2300, %v2560
      %v2607 = vadd.f32 %v2301, %v2565
      %v2608 = vadd.f32 %v2302, %v2568
      %v2609 = vadd.f32 %v2303, %v2573
      %v2610 = vadd.f32 %v2304, %v2576
      %v2611 = vld [vmem:[%s1998 + $0x2] sm:$0xff]
      %v2612 = vld [vmem:[%s1998 + $0xa] sm:$0xff]
      %v2613 = vld [vmem:[%s1998 + $0x1a] sm:$0xff]
      %v2614 = vld [vmem:[%s1998 + $0x22] sm:$0xff]
      %v2615 = vld [vmem:[%s1998 + $0x32] sm:$0xff]
      %v2616 = vld [vmem:[%s1998 + $0x3a] sm:$0xff]
      %v2617 = vld [vmem:[%s1998 + $0x4a] sm:$0xff]
      %v2618 = vld [vmem:[%s1998 + $0x52] sm:$0xff]
      %v2619 = vld [vmem:[%s1998 + $0x62] sm:$0xff]
      %v2620 = vld [vmem:[%s1998 + $0x6a] sm:$0xff]
      %v2621 = vld [vmem:[%s1998 + $0x7a] sm:$0xff]
      %v2622 = vld [vmem:[%s1998 + $0x82] sm:$0xff]
      %v2623 = vld [vmem:[%s1998 + $0x92] sm:$0xff]
      %v2624 = vld [vmem:[%s1998 + $0x9a] sm:$0xff]
      %v2625 = vld [vmem:[%s1998 + $0xaa] sm:$0xff]
      %v2626 = vld [vmem:[%s1998 + $0xb2] sm:$0xff]
      %v2627 = vld [vmem:[%s1998 + $0xc2] sm:$0xff]
      %v2628 = vld [vmem:[%s1998 + $0xca] sm:$0xff]
      %v2629 = vld [vmem:[%s1998 + $0xda] sm:$0xff]
      %v2630 = vld [vmem:[%s1998 + $0xe2] sm:$0xff]
      %v2631 = vld [vmem:[%s1998 + $0xf2] sm:$0xff]
      %v2632 = vld [vmem:[%s1998 + $0xfa] sm:$0xff]
      %v2633 = vld [vmem:[%s1998 + $0x10a] sm:$0xff]
      %v2634 = vld [vmem:[%s1998 + $0x112] sm:$0xff]
      %v2635 = vld [vmem:[%s1998 + $0x122] sm:$0xff]
      %v2636 = vld [vmem:[%s1998 + $0x12a] sm:$0xff]
      %v2637 = vld [vmem:[%s1998 + $0x13a] sm:$0xff]
      %v2638 = vld [vmem:[%s1998 + $0x142] sm:$0xff]
      %v2639 = vld [vmem:[%s1998 + $0x152] sm:$0xff]
      %v2640 = vld [vmem:[%s1998 + $0x15a] sm:$0xff]
      %v2641 = vld [vmem:[%s1998 + $0x16a] sm:$0xff]
      %v2642 = vld [vmem:[%s1998 + $0x172] sm:$0xff]
      %v2643 = vpack.c.bf16 %v2612, %v2611
      %v2644 = vpack.c.bf16 %v2614, %v2613
      %v2645 = vpack.c.bf16 %v2616, %v2615
      %v2646 = vpack.c.bf16 %v2618, %v2617
      %v2647 = vpack.c.bf16 %v2620, %v2619
      %v2648 = vpack.c.bf16 %v2622, %v2621
      %v2649 = vpack.c.bf16 %v2624, %v2623
      %v2650 = vpack.c.bf16 %v2626, %v2625
      %v2651 = vpack.c.bf16 %v2628, %v2627
      %v2652 = vpack.c.bf16 %v2630, %v2629
      %v2653 = vpack.c.bf16 %v2632, %v2631
      %v2654 = vpack.c.bf16 %v2634, %v2633
      %v2655 = vpack.c.bf16 %v2636, %v2635
      %v2656 = vpack.c.bf16 %v2638, %v2637
      %v2657 = vpack.c.bf16 %v2640, %v2639
      %v2658 = vpack.c.bf16 %v2642, %v2641
      %s2659 = scalar_lea.vmem %s1, 512
      %v2660 = vld [vmem:[%s2659] sm:$0xf]
      %v2661 = vld [vmem:[%s2659 + $0x4] sm:$0xf]
      %v2662 = vld [vmem:[%s2659 + $0x8] sm:$0xf]
      %v2663 = vld [vmem:[%s2659 + $0xc] sm:$0xf]
      %v2664 = vld [vmem:[%s2659 + $0x10] sm:$0xf]
      %v2665 = vld [vmem:[%s2659 + $0x14] sm:$0xf]
      %v2666 = vld [vmem:[%s2659 + $0x18] sm:$0xf]
      %v2667 = vld [vmem:[%s2659 + $0x1c] sm:$0xf]
      %v2668 = vld [vmem:[%s2659 + $0x20] sm:$0xf]
      %v2669 = vld [vmem:[%s2659 + $0x24] sm:$0xf]
      %v2670 = vld [vmem:[%s2659 + $0x28] sm:$0xf]
      %v2671 = vld [vmem:[%s2659 + $0x2c] sm:$0xf]
      %v2672 = vld [vmem:[%s2659 + $0x30] sm:$0xf]
      %v2673 = vld [vmem:[%s2659 + $0x34] sm:$0xf]
      %v2674 = vld [vmem:[%s2659 + $0x38] sm:$0xf]
      %v2675 = vld [vmem:[%s2659 + $0x3c] sm:$0xf]
      %v2692 = vunpack.c.l.b16 %v2660
      %v2693 = vunpack.c.l.b16 %v2661
      %v2694 = vunpack.c.l.b16 %v2662
      %v2695 = vunpack.c.l.b16 %v2663
      %v2696 = vunpack.c.l.b16 %v2664
      %v2697 = vunpack.c.l.b16 %v2665
      %v2698 = vunpack.c.l.b16 %v2666
      %v2699 = vunpack.c.l.b16 %v2667
      %v2700 = vunpack.c.l.b16 %v2668
      %v2701 = vunpack.c.l.b16 %v2669
      %v2702 = vunpack.c.l.b16 %v2670
      %v2703 = vunpack.c.l.b16 %v2671
      %v2704 = vunpack.c.l.b16 %v2672
      %v2705 = vunpack.c.l.b16 %v2673
      %v2706 = vunpack.c.l.b16 %v2674
      %v2707 = vunpack.c.l.b16 %v2675
      %v2708 = vpack.c.b16 %v2693, %v2692
      %v2709 = vpack.c.b16 %v2695, %v2694
      %v2710 = vpack.c.b16 %v2697, %v2696
      %v2711 = vpack.c.b16 %v2699, %v2698
      %v2712 = vpack.c.b16 %v2701, %v2700
      %v2713 = vpack.c.b16 %v2703, %v2702
      %v2714 = vpack.c.b16 %v2705, %v2704
      %v2715 = vpack.c.b16 %v2707, %v2706
      %2724 = vmatprep.subr.bf16.mxu0 0
      %2725 = vmatpush1.bf16.msra.mxu0 %v2708
      %2726 = vmatprep.subr.bf16.mxu0 0
      %2727 = vmatpush1.bf16.msra.mxu0 %v2709
      %2728 = vmatprep.subr.bf16.mxu0 0
      %2729 = vmatpush1.bf16.msra.mxu0 %v2710
      %2730 = vmatprep.subr.bf16.mxu0 0
      %2731 = vmatpush1.bf16.msra.mxu0 %v2711
      %2732 = vmatprep.subr.bf16.mxu0 0
      %2733 = vmatpush1.bf16.msra.mxu0 %v2712
      %2734 = vmatprep.subr.bf16.mxu0 0
      %2735 = vmatpush1.bf16.msra.mxu0 %v2713
      %2736 = vmatprep.subr.bf16.mxu0 0
      %2737 = vmatpush1.bf16.msra.mxu0 %v2714
      %2738 = vmatprep.subr.bf16.mxu0 0
      %2739 = vmatpush1.bf16.msra.mxu0 %v2715
      %2740 = vmatprep.subr.bf16.mxu0 0
      %2741 = vmatpush1.bf16.msra.mxu0 0
      %2742 = vmatprep.subr.bf16.mxu0 0
      %2743 = vmatpush1.bf16.msra.mxu0 0
      %2744 = vmatprep.subr.bf16.mxu0 0
      %2745 = vmatpush1.bf16.msra.mxu0 0
      %2746 = vmatprep.subr.bf16.mxu0 0
      %2747 = vmatpush1.bf16.msra.mxu0 0
      %2748 = vmatprep.subr.bf16.mxu0 0
      %2749 = vmatpush1.bf16.msra.mxu0 0
      %2750 = vmatprep.subr.bf16.mxu0 0
      %2751 = vmatpush1.bf16.msra.mxu0 0
      %2752 = vmatprep.subr.bf16.mxu0 0
      %2753 = vmatpush1.bf16.msra.mxu0 0
      %2754 = vmatprep.subr.bf16.mxu0 0
      %2755 = vmatpush1.bf16.msra.mxu0 0
      %2756 = vmatprep.mubr.bf16.mxu0 0
      %2757 = vmatmul.mubr.bf16.gmra.mrb[0].mxu0 %v2643
      %v2758 = vpop.f32.mrb[0].mxu0
      %v2759 = vadd.f32 0.0, %v2758
      %v2760 = vpop.f32.mrb[0].mxu0
      %v2761 = vpop.f32.mrb[0].mxu0
      %v2762 = vadd.f32 0.0, %v2761
      %v2763 = vpop.f32.mrb[0].mxu0
      %2764 = vmatprep.mubr.bf16.mxu0 0
      %2765 = vmatmul.mubr.bf16.gmra.mrb[0].mxu0 %v2644
      %v2766 = vpop.f32.mrb[0].mxu0
      %v2767 = vadd.f32 0.0, %v2766
      %v2768 = vpop.f32.mrb[0].mxu0
      %v2769 = vpop.f32.mrb[0].mxu0
      %v2770 = vadd.f32 0.0, %v2769
      %v2771 = vpop.f32.mrb[0].mxu0
      %2772 = vmatprep.mubr.bf16.mxu0 0
      %2773 = vmatmul.mubr.bf16.gmra.mrb[0].mxu0 %v2645
      %v2774 = vpop.f32.mrb[0].mxu0
      %v2775 = vadd.f32 0.0, %v2774
      %v2776 = vpop.f32.mrb[0].mxu0
      %v2777 = vpop.f32.mrb[0].mxu0
      %v2778 = vadd.f32 0.0, %v2777
      %v2779 = vpop.f32.mrb[0].mxu0
      %2780 = vmatprep.mubr.bf16.mxu0 0
      %2781 = vmatmul.mubr.bf16.gmra.mrb[0].mxu0 %v2646
      %v2782 = vpop.f32.mrb[0].mxu0
      %v2783 = vadd.f32 0.0, %v2782
      %v2784 = vpop.f32.mrb[0].mxu0
      %v2785 = vpop.f32.mrb[0].mxu0
      %v2786 = vadd.f32 0.0, %v2785
      %v2787 = vpop.f32.mrb[0].mxu0
      %2788 = vmatprep.mubr.bf16.mxu0 0
      %2789 = vmatmul.mubr.bf16.gmra.mrb[0].mxu0 %v2647
      %v2790 = vpop.f32.mrb[0].mxu0
      %v2791 = vadd.f32 0.0, %v2790
      %v2792 = vpop.f32.mrb[0].mxu0
      %v2793 = vpop.f32.mrb[0].mxu0
      %v2794 = vadd.f32 0.0, %v2793
      %v2795 = vpop.f32.mrb[0].mxu0
      %2796 = vmatprep.mubr.bf16.mxu0 0
      %2797 = vmatmul.mubr.bf16.gmra.mrb[0].mxu0 %v2648
      %v2798 = vpop.f32.mrb[0].mxu0
      %v2799 = vadd.f32 0.0, %v2798
      %v2800 = vpop.f32.mrb[0].mxu0
      %v2801 = vpop.f32.mrb[0].mxu0
      %v2802 = vadd.f32 0.0, %v2801
      %v2803 = vpop.f32.mrb[0].mxu0
      %2804 = vmatprep.mubr.bf16.mxu0 0
      %2805 = vmatmul.mubr.bf16.gmra.mrb[0].mxu0 %v2649
      %v2806 = vpop.f32.mrb[0].mxu0
      %v2807 = vadd.f32 0.0, %v2806
      %v2808 = vpop.f32.mrb[0].mxu0
      %v2809 = vpop.f32.mrb[0].mxu0
      %v2810 = vadd.f32 0.0, %v2809
      %v2811 = vpop.f32.mrb[0].mxu0
      %2812 = vmatprep.mubr.bf16.mxu0 0
      %2813 = vmatmul.mubr.bf16.gmra.mrb[0].mxu0 %v2650
      %v2814 = vpop.f32.mrb[0].mxu0
      %v2815 = vadd.f32 0.0, %v2814
      %v2816 = vpop.f32.mrb[0].mxu0
      %v2817 = vpop.f32.mrb[0].mxu0
      %v2818 = vadd.f32 0.0, %v2817
      %v2819 = vpop.f32.mrb[0].mxu0
      %2820 = vmatprep.mubr.bf16.mxu0 0
      %2821 = vmatmul.mubr.bf16.gmra.mrb[0].mxu0 %v2651
      %v2822 = vpop.f32.mrb[0].mxu0
      %v2823 = vadd.f32 0.0, %v2822
      %v2824 = vpop.f32.mrb[0].mxu0
      %v2825 = vpop.f32.mrb[0].mxu0
      %v2826 = vadd.f32 0.0, %v2825
      %v2827 = vpop.f32.mrb[0].mxu0
      %2828 = vmatprep.mubr.bf16.mxu0 0
      %2829 = vmatmul.mubr.bf16.gmra.mrb[0].mxu0 %v2652
      %v2830 = vpop.f32.mrb[0].mxu0
      %v2831 = vadd.f32 0.0, %v2830
      %v2832 = vpop.f32.mrb[0].mxu0
      %v2833 = vpop.f32.mrb[0].mxu0
      %v2834 = vadd.f32 0.0, %v2833
      %v2835 = vpop.f32.mrb[0].mxu0
      %2836 = vmatprep.mubr.bf16.mxu0 0
      %2837 = vmatmul.mubr.bf16.gmra.mrb[0].mxu0 %v2653
      %v2838 = vpop.f32.mrb[0].mxu0
      %v2839 = vadd.f32 0.0, %v2838
      %v2840 = vpop.f32.mrb[0].mxu0
      %v2841 = vpop.f32.mrb[0].mxu0
      %v2842 = vadd.f32 0.0, %v2841
      %v2843 = vpop.f32.mrb[0].mxu0
      %2844 = vmatprep.mubr.bf16.mxu0 0
      %2845 = vmatmul.mubr.bf16.gmra.mrb[0].mxu0 %v2654
      %v2846 = vpop.f32.mrb[0].mxu0
      %v2847 = vadd.f32 0.0, %v2846
      %v2848 = vpop.f32.mrb[0].mxu0
      %v2849 = vpop.f32.mrb[0].mxu0
      %v2850 = vadd.f32 0.0, %v2849
      %v2851 = vpop.f32.mrb[0].mxu0
      %2852 = vmatprep.mubr.bf16.mxu0 0
      %2853 = vmatmul.mubr.bf16.gmra.mrb[0].mxu0 %v2655
      %v2854 = vpop.f32.mrb[0].mxu0
      %v2855 = vadd.f32 0.0, %v2854
      %v2856 = vpop.f32.mrb[0].mxu0
      %v2857 = vpop.f32.mrb[0].mxu0
      %v2858 = vadd.f32 0.0, %v2857
      %v2859 = vpop.f32.mrb[0].mxu0
      %2860 = vmatprep.mubr.bf16.mxu0 0
      %2861 = vmatmul.mubr.bf16.gmra.mrb[0].mxu0 %v2656
      %v2862 = vpop.f32.mrb[0].mxu0
      %v2863 = vadd.f32 0.0, %v2862
      %v2864 = vpop.f32.mrb[0].mxu0
      %v2865 = vpop.f32.mrb[0].mxu0
      %v2866 = vadd.f32 0.0, %v2865
      %v2867 = vpop.f32.mrb[0].mxu0
      %2868 = vmatprep.mubr.bf16.mxu0 0
      %2869 = vmatmul.mubr.bf16.gmra.mrb[0].mxu0 %v2657
      %v2870 = vpop.f32.mrb[0].mxu0
      %v2871 = vadd.f32 0.0, %v2870
      %v2872 = vpop.f32.mrb[0].mxu0
      %v2873 = vpop.f32.mrb[0].mxu0
      %v2874 = vadd.f32 0.0, %v2873
      %v2875 = vpop.f32.mrb[0].mxu0
      %2876 = vmatprep.mubr.bf16.mxu0 0
      %2877 = vmatmul.mubr.bf16.gmra.mrb[0].mxu0 %v2658
      %v2878 = vpop.f32.mrb[0].mxu0
      %v2879 = vadd.f32 0.0, %v2878
      %v2880 = vpop.f32.mrb[0].mxu0
      %v2881 = vpop.f32.mrb[0].mxu0
      %v2882 = vadd.f32 0.0, %v2881
      %v2883 = vpop.f32.mrb[0].mxu0
      %2884 = vdwg.mxu0
      %v2885 = vadd.f32 %v2579, %v2759
      %v2886 = vadd.f32 %v2580, %v2762
      %v2887 = vadd.f32 %v2581, %v2767
      %v2888 = vadd.f32 %v2582, %v2770
      %v2889 = vadd.f32 %v2583, %v2775
      %v2890 = vadd.f32 %v2584, %v2778
      %v2891 = vadd.f32 %v2585, %v2783
      %v2892 = vadd.f32 %v2586, %v2786
      %v2893 = vadd.f32 %v2587, %v2791
      %v2894 = vadd.f32 %v2588, %v2794
      %v2895 = vadd.f32 %v2589, %v2799
      %v2896 = vadd.f32 %v2590, %v2802
      %v2897 = vadd.f32 %v2591, %v2807
      %v2898 = vadd.f32 %v2592, %v2810
      %v2899 = vadd.f32 %v2593, %v2815
      %v2900 = vadd.f32 %v2594, %v2818
      %v2901 = vadd.f32 %v2595, %v2823
      %v2902 = vadd.f32 %v2596, %v2826
      %v2903 = vadd.f32 %v2597, %v2831
      %v2904 = vadd.f32 %v2598, %v2834
      %v2905 = vadd.f32 %v2599, %v2839
      %v2906 = vadd.f32 %v2600, %v2842
      %v2907 = vadd.f32 %v2601, %v2847
      %v2908 = vadd.f32 %v2602, %v2850
      %v2909 = vadd.f32 %v2603, %v2855
      %v2910 = vadd.f32 %v2604, %v2858
      %v2911 = vadd.f32 %v2605, %v2863
      %v2912 = vadd.f32 %v2606, %v2866
      %v2913 = vadd.f32 %v2607, %v2871
      %v2914 = vadd.f32 %v2608, %v2874
      %v2915 = vadd.f32 %v2609, %v2879
      %v2916 = vadd.f32 %v2610, %v2882
      %v2917 = vld [vmem:[%s2] sm:$0x1]
      %v2919 = vlaneseq
      %v2920 = vshrl.u32 %v2919, 7
      %v2921 = vsub.s32 0, %v2920
      %v2922 = vrot.slane %v2917, %v2921
      %v2924 = vadd.f32 %v2885, %v2922
      %v2925 = vadd.f32 %v2886, %v2922
      %v2926 = vadd.f32 %v2887, %v2922
      %v2927 = vadd.f32 %v2888, %v2922
      %v2928 = vadd.f32 %v2889, %v2922
      %v2929 = vadd.f32 %v2890, %v2922
      %v2930 = vadd.f32 %v2891, %v2922
      %v2931 = vadd.f32 %v2892, %v2922
      %v2932 = vadd.f32 %v2893, %v2922
      %v2933 = vadd.f32 %v2894, %v2922
      %v2934 = vadd.f32 %v2895, %v2922
      %v2935 = vadd.f32 %v2896, %v2922
      %v2936 = vadd.f32 %v2897, %v2922
      %v2937 = vadd.f32 %v2898, %v2922
      %v2938 = vadd.f32 %v2899, %v2922
      %v2939 = vadd.f32 %v2900, %v2922
      %v2940 = vadd.f32 %v2901, %v2922
      %v2941 = vadd.f32 %v2902, %v2922
      %v2942 = vadd.f32 %v2903, %v2922
      %v2943 = vadd.f32 %v2904, %v2922
      %v2944 = vadd.f32 %v2905, %v2922
      %v2945 = vadd.f32 %v2906, %v2922
      %v2946 = vadd.f32 %v2907, %v2922
      %v2947 = vadd.f32 %v2908, %v2922
      %v2948 = vadd.f32 %v2909, %v2922
      %v2949 = vadd.f32 %v2910, %v2922
      %v2950 = vadd.f32 %v2911, %v2922
      %v2951 = vadd.f32 %v2912, %v2922
      %v2952 = vadd.f32 %v2913, %v2922
      %v2953 = vadd.f32 %v2914, %v2922
      %v2954 = vadd.f32 %v2915, %v2922
      %v2955 = vadd.f32 %v2916, %v2922
      %v2956 = vmax.f32 %v2924, 0.0
      %v2957 = vmax.f32 %v2925, 0.0
      %v2958 = vmax.f32 %v2926, 0.0
      %v2959 = vmax.f32 %v2927, 0.0
      %v2960 = vmax.f32 %v2928, 0.0
      %v2961 = vmax.f32 %v2929, 0.0
      %v2962 = vmax.f32 %v2930, 0.0
      %v2963 = vmax.f32 %v2931, 0.0
      %v2964 = vmax.f32 %v2932, 0.0
      %v2965 = vmax.f32 %v2933, 0.0
      %v2966 = vmax.f32 %v2934, 0.0
      %v2967 = vmax.f32 %v2935, 0.0
      %v2968 = vmax.f32 %v2936, 0.0
      %v2969 = vmax.f32 %v2937, 0.0
      %v2970 = vmax.f32 %v2938, 0.0
      %v2971 = vmax.f32 %v2939, 0.0
      %v2972 = vmax.f32 %v2940, 0.0
      %v2973 = vmax.f32 %v2941, 0.0
      %v2974 = vmax.f32 %v2942, 0.0
      %v2975 = vmax.f32 %v2943, 0.0
      %v2976 = vmax.f32 %v2944, 0.0
      %v2977 = vmax.f32 %v2945, 0.0
      %v2978 = vmax.f32 %v2946, 0.0
      %v2979 = vmax.f32 %v2947, 0.0
      %v2980 = vmax.f32 %v2948, 0.0
      %v2981 = vmax.f32 %v2949, 0.0
      %v2982 = vmax.f32 %v2950, 0.0
      %v2983 = vmax.f32 %v2951, 0.0
      %v2984 = vmax.f32 %v2952, 0.0
      %v2985 = vmax.f32 %v2953, 0.0
      %v2986 = vmax.f32 %v2954, 0.0
      %v2987 = vmax.f32 %v2955, 0.0
      %2988 = vst [vmem:[#allocation2] sm:$0xff] 0.0
      %2989 = vst [vmem:[#allocation2 + $0x8] sm:$0xff] 0.0
      %2990 = vst [vmem:[#allocation2 + $0x10] sm:$0xff] 0.0
      %2991 = vst [vmem:[#allocation2 + $0x18] sm:$0xff] 0.0
      %2992 = vst [vmem:[#allocation2 + $0x20] sm:$0xff] 0.0
      %2993 = vst [vmem:[#allocation2 + $0x28] sm:$0xff] 0.0
      %2994 = vst [vmem:[#allocation2 + $0x30] sm:$0xff] 0.0
      %2995 = vst [vmem:[#allocation2 + $0x38] sm:$0xff] 0.0
      %2996 = vst [vmem:[#allocation2 + $0x40] sm:$0xff] 0.0
      %2997 = vst [vmem:[#allocation2 + $0x48] sm:$0xff] 0.0
      %2998 = vst [vmem:[#allocation2 + $0x50] sm:$0xff] 0.0
      %2999 = vst [vmem:[#allocation2 + $0x58] sm:$0xff] 0.0
      %3000 = vst [vmem:[#allocation2 + $0x60] sm:$0xff] 0.0
      %3001 = vst [vmem:[#allocation2 + $0x68] sm:$0xff] 0.0
      %3002 = vst [vmem:[#allocation2 + $0x70] sm:$0xff] 0.0
      %3003 = vst [vmem:[#allocation2 + $0x78] sm:$0xff] 0.0
      %3004 = vst [vmem:[#allocation2 + $0x80] sm:$0xff] 0.0
      %3005 = vst [vmem:[#allocation2 + $0x88] sm:$0xff] 0.0
      %3006 = vst [vmem:[#allocation2 + $0x90] sm:$0xff] 0.0
      %3007 = vst [vmem:[#allocation2 + $0x98] sm:$0xff] 0.0
      %3008 = vst [vmem:[#allocation2 + $0xa0] sm:$0xff] 0.0
      %3009 = vst [vmem:[#allocation2 + $0xa8] sm:$0xff] 0.0
      %3010 = vst [vmem:[#allocation2 + $0xb0] sm:$0xff] 0.0
      %3011 = vst [vmem:[#allocation2 + $0xb8] sm:$0xff] 0.0
      %3012 = vst [vmem:[#allocation2 + $0xc0] sm:$0xff] 0.0
      %3013 = vst [vmem:[#allocation2 + $0xc8] sm:$0xff] 0.0
      %3014 = vst [vmem:[#allocation2 + $0xd0] sm:$0xff] 0.0
      %3015 = vst [vmem:[#allocation2 + $0xd8] sm:$0xff] 0.0
      %3016 = vst [vmem:[#allocation2 + $0xe0] sm:$0xff] 0.0
      %3017 = vst [vmem:[#allocation2 + $0xe8] sm:$0xff] 0.0
      %3018 = vst [vmem:[#allocation2 + $0xf0] sm:$0xff] 0.0
      %3019 = vst [vmem:[#allocation2 + $0xf8] sm:$0xff] 0.0
      %3020 = vst [vmem:[#allocation2 + $0x100] sm:$0xff] 0.0
      %3021 = vst [vmem:[#allocation2 + $0x108] sm:$0xff] 0.0
      %3022 = vst [vmem:[#allocation2 + $0x110] sm:$0xff] 0.0
      %3023 = vst [vmem:[#allocation2 + $0x118] sm:$0xff] 0.0
      %3024 = vst [vmem:[#allocation2 + $0x120] sm:$0xff] 0.0
      %3025 = vst [vmem:[#allocation2 + $0x128] sm:$0xff] 0.0
      %3026 = vst [vmem:[#allocation2 + $0x130] sm:$0xff] 0.0
      %3027 = vst [vmem:[#allocation2 + $0x138] sm:$0xff] 0.0
      %3028 = vst [vmem:[#allocation2 + $0x140] sm:$0xff] 0.0
      %3029 = vst [vmem:[#allocation2 + $0x148] sm:$0xff] 0.0
      %3030 = vst [vmem:[#allocation2 + $0x150] sm:$0xff] 0.0
      %3031 = vst [vmem:[#allocation2 + $0x158] sm:$0xff] 0.0
      %3032 = vst [vmem:[#allocation2 + $0x160] sm:$0xff] 0.0
      %3033 = vst [vmem:[#allocation2 + $0x168] sm:$0xff] 0.0
      %3034 = vst [vmem:[#allocation2 + $0x170] sm:$0xff] 0.0
      %3035 = vst [vmem:[#allocation2 + $0x178] sm:$0xff] 0.0
      %3036 = vst [vmem:[#allocation2 + $0x180] sm:$0xff] 0.0
      %3037 = vst [vmem:[#allocation2 + $0x188] sm:$0xff] 0.0
      %3038 = vst [vmem:[#allocation2 + $0x190] sm:$0xff] 0.0
      %3039 = vst [vmem:[#allocation2 + $0x198] sm:$0xff] 0.0
      %3040 = vst [vmem:[#allocation2 + $0x1a0] sm:$0xff] 0.0
      %3041 = vst [vmem:[#allocation2 + $0x1a8] sm:$0xff] 0.0
      %3042 = vst [vmem:[#allocation2 + $0x1b0] sm:$0xff] 0.0
      %3043 = vst [vmem:[#allocation2 + $0x1b8] sm:$0xff] 0.0
      %3044 = vst [vmem:[#allocation2 + $0x1c0] sm:$0xff] 0.0
      %3045 = vst [vmem:[#allocation2 + $0x1c8] sm:$0xff] 0.0
      %3046 = vst [vmem:[#allocation2 + $0x1d0] sm:$0xff] 0.0
      %3047 = vst [vmem:[#allocation2 + $0x1d8] sm:$0xff] 0.0
      %3048 = vst [vmem:[#allocation2 + $0x1e0] sm:$0xff] 0.0
      %3049 = vst [vmem:[#allocation2 + $0x1e8] sm:$0xff] 0.0
      %3050 = vst [vmem:[#allocation2 + $0x1f0] sm:$0xff] 0.0
      %3051 = vst [vmem:[#allocation2 + $0x1f8] sm:$0xff] 0.0
      %3052 = vst [vmem:[#allocation2 + $0x200] sm:$0xff] 0.0
      %3053 = vst [vmem:[#allocation2 + $0x208] sm:$0xff] 0.0
      %3054 = vst [vmem:[#allocation2 + $0x210] sm:$0xff] 0.0
      %3055 = vst [vmem:[#allocation2 + $0x218] sm:$0xff] 0.0
      %3056 = vst [vmem:[#allocation2 + $0x220] sm:$0xff] 0.0
      %3057 = vst [vmem:[#allocation2 + $0x228] sm:$0xff] 0.0
      %3058 = vst [vmem:[#allocation2 + $0x230] sm:$0xff] 0.0
      %3059 = vst [vmem:[#allocation2 + $0x238] sm:$0xff] 0.0
      %s3060 = scalar_lea.vmem [#allocation2], 32
      %3061 = vst [vmem:[%s3060 + $0x8] sm:$0xff] %v2956
      %3062 = vst [vmem:[%s3060 + $0x10] sm:$0xff] %v2957
      %3063 = vst [vmem:[%s3060 + $0x28] sm:$0xff] %v2958
      %3064 = vst [vmem:[%s3060 + $0x30] sm:$0xff] %v2959
      %3065 = vst [vmem:[%s3060 + $0x48] sm:$0xff] %v2960
      %3066 = vst [vmem:[%s3060 + $0x50] sm:$0xff] %v2961
      %3067 = vst [vmem:[%s3060 + $0x68] sm:$0xff] %v2962
      %3068 = vst [vmem:[%s3060 + $0x70] sm:$0xff] %v2963
      %3069 = vst [vmem:[%s3060 + $0x88] sm:$0xff] %v2964
      %3070 = vst [vmem:[%s3060 + $0x90] sm:$0xff] %v2965
      %3071 = vst [vmem:[%s3060 + $0xa8] sm:$0xff] %v2966
      %3072 = vst [vmem:[%s3060 + $0xb0] sm:$0xff] %v2967
      %3073 = vst [vmem:[%s3060 + $0xc8] sm:$0xff] %v2968
      %3074 = vst [vmem:[%s3060 + $0xd0] sm:$0xff] %v2969
      %3075 = vst [vmem:[%s3060 + $0xe8] sm:$0xff] %v2970
      %3076 = vst [vmem:[%s3060 + $0xf0] sm:$0xff] %v2971
      %3077 = vst [vmem:[%s3060 + $0x108] sm:$0xff] %v2972
      %3078 = vst [vmem:[%s3060 + $0x110] sm:$0xff] %v2973
      %3079 = vst [vmem:[%s3060 + $0x128] sm:$0xff] %v2974
      %3080 = vst [vmem:[%s3060 + $0x130] sm:$0xff] %v2975
      %3081 = vst [vmem:[%s3060 + $0x148] sm:$0xff] %v2976
      %3082 = vst [vmem:[%s3060 + $0x150] sm:$0xff] %v2977
      %3083 = vst [vmem:[%s3060 + $0x168] sm:$0xff] %v2978
      %3084 = vst [vmem:[%s3060 + $0x170] sm:$0xff] %v2979
      %3085 = vst [vmem:[%s3060 + $0x188] sm:$0xff] %v2980
      %3086 = vst [vmem:[%s3060 + $0x190] sm:$0xff] %v2981
      %3087 = vst [vmem:[%s3060 + $0x1a8] sm:$0xff] %v2982
      %3088 = vst [vmem:[%s3060 + $0x1b0] sm:$0xff] %v2983
      %3089 = vst [vmem:[%s3060 + $0x1c8] sm:$0xff] %v2984
      %3090 = vst [vmem:[%s3060 + $0x1d0] sm:$0xff] %v2985
      %3091 = vst [vmem:[%s3060 + $0x1e8] sm:$0xff] %v2986
      %3092 = vst [vmem:[%s3060 + $0x1f0] sm:$0xff] %v2987
      %v3093 = vld [vmem:[#allocation2 + $0x7] sm:$0xff]
      %v3094 = vld [vmem:[#allocation2 + $0xf] sm:$0xff]
      %v3095 = vld [vmem:[#allocation2 + $0x27] sm:$0xff]
      %v3096 = vld [vmem:[#allocation2 + $0x2f] sm:$0xff]
      %v3097 = vld [vmem:[#allocation2 + $0x47] sm:$0xff]
      %v3098 = vld [vmem:[#allocation2 + $0x4f] sm:$0xff]
      %v3099 = vld [vmem:[#allocation2 + $0x67] sm:$0xff]
      %v3100 = vld [vmem:[#allocation2 + $0x6f] sm:$0xff]
      %v3101 = vld [vmem:[#allocation2 + $0x87] sm:$0xff]
      %v3102 = vld [vmem:[#allocation2 + $0x8f] sm:$0xff]
      %v3103 = vld [vmem:[#allocation2 + $0xa7] sm:$0xff]
      %v3104 = vld [vmem:[#allocation2 + $0xaf] sm:$0xff]
      %v3105 = vld [vmem:[#allocation2 + $0xc7] sm:$0xff]
      %v3106 = vld [vmem:[#allocation2 + $0xcf] sm:$0xff]
      %v3107 = vld [vmem:[#allocation2 + $0xe7] sm:$0xff]
      %v3108 = vld [vmem:[#allocation2 + $0xef] sm:$0xff]
      %v3109 = vld [vmem:[#allocation2 + $0x107] sm:$0xff]
      %v3110 = vld [vmem:[#allocation2 + $0x10f] sm:$0xff]
      %v3111 = vld [vmem:[#allocation2 + $0x127] sm:$0xff]
      %v3112 = vld [vmem:[#allocation2 + $0x12f] sm:$0xff]
      %v3113 = vld [vmem:[#allocation2 + $0x147] sm:$0xff]
      %v3114 = vld [vmem:[#allocation2 + $0x14f] sm:$0xff]
      %v3115 = vld [vmem:[#allocation2 + $0x167] sm:$0xff]
      %v3116 = vld [vmem:[#allocation2 + $0x16f] sm:$0xff]
      %v3117 = vld [vmem:[#allocation2 + $0x187] sm:$0xff]
      %v3118 = vld [vmem:[#allocation2 + $0x18f] sm:$0xff]
      %v3119 = vld [vmem:[#allocation2 + $0x1a7] sm:$0xff]
      %v3120 = vld [vmem:[#allocation2 + $0x1af] sm:$0xff]
      %v3121 = vld [vmem:[#allocation2 + $0x1c7] sm:$0xff]
      %v3122 = vld [vmem:[#allocation2 + $0x1cf] sm:$0xff]
      %v3123 = vld [vmem:[#allocation2 + $0x1e7] sm:$0xff]
      %v3124 = vld [vmem:[#allocation2 + $0x1ef] sm:$0xff]
      %v3125 = vpack.c.bf16 %v3094, %v3093
      %v3126 = vpack.c.bf16 %v3096, %v3095
      %v3127 = vpack.c.bf16 %v3098, %v3097
      %v3128 = vpack.c.bf16 %v3100, %v3099
      %v3129 = vpack.c.bf16 %v3102, %v3101
      %v3130 = vpack.c.bf16 %v3104, %v3103
      %v3131 = vpack.c.bf16 %v3106, %v3105
      %v3132 = vpack.c.bf16 %v3108, %v3107
      %v3133 = vpack.c.bf16 %v3110, %v3109
      %v3134 = vpack.c.bf16 %v3112, %v3111
      %v3135 = vpack.c.bf16 %v3114, %v3113
      %v3136 = vpack.c.bf16 %v3116, %v3115
      %v3137 = vpack.c.bf16 %v3118, %v3117
      %v3138 = vpack.c.bf16 %v3120, %v3119
      %v3139 = vpack.c.bf16 %v3122, %v3121
      %v3140 = vpack.c.bf16 %v3124, %v3123
      %v3141 = vld [vmem:[%s3] sm:$0xf]
      %v3142 = vld [vmem:[%s3 + $0x4] sm:$0xf]
      %v3143 = vld [vmem:[%s3 + $0x8] sm:$0xf]
      %v3144 = vld [vmem:[%s3 + $0xc] sm:$0xf]
      %v3145 = vld [vmem:[%s3 + $0x10] sm:$0xf]
      %v3146 = vld [vmem:[%s3 + $0x14] sm:$0xf]
      %v3147 = vld [vmem:[%s3 + $0x18] sm:$0xf]
      %v3148 = vld [vmem:[%s3 + $0x1c] sm:$0xf]
      %v3149 = vld [vmem:[%s3 + $0x20] sm:$0xf]
      %v3150 = vld [vmem:[%s3 + $0x24] sm:$0xf]
      %v3151 = vld [vmem:[%s3 + $0x28] sm:$0xf]
      %v3152 = vld [vmem:[%s3 + $0x2c] sm:$0xf]
      %v3153 = vld [vmem:[%s3 + $0x30] sm:$0xf]
      %v3154 = vld [vmem:[%s3 + $0x34] sm:$0xf]
      %v3155 = vld [vmem:[%s3 + $0x38] sm:$0xf]
      %v3156 = vld [vmem:[%s3 + $0x3c] sm:$0xf]
      %v3157 = vld [vmem:[#allocation2 + $0x8] sm:$0xff]
      %v3158 = vld [vmem:[#allocation2 + $0x10] sm:$0xff]
      %v3159 = vld [vmem:[#allocation2 + $0x28] sm:$0xff]
      %v3160 = vld [vmem:[#allocation2 + $0x30] sm:$0xff]
      %v3161 = vld [vmem:[#allocation2 + $0x48] sm:$0xff]
      %v3162 = vld [vmem:[#allocation2 + $0x50] sm:$0xff]
      %v3163 = vld [vmem:[#allocation2 + $0x68] sm:$0xff]
      %v3164 = vld [vmem:[#allocation2 + $0x70] sm:$0xff]
      %v3165 = vld [vmem:[#allocation2 + $0x88] sm:$0xff]
      %v3166 = vld [vmem:[#allocation2 + $0x90] sm:$0xff]
      %v3167 = vld [vmem:[#allocation2 + $0xa8] sm:$0xff]
      %v3168 = vld [vmem:[#allocation2 + $0xb0] sm:$0xff]
      %v3169 = vld [vmem:[#allocation2 + $0xc8] sm:$0xff]
      %v3170 = vld [vmem:[#allocation2 + $0xd0] sm:$0xff]
      %v3171 = vld [vmem:[#allocation2 + $0xe8] sm:$0xff]
      %v3172 = vld [vmem:[#allocation2 + $0xf0] sm:$0xff]
      %v3173 = vld [vmem:[#allocation2 + $0x108] sm:$0xff]
      %v3174 = vld [vmem:[#allocation2 + $0x110] sm:$0xff]
      %v3175 = vld [vmem:[#allocation2 + $0x128] sm:$0xff]
      %v3176 = vld [vmem:[#allocation2 + $0x130] sm:$0xff]
      %v3177 = vld [vmem:[#allocation2 + $0x148] sm:$0xff]
      %v3178 = vld [vmem:[#allocation2 + $0x150] sm:$0xff]
      %v3179 = vld [vmem:[#allocation2 + $0x168] sm:$0xff]
      %v3180 = vld [vmem:[#allocation2 + $0x170] sm:$0xff]
      %v3181 = vld [vmem:[#allocation2 + $0x188] sm:$0xff]
      %v3182 = vld [vmem:[#allocation2 + $0x190] sm:$0xff]
      %v3183 = vld [vmem:[#allocation2 + $0x1a8] sm:$0xff]
      %v3184 = vld [vmem:[#allocation2 + $0x1b0] sm:$0xff]
      %v3185 = vld [vmem:[#allocation2 + $0x1c8] sm:$0xff]
      %v3186 = vld [vmem:[#allocation2 + $0x1d0] sm:$0xff]
      %v3187 = vld [vmem:[#allocation2 + $0x1e8] sm:$0xff]
      %v3188 = vld [vmem:[#allocation2 + $0x1f0] sm:$0xff]
      %v3189 = vpack.c.bf16 %v3158, %v3157
      %v3190 = vpack.c.bf16 %v3160, %v3159
      %v3191 = vpack.c.bf16 %v3162, %v3161
      %v3192 = vpack.c.bf16 %v3164, %v3163
      %v3193 = vpack.c.bf16 %v3166, %v3165
      %v3194 = vpack.c.bf16 %v3168, %v3167
      %v3195 = vpack.c.bf16 %v3170, %v3169
      %v3196 = vpack.c.bf16 %v3172, %v3171
      %v3197 = vpack.c.bf16 %v3174, %v3173
      %v3198 = vpack.c.bf16 %v3176, %v3175
      %v3199 = vpack.c.bf16 %v3178, %v3177
      %v3200 = vpack.c.bf16 %v3180, %v3179
      %v3201 = vpack.c.bf16 %v3182, %v3181
      %v3202 = vpack.c.bf16 %v3184, %v3183
      %v3203 = vpack.c.bf16 %v3186, %v3185
      %v3204 = vpack.c.bf16 %v3188, %v3187
      %s3205 = scalar_lea.vmem %s3, 64
      %v3206 = vld [vmem:[%s3205] sm:$0xf]
      %v3207 = vld [vmem:[%s3205 + $0x4] sm:$0xf]
      %v3208 = vld [vmem:[%s3205 + $0x8] sm:$0xf]
      %v3209 = vld [vmem:[%s3205 + $0xc] sm:$0xf]
      %v3210 = vld [vmem:[%s3205 + $0x10] sm:$0xf]
      %v3211 = vld [vmem:[%s3205 + $0x14] sm:$0xf]
      %v3212 = vld [vmem:[%s3205 + $0x18] sm:$0xf]
      %v3213 = vld [vmem:[%s3205 + $0x1c] sm:$0xf]
      %v3214 = vld [vmem:[%s3205 + $0x20] sm:$0xf]
      %v3215 = vld [vmem:[%s3205 + $0x24] sm:$0xf]
      %v3216 = vld [vmem:[%s3205 + $0x28] sm:$0xf]
      %v3217 = vld [vmem:[%s3205 + $0x2c] sm:$0xf]
      %v3218 = vld [vmem:[%s3205 + $0x30] sm:$0xf]
      %v3219 = vld [vmem:[%s3205 + $0x34] sm:$0xf]
      %v3220 = vld [vmem:[%s3205 + $0x38] sm:$0xf]
      %v3221 = vld [vmem:[%s3205 + $0x3c] sm:$0xf]
      %v3238 = vunpack.c.l.b16 %v3206
      %v3239 = vunpack.c.l.b16 %v3207
      %v3240 = vunpack.c.l.b16 %v3208
      %v3241 = vunpack.c.l.b16 %v3209
      %v3242 = vunpack.c.l.b16 %v3210
      %v3243 = vunpack.c.l.b16 %v3211
      %v3244 = vunpack.c.l.b16 %v3212
      %v3245 = vunpack.c.l.b16 %v3213
      %v3246 = vunpack.c.l.b16 %v3214
      %v3247 = vunpack.c.l.b16 %v3215
      %v3248 = vunpack.c.l.b16 %v3216
      %v3249 = vunpack.c.l.b16 %v3217
      %v3250 = vunpack.c.l.b16 %v3218
      %v3251 = vunpack.c.l.b16 %v3219
      %v3252 = vunpack.c.l.b16 %v3220
      %v3253 = vunpack.c.l.b16 %v3221
      %v3254 = vpack.c.b16 %v3239, %v3238
      %v3255 = vpack.c.b16 %v3241, %v3240
      %v3256 = vpack.c.b16 %v3243, %v3242
      %v3257 = vpack.c.b16 %v3245, %v3244
      %v3258 = vpack.c.b16 %v3247, %v3246
      %v3259 = vpack.c.b16 %v3249, %v3248
      %v3260 = vpack.c.b16 %v3251, %v3250
      %v3261 = vpack.c.b16 %v3253, %v3252
      %3270 = vmatprep.subr.bf16.mxu0 0
      %3271 = vmatpush1.bf16.msra.mxu0 %v3254
      %3272 = vmatprep.subr.bf16.mxu0 0
      %3273 = vmatpush1.bf16.msra.mxu0 %v3255
      %3274 = vmatprep.subr.bf16.mxu0 0
      %3275 = vmatpush1.bf16.msra.mxu0 %v3256
      %3276 = vmatprep.subr.bf16.mxu0 0
      %3277 = vmatpush1.bf16.msra.mxu0 %v3257
      %3278 = vmatprep.subr.bf16.mxu0 0
      %3279 = vmatpush1.bf16.msra.mxu0 %v3258
      %3280 = vmatprep.subr.bf16.mxu0 0
      %3281 = vmatpush1.bf16.msra.mxu0 %v3259
      %3282 = vmatprep.subr.bf16.mxu0 0
      %3283 = vmatpush1.bf16.msra.mxu0 %v3260
      %3284 = vmatprep.subr.bf16.mxu0 0
      %3285 = vmatpush1.bf16.msra.mxu0 %v3261
      %3286 = vmatprep.subr.bf16.mxu0 0
      %3287 = vmatpush1.bf16.msra.mxu0 0
      %3288 = vmatprep.subr.bf16.mxu0 0
      %3289 = vmatpush1.bf16.msra.mxu0 0
      %3290 = vmatprep.subr.bf16.mxu0 0
      %3291 = vmatpush1.bf16.msra.mxu0 0
      %3292 = vmatprep.subr.bf16.mxu0 0
      %3293 = vmatpush1.bf16.msra.mxu0 0
      %3294 = vmatprep.subr.bf16.mxu0 0
      %3295 = vmatpush1.bf16.msra.mxu0 0
      %3296 = vmatprep.subr.bf16.mxu0 0
      %3297 = vmatpush1.bf16.msra.mxu0 0
      %3298 = vmatprep.subr.bf16.mxu0 0
      %3299 = vmatpush1.bf16.msra.mxu0 0
      %3300 = vmatprep.subr.bf16.mxu0 0
      %3301 = vmatpush1.bf16.msra.mxu0 0
      %3302 = vmatprep.mubr.bf16.mxu0 0
      %3303 = vmatmul.mubr.bf16.gmra.mrb[0].mxu0 %v3189
      %v3304 = vpop.f32.mrb[0].mxu0
      %v3305 = vadd.f32 0.0, %v3304
      %v3306 = vpop.f32.mrb[0].mxu0
      %v3307 = vpop.f32.mrb[0].mxu0
      %v3308 = vadd.f32 0.0, %v3307
      %v3309 = vpop.f32.mrb[0].mxu0
      %3310 = vmatprep.mubr.bf16.mxu0 0
      %3311 = vmatmul.mubr.bf16.gmra.mrb[0].mxu0 %v3190
      %v3312 = vpop.f32.mrb[0].mxu0
      %v3313 = vadd.f32 0.0, %v3312
      %v3314 = vpop.f32.mrb[0].mxu0
      %v3315 = vpop.f32.mrb[0].mxu0
      %v3316 = vadd.f32 0.0, %v3315
      %v3317 = vpop.f32.mrb[0].mxu0
      %3318 = vmatprep.mubr.bf16.mxu0 0
      %3319 = vmatmul.mubr.bf16.gmra.mrb[0].mxu0 %v3191
      %v3320 = vpop.f32.mrb[0].mxu0
      %v3321 = vadd.f32 0.0, %v3320
      %v3322 = vpop.f32.mrb[0].mxu0
      %v3323 = vpop.f32.mrb[0].mxu0
      %v3324 = vadd.f32 0.0, %v3323
      %v3325 = vpop.f32.mrb[0].mxu0
      %3326 = vmatprep.mubr.bf16.mxu0 0
      %3327 = vmatmul.mubr.bf16.gmra.mrb[0].mxu0 %v3192
      %v3328 = vpop.f32.mrb[0].mxu0
      %v3329 = vadd.f32 0.0, %v3328
      %v3330 = vpop.f32.mrb[0].mxu0
      %v3331 = vpop.f32.mrb[0].mxu0
      %v3332 = vadd.f32 0.0, %v3331
      %v3333 = vpop.f32.mrb[0].mxu0
      %3334 = vmatprep.mubr.bf16.mxu0 0
      %3335 = vmatmul.mubr.bf16.gmra.mrb[0].mxu0 %v3193
      %v3336 = vpop.f32.mrb[0].mxu0
      %v3337 = vadd.f32 0.0, %v3336
      %v3338 = vpop.f32.mrb[0].mxu0
      %v3339 = vpop.f32.mrb[0].mxu0
      %v3340 = vadd.f32 0.0, %v3339
      %v3341 = vpop.f32.mrb[0].mxu0
      %3342 = vmatprep.mubr.bf16.mxu0 0
      %3343 = vmatmul.mubr.bf16.gmra.mrb[0].mxu0 %v3194
      %v3344 = vpop.f32.mrb[0].mxu0
      %v3345 = vadd.f32 0.0, %v3344
      %v3346 = vpop.f32.mrb[0].mxu0
      %v3347 = vpop.f32.mrb[0].mxu0
      %v3348 = vadd.f32 0.0, %v3347
      %v3349 = vpop.f32.mrb[0].mxu0
      %3350 = vmatprep.mubr.bf16.mxu0 0
      %3351 = vmatmul.mubr.bf16.gmra.mrb[0].mxu0 %v3195
      %v3352 = vpop.f32.mrb[0].mxu0
      %v3353 = vadd.f32 0.0, %v3352
      %v3354 = vpop.f32.mrb[0].mxu0
      %v3355 = vpop.f32.mrb[0].mxu0
      %v3356 = vadd.f32 0.0, %v3355
      %v3357 = vpop.f32.mrb[0].mxu0
      %3358 = vmatprep.mubr.bf16.mxu0 0
      %3359 = vmatmul.mubr.bf16.gmra.mrb[0].mxu0 %v3196
      %v3360 = vpop.f32.mrb[0].mxu0
      %v3361 = vadd.f32 0.0, %v3360
      %v3362 = vpop.f32.mrb[0].mxu0
      %v3363 = vpop.f32.mrb[0].mxu0
      %v3364 = vadd.f32 0.0, %v3363
      %v3365 = vpop.f32.mrb[0].mxu0
      %3366 = vmatprep.mubr.bf16.mxu0 0
      %3367 = vmatmul.mubr.bf16.gmra.mrb[0].mxu0 %v3197
      %v3368 = vpop.f32.mrb[0].mxu0
      %v3369 = vadd.f32 0.0, %v3368
      %v3370 = vpop.f32.mrb[0].mxu0
      %v3371 = vpop.f32.mrb[0].mxu0
      %v3372 = vadd.f32 0.0, %v3371
      %v3373 = vpop.f32.mrb[0].mxu0
      %3374 = vmatprep.mubr.bf16.mxu0 0
      %3375 = vmatmul.mubr.bf16.gmra.mrb[0].mxu0 %v3198
      %v3376 = vpop.f32.mrb[0].mxu0
      %v3377 = vadd.f32 0.0, %v3376
      %v3378 = vpop.f32.mrb[0].mxu0
      %v3379 = vpop.f32.mrb[0].mxu0
      %v3380 = vadd.f32 0.0, %v3379
      %v3381 = vpop.f32.mrb[0].mxu0
      %3382 = vmatprep.mubr.bf16.mxu0 0
      %3383 = vmatmul.mubr.bf16.gmra.mrb[0].mxu0 %v3199
      %v3384 = vpop.f32.mrb[0].mxu0
      %v3385 = vadd.f32 0.0, %v3384
      %v3386 = vpop.f32.mrb[0].mxu0
      %v3387 = vpop.f32.mrb[0].mxu0
      %v3388 = vadd.f32 0.0, %v3387
      %v3389 = vpop.f32.mrb[0].mxu0
      %3390 = vmatprep.mubr.bf16.mxu0 0
      %3391 = vmatmul.mubr.bf16.gmra.mrb[0].mxu0 %v3200
      %v3392 = vpop.f32.mrb[0].mxu0
      %v3393 = vadd.f32 0.0, %v3392
      %v3394 = vpop.f32.mrb[0].mxu0
      %v3395 = vpop.f32.mrb[0].mxu0
      %v3396 = vadd.f32 0.0, %v3395
      %v3397 = vpop.f32.mrb[0].mxu0
      %3398 = vmatprep.mubr.bf16.mxu0 0
      %3399 = vmatmul.mubr.bf16.gmra.mrb[0].mxu0 %v3201
      %v3400 = vpop.f32.mrb[0].mxu0
      %v3401 = vadd.f32 0.0, %v3400
      %v3402 = vpop.f32.mrb[0].mxu0
      %v3403 = vpop.f32.mrb[0].mxu0
      %v3404 = vadd.f32 0.0, %v3403
      %v3405 = vpop.f32.mrb[0].mxu0
      %3406 = vmatprep.mubr.bf16.mxu0 0
      %3407 = vmatmul.mubr.bf16.gmra.mrb[0].mxu0 %v3202
      %v3408 = vpop.f32.mrb[0].mxu0
      %v3409 = vadd.f32 0.0, %v3408
      %v3410 = vpop.f32.mrb[0].mxu0
      %v3411 = vpop.f32.mrb[0].mxu0
      %v3412 = vadd.f32 0.0, %v3411
      %v3413 = vpop.f32.mrb[0].mxu0
      %3414 = vmatprep.mubr.bf16.mxu0 0
      %3415 = vmatmul.mubr.bf16.gmra.mrb[0].mxu0 %v3203
      %v3416 = vpop.f32.mrb[0].mxu0
      %v3417 = vadd.f32 0.0, %v3416
      %v3418 = vpop.f32.mrb[0].mxu0
      %v3419 = vpop.f32.mrb[0].mxu0
      %v3420 = vadd.f32 0.0, %v3419
      %v3421 = vpop.f32.mrb[0].mxu0
      %3422 = vmatprep.mubr.bf16.mxu0 0
      %3423 = vmatmul.mubr.bf16.gmra.mrb[0].mxu0 %v3204
      %v3424 = vpop.f32.mrb[0].mxu0
      %v3425 = vadd.f32 0.0, %v3424
      %v3426 = vpop.f32.mrb[0].mxu0
      %v3427 = vpop.f32.mrb[0].mxu0
      %v3428 = vadd.f32 0.0, %v3427
      %v3429 = vpop.f32.mrb[0].mxu0
      %3430 = vdwg.mxu0
      %v3447 = vunpack.c.l.b16 %v3141
      %v3448 = vunpack.c.l.b16 %v3142
      %v3449 = vunpack.c.l.b16 %v3143
      %v3450 = vunpack.c.l.b16 %v3144
      %v3451 = vunpack.c.l.b16 %v3145
      %v3452 = vunpack.c.l.b16 %v3146
      %v3453 = vunpack.c.l.b16 %v3147
      %v3454 = vunpack.c.l.b16 %v3148
      %v3455 = vunpack.c.l.b16 %v3149
      %v3456 = vunpack.c.l.b16 %v3150
      %v3457 = vunpack.c.l.b16 %v3151
      %v3458 = vunpack.c.l.b16 %v3152
      %v3459 = vunpack.c.l.b16 %v3153
      %v3460 = vunpack.c.l.b16 %v3154
      %v3461 = vunpack.c.l.b16 %v3155
      %v3462 = vunpack.c.l.b16 %v3156
      %v3463 = vpack.c.b16 %v3448, %v3447
      %v3464 = vpack.c.b16 %v3450, %v3449
      %v3465 = vpack.c.b16 %v3452, %v3451
      %v3466 = vpack.c.b16 %v3454, %v3453
      %v3467 = vpack.c.b16 %v3456, %v3455
      %v3468 = vpack.c.b16 %v3458, %v3457
      %v3469 = vpack.c.b16 %v3460, %v3459
      %v3470 = vpack.c.b16 %v3462, %v3461
      %3479 = vmatprep.subr.bf16.mxu0 0
      %3480 = vmatpush1.bf16.msra.mxu0 %v3463
      %3481 = vmatprep.subr.bf16.mxu0 0
      %3482 = vmatpush1.bf16.msra.mxu0 %v3464
      %3483 = vmatprep.subr.bf16.mxu0 0
      %3484 = vmatpush1.bf16.msra.mxu0 %v3465
      %3485 = vmatprep.subr.bf16.mxu0 0
      %3486 = vmatpush1.bf16.msra.mxu0 %v3466
      %3487 = vmatprep.subr.bf16.mxu0 0
      %3488 = vmatpush1.bf16.msra.mxu0 %v3467
      %3489 = vmatprep.subr.bf16.mxu0 0
      %3490 = vmatpush1.bf16.msra.mxu0 %v3468
      %3491 = vmatprep.subr.bf16.mxu0 0
      %3492 = vmatpush1.bf16.msra.mxu0 %v3469
      %3493 = vmatprep.subr.bf16.mxu0 0
      %3494 = vmatpush1.bf16.msra.mxu0 %v3470
      %3495 = vmatprep.subr.bf16.mxu0 0
      %3496 = vmatpush1.bf16.msra.mxu0 0
      %3497 = vmatprep.subr.bf16.mxu0 0
      %3498 = vmatpush1.bf16.msra.mxu0 0
      %3499 = vmatprep.subr.bf16.mxu0 0
      %3500 = vmatpush1.bf16.msra.mxu0 0
      %3501 = vmatprep.subr.bf16.mxu0 0
      %3502 = vmatpush1.bf16.msra.mxu0 0
      %3503 = vmatprep.subr.bf16.mxu0 0
      %3504 = vmatpush1.bf16.msra.mxu0 0
      %3505 = vmatprep.subr.bf16.mxu0 0
      %3506 = vmatpush1.bf16.msra.mxu0 0
      %3507 = vmatprep.subr.bf16.mxu0 0
      %3508 = vmatpush1.bf16.msra.mxu0 0
      %3509 = vmatprep.subr.bf16.mxu0 0
      %3510 = vmatpush1.bf16.msra.mxu0 0
      %3511 = vmatprep.mubr.bf16.mxu0 0
      %3512 = vmatmul.mubr.bf16.gmra.mrb[0].mxu0 %v3125
      %v3513 = vpop.f32.mrb[0].mxu0
      %v3514 = vadd.f32 %v3305, %v3513
      %v3515 = vpop.f32.mrb[0].mxu0
      %v3516 = vpop.f32.mrb[0].mxu0
      %v3517 = vadd.f32 %v3308, %v3516
      %v3518 = vpop.f32.mrb[0].mxu0
      %3519 = vmatprep.mubr.bf16.mxu0 0
      %3520 = vmatmul.mubr.bf16.gmra.mrb[0].mxu0 %v3126
      %v3521 = vpop.f32.mrb[0].mxu0
      %v3522 = vadd.f32 %v3313, %v3521
      %v3523 = vpop.f32.mrb[0].mxu0
      %v3524 = vpop.f32.mrb[0].mxu0
      %v3525 = vadd.f32 %v3316, %v3524
      %v3526 = vpop.f32.mrb[0].mxu0
      %3527 = vmatprep.mubr.bf16.mxu0 0
      %3528 = vmatmul.mubr.bf16.gmra.mrb[0].mxu0 %v3127
      %v3529 = vpop.f32.mrb[0].mxu0
      %v3530 = vadd.f32 %v3321, %v3529
      %v3531 = vpop.f32.mrb[0].mxu0
      %v3532 = vpop.f32.mrb[0].mxu0
      %v3533 = vadd.f32 %v3324, %v3532
      %v3534 = vpop.f32.mrb[0].mxu0
      %3535 = vmatprep.mubr.bf16.mxu0 0
      %3536 = vmatmul.mubr.bf16.gmra.mrb[0].mxu0 %v3128
      %v3537 = vpop.f32.mrb[0].mxu0
      %v3538 = vadd.f32 %v3329, %v3537
      %v3539 = vpop.f32.mrb[0].mxu0
      %v3540 = vpop.f32.mrb[0].mxu0
      %v3541 = vadd.f32 %v3332, %v3540
      %v3542 = vpop.f32.mrb[0].mxu0
      %3543 = vmatprep.mubr.bf16.mxu0 0
      %3544 = vmatmul.mubr.bf16.gmra.mrb[0].mxu0 %v3129
      %v3545 = vpop.f32.mrb[0].mxu0
      %v3546 = vadd.f32 %v3337, %v3545
      %v3547 = vpop.f32.mrb[0].mxu0
      %v3548 = vpop.f32.mrb[0].mxu0
      %v3549 = vadd.f32 %v3340, %v3548
      %v3550 = vpop.f32.mrb[0].mxu0
      %3551 = vmatprep.mubr.bf16.mxu0 0
      %3552 = vmatmul.mubr.bf16.gmra.mrb[0].mxu0 %v3130
      %v3553 = vpop.f32.mrb[0].mxu0
      %v3554 = vadd.f32 %v3345, %v3553
      %v3555 = vpop.f32.mrb[0].mxu0
      %v3556 = vpop.f32.mrb[0].mxu0
      %v3557 = vadd.f32 %v3348, %v3556
      %v3558 = vpop.f32.mrb[0].mxu0
      %3559 = vmatprep.mubr.bf16.mxu0 0
      %3560 = vmatmul.mubr.bf16.gmra.mrb[0].mxu0 %v3131
      %v3561 = vpop.f32.mrb[0].mxu0
      %v3562 = vadd.f32 %v3353, %v3561
      %v3563 = vpop.f32.mrb[0].mxu0
      %v3564 = vpop.f32.mrb[0].mxu0
      %v3565 = vadd.f32 %v3356, %v3564
      %v3566 = vpop.f32.mrb[0].mxu0
      %3567 = vmatprep.mubr.bf16.mxu0 0
      %3568 = vmatmul.mubr.bf16.gmra.mrb[0].mxu0 %v3132
      %v3569 = vpop.f32.mrb[0].mxu0
      %v3570 = vadd.f32 %v3361, %v3569
      %v3571 = vpop.f32.mrb[0].mxu0
      %v3572 = vpop.f32.mrb[0].mxu0
      %v3573 = vadd.f32 %v3364, %v3572
      %v3574 = vpop.f32.mrb[0].mxu0
      %3575 = vmatprep.mubr.bf16.mxu0 0
      %3576 = vmatmul.mubr.bf16.gmra.mrb[0].mxu0 %v3133
      %v3577 = vpop.f32.mrb[0].mxu0
      %v3578 = vadd.f32 %v3369, %v3577
      %v3579 = vpop.f32.mrb[0].mxu0
      %v3580 = vpop.f32.mrb[0].mxu0
      %v3581 = vadd.f32 %v3372, %v3580
      %v3582 = vpop.f32.mrb[0].mxu0
      %3583 = vmatprep.mubr.bf16.mxu0 0
      %3584 = vmatmul.mubr.bf16.gmra.mrb[0].mxu0 %v3134
      %v3585 = vpop.f32.mrb[0].mxu0
      %v3586 = vadd.f32 %v3377, %v3585
      %v3587 = vpop.f32.mrb[0].mxu0
      %v3588 = vpop.f32.mrb[0].mxu0
      %v3589 = vadd.f32 %v3380, %v3588
      %v3590 = vpop.f32.mrb[0].mxu0
      %3591 = vmatprep.mubr.bf16.mxu0 0
      %3592 = vmatmul.mubr.bf16.gmra.mrb[0].mxu0 %v3135
      %v3593 = vpop.f32.mrb[0].mxu0
      %v3594 = vadd.f32 %v3385, %v3593
      %v3595 = vpop.f32.mrb[0].mxu0
      %v3596 = vpop.f32.mrb[0].mxu0
      %v3597 = vadd.f32 %v3388, %v3596
      %v3598 = vpop.f32.mrb[0].mxu0
      %3599 = vmatprep.mubr.bf16.mxu0 0
      %3600 = vmatmul.mubr.bf16.gmra.mrb[0].mxu0 %v3136
      %v3601 = vpop.f32.mrb[0].mxu0
      %v3602 = vadd.f32 %v3393, %v3601
      %v3603 = vpop.f32.mrb[0].mxu0
      %v3604 = vpop.f32.mrb[0].mxu0
      %v3605 = vadd.f32 %v3396, %v3604
      %v3606 = vpop.f32.mrb[0].mxu0
      %3607 = vmatprep.mubr.bf16.mxu0 0
      %3608 = vmatmul.mubr.bf16.gmra.mrb[0].mxu0 %v3137
      %v3609 = vpop.f32.mrb[0].mxu0
      %v3610 = vadd.f32 %v3401, %v3609
      %v3611 = vpop.f32.mrb[0].mxu0
      %v3612 = vpop.f32.mrb[0].mxu0
      %v3613 = vadd.f32 %v3404, %v3612
      %v3614 = vpop.f32.mrb[0].mxu0
      %3615 = vmatprep.mubr.bf16.mxu0 0
      %3616 = vmatmul.mubr.bf16.gmra.mrb[0].mxu0 %v3138
      %v3617 = vpop.f32.mrb[0].mxu0
      %v3618 = vadd.f32 %v3409, %v3617
      %v3619 = vpop.f32.mrb[0].mxu0
      %v3620 = vpop.f32.mrb[0].mxu0
      %v3621 = vadd.f32 %v3412, %v3620
      %v3622 = vpop.f32.mrb[0].mxu0
      %3623 = vmatprep.mubr.bf16.mxu0 0
      %3624 = vmatmul.mubr.bf16.gmra.mrb[0].mxu0 %v3139
      %v3625 = vpop.f32.mrb[0].mxu0
      %v3626 = vadd.f32 %v3417, %v3625
      %v3627 = vpop.f32.mrb[0].mxu0
      %v3628 = vpop.f32.mrb[0].mxu0
      %v3629 = vadd.f32 %v3420, %v3628
      %v3630 = vpop.f32.mrb[0].mxu0
      %3631 = vmatprep.mubr.bf16.mxu0 0
      %3632 = vmatmul.mubr.bf16.gmra.mrb[0].mxu0 %v3140
      %v3633 = vpop.f32.mrb[0].mxu0
      %v3634 = vadd.f32 %v3425, %v3633
      %v3635 = vpop.f32.mrb[0].mxu0
      %v3636 = vpop.f32.mrb[0].mxu0
      %v3637 = vadd.f32 %v3428, %v3636
      %v3638 = vpop.f32.mrb[0].mxu0
      %3639 = vdwg.mxu0
      %v3640 = vld [vmem:[#allocation2 + $0x9] sm:$0xff]
      %v3641 = vld [vmem:[#allocation2 + $0x11] sm:$0xff]
      %v3642 = vld [vmem:[#allocation2 + $0x29] sm:$0xff]
      %v3643 = vld [vmem:[#allocation2 + $0x31] sm:$0xff]
      %v3644 = vld [vmem:[#allocation2 + $0x49] sm:$0xff]
      %v3645 = vld [vmem:[#allocation2 + $0x51] sm:$0xff]
      %v3646 = vld [vmem:[#allocation2 + $0x69] sm:$0xff]
      %v3647 = vld [vmem:[#allocation2 + $0x71] sm:$0xff]
      %v3648 = vld [vmem:[#allocation2 + $0x89] sm:$0xff]
      %v3649 = vld [vmem:[#allocation2 + $0x91] sm:$0xff]
      %v3650 = vld [vmem:[#allocation2 + $0xa9] sm:$0xff]
      %v3651 = vld [vmem:[#allocation2 + $0xb1] sm:$0xff]
      %v3652 = vld [vmem:[#allocation2 + $0xc9] sm:$0xff]
      %v3653 = vld [vmem:[#allocation2 + $0xd1] sm:$0xff]
      %v3654 = vld [vmem:[#allocation2 + $0xe9] sm:$0xff]
      %v3655 = vld [vmem:[#allocation2 + $0xf1] sm:$0xff]
      %v3656 = vld [vmem:[#allocation2 + $0x109] sm:$0xff]
      %v3657 = vld [vmem:[#allocation2 + $0x111] sm:$0xff]
      %v3658 = vld [vmem:[#allocation2 + $0x129] sm:$0xff]
      %v3659 = vld [vmem:[#allocation2 + $0x131] sm:$0xff]
      %v3660 = vld [vmem:[#allocation2 + $0x149] sm:$0xff]
      %v3661 = vld [vmem:[#allocation2 + $0x151] sm:$0xff]
      %v3662 = vld [vmem:[#allocation2 + $0x169] sm:$0xff]
      %v3663 = vld [vmem:[#allocation2 + $0x171] sm:$0xff]
      %v3664 = vld [vmem:[#allocation2 + $0x189] sm:$0xff]
      %v3665 = vld [vmem:[#allocation2 + $0x191] sm:$0xff]
      %v3666 = vld [vmem:[#allocation2 + $0x1a9] sm:$0xff]
      %v3667 = vld [vmem:[#allocation2 + $0x1b1] sm:$0xff]
      %v3668 = vld [vmem:[#allocation2 + $0x1c9] sm:$0xff]
      %v3669 = vld [vmem:[#allocation2 + $0x1d1] sm:$0xff]
      %v3670 = vld [vmem:[#allocation2 + $0x1e9] sm:$0xff]
      %v3671 = vld [vmem:[#allocation2 + $0x1f1] sm:$0xff]
      %v3672 = vpack.c.bf16 %v3641, %v3640
      %v3673 = vpack.c.bf16 %v3643, %v3642
      %v3674 = vpack.c.bf16 %v3645, %v3644
      %v3675 = vpack.c.bf16 %v3647, %v3646
      %v3676 = vpack.c.bf16 %v3649, %v3648
      %v3677 = vpack.c.bf16 %v3651, %v3650
      %v3678 = vpack.c.bf16 %v3653, %v3652
      %v3679 = vpack.c.bf16 %v3655, %v3654
      %v3680 = vpack.c.bf16 %v3657, %v3656
      %v3681 = vpack.c.bf16 %v3659, %v3658
      %v3682 = vpack.c.bf16 %v3661, %v3660
      %v3683 = vpack.c.bf16 %v3663, %v3662
      %v3684 = vpack.c.bf16 %v3665, %v3664
      %v3685 = vpack.c.bf16 %v3667, %v3666
      %v3686 = vpack.c.bf16 %v3669, %v3668
      %v3687 = vpack.c.bf16 %v3671, %v3670
      %s3688 = scalar_lea.vmem %s3, 128
      %v3689 = vld [vmem:[%s3688] sm:$0xf]
      %v3690 = vld [vmem:[%s3688 + $0x4] sm:$0xf]
      %v3691 = vld [vmem:[%s3688 + $0x8] sm:$0xf]
      %v3692 = vld [vmem:[%s3688 + $0xc] sm:$0xf]
      %v3693 = vld [vmem:[%s3688 + $0x10] sm:$0xf]
      %v3694 = vld [vmem:[%s3688 + $0x14] sm:$0xf]
      %v3695 = vld [vmem:[%s3688 + $0x18] sm:$0xf]
      %v3696 = vld [vmem:[%s3688 + $0x1c] sm:$0xf]
      %v3697 = vld [vmem:[%s3688 + $0x20] sm:$0xf]
      %v3698 = vld [vmem:[%s3688 + $0x24] sm:$0xf]
      %v3699 = vld [vmem:[%s3688 + $0x28] sm:$0xf]
      %v3700 = vld [vmem:[%s3688 + $0x2c] sm:$0xf]
      %v3701 = vld [vmem:[%s3688 + $0x30] sm:$0xf]
      %v3702 = vld [vmem:[%s3688 + $0x34] sm:$0xf]
      %v3703 = vld [vmem:[%s3688 + $0x38] sm:$0xf]
      %v3704 = vld [vmem:[%s3688 + $0x3c] sm:$0xf]
      %v3721 = vunpack.c.l.b16 %v3689
      %v3722 = vunpack.c.l.b16 %v3690
      %v3723 = vunpack.c.l.b16 %v3691
      %v3724 = vunpack.c.l.b16 %v3692
      %v3725 = vunpack.c.l.b16 %v3693
      %v3726 = vunpack.c.l.b16 %v3694
      %v3727 = vunpack.c.l.b16 %v3695
      %v3728 = vunpack.c.l.b16 %v3696
      %v3729 = vunpack.c.l.b16 %v3697
      %v3730 = vunpack.c.l.b16 %v3698
      %v3731 = vunpack.c.l.b16 %v3699
      %v3732 = vunpack.c.l.b16 %v3700
      %v3733 = vunpack.c.l.b16 %v3701
      %v3734 = vunpack.c.l.b16 %v3702
      %v3735 = vunpack.c.l.b16 %v3703
      %v3736 = vunpack.c.l.b16 %v3704
      %v3737 = vpack.c.b16 %v3722, %v3721
      %v3738 = vpack.c.b16 %v3724, %v3723
      %v3739 = vpack.c.b16 %v3726, %v3725
      %v3740 = vpack.c.b16 %v3728, %v3727
      %v3741 = vpack.c.b16 %v3730, %v3729
      %v3742 = vpack.c.b16 %v3732, %v3731
      %v3743 = vpack.c.b16 %v3734, %v3733
      %v3744 = vpack.c.b16 %v3736, %v3735
      %3753 = vmatprep.subr.bf16.mxu0 0
      %3754 = vmatpush1.bf16.msra.mxu0 %v3737
      %3755 = vmatprep.subr.bf16.mxu0 0
      %3756 = vmatpush1.bf16.msra.mxu0 %v3738
      %3757 = vmatprep.subr.bf16.mxu0 0
      %3758 = vmatpush1.bf16.msra.mxu0 %v3739
      %3759 = vmatprep.subr.bf16.mxu0 0
      %3760 = vmatpush1.bf16.msra.mxu0 %v3740
      %3761 = vmatprep.subr.bf16.mxu0 0
      %3762 = vmatpush1.bf16.msra.mxu0 %v3741
      %3763 = vmatprep.subr.bf16.mxu0 0
      %3764 = vmatpush1.bf16.msra.mxu0 %v3742
      %3765 = vmatprep.subr.bf16.mxu0 0
      %3766 = vmatpush1.bf16.msra.mxu0 %v3743
      %3767 = vmatprep.subr.bf16.mxu0 0
      %3768 = vmatpush1.bf16.msra.mxu0 %v3744
      %3769 = vmatprep.subr.bf16.mxu0 0
      %3770 = vmatpush1.bf16.msra.mxu0 0
      %3771 = vmatprep.subr.bf16.mxu0 0
      %3772 = vmatpush1.bf16.msra.mxu0 0
      %3773 = vmatprep.subr.bf16.mxu0 0
      %3774 = vmatpush1.bf16.msra.mxu0 0
      %3775 = vmatprep.subr.bf16.mxu0 0
      %3776 = vmatpush1.bf16.msra.mxu0 0
      %3777 = vmatprep.subr.bf16.mxu0 0
      %3778 = vmatpush1.bf16.msra.mxu0 0
      %3779 = vmatprep.subr.bf16.mxu0 0
      %3780 = vmatpush1.bf16.msra.mxu0 0
      %3781 = vmatprep.subr.bf16.mxu0 0
      %3782 = vmatpush1.bf16.msra.mxu0 0
      %3783 = vmatprep.subr.bf16.mxu0 0
      %3784 = vmatpush1.bf16.msra.mxu0 0
      %3785 = vmatprep.mubr.bf16.mxu0 0
      %3786 = vmatmul.mubr.bf16.gmra.mrb[0].mxu0 %v3672
      %v3787 = vpop.f32.mrb[0].mxu0
      %v3788 = vadd.f32 0.0, %v3787
      %v3789 = vpop.f32.mrb[0].mxu0
      %v3790 = vpop.f32.mrb[0].mxu0
      %v3791 = vadd.f32 0.0, %v3790
      %v3792 = vpop.f32.mrb[0].mxu0
      %3793 = vmatprep.mubr.bf16.mxu0 0
      %3794 = vmatmul.mubr.bf16.gmra.mrb[0].mxu0 %v3673
      %v3795 = vpop.f32.mrb[0].mxu0
      %v3796 = vadd.f32 0.0, %v3795
      %v3797 = vpop.f32.mrb[0].mxu0
      %v3798 = vpop.f32.mrb[0].mxu0
      %v3799 = vadd.f32 0.0, %v3798
      %v3800 = vpop.f32.mrb[0].mxu0
      %3801 = vmatprep.mubr.bf16.mxu0 0
      %3802 = vmatmul.mubr.bf16.gmra.mrb[0].mxu0 %v3674
      %v3803 = vpop.f32.mrb[0].mxu0
      %v3804 = vadd.f32 0.0, %v3803
      %v3805 = vpop.f32.mrb[0].mxu0
      %v3806 = vpop.f32.mrb[0].mxu0
      %v3807 = vadd.f32 0.0, %v3806
      %v3808 = vpop.f32.mrb[0].mxu0
      %3809 = vmatprep.mubr.bf16.mxu0 0
      %3810 = vmatmul.mubr.bf16.gmra.mrb[0].mxu0 %v3675
      %v3811 = vpop.f32.mrb[0].mxu0
      %v3812 = vadd.f32 0.0, %v3811
      %v3813 = vpop.f32.mrb[0].mxu0
      %v3814 = vpop.f32.mrb[0].mxu0
      %v3815 = vadd.f32 0.0, %v3814
      %v3816 = vpop.f32.mrb[0].mxu0
      %3817 = vmatprep.mubr.bf16.mxu0 0
      %3818 = vmatmul.mubr.bf16.gmra.mrb[0].mxu0 %v3676
      %v3819 = vpop.f32.mrb[0].mxu0
      %v3820 = vadd.f32 0.0, %v3819
      %v3821 = vpop.f32.mrb[0].mxu0
      %v3822 = vpop.f32.mrb[0].mxu0
      %v3823 = vadd.f32 0.0, %v3822
      %v3824 = vpop.f32.mrb[0].mxu0
      %3825 = vmatprep.mubr.bf16.mxu0 0
      %3826 = vmatmul.mubr.bf16.gmra.mrb[0].mxu0 %v3677
      %v3827 = vpop.f32.mrb[0].mxu0
      %v3828 = vadd.f32 0.0, %v3827
      %v3829 = vpop.f32.mrb[0].mxu0
      %v3830 = vpop.f32.mrb[0].mxu0
      %v3831 = vadd.f32 0.0, %v3830
      %v3832 = vpop.f32.mrb[0].mxu0
      %3833 = vmatprep.mubr.bf16.mxu0 0
      %3834 = vmatmul.mubr.bf16.gmra.mrb[0].mxu0 %v3678
      %v3835 = vpop.f32.mrb[0].mxu0
      %v3836 = vadd.f32 0.0, %v3835
      %v3837 = vpop.f32.mrb[0].mxu0
      %v3838 = vpop.f32.mrb[0].mxu0
      %v3839 = vadd.f32 0.0, %v3838
      %v3840 = vpop.f32.mrb[0].mxu0
      %3841 = vmatprep.mubr.bf16.mxu0 0
      %3842 = vmatmul.mubr.bf16.gmra.mrb[0].mxu0 %v3679
      %v3843 = vpop.f32.mrb[0].mxu0
      %v3844 = vadd.f32 0.0, %v3843
      %v3845 = vpop.f32.mrb[0].mxu0
      %v3846 = vpop.f32.mrb[0].mxu0
      %v3847 = vadd.f32 0.0, %v3846
      %v3848 = vpop.f32.mrb[0].mxu0
      %3849 = vmatprep.mubr.bf16.mxu0 0
      %3850 = vmatmul.mubr.bf16.gmra.mrb[0].mxu0 %v3680
      %v3851 = vpop.f32.mrb[0].mxu0
      %v3852 = vadd.f32 0.0, %v3851
      %v3853 = vpop.f32.mrb[0].mxu0
      %v3854 = vpop.f32.mrb[0].mxu0
      %v3855 = vadd.f32 0.0, %v3854
      %v3856 = vpop.f32.mrb[0].mxu0
      %3857 = vmatprep.mubr.bf16.mxu0 0
      %3858 = vmatmul.mubr.bf16.gmra.mrb[0].mxu0 %v3681
      %v3859 = vpop.f32.mrb[0].mxu0
      %v3860 = vadd.f32 0.0, %v3859
      %v3861 = vpop.f32.mrb[0].mxu0
      %v3862 = vpop.f32.mrb[0].mxu0
      %v3863 = vadd.f32 0.0, %v3862
      %v3864 = vpop.f32.mrb[0].mxu0
      %3865 = vmatprep.mubr.bf16.mxu0 0
      %3866 = vmatmul.mubr.bf16.gmra.mrb[0].mxu0 %v3682
      %v3867 = vpop.f32.mrb[0].mxu0
      %v3868 = vadd.f32 0.0, %v3867
      %v3869 = vpop.f32.mrb[0].mxu0
      %v3870 = vpop.f32.mrb[0].mxu0
      %v3871 = vadd.f32 0.0, %v3870
      %v3872 = vpop.f32.mrb[0].mxu0
      %3873 = vmatprep.mubr.bf16.mxu0 0
      %3874 = vmatmul.mubr.bf16.gmra.mrb[0].mxu0 %v3683
      %v3875 = vpop.f32.mrb[0].mxu0
      %v3876 = vadd.f32 0.0, %v3875
      %v3877 = vpop.f32.mrb[0].mxu0
      %v3878 = vpop.f32.mrb[0].mxu0
      %v3879 = vadd.f32 0.0, %v3878
      %v3880 = vpop.f32.mrb[0].mxu0
      %3881 = vmatprep.mubr.bf16.mxu0 0
      %3882 = vmatmul.mubr.bf16.gmra.mrb[0].mxu0 %v3684
      %v3883 = vpop.f32.mrb[0].mxu0
      %v3884 = vadd.f32 0.0, %v3883
      %v3885 = vpop.f32.mrb[0].mxu0
      %v3886 = vpop.f32.mrb[0].mxu0
      %v3887 = vadd.f32 0.0, %v3886
      %v3888 = vpop.f32.mrb[0].mxu0
      %3889 = vmatprep.mubr.bf16.mxu0 0
      %3890 = vmatmul.mubr.bf16.gmra.mrb[0].mxu0 %v3685
      %v3891 = vpop.f32.mrb[0].mxu0
      %v3892 = vadd.f32 0.0, %v3891
      %v3893 = vpop.f32.mrb[0].mxu0
      %v3894 = vpop.f32.mrb[0].mxu0
      %v3895 = vadd.f32 0.0, %v3894
      %v3896 = vpop.f32.mrb[0].mxu0
      %3897 = vmatprep.mubr.bf16.mxu0 0
      %3898 = vmatmul.mubr.bf16.gmra.mrb[0].mxu0 %v3686
      %v3899 = vpop.f32.mrb[0].mxu0
      %v3900 = vadd.f32 0.0, %v3899
      %v3901 = vpop.f32.mrb[0].mxu0
      %v3902 = vpop.f32.mrb[0].mxu0
      %v3903 = vadd.f32 0.0, %v3902
      %v3904 = vpop.f32.mrb[0].mxu0
      %3905 = vmatprep.mubr.bf16.mxu0 0
      %3906 = vmatmul.mubr.bf16.gmra.mrb[0].mxu0 %v3687
      %v3907 = vpop.f32.mrb[0].mxu0
      %v3908 = vadd.f32 0.0, %v3907
      %v3909 = vpop.f32.mrb[0].mxu0
      %v3910 = vpop.f32.mrb[0].mxu0
      %v3911 = vadd.f32 0.0, %v3910
      %v3912 = vpop.f32.mrb[0].mxu0
      %3913 = vdwg.mxu0
      %v3914 = vadd.f32 %v3514, %v3788
      %v3915 = vadd.f32 %v3517, %v3791
      %v3916 = vadd.f32 %v3522, %v3796
      %v3917 = vadd.f32 %v3525, %v3799
      %v3918 = vadd.f32 %v3530, %v3804
      %v3919 = vadd.f32 %v3533, %v3807
      %v3920 = vadd.f32 %v3538, %v3812
      %v3921 = vadd.f32 %v3541, %v3815
      %v3922 = vadd.f32 %v3546, %v3820
      %v3923 = vadd.f32 %v3549, %v3823
      %v3924 = vadd.f32 %v3554, %v3828
      %v3925 = vadd.f32 %v3557, %v3831
      %v3926 = vadd.f32 %v3562, %v3836
      %v3927 = vadd.f32 %v3565, %v3839
      %v3928 = vadd.f32 %v3570, %v3844
      %v3929 = vadd.f32 %v3573, %v3847
      %v3930 = vadd.f32 %v3578, %v3852
      %v3931 = vadd.f32 %v3581, %v3855
      %v3932 = vadd.f32 %v3586, %v3860
      %v3933 = vadd.f32 %v3589, %v3863
      %v3934 = vadd.f32 %v3594, %v3868
      %v3935 = vadd.f32 %v3597, %v3871
      %v3936 = vadd.f32 %v3602, %v3876
      %v3937 = vadd.f32 %v3605, %v3879
      %v3938 = vadd.f32 %v3610, %v3884
      %v3939 = vadd.f32 %v3613, %v3887
      %v3940 = vadd.f32 %v3618, %v3892
      %v3941 = vadd.f32 %v3621, %v3895
      %v3942 = vadd.f32 %v3626, %v3900
      %v3943 = vadd.f32 %v3629, %v3903
      %v3944 = vadd.f32 %v3634, %v3908
      %v3945 = vadd.f32 %v3637, %v3911
      %v3946 = vld [vmem:[%s3060 + $0x7] sm:$0xff]
      %v3947 = vld [vmem:[%s3060 + $0xf] sm:$0xff]
      %v3948 = vld [vmem:[%s3060 + $0x27] sm:$0xff]
      %v3949 = vld [vmem:[%s3060 + $0x2f] sm:$0xff]
      %v3950 = vld [vmem:[%s3060 + $0x47] sm:$0xff]
      %v3951 = vld [vmem:[%s3060 + $0x4f] sm:$0xff]
      %v3952 = vld [vmem:[%s3060 + $0x67] sm:$0xff]
      %v3953 = vld [vmem:[%s3060 + $0x6f] sm:$0xff]
      %v3954 = vld [vmem:[%s3060 + $0x87] sm:$0xff]
      %v3955 = vld [vmem:[%s3060 + $0x8f] sm:$0xff]
      %v3956 = vld [vmem:[%s3060 + $0xa7] sm:$0xff]
      %v3957 = vld [vmem:[%s3060 + $0xaf] sm:$0xff]
      %v3958 = vld [vmem:[%s3060 + $0xc7] sm:$0xff]
      %v3959 = vld [vmem:[%s3060 + $0xcf] sm:$0xff]
      %v3960 = vld [vmem:[%s3060 + $0xe7] sm:$0xff]
      %v3961 = vld [vmem:[%s3060 + $0xef] sm:$0xff]
      %v3962 = vld [vmem:[%s3060 + $0x107] sm:$0xff]
      %v3963 = vld [vmem:[%s3060 + $0x10f] sm:$0xff]
      %v3964 = vld [vmem:[%s3060 + $0x127] sm:$0xff]
      %v3965 = vld [vmem:[%s3060 + $0x12f] sm:$0xff]
      %v3966 = vld [vmem:[%s3060 + $0x147] sm:$0xff]
      %v3967 = vld [vmem:[%s3060 + $0x14f] sm:$0xff]
      %v3968 = vld [vmem:[%s3060 + $0x167] sm:$0xff]
      %v3969 = vld [vmem:[%s3060 + $0x16f] sm:$0xff]
      %v3970 = vld [vmem:[%s3060 + $0x187] sm:$0xff]
      %v3971 = vld [vmem:[%s3060 + $0x18f] sm:$0xff]
      %v3972 = vld [vmem:[%s3060 + $0x1a7] sm:$0xff]
      %v3973 = vld [vmem:[%s3060 + $0x1af] sm:$0xff]
      %v3974 = vld [vmem:[%s3060 + $0x1c7] sm:$0xff]
      %v3975 = vld [vmem:[%s3060 + $0x1cf] sm:$0xff]
      %v3976 = vld [vmem:[%s3060 + $0x1e7] sm:$0xff]
      %v3977 = vld [vmem:[%s3060 + $0x1ef] sm:$0xff]
      %v3978 = vpack.c.bf16 %v3947, %v3946
      %v3979 = vpack.c.bf16 %v3949, %v3948
      %v3980 = vpack.c.bf16 %v3951, %v3950
      %v3981 = vpack.c.bf16 %v3953, %v3952
      %v3982 = vpack.c.bf16 %v3955, %v3954
      %v3983 = vpack.c.bf16 %v3957, %v3956
      %v3984 = vpack.c.bf16 %v3959, %v3958
      %v3985 = vpack.c.bf16 %v3961, %v3960
      %v3986 = vpack.c.bf16 %v3963, %v3962
      %v3987 = vpack.c.bf16 %v3965, %v3964
      %v3988 = vpack.c.bf16 %v3967, %v3966
      %v3989 = vpack.c.bf16 %v3969, %v3968
      %v3990 = vpack.c.bf16 %v3971, %v3970
      %v3991 = vpack.c.bf16 %v3973, %v3972
      %v3992 = vpack.c.bf16 %v3975, %v3974
      %v3993 = vpack.c.bf16 %v3977, %v3976
      %s3994 = scalar_lea.vmem %s3, 192
      %v3995 = vld [vmem:[%s3994] sm:$0xf]
      %v3996 = vld [vmem:[%s3994 + $0x4] sm:$0xf]
      %v3997 = vld [vmem:[%s3994 + $0x8] sm:$0xf]
      %v3998 = vld [vmem:[%s3994 + $0xc] sm:$0xf]
      %v3999 = vld [vmem:[%s3994 + $0x10] sm:$0xf]
      %v4000 = vld [vmem:[%s3994 + $0x14] sm:$0xf]
      %v4001 = vld [vmem:[%s3994 + $0x18] sm:$0xf]
      %v4002 = vld [vmem:[%s3994 + $0x1c] sm:$0xf]
      %v4003 = vld [vmem:[%s3994 + $0x20] sm:$0xf]
      %v4004 = vld [vmem:[%s3994 + $0x24] sm:$0xf]
      %v4005 = vld [vmem:[%s3994 + $0x28] sm:$0xf]
      %v4006 = vld [vmem:[%s3994 + $0x2c] sm:$0xf]
      %v4007 = vld [vmem:[%s3994 + $0x30] sm:$0xf]
      %v4008 = vld [vmem:[%s3994 + $0x34] sm:$0xf]
      %v4009 = vld [vmem:[%s3994 + $0x38] sm:$0xf]
      %v4010 = vld [vmem:[%s3994 + $0x3c] sm:$0xf]
      %v4027 = vunpack.c.l.b16 %v3995
      %v4028 = vunpack.c.l.b16 %v3996
      %v4029 = vunpack.c.l.b16 %v3997
      %v4030 = vunpack.c.l.b16 %v3998
      %v4031 = vunpack.c.l.b16 %v3999
      %v4032 = vunpack.c.l.b16 %v4000
      %v4033 = vunpack.c.l.b16 %v4001
      %v4034 = vunpack.c.l.b16 %v4002
      %v4035 = vunpack.c.l.b16 %v4003
      %v4036 = vunpack.c.l.b16 %v4004
      %v4037 = vunpack.c.l.b16 %v4005
      %v4038 = vunpack.c.l.b16 %v4006
      %v4039 = vunpack.c.l.b16 %v4007
      %v4040 = vunpack.c.l.b16 %v4008
      %v4041 = vunpack.c.l.b16 %v4009
      %v4042 = vunpack.c.l.b16 %v4010
      %v4043 = vpack.c.b16 %v4028, %v4027
      %v4044 = vpack.c.b16 %v4030, %v4029
      %v4045 = vpack.c.b16 %v4032, %v4031
      %v4046 = vpack.c.b16 %v4034, %v4033
      %v4047 = vpack.c.b16 %v4036, %v4035
      %v4048 = vpack.c.b16 %v4038, %v4037
      %v4049 = vpack.c.b16 %v4040, %v4039
      %v4050 = vpack.c.b16 %v4042, %v4041
      %4059 = vmatprep.subr.bf16.mxu0 0
      %4060 = vmatpush1.bf16.msra.mxu0 %v4043
      %4061 = vmatprep.subr.bf16.mxu0 0
      %4062 = vmatpush1.bf16.msra.mxu0 %v4044
      %4063 = vmatprep.subr.bf16.mxu0 0
      %4064 = vmatpush1.bf16.msra.mxu0 %v4045
      %4065 = vmatprep.subr.bf16.mxu0 0
      %4066 = vmatpush1.bf16.msra.mxu0 %v4046
      %4067 = vmatprep.subr.bf16.mxu0 0
      %4068 = vmatpush1.bf16.msra.mxu0 %v4047
      %4069 = vmatprep.subr.bf16.mxu0 0
      %4070 = vmatpush1.bf16.msra.mxu0 %v4048
      %4071 = vmatprep.subr.bf16.mxu0 0
      %4072 = vmatpush1.bf16.msra.mxu0 %v4049
      %4073 = vmatprep.subr.bf16.mxu0 0
      %4074 = vmatpush1.bf16.msra.mxu0 %v4050
      %4075 = vmatprep.subr.bf16.mxu0 0
      %4076 = vmatpush1.bf16.msra.mxu0 0
      %4077 = vmatprep.subr.bf16.mxu0 0
      %4078 = vmatpush1.bf16.msra.mxu0 0
      %4079 = vmatprep.subr.bf16.mxu0 0
      %4080 = vmatpush1.bf16.msra.mxu0 0
      %4081 = vmatprep.subr.bf16.mxu0 0
      %4082 = vmatpush1.bf16.msra.mxu0 0
      %4083 = vmatprep.subr.bf16.mxu0 0
      %4084 = vmatpush1.bf16.msra.mxu0 0
      %4085 = vmatprep.subr.bf16.mxu0 0
      %4086 = vmatpush1.bf16.msra.mxu0 0
      %4087 = vmatprep.subr.bf16.mxu0 0
      %4088 = vmatpush1.bf16.msra.mxu0 0
      %4089 = vmatprep.subr.bf16.mxu0 0
      %4090 = vmatpush1.bf16.msra.mxu0 0
      %4091 = vmatprep.mubr.bf16.mxu0 0
      %4092 = vmatmul.mubr.bf16.gmra.mrb[0].mxu0 %v3978
      %v4093 = vpop.f32.mrb[0].mxu0
      %v4094 = vadd.f32 0.0, %v4093
      %v4095 = vpop.f32.mrb[0].mxu0
      %v4096 = vpop.f32.mrb[0].mxu0
      %v4097 = vadd.f32 0.0, %v4096
      %v4098 = vpop.f32.mrb[0].mxu0
      %4099 = vmatprep.mubr.bf16.mxu0 0
      %4100 = vmatmul.mubr.bf16.gmra.mrb[0].mxu0 %v3979
      %v4101 = vpop.f32.mrb[0].mxu0
      %v4102 = vadd.f32 0.0, %v4101
      %v4103 = vpop.f32.mrb[0].mxu0
      %v4104 = vpop.f32.mrb[0].mxu0
      %v4105 = vadd.f32 0.0, %v4104
      %v4106 = vpop.f32.mrb[0].mxu0
      %4107 = vmatprep.mubr.bf16.mxu0 0
      %4108 = vmatmul.mubr.bf16.gmra.mrb[0].mxu0 %v3980
      %v4109 = vpop.f32.mrb[0].mxu0
      %v4110 = vadd.f32 0.0, %v4109
      %v4111 = vpop.f32.mrb[0].mxu0
      %v4112 = vpop.f32.mrb[0].mxu0
      %v4113 = vadd.f32 0.0, %v4112
      %v4114 = vpop.f32.mrb[0].mxu0
      %4115 = vmatprep.mubr.bf16.mxu0 0
      %4116 = vmatmul.mubr.bf16.gmra.mrb[0].mxu0 %v3981
      %v4117 = vpop.f32.mrb[0].mxu0
      %v4118 = vadd.f32 0.0, %v4117
      %v4119 = vpop.f32.mrb[0].mxu0
      %v4120 = vpop.f32.mrb[0].mxu0
      %v4121 = vadd.f32 0.0, %v4120
      %v4122 = vpop.f32.mrb[0].mxu0
      %4123 = vmatprep.mubr.bf16.mxu0 0
      %4124 = vmatmul.mubr.bf16.gmra.mrb[0].mxu0 %v3982
      %v4125 = vpop.f32.mrb[0].mxu0
      %v4126 = vadd.f32 0.0, %v4125
      %v4127 = vpop.f32.mrb[0].mxu0
      %v4128 = vpop.f32.mrb[0].mxu0
      %v4129 = vadd.f32 0.0, %v4128
      %v4130 = vpop.f32.mrb[0].mxu0
      %4131 = vmatprep.mubr.bf16.mxu0 0
      %4132 = vmatmul.mubr.bf16.gmra.mrb[0].mxu0 %v3983
      %v4133 = vpop.f32.mrb[0].mxu0
      %v4134 = vadd.f32 0.0, %v4133
      %v4135 = vpop.f32.mrb[0].mxu0
      %v4136 = vpop.f32.mrb[0].mxu0
      %v4137 = vadd.f32 0.0, %v4136
      %v4138 = vpop.f32.mrb[0].mxu0
      %4139 = vmatprep.mubr.bf16.mxu0 0
      %4140 = vmatmul.mubr.bf16.gmra.mrb[0].mxu0 %v3984
      %v4141 = vpop.f32.mrb[0].mxu0
      %v4142 = vadd.f32 0.0, %v4141
      %v4143 = vpop.f32.mrb[0].mxu0
      %v4144 = vpop.f32.mrb[0].mxu0
      %v4145 = vadd.f32 0.0, %v4144
      %v4146 = vpop.f32.mrb[0].mxu0
      %4147 = vmatprep.mubr.bf16.mxu0 0
      %4148 = vmatmul.mubr.bf16.gmra.mrb[0].mxu0 %v3985
      %v4149 = vpop.f32.mrb[0].mxu0
      %v4150 = vadd.f32 0.0, %v4149
      %v4151 = vpop.f32.mrb[0].mxu0
      %v4152 = vpop.f32.mrb[0].mxu0
      %v4153 = vadd.f32 0.0, %v4152
      %v4154 = vpop.f32.mrb[0].mxu0
      %4155 = vmatprep.mubr.bf16.mxu0 0
      %4156 = vmatmul.mubr.bf16.gmra.mrb[0].mxu0 %v3986
      %v4157 = vpop.f32.mrb[0].mxu0
      %v4158 = vadd.f32 0.0, %v4157
      %v4159 = vpop.f32.mrb[0].mxu0
      %v4160 = vpop.f32.mrb[0].mxu0
      %v4161 = vadd.f32 0.0, %v4160
      %v4162 = vpop.f32.mrb[0].mxu0
      %4163 = vmatprep.mubr.bf16.mxu0 0
      %4164 = vmatmul.mubr.bf16.gmra.mrb[0].mxu0 %v3987
      %v4165 = vpop.f32.mrb[0].mxu0
      %v4166 = vadd.f32 0.0, %v4165
      %v4167 = vpop.f32.mrb[0].mxu0
      %v4168 = vpop.f32.mrb[0].mxu0
      %v4169 = vadd.f32 0.0, %v4168
      %v4170 = vpop.f32.mrb[0].mxu0
      %4171 = vmatprep.mubr.bf16.mxu0 0
      %4172 = vmatmul.mubr.bf16.gmra.mrb[0].mxu0 %v3988
      %v4173 = vpop.f32.mrb[0].mxu0
      %v4174 = vadd.f32 0.0, %v4173
      %v4175 = vpop.f32.mrb[0].mxu0
      %v4176 = vpop.f32.mrb[0].mxu0
      %v4177 = vadd.f32 0.0, %v4176
      %v4178 = vpop.f32.mrb[0].mxu0
      %4179 = vmatprep.mubr.bf16.mxu0 0
      %4180 = vmatmul.mubr.bf16.gmra.mrb[0].mxu0 %v3989
      %v4181 = vpop.f32.mrb[0].mxu0
      %v4182 = vadd.f32 0.0, %v4181
      %v4183 = vpop.f32.mrb[0].mxu0
      %v4184 = vpop.f32.mrb[0].mxu0
      %v4185 = vadd.f32 0.0, %v4184
      %v4186 = vpop.f32.mrb[0].mxu0
      %4187 = vmatprep.mubr.bf16.mxu0 0
      %4188 = vmatmul.mubr.bf16.gmra.mrb[0].mxu0 %v3990
      %v4189 = vpop.f32.mrb[0].mxu0
      %v4190 = vadd.f32 0.0, %v4189
      %v4191 = vpop.f32.mrb[0].mxu0
      %v4192 = vpop.f32.mrb[0].mxu0
      %v4193 = vadd.f32 0.0, %v4192
      %v4194 = vpop.f32.mrb[0].mxu0
      %4195 = vmatprep.mubr.bf16.mxu0 0
      %4196 = vmatmul.mubr.bf16.gmra.mrb[0].mxu0 %v3991
      %v4197 = vpop.f32.mrb[0].mxu0
      %v4198 = vadd.f32 0.0, %v4197
      %v4199 = vpop.f32.mrb[0].mxu0
      %v4200 = vpop.f32.mrb[0].mxu0
      %v4201 = vadd.f32 0.0, %v4200
      %v4202 = vpop.f32.mrb[0].mxu0
      %4203 = vmatprep.mubr.bf16.mxu0 0
      %4204 = vmatmul.mubr.bf16.gmra.mrb[0].mxu0 %v3992
      %v4205 = vpop.f32.mrb[0].mxu0
      %v4206 = vadd.f32 0.0, %v4205
      %v4207 = vpop.f32.mrb[0].mxu0
      %v4208 = vpop.f32.mrb[0].mxu0
      %v4209 = vadd.f32 0.0, %v4208
      %v4210 = vpop.f32.mrb[0].mxu0
      %4211 = vmatprep.mubr.bf16.mxu0 0
      %4212 = vmatmul.mubr.bf16.gmra.mrb[0].mxu0 %v3993
      %v4213 = vpop.f32.mrb[0].mxu0
      %v4214 = vadd.f32 0.0, %v4213
      %v4215 = vpop.f32.mrb[0].mxu0
      %v4216 = vpop.f32.mrb[0].mxu0
      %v4217 = vadd.f32 0.0, %v4216
      %v4218 = vpop.f32.mrb[0].mxu0
      %4219 = vdwg.mxu0
      %v4220 = vadd.f32 %v3914, %v4094
      %v4221 = vadd.f32 %v3915, %v4097
      %v4222 = vadd.f32 %v3916, %v4102
      %v4223 = vadd.f32 %v3917, %v4105
      %v4224 = vadd.f32 %v3918, %v4110
      %v4225 = vadd.f32 %v3919, %v4113
      %v4226 = vadd.f32 %v3920, %v4118
      %v4227 = vadd.f32 %v3921, %v4121
      %v4228 = vadd.f32 %v3922, %v4126
      %v4229 = vadd.f32 %v3923, %v4129
      %v4230 = vadd.f32 %v3924, %v4134
      %v4231 = vadd.f32 %v3925, %v4137
      %v4232 = vadd.f32 %v3926, %v4142
      %v4233 = vadd.f32 %v3927, %v4145
      %v4234 = vadd.f32 %v3928, %v4150
      %v4235 = vadd.f32 %v3929, %v4153
      %v4236 = vadd.f32 %v3930, %v4158
      %v4237 = vadd.f32 %v3931, %v4161
      %v4238 = vadd.f32 %v3932, %v4166
      %v4239 = vadd.f32 %v3933, %v4169
      %v4240 = vadd.f32 %v3934, %v4174
      %v4241 = vadd.f32 %v3935, %v4177
      %v4242 = vadd.f32 %v3936, %v4182
      %v4243 = vadd.f32 %v3937, %v4185
      %v4244 = vadd.f32 %v3938, %v4190
      %v4245 = vadd.f32 %v3939, %v4193
      %v4246 = vadd.f32 %v3940, %v4198
      %v4247 = vadd.f32 %v3941, %v4201
      %v4248 = vadd.f32 %v3942, %v4206
      %v4249 = vadd.f32 %v3943, %v4209
      %v4250 = vadd.f32 %v3944, %v4214
      %v4251 = vadd.f32 %v3945, %v4217
      %v4252 = vld [vmem:[%s3060 + $0x8] sm:$0xff]
      %v4253 = vld [vmem:[%s3060 + $0x10] sm:$0xff]
      %v4254 = vld [vmem:[%s3060 + $0x28] sm:$0xff]
      %v4255 = vld [vmem:[%s3060 + $0x30] sm:$0xff]
      %v4256 = vld [vmem:[%s3060 + $0x48] sm:$0xff]
      %v4257 = vld [vmem:[%s3060 + $0x50] sm:$0xff]
      %v4258 = vld [vmem:[%s3060 + $0x68] sm:$0xff]
      %v4259 = vld [vmem:[%s3060 + $0x70] sm:$0xff]
      %v4260 = vld [vmem:[%s3060 + $0x88] sm:$0xff]
      %v4261 = vld [vmem:[%s3060 + $0x90] sm:$0xff]
      %v4262 = vld [vmem:[%s3060 + $0xa8] sm:$0xff]
      %v4263 = vld [vmem:[%s3060 + $0xb0] sm:$0xff]
      %v4264 = vld [vmem:[%s3060 + $0xc8] sm:$0xff]
      %v4265 = vld [vmem:[%s3060 + $0xd0] sm:$0xff]
      %v4266 = vld [vmem:[%s3060 + $0xe8] sm:$0xff]
      %v4267 = vld [vmem:[%s3060 + $0xf0] sm:$0xff]
      %v4268 = vld [vmem:[%s3060 + $0x108] sm:$0xff]
      %v4269 = vld [vmem:[%s3060 + $0x110] sm:$0xff]
      %v4270 = vld [vmem:[%s3060 + $0x128] sm:$0xff]
      %v4271 = vld [vmem:[%s3060 + $0x130] sm:$0xff]
      %v4272 = vld [vmem:[%s3060 + $0x148] sm:$0xff]
      %v4273 = vld [vmem:[%s3060 + $0x150] sm:$0xff]
      %v4274 = vld [vmem:[%s3060 + $0x168] sm:$0xff]
      %v4275 = vld [vmem:[%s3060 + $0x170] sm:$0xff]
      %v4276 = vld [vmem:[%s3060 + $0x188] sm:$0xff]
      %v4277 = vld [vmem:[%s3060 + $0x190] sm:$0xff]
      %v4278 = vld [vmem:[%s3060 + $0x1a8] sm:$0xff]
      %v4279 = vld [vmem:[%s3060 + $0x1b0] sm:$0xff]
      %v4280 = vld [vmem:[%s3060 + $0x1c8] sm:$0xff]
      %v4281 = vld [vmem:[%s3060 + $0x1d0] sm:$0xff]
      %v4282 = vld [vmem:[%s3060 + $0x1e8] sm:$0xff]
      %v4283 = vld [vmem:[%s3060 + $0x1f0] sm:$0xff]
      %v4284 = vpack.c.bf16 %v4253, %v4252
      %v4285 = vpack.c.bf16 %v4255, %v4254
      %v4286 = vpack.c.bf16 %v4257, %v4256
      %v4287 = vpack.c.bf16 %v4259, %v4258
      %v4288 = vpack.c.bf16 %v4261, %v4260
      %v4289 = vpack.c.bf16 %v4263, %v4262
      %v4290 = vpack.c.bf16 %v4265, %v4264
      %v4291 = vpack.c.bf16 %v4267, %v4266
      %v4292 = vpack.c.bf16 %v4269, %v4268
      %v4293 = vpack.c.bf16 %v4271, %v4270
      %v4294 = vpack.c.bf16 %v4273, %v4272
      %v4295 = vpack.c.bf16 %v4275, %v4274
      %v4296 = vpack.c.bf16 %v4277, %v4276
      %v4297 = vpack.c.bf16 %v4279, %v4278
      %v4298 = vpack.c.bf16 %v4281, %v4280
      %v4299 = vpack.c.bf16 %v4283, %v4282
      %s4300 = scalar_lea.vmem %s3, 256
      %v4301 = vld [vmem:[%s4300] sm:$0xf]
      %v4302 = vld [vmem:[%s4300 + $0x4] sm:$0xf]
      %v4303 = vld [vmem:[%s4300 + $0x8] sm:$0xf]
      %v4304 = vld [vmem:[%s4300 + $0xc] sm:$0xf]
      %v4305 = vld [vmem:[%s4300 + $0x10] sm:$0xf]
      %v4306 = vld [vmem:[%s4300 + $0x14] sm:$0xf]
      %v4307 = vld [vmem:[%s4300 + $0x18] sm:$0xf]
      %v4308 = vld [vmem:[%s4300 + $0x1c] sm:$0xf]
      %v4309 = vld [vmem:[%s4300 + $0x20] sm:$0xf]
      %v4310 = vld [vmem:[%s4300 + $0x24] sm:$0xf]
      %v4311 = vld [vmem:[%s4300 + $0x28] sm:$0xf]
      %v4312 = vld [vmem:[%s4300 + $0x2c] sm:$0xf]
      %v4313 = vld [vmem:[%s4300 + $0x30] sm:$0xf]
      %v4314 = vld [vmem:[%s4300 + $0x34] sm:$0xf]
      %v4315 = vld [vmem:[%s4300 + $0x38] sm:$0xf]
      %v4316 = vld [vmem:[%s4300 + $0x3c] sm:$0xf]
      %v4333 = vunpack.c.l.b16 %v4301
      %v4334 = vunpack.c.l.b16 %v4302
      %v4335 = vunpack.c.l.b16 %v4303
      %v4336 = vunpack.c.l.b16 %v4304
      %v4337 = vunpack.c.l.b16 %v4305
      %v4338 = vunpack.c.l.b16 %v4306
      %v4339 = vunpack.c.l.b16 %v4307
      %v4340 = vunpack.c.l.b16 %v4308
      %v4341 = vunpack.c.l.b16 %v4309
      %v4342 = vunpack.c.l.b16 %v4310
      %v4343 = vunpack.c.l.b16 %v4311
      %v4344 = vunpack.c.l.b16 %v4312
      %v4345 = vunpack.c.l.b16 %v4313
      %v4346 = vunpack.c.l.b16 %v4314
      %v4347 = vunpack.c.l.b16 %v4315
      %v4348 = vunpack.c.l.b16 %v4316
      %v4349 = vpack.c.b16 %v4334, %v4333
      %v4350 = vpack.c.b16 %v4336, %v4335
      %v4351 = vpack.c.b16 %v4338, %v4337
      %v4352 = vpack.c.b16 %v4340, %v4339
      %v4353 = vpack.c.b16 %v4342, %v4341
      %v4354 = vpack.c.b16 %v4344, %v4343
      %v4355 = vpack.c.b16 %v4346, %v4345
      %v4356 = vpack.c.b16 %v4348, %v4347
      %4365 = vmatprep.subr.bf16.mxu0 0
      %4366 = vmatpush1.bf16.msra.mxu0 %v4349
      %4367 = vmatprep.subr.bf16.mxu0 0
      %4368 = vmatpush1.bf16.msra.mxu0 %v4350
      %4369 = vmatprep.subr.bf16.mxu0 0
      %4370 = vmatpush1.bf16.msra.mxu0 %v4351
      %4371 = vmatprep.subr.bf16.mxu0 0
      %4372 = vmatpush1.bf16.msra.mxu0 %v4352
      %4373 = vmatprep.subr.bf16.mxu0 0
      %4374 = vmatpush1.bf16.msra.mxu0 %v4353
      %4375 = vmatprep.subr.bf16.mxu0 0
      %4376 = vmatpush1.bf16.msra.mxu0 %v4354
      %4377 = vmatprep.subr.bf16.mxu0 0
      %4378 = vmatpush1.bf16.msra.mxu0 %v4355
      %4379 = vmatprep.subr.bf16.mxu0 0
      %4380 = vmatpush1.bf16.msra.mxu0 %v4356
      %4381 = vmatprep.subr.bf16.mxu0 0
      %4382 = vmatpush1.bf16.msra.mxu0 0
      %4383 = vmatprep.subr.bf16.mxu0 0
      %4384 = vmatpush1.bf16.msra.mxu0 0
      %4385 = vmatprep.subr.bf16.mxu0 0
      %4386 = vmatpush1.bf16.msra.mxu0 0
      %4387 = vmatprep.subr.bf16.mxu0 0
      %4388 = vmatpush1.bf16.msra.mxu0 0
      %4389 = vmatprep.subr.bf16.mxu0 0
      %4390 = vmatpush1.bf16.msra.mxu0 0
      %4391 = vmatprep.subr.bf16.mxu0 0
      %4392 = vmatpush1.bf16.msra.mxu0 0
      %4393 = vmatprep.subr.bf16.mxu0 0
      %4394 = vmatpush1.bf16.msra.mxu0 0
      %4395 = vmatprep.subr.bf16.mxu0 0
      %4396 = vmatpush1.bf16.msra.mxu0 0
      %4397 = vmatprep.mubr.bf16.mxu0 0
      %4398 = vmatmul.mubr.bf16.gmra.mrb[0].mxu0 %v4284
      %v4399 = vpop.f32.mrb[0].mxu0
      %v4400 = vadd.f32 0.0, %v4399
      %v4401 = vpop.f32.mrb[0].mxu0
      %v4402 = vpop.f32.mrb[0].mxu0
      %v4403 = vadd.f32 0.0, %v4402
      %v4404 = vpop.f32.mrb[0].mxu0
      %4405 = vmatprep.mubr.bf16.mxu0 0
      %4406 = vmatmul.mubr.bf16.gmra.mrb[0].mxu0 %v4285
      %v4407 = vpop.f32.mrb[0].mxu0
      %v4408 = vadd.f32 0.0, %v4407
      %v4409 = vpop.f32.mrb[0].mxu0
      %v4410 = vpop.f32.mrb[0].mxu0
      %v4411 = vadd.f32 0.0, %v4410
      %v4412 = vpop.f32.mrb[0].mxu0
      %4413 = vmatprep.mubr.bf16.mxu0 0
      %4414 = vmatmul.mubr.bf16.gmra.mrb[0].mxu0 %v4286
      %v4415 = vpop.f32.mrb[0].mxu0
      %v4416 = vadd.f32 0.0, %v4415
      %v4417 = vpop.f32.mrb[0].mxu0
      %v4418 = vpop.f32.mrb[0].mxu0
      %v4419 = vadd.f32 0.0, %v4418
      %v4420 = vpop.f32.mrb[0].mxu0
      %4421 = vmatprep.mubr.bf16.mxu0 0
      %4422 = vmatmul.mubr.bf16.gmra.mrb[0].mxu0 %v4287
      %v4423 = vpop.f32.mrb[0].mxu0
      %v4424 = vadd.f32 0.0, %v4423
      %v4425 = vpop.f32.mrb[0].mxu0
      %v4426 = vpop.f32.mrb[0].mxu0
      %v4427 = vadd.f32 0.0, %v4426
      %v4428 = vpop.f32.mrb[0].mxu0
      %4429 = vmatprep.mubr.bf16.mxu0 0
      %4430 = vmatmul.mubr.bf16.gmra.mrb[0].mxu0 %v4288
      %v4431 = vpop.f32.mrb[0].mxu0
      %v4432 = vadd.f32 0.0, %v4431
      %v4433 = vpop.f32.mrb[0].mxu0
      %v4434 = vpop.f32.mrb[0].mxu0
      %v4435 = vadd.f32 0.0, %v4434
      %v4436 = vpop.f32.mrb[0].mxu0
      %4437 = vmatprep.mubr.bf16.mxu0 0
      %4438 = vmatmul.mubr.bf16.gmra.mrb[0].mxu0 %v4289
      %v4439 = vpop.f32.mrb[0].mxu0
      %v4440 = vadd.f32 0.0, %v4439
      %v4441 = vpop.f32.mrb[0].mxu0
      %v4442 = vpop.f32.mrb[0].mxu0
      %v4443 = vadd.f32 0.0, %v4442
      %v4444 = vpop.f32.mrb[0].mxu0
      %4445 = vmatprep.mubr.bf16.mxu0 0
      %4446 = vmatmul.mubr.bf16.gmra.mrb[0].mxu0 %v4290
      %v4447 = vpop.f32.mrb[0].mxu0
      %v4448 = vadd.f32 0.0, %v4447
      %v4449 = vpop.f32.mrb[0].mxu0
      %v4450 = vpop.f32.mrb[0].mxu0
      %v4451 = vadd.f32 0.0, %v4450
      %v4452 = vpop.f32.mrb[0].mxu0
      %4453 = vmatprep.mubr.bf16.mxu0 0
      %4454 = vmatmul.mubr.bf16.gmra.mrb[0].mxu0 %v4291
      %v4455 = vpop.f32.mrb[0].mxu0
      %v4456 = vadd.f32 0.0, %v4455
      %v4457 = vpop.f32.mrb[0].mxu0
      %v4458 = vpop.f32.mrb[0].mxu0
      %v4459 = vadd.f32 0.0, %v4458
      %v4460 = vpop.f32.mrb[0].mxu0
      %4461 = vmatprep.mubr.bf16.mxu0 0
      %4462 = vmatmul.mubr.bf16.gmra.mrb[0].mxu0 %v4292
      %v4463 = vpop.f32.mrb[0].mxu0
      %v4464 = vadd.f32 0.0, %v4463
      %v4465 = vpop.f32.mrb[0].mxu0
      %v4466 = vpop.f32.mrb[0].mxu0
      %v4467 = vadd.f32 0.0, %v4466
      %v4468 = vpop.f32.mrb[0].mxu0
      %4469 = vmatprep.mubr.bf16.mxu0 0
      %4470 = vmatmul.mubr.bf16.gmra.mrb[0].mxu0 %v4293
      %v4471 = vpop.f32.mrb[0].mxu0
      %v4472 = vadd.f32 0.0, %v4471
      %v4473 = vpop.f32.mrb[0].mxu0
      %v4474 = vpop.f32.mrb[0].mxu0
      %v4475 = vadd.f32 0.0, %v4474
      %v4476 = vpop.f32.mrb[0].mxu0
      %4477 = vmatprep.mubr.bf16.mxu0 0
      %4478 = vmatmul.mubr.bf16.gmra.mrb[0].mxu0 %v4294
      %v4479 = vpop.f32.mrb[0].mxu0
      %v4480 = vadd.f32 0.0, %v4479
      %v4481 = vpop.f32.mrb[0].mxu0
      %v4482 = vpop.f32.mrb[0].mxu0
      %v4483 = vadd.f32 0.0, %v4482
      %v4484 = vpop.f32.mrb[0].mxu0
      %4485 = vmatprep.mubr.bf16.mxu0 0
      %4486 = vmatmul.mubr.bf16.gmra.mrb[0].mxu0 %v4295
      %v4487 = vpop.f32.mrb[0].mxu0
      %v4488 = vadd.f32 0.0, %v4487
      %v4489 = vpop.f32.mrb[0].mxu0
      %v4490 = vpop.f32.mrb[0].mxu0
      %v4491 = vadd.f32 0.0, %v4490
      %v4492 = vpop.f32.mrb[0].mxu0
      %4493 = vmatprep.mubr.bf16.mxu0 0
      %4494 = vmatmul.mubr.bf16.gmra.mrb[0].mxu0 %v4296
      %v4495 = vpop.f32.mrb[0].mxu0
      %v4496 = vadd.f32 0.0, %v4495
      %v4497 = vpop.f32.mrb[0].mxu0
      %v4498 = vpop.f32.mrb[0].mxu0
      %v4499 = vadd.f32 0.0, %v4498
      %v4500 = vpop.f32.mrb[0].mxu0
      %4501 = vmatprep.mubr.bf16.mxu0 0
      %4502 = vmatmul.mubr.bf16.gmra.mrb[0].mxu0 %v4297
      %v4503 = vpop.f32.mrb[0].mxu0
      %v4504 = vadd.f32 0.0, %v4503
      %v4505 = vpop.f32.mrb[0].mxu0
      %v4506 = vpop.f32.mrb[0].mxu0
      %v4507 = vadd.f32 0.0, %v4506
      %v4508 = vpop.f32.mrb[0].mxu0
      %4509 = vmatprep.mubr.bf16.mxu0 0
      %4510 = vmatmul.mubr.bf16.gmra.mrb[0].mxu0 %v4298
      %v4511 = vpop.f32.mrb[0].mxu0
      %v4512 = vadd.f32 0.0, %v4511
      %v4513 = vpop.f32.mrb[0].mxu0
      %v4514 = vpop.f32.mrb[0].mxu0
      %v4515 = vadd.f32 0.0, %v4514
      %v4516 = vpop.f32.mrb[0].mxu0
      %4517 = vmatprep.mubr.bf16.mxu0 0
      %4518 = vmatmul.mubr.bf16.gmra.mrb[0].mxu0 %v4299
      %v4519 = vpop.f32.mrb[0].mxu0
      %v4520 = vadd.f32 0.0, %v4519
      %v4521 = vpop.f32.mrb[0].mxu0
      %v4522 = vpop.f32.mrb[0].mxu0
      %v4523 = vadd.f32 0.0, %v4522
      %v4524 = vpop.f32.mrb[0].mxu0
      %4525 = vdwg.mxu0
      %v4526 = vadd.f32 %v4220, %v4400
      %v4527 = vadd.f32 %v4221, %v4403
      %v4528 = vadd.f32 %v4222, %v4408
      %v4529 = vadd.f32 %v4223, %v4411
      %v4530 = vadd.f32 %v4224, %v4416
      %v4531 = vadd.f32 %v4225, %v4419
      %v4532 = vadd.f32 %v4226, %v4424
      %v4533 = vadd.f32 %v4227, %v4427
      %v4534 = vadd.f32 %v4228, %v4432
      %v4535 = vadd.f32 %v4229, %v4435
      %v4536 = vadd.f32 %v4230, %v4440
      %v4537 = vadd.f32 %v4231, %v4443
      %v4538 = vadd.f32 %v4232, %v4448
      %v4539 = vadd.f32 %v4233, %v4451
      %v4540 = vadd.f32 %v4234, %v4456
      %v4541 = vadd.f32 %v4235, %v4459
      %v4542 = vadd.f32 %v4236, %v4464
      %v4543 = vadd.f32 %v4237, %v4467
      %v4544 = vadd.f32 %v4238, %v4472
      %v4545 = vadd.f32 %v4239, %v4475
      %v4546 = vadd.f32 %v4240, %v4480
      %v4547 = vadd.f32 %v4241, %v4483
      %v4548 = vadd.f32 %v4242, %v4488
      %v4549 = vadd.f32 %v4243, %v4491
      %v4550 = vadd.f32 %v4244, %v4496
      %v4551 = vadd.f32 %v4245, %v4499
      %v4552 = vadd.f32 %v4246, %v4504
      %v4553 = vadd.f32 %v4247, %v4507
      %v4554 = vadd.f32 %v4248, %v4512
      %v4555 = vadd.f32 %v4249, %v4515
      %v4556 = vadd.f32 %v4250, %v4520
      %v4557 = vadd.f32 %v4251, %v4523
      %v4558 = vld [vmem:[%s3060 + $0x9] sm:$0xff]
      %v4559 = vld [vmem:[%s3060 + $0x11] sm:$0xff]
      %v4560 = vld [vmem:[%s3060 + $0x29] sm:$0xff]
      %v4561 = vld [vmem:[%s3060 + $0x31] sm:$0xff]
      %v4562 = vld [vmem:[%s3060 + $0x49] sm:$0xff]
      %v4563 = vld [vmem:[%s3060 + $0x51] sm:$0xff]
      %v4564 = vld [vmem:[%s3060 + $0x69] sm:$0xff]
      %v4565 = vld [vmem:[%s3060 + $0x71] sm:$0xff]
      %v4566 = vld [vmem:[%s3060 + $0x89] sm:$0xff]
      %v4567 = vld [vmem:[%s3060 + $0x91] sm:$0xff]
      %v4568 = vld [vmem:[%s3060 + $0xa9] sm:$0xff]
      %v4569 = vld [vmem:[%s3060 + $0xb1] sm:$0xff]
      %v4570 = vld [vmem:[%s3060 + $0xc9] sm:$0xff]
      %v4571 = vld [vmem:[%s3060 + $0xd1] sm:$0xff]
      %v4572 = vld [vmem:[%s3060 + $0xe9] sm:$0xff]
      %v4573 = vld [vmem:[%s3060 + $0xf1] sm:$0xff]
      %v4574 = vld [vmem:[%s3060 + $0x109] sm:$0xff]
      %v4575 = vld [vmem:[%s3060 + $0x111] sm:$0xff]
      %v4576 = vld [vmem:[%s3060 + $0x129] sm:$0xff]
      %v4577 = vld [vmem:[%s3060 + $0x131] sm:$0xff]
      %v4578 = vld [vmem:[%s3060 + $0x149] sm:$0xff]
      %v4579 = vld [vmem:[%s3060 + $0x151] sm:$0xff]
      %v4580 = vld [vmem:[%s3060 + $0x169] sm:$0xff]
      %v4581 = vld [vmem:[%s3060 + $0x171] sm:$0xff]
      %v4582 = vld [vmem:[%s3060 + $0x189] sm:$0xff]
      %v4583 = vld [vmem:[%s3060 + $0x191] sm:$0xff]
      %v4584 = vld [vmem:[%s3060 + $0x1a9] sm:$0xff]
      %v4585 = vld [vmem:[%s3060 + $0x1b1] sm:$0xff]
      %v4586 = vld [vmem:[%s3060 + $0x1c9] sm:$0xff]
      %v4587 = vld [vmem:[%s3060 + $0x1d1] sm:$0xff]
      %v4588 = vld [vmem:[%s3060 + $0x1e9] sm:$0xff]
      %v4589 = vld [vmem:[%s3060 + $0x1f1] sm:$0xff]
      %v4590 = vpack.c.bf16 %v4559, %v4558
      %v4591 = vpack.c.bf16 %v4561, %v4560
      %v4592 = vpack.c.bf16 %v4563, %v4562
      %v4593 = vpack.c.bf16 %v4565, %v4564
      %v4594 = vpack.c.bf16 %v4567, %v4566
      %v4595 = vpack.c.bf16 %v4569, %v4568
      %v4596 = vpack.c.bf16 %v4571, %v4570
      %v4597 = vpack.c.bf16 %v4573, %v4572
      %v4598 = vpack.c.bf16 %v4575, %v4574
      %v4599 = vpack.c.bf16 %v4577, %v4576
      %v4600 = vpack.c.bf16 %v4579, %v4578
      %v4601 = vpack.c.bf16 %v4581, %v4580
      %v4602 = vpack.c.bf16 %v4583, %v4582
      %v4603 = vpack.c.bf16 %v4585, %v4584
      %v4604 = vpack.c.bf16 %v4587, %v4586
      %v4605 = vpack.c.bf16 %v4589, %v4588
      %s4606 = scalar_lea.vmem %s3, 320
      %v4607 = vld [vmem:[%s4606] sm:$0xf]
      %v4608 = vld [vmem:[%s4606 + $0x4] sm:$0xf]
      %v4609 = vld [vmem:[%s4606 + $0x8] sm:$0xf]
      %v4610 = vld [vmem:[%s4606 + $0xc] sm:$0xf]
      %v4611 = vld [vmem:[%s4606 + $0x10] sm:$0xf]
      %v4612 = vld [vmem:[%s4606 + $0x14] sm:$0xf]
      %v4613 = vld [vmem:[%s4606 + $0x18] sm:$0xf]
      %v4614 = vld [vmem:[%s4606 + $0x1c] sm:$0xf]
      %v4615 = vld [vmem:[%s4606 + $0x20] sm:$0xf]
      %v4616 = vld [vmem:[%s4606 + $0x24] sm:$0xf]
      %v4617 = vld [vmem:[%s4606 + $0x28] sm:$0xf]
      %v4618 = vld [vmem:[%s4606 + $0x2c] sm:$0xf]
      %v4619 = vld [vmem:[%s4606 + $0x30] sm:$0xf]
      %v4620 = vld [vmem:[%s4606 + $0x34] sm:$0xf]
      %v4621 = vld [vmem:[%s4606 + $0x38] sm:$0xf]
      %v4622 = vld [vmem:[%s4606 + $0x3c] sm:$0xf]
      %v4639 = vunpack.c.l.b16 %v4607
      %v4640 = vunpack.c.l.b16 %v4608
      %v4641 = vunpack.c.l.b16 %v4609
      %v4642 = vunpack.c.l.b16 %v4610
      %v4643 = vunpack.c.l.b16 %v4611
      %v4644 = vunpack.c.l.b16 %v4612
      %v4645 = vunpack.c.l.b16 %v4613
      %v4646 = vunpack.c.l.b16 %v4614
      %v4647 = vunpack.c.l.b16 %v4615
      %v4648 = vunpack.c.l.b16 %v4616
      %v4649 = vunpack.c.l.b16 %v4617
      %v4650 = vunpack.c.l.b16 %v4618
      %v4651 = vunpack.c.l.b16 %v4619
      %v4652 = vunpack.c.l.b16 %v4620
      %v4653 = vunpack.c.l.b16 %v4621
      %v4654 = vunpack.c.l.b16 %v4622
      %v4655 = vpack.c.b16 %v4640, %v4639
      %v4656 = vpack.c.b16 %v4642, %v4641
      %v4657 = vpack.c.b16 %v4644, %v4643
      %v4658 = vpack.c.b16 %v4646, %v4645
      %v4659 = vpack.c.b16 %v4648, %v4647
      %v4660 = vpack.c.b16 %v4650, %v4649
      %v4661 = vpack.c.b16 %v4652, %v4651
      %v4662 = vpack.c.b16 %v4654, %v4653
      %4671 = vmatprep.subr.bf16.mxu0 0
      %4672 = vmatpush1.bf16.msra.mxu0 %v4655
      %4673 = vmatprep.subr.bf16.mxu0 0
      %4674 = vmatpush1.bf16.msra.mxu0 %v4656
      %4675 = vmatprep.subr.bf16.mxu0 0
      %4676 = vmatpush1.bf16.msra.mxu0 %v4657
      %4677 = vmatprep.subr.bf16.mxu0 0
      %4678 = vmatpush1.bf16.msra.mxu0 %v4658
      %4679 = vmatprep.subr.bf16.mxu0 0
      %4680 = vmatpush1.bf16.msra.mxu0 %v4659
      %4681 = vmatprep.subr.bf16.mxu0 0
      %4682 = vmatpush1.bf16.msra.mxu0 %v4660
      %4683 = vmatprep.subr.bf16.mxu0 0
      %4684 = vmatpush1.bf16.msra.mxu0 %v4661
      %4685 = vmatprep.subr.bf16.mxu0 0
      %4686 = vmatpush1.bf16.msra.mxu0 %v4662
      %4687 = vmatprep.subr.bf16.mxu0 0
      %4688 = vmatpush1.bf16.msra.mxu0 0
      %4689 = vmatprep.subr.bf16.mxu0 0
      %4690 = vmatpush1.bf16.msra.mxu0 0
      %4691 = vmatprep.subr.bf16.mxu0 0
      %4692 = vmatpush1.bf16.msra.mxu0 0
      %4693 = vmatprep.subr.bf16.mxu0 0
      %4694 = vmatpush1.bf16.msra.mxu0 0
      %4695 = vmatprep.subr.bf16.mxu0 0
      %4696 = vmatpush1.bf16.msra.mxu0 0
      %4697 = vmatprep.subr.bf16.mxu0 0
      %4698 = vmatpush1.bf16.msra.mxu0 0
      %4699 = vmatprep.subr.bf16.mxu0 0
      %4700 = vmatpush1.bf16.msra.mxu0 0
      %4701 = vmatprep.subr.bf16.mxu0 0
      %4702 = vmatpush1.bf16.msra.mxu0 0
      %4703 = vmatprep.mubr.bf16.mxu0 0
      %4704 = vmatmul.mubr.bf16.gmra.mrb[0].mxu0 %v4590
      %v4705 = vpop.f32.mrb[0].mxu0
      %v4706 = vadd.f32 0.0, %v4705
      %v4707 = vpop.f32.mrb[0].mxu0
      %v4708 = vpop.f32.mrb[0].mxu0
      %v4709 = vadd.f32 0.0, %v4708
      %v4710 = vpop.f32.mrb[0].mxu0
      %4711 = vmatprep.mubr.bf16.mxu0 0
      %4712 = vmatmul.mubr.bf16.gmra.mrb[0].mxu0 %v4591
      %v4713 = vpop.f32.mrb[0].mxu0
      %v4714 = vadd.f32 0.0, %v4713
      %v4715 = vpop.f32.mrb[0].mxu0
      %v4716 = vpop.f32.mrb[0].mxu0
      %v4717 = vadd.f32 0.0, %v4716
      %v4718 = vpop.f32.mrb[0].mxu0
      %4719 = vmatprep.mubr.bf16.mxu0 0
      %4720 = vmatmul.mubr.bf16.gmra.mrb[0].mxu0 %v4592
      %v4721 = vpop.f32.mrb[0].mxu0
      %v4722 = vadd.f32 0.0, %v4721
      %v4723 = vpop.f32.mrb[0].mxu0
      %v4724 = vpop.f32.mrb[0].mxu0
      %v4725 = vadd.f32 0.0, %v4724
      %v4726 = vpop.f32.mrb[0].mxu0
      %4727 = vmatprep.mubr.bf16.mxu0 0
      %4728 = vmatmul.mubr.bf16.gmra.mrb[0].mxu0 %v4593
      %v4729 = vpop.f32.mrb[0].mxu0
      %v4730 = vadd.f32 0.0, %v4729
      %v4731 = vpop.f32.mrb[0].mxu0
      %v4732 = vpop.f32.mrb[0].mxu0
      %v4733 = vadd.f32 0.0, %v4732
      %v4734 = vpop.f32.mrb[0].mxu0
      %4735 = vmatprep.mubr.bf16.mxu0 0
      %4736 = vmatmul.mubr.bf16.gmra.mrb[0].mxu0 %v4594
      %v4737 = vpop.f32.mrb[0].mxu0
      %v4738 = vadd.f32 0.0, %v4737
      %v4739 = vpop.f32.mrb[0].mxu0
      %v4740 = vpop.f32.mrb[0].mxu0
      %v4741 = vadd.f32 0.0, %v4740
      %v4742 = vpop.f32.mrb[0].mxu0
      %4743 = vmatprep.mubr.bf16.mxu0 0
      %4744 = vmatmul.mubr.bf16.gmra.mrb[0].mxu0 %v4595
      %v4745 = vpop.f32.mrb[0].mxu0
      %v4746 = vadd.f32 0.0, %v4745
      %v4747 = vpop.f32.mrb[0].mxu0
      %v4748 = vpop.f32.mrb[0].mxu0
      %v4749 = vadd.f32 0.0, %v4748
      %v4750 = vpop.f32.mrb[0].mxu0
      %4751 = vmatprep.mubr.bf16.mxu0 0
      %4752 = vmatmul.mubr.bf16.gmra.mrb[0].mxu0 %v4596
      %v4753 = vpop.f32.mrb[0].mxu0
      %v4754 = vadd.f32 0.0, %v4753
      %v4755 = vpop.f32.mrb[0].mxu0
      %v4756 = vpop.f32.mrb[0].mxu0
      %v4757 = vadd.f32 0.0, %v4756
      %v4758 = vpop.f32.mrb[0].mxu0
      %4759 = vmatprep.mubr.bf16.mxu0 0
      %4760 = vmatmul.mubr.bf16.gmra.mrb[0].mxu0 %v4597
      %v4761 = vpop.f32.mrb[0].mxu0
      %v4762 = vadd.f32 0.0, %v4761
      %v4763 = vpop.f32.mrb[0].mxu0
      %v4764 = vpop.f32.mrb[0].mxu0
      %v4765 = vadd.f32 0.0, %v4764
      %v4766 = vpop.f32.mrb[0].mxu0
      %4767 = vmatprep.mubr.bf16.mxu0 0
      %4768 = vmatmul.mubr.bf16.gmra.mrb[0].mxu0 %v4598
      %v4769 = vpop.f32.mrb[0].mxu0
      %v4770 = vadd.f32 0.0, %v4769
      %v4771 = vpop.f32.mrb[0].mxu0
      %v4772 = vpop.f32.mrb[0].mxu0
      %v4773 = vadd.f32 0.0, %v4772
      %v4774 = vpop.f32.mrb[0].mxu0
      %4775 = vmatprep.mubr.bf16.mxu0 0
      %4776 = vmatmul.mubr.bf16.gmra.mrb[0].mxu0 %v4599
      %v4777 = vpop.f32.mrb[0].mxu0
      %v4778 = vadd.f32 0.0, %v4777
      %v4779 = vpop.f32.mrb[0].mxu0
      %v4780 = vpop.f32.mrb[0].mxu0
      %v4781 = vadd.f32 0.0, %v4780
      %v4782 = vpop.f32.mrb[0].mxu0
      %4783 = vmatprep.mubr.bf16.mxu0 0
      %4784 = vmatmul.mubr.bf16.gmra.mrb[0].mxu0 %v4600
      %v4785 = vpop.f32.mrb[0].mxu0
      %v4786 = vadd.f32 0.0, %v4785
      %v4787 = vpop.f32.mrb[0].mxu0
      %v4788 = vpop.f32.mrb[0].mxu0
      %v4789 = vadd.f32 0.0, %v4788
      %v4790 = vpop.f32.mrb[0].mxu0
      %4791 = vmatprep.mubr.bf16.mxu0 0
      %4792 = vmatmul.mubr.bf16.gmra.mrb[0].mxu0 %v4601
      %v4793 = vpop.f32.mrb[0].mxu0
      %v4794 = vadd.f32 0.0, %v4793
      %v4795 = vpop.f32.mrb[0].mxu0
      %v4796 = vpop.f32.mrb[0].mxu0
      %v4797 = vadd.f32 0.0, %v4796
      %v4798 = vpop.f32.mrb[0].mxu0
      %4799 = vmatprep.mubr.bf16.mxu0 0
      %4800 = vmatmul.mubr.bf16.gmra.mrb[0].mxu0 %v4602
      %v4801 = vpop.f32.mrb[0].mxu0
      %v4802 = vadd.f32 0.0, %v4801
      %v4803 = vpop.f32.mrb[0].mxu0
      %v4804 = vpop.f32.mrb[0].mxu0
      %v4805 = vadd.f32 0.0, %v4804
      %v4806 = vpop.f32.mrb[0].mxu0
      %4807 = vmatprep.mubr.bf16.mxu0 0
      %4808 = vmatmul.mubr.bf16.gmra.mrb[0].mxu0 %v4603
      %v4809 = vpop.f32.mrb[0].mxu0
      %v4810 = vadd.f32 0.0, %v4809
      %v4811 = vpop.f32.mrb[0].mxu0
      %v4812 = vpop.f32.mrb[0].mxu0
      %v4813 = vadd.f32 0.0, %v4812
      %v4814 = vpop.f32.mrb[0].mxu0
      %4815 = vmatprep.mubr.bf16.mxu0 0
      %4816 = vmatmul.mubr.bf16.gmra.mrb[0].mxu0 %v4604
      %v4817 = vpop.f32.mrb[0].mxu0
      %v4818 = vadd.f32 0.0, %v4817
      %v4819 = vpop.f32.mrb[0].mxu0
      %v4820 = vpop.f32.mrb[0].mxu0
      %v4821 = vadd.f32 0.0, %v4820
      %v4822 = vpop.f32.mrb[0].mxu0
      %4823 = vmatprep.mubr.bf16.mxu0 0
      %4824 = vmatmul.mubr.bf16.gmra.mrb[0].mxu0 %v4605
      %v4825 = vpop.f32.mrb[0].mxu0
      %v4826 = vadd.f32 0.0, %v4825
      %v4827 = vpop.f32.mrb[0].mxu0
      %v4828 = vpop.f32.mrb[0].mxu0
      %v4829 = vadd.f32 0.0, %v4828
      %v4830 = vpop.f32.mrb[0].mxu0
      %4831 = vdwg.mxu0
      %v4832 = vadd.f32 %v4526, %v4706
      %v4833 = vadd.f32 %v4527, %v4709
      %v4834 = vadd.f32 %v4528, %v4714
      %v4835 = vadd.f32 %v4529, %v4717
      %v4836 = vadd.f32 %v4530, %v4722
      %v4837 = vadd.f32 %v4531, %v4725
      %v4838 = vadd.f32 %v4532, %v4730
      %v4839 = vadd.f32 %v4533, %v4733
      %v4840 = vadd.f32 %v4534, %v4738
      %v4841 = vadd.f32 %v4535, %v4741
      %v4842 = vadd.f32 %v4536, %v4746
      %v4843 = vadd.f32 %v4537, %v4749
      %v4844 = vadd.f32 %v4538, %v4754
      %v4845 = vadd.f32 %v4539, %v4757
      %v4846 = vadd.f32 %v4540, %v4762
      %v4847 = vadd.f32 %v4541, %v4765
      %v4848 = vadd.f32 %v4542, %v4770
      %v4849 = vadd.f32 %v4543, %v4773
      %v4850 = vadd.f32 %v4544, %v4778
      %v4851 = vadd.f32 %v4545, %v4781
      %v4852 = vadd.f32 %v4546, %v4786
      %v4853 = vadd.f32 %v4547, %v4789
      %v4854 = vadd.f32 %v4548, %v4794
      %v4855 = vadd.f32 %v4549, %v4797
      %v4856 = vadd.f32 %v4550, %v4802
      %v4857 = vadd.f32 %v4551, %v4805
      %v4858 = vadd.f32 %v4552, %v4810
      %v4859 = vadd.f32 %v4553, %v4813
      %v4860 = vadd.f32 %v4554, %v4818
      %v4861 = vadd.f32 %v4555, %v4821
      %v4862 = vadd.f32 %v4556, %v4826
      %v4863 = vadd.f32 %v4557, %v4829
      %s4864 = scalar_lea.vmem [#allocation2], 64
      %v4865 = vld [vmem:[%s4864 + $0x7] sm:$0xff]
      %v4866 = vld [vmem:[%s4864 + $0xf] sm:$0xff]
      %v4867 = vld [vmem:[%s4864 + $0x27] sm:$0xff]
      %v4868 = vld [vmem:[%s4864 + $0x2f] sm:$0xff]
      %v4869 = vld [vmem:[%s4864 + $0x47] sm:$0xff]
      %v4870 = vld [vmem:[%s4864 + $0x4f] sm:$0xff]
      %v4871 = vld [vmem:[%s4864 + $0x67] sm:$0xff]
      %v4872 = vld [vmem:[%s4864 + $0x6f] sm:$0xff]
      %v4873 = vld [vmem:[%s4864 + $0x87] sm:$0xff]
      %v4874 = vld [vmem:[%s4864 + $0x8f] sm:$0xff]
      %v4875 = vld [vmem:[%s4864 + $0xa7] sm:$0xff]
      %v4876 = vld [vmem:[%s4864 + $0xaf] sm:$0xff]
      %v4877 = vld [vmem:[%s4864 + $0xc7] sm:$0xff]
      %v4878 = vld [vmem:[%s4864 + $0xcf] sm:$0xff]
      %v4879 = vld [vmem:[%s4864 + $0xe7] sm:$0xff]
      %v4880 = vld [vmem:[%s4864 + $0xef] sm:$0xff]
      %v4881 = vld [vmem:[%s4864 + $0x107] sm:$0xff]
      %v4882 = vld [vmem:[%s4864 + $0x10f] sm:$0xff]
      %v4883 = vld [vmem:[%s4864 + $0x127] sm:$0xff]
      %v4884 = vld [vmem:[%s4864 + $0x12f] sm:$0xff]
      %v4885 = vld [vmem:[%s4864 + $0x147] sm:$0xff]
      %v4886 = vld [vmem:[%s4864 + $0x14f] sm:$0xff]
      %v4887 = vld [vmem:[%s4864 + $0x167] sm:$0xff]
      %v4888 = vld [vmem:[%s4864 + $0x16f] sm:$0xff]
      %v4889 = vld [vmem:[%s4864 + $0x187] sm:$0xff]
      %v4890 = vld [vmem:[%s4864 + $0x18f] sm:$0xff]
      %v4891 = vld [vmem:[%s4864 + $0x1a7] sm:$0xff]
      %v4892 = vld [vmem:[%s4864 + $0x1af] sm:$0xff]
      %v4893 = vld [vmem:[%s4864 + $0x1c7] sm:$0xff]
      %v4894 = vld [vmem:[%s4864 + $0x1cf] sm:$0xff]
      %v4895 = vld [vmem:[%s4864 + $0x1e7] sm:$0xff]
      %v4896 = vld [vmem:[%s4864 + $0x1ef] sm:$0xff]
      %v4897 = vpack.c.bf16 %v4866, %v4865
      %v4898 = vpack.c.bf16 %v4868, %v4867
      %v4899 = vpack.c.bf16 %v4870, %v4869
      %v4900 = vpack.c.bf16 %v4872, %v4871
      %v4901 = vpack.c.bf16 %v4874, %v4873
      %v4902 = vpack.c.bf16 %v4876, %v4875
      %v4903 = vpack.c.bf16 %v4878, %v4877
      %v4904 = vpack.c.bf16 %v4880, %v4879
      %v4905 = vpack.c.bf16 %v4882, %v4881
      %v4906 = vpack.c.bf16 %v4884, %v4883
      %v4907 = vpack.c.bf16 %v4886, %v4885
      %v4908 = vpack.c.bf16 %v4888, %v4887
      %v4909 = vpack.c.bf16 %v4890, %v4889
      %v4910 = vpack.c.bf16 %v4892, %v4891
      %v4911 = vpack.c.bf16 %v4894, %v4893
      %v4912 = vpack.c.bf16 %v4896, %v4895
      %s4913 = scalar_lea.vmem %s3, 384
      %v4914 = vld [vmem:[%s4913] sm:$0xf]
      %v4915 = vld [vmem:[%s4913 + $0x4] sm:$0xf]
      %v4916 = vld [vmem:[%s4913 + $0x8] sm:$0xf]
      %v4917 = vld [vmem:[%s4913 + $0xc] sm:$0xf]
      %v4918 = vld [vmem:[%s4913 + $0x10] sm:$0xf]
      %v4919 = vld [vmem:[%s4913 + $0x14] sm:$0xf]
      %v4920 = vld [vmem:[%s4913 + $0x18] sm:$0xf]
      %v4921 = vld [vmem:[%s4913 + $0x1c] sm:$0xf]
      %v4922 = vld [vmem:[%s4913 + $0x20] sm:$0xf]
      %v4923 = vld [vmem:[%s4913 + $0x24] sm:$0xf]
      %v4924 = vld [vmem:[%s4913 + $0x28] sm:$0xf]
      %v4925 = vld [vmem:[%s4913 + $0x2c] sm:$0xf]
      %v4926 = vld [vmem:[%s4913 + $0x30] sm:$0xf]
      %v4927 = vld [vmem:[%s4913 + $0x34] sm:$0xf]
      %v4928 = vld [vmem:[%s4913 + $0x38] sm:$0xf]
      %v4929 = vld [vmem:[%s4913 + $0x3c] sm:$0xf]
      %v4946 = vunpack.c.l.b16 %v4914
      %v4947 = vunpack.c.l.b16 %v4915
      %v4948 = vunpack.c.l.b16 %v4916
      %v4949 = vunpack.c.l.b16 %v4917
      %v4950 = vunpack.c.l.b16 %v4918
      %v4951 = vunpack.c.l.b16 %v4919
      %v4952 = vunpack.c.l.b16 %v4920
      %v4953 = vunpack.c.l.b16 %v4921
      %v4954 = vunpack.c.l.b16 %v4922
      %v4955 = vunpack.c.l.b16 %v4923
      %v4956 = vunpack.c.l.b16 %v4924
      %v4957 = vunpack.c.l.b16 %v4925
      %v4958 = vunpack.c.l.b16 %v4926
      %v4959 = vunpack.c.l.b16 %v4927
      %v4960 = vunpack.c.l.b16 %v4928
      %v4961 = vunpack.c.l.b16 %v4929
      %v4962 = vpack.c.b16 %v4947, %v4946
      %v4963 = vpack.c.b16 %v4949, %v4948
      %v4964 = vpack.c.b16 %v4951, %v4950
      %v4965 = vpack.c.b16 %v4953, %v4952
      %v4966 = vpack.c.b16 %v4955, %v4954
      %v4967 = vpack.c.b16 %v4957, %v4956
      %v4968 = vpack.c.b16 %v4959, %v4958
      %v4969 = vpack.c.b16 %v4961, %v4960
      %4978 = vmatprep.subr.bf16.mxu0 0
      %4979 = vmatpush1.bf16.msra.mxu0 %v4962
      %4980 = vmatprep.subr.bf16.mxu0 0
      %4981 = vmatpush1.bf16.msra.mxu0 %v4963
      %4982 = vmatprep.subr.bf16.mxu0 0
      %4983 = vmatpush1.bf16.msra.mxu0 %v4964
      %4984 = vmatprep.subr.bf16.mxu0 0
      %4985 = vmatpush1.bf16.msra.mxu0 %v4965
      %4986 = vmatprep.subr.bf16.mxu0 0
      %4987 = vmatpush1.bf16.msra.mxu0 %v4966
      %4988 = vmatprep.subr.bf16.mxu0 0
      %4989 = vmatpush1.bf16.msra.mxu0 %v4967
      %4990 = vmatprep.subr.bf16.mxu0 0
      %4991 = vmatpush1.bf16.msra.mxu0 %v4968
      %4992 = vmatprep.subr.bf16.mxu0 0
      %4993 = vmatpush1.bf16.msra.mxu0 %v4969
      %4994 = vmatprep.subr.bf16.mxu0 0
      %4995 = vmatpush1.bf16.msra.mxu0 0
      %4996 = vmatprep.subr.bf16.mxu0 0
      %4997 = vmatpush1.bf16.msra.mxu0 0
      %4998 = vmatprep.subr.bf16.mxu0 0
      %4999 = vmatpush1.bf16.msra.mxu0 0
      %5000 = vmatprep.subr.bf16.mxu0 0
      %5001 = vmatpush1.bf16.msra.mxu0 0
      %5002 = vmatprep.subr.bf16.mxu0 0
      %5003 = vmatpush1.bf16.msra.mxu0 0
      %5004 = vmatprep.subr.bf16.mxu0 0
      %5005 = vmatpush1.bf16.msra.mxu0 0
      %5006 = vmatprep.subr.bf16.mxu0 0
      %5007 = vmatpush1.bf16.msra.mxu0 0
      %5008 = vmatprep.subr.bf16.mxu0 0
      %5009 = vmatpush1.bf16.msra.mxu0 0
      %5010 = vmatprep.mubr.bf16.mxu0 0
      %5011 = vmatmul.mubr.bf16.gmra.mrb[0].mxu0 %v4897
      %v5012 = vpop.f32.mrb[0].mxu0
      %v5013 = vadd.f32 0.0, %v5012
      %v5014 = vpop.f32.mrb[0].mxu0
      %v5015 = vpop.f32.mrb[0].mxu0
      %v5016 = vadd.f32 0.0, %v5015
      %v5017 = vpop.f32.mrb[0].mxu0
      %5018 = vmatprep.mubr.bf16.mxu0 0
      %5019 = vmatmul.mubr.bf16.gmra.mrb[0].mxu0 %v4898
      %v5020 = vpop.f32.mrb[0].mxu0
      %v5021 = vadd.f32 0.0, %v5020
      %v5022 = vpop.f32.mrb[0].mxu0
      %v5023 = vpop.f32.mrb[0].mxu0
      %v5024 = vadd.f32 0.0, %v5023
      %v5025 = vpop.f32.mrb[0].mxu0
      %5026 = vmatprep.mubr.bf16.mxu0 0
      %5027 = vmatmul.mubr.bf16.gmra.mrb[0].mxu0 %v4899
      %v5028 = vpop.f32.mrb[0].mxu0
      %v5029 = vadd.f32 0.0, %v5028
      %v5030 = vpop.f32.mrb[0].mxu0
      %v5031 = vpop.f32.mrb[0].mxu0
      %v5032 = vadd.f32 0.0, %v5031
      %v5033 = vpop.f32.mrb[0].mxu0
      %5034 = vmatprep.mubr.bf16.mxu0 0
      %5035 = vmatmul.mubr.bf16.gmra.mrb[0].mxu0 %v4900
      %v5036 = vpop.f32.mrb[0].mxu0
      %v5037 = vadd.f32 0.0, %v5036
      %v5038 = vpop.f32.mrb[0].mxu0
      %v5039 = vpop.f32.mrb[0].mxu0
      %v5040 = vadd.f32 0.0, %v5039
      %v5041 = vpop.f32.mrb[0].mxu0
      %5042 = vmatprep.mubr.bf16.mxu0 0
      %5043 = vmatmul.mubr.bf16.gmra.mrb[0].mxu0 %v4901
      %v5044 = vpop.f32.mrb[0].mxu0
      %v5045 = vadd.f32 0.0, %v5044
      %v5046 = vpop.f32.mrb[0].mxu0
      %v5047 = vpop.f32.mrb[0].mxu0
      %v5048 = vadd.f32 0.0, %v5047
      %v5049 = vpop.f32.mrb[0].mxu0
      %5050 = vmatprep.mubr.bf16.mxu0 0
      %5051 = vmatmul.mubr.bf16.gmra.mrb[0].mxu0 %v4902
      %v5052 = vpop.f32.mrb[0].mxu0
      %v5053 = vadd.f32 0.0, %v5052
      %v5054 = vpop.f32.mrb[0].mxu0
      %v5055 = vpop.f32.mrb[0].mxu0
      %v5056 = vadd.f32 0.0, %v5055
      %v5057 = vpop.f32.mrb[0].mxu0
      %5058 = vmatprep.mubr.bf16.mxu0 0
      %5059 = vmatmul.mubr.bf16.gmra.mrb[0].mxu0 %v4903
      %v5060 = vpop.f32.mrb[0].mxu0
      %v5061 = vadd.f32 0.0, %v5060
      %v5062 = vpop.f32.mrb[0].mxu0
      %v5063 = vpop.f32.mrb[0].mxu0
      %v5064 = vadd.f32 0.0, %v5063
      %v5065 = vpop.f32.mrb[0].mxu0
      %5066 = vmatprep.mubr.bf16.mxu0 0
      %5067 = vmatmul.mubr.bf16.gmra.mrb[0].mxu0 %v4904
      %v5068 = vpop.f32.mrb[0].mxu0
      %v5069 = vadd.f32 0.0, %v5068
      %v5070 = vpop.f32.mrb[0].mxu0
      %v5071 = vpop.f32.mrb[0].mxu0
      %v5072 = vadd.f32 0.0, %v5071
      %v5073 = vpop.f32.mrb[0].mxu0
      %5074 = vmatprep.mubr.bf16.mxu0 0
      %5075 = vmatmul.mubr.bf16.gmra.mrb[0].mxu0 %v4905
      %v5076 = vpop.f32.mrb[0].mxu0
      %v5077 = vadd.f32 0.0, %v5076
      %v5078 = vpop.f32.mrb[0].mxu0
      %v5079 = vpop.f32.mrb[0].mxu0
      %v5080 = vadd.f32 0.0, %v5079
      %v5081 = vpop.f32.mrb[0].mxu0
      %5082 = vmatprep.mubr.bf16.mxu0 0
      %5083 = vmatmul.mubr.bf16.gmra.mrb[0].mxu0 %v4906
      %v5084 = vpop.f32.mrb[0].mxu0
      %v5085 = vadd.f32 0.0, %v5084
      %v5086 = vpop.f32.mrb[0].mxu0
      %v5087 = vpop.f32.mrb[0].mxu0
      %v5088 = vadd.f32 0.0, %v5087
      %v5089 = vpop.f32.mrb[0].mxu0
      %5090 = vmatprep.mubr.bf16.mxu0 0
      %5091 = vmatmul.mubr.bf16.gmra.mrb[0].mxu0 %v4907
      %v5092 = vpop.f32.mrb[0].mxu0
      %v5093 = vadd.f32 0.0, %v5092
      %v5094 = vpop.f32.mrb[0].mxu0
      %v5095 = vpop.f32.mrb[0].mxu0
      %v5096 = vadd.f32 0.0, %v5095
      %v5097 = vpop.f32.mrb[0].mxu0
      %5098 = vmatprep.mubr.bf16.mxu0 0
      %5099 = vmatmul.mubr.bf16.gmra.mrb[0].mxu0 %v4908
      %v5100 = vpop.f32.mrb[0].mxu0
      %v5101 = vadd.f32 0.0, %v5100
      %v5102 = vpop.f32.mrb[0].mxu0
      %v5103 = vpop.f32.mrb[0].mxu0
      %v5104 = vadd.f32 0.0, %v5103
      %v5105 = vpop.f32.mrb[0].mxu0
      %5106 = vmatprep.mubr.bf16.mxu0 0
      %5107 = vmatmul.mubr.bf16.gmra.mrb[0].mxu0 %v4909
      %v5108 = vpop.f32.mrb[0].mxu0
      %v5109 = vadd.f32 0.0, %v5108
      %v5110 = vpop.f32.mrb[0].mxu0
      %v5111 = vpop.f32.mrb[0].mxu0
      %v5112 = vadd.f32 0.0, %v5111
      %v5113 = vpop.f32.mrb[0].mxu0
      %5114 = vmatprep.mubr.bf16.mxu0 0
      %5115 = vmatmul.mubr.bf16.gmra.mrb[0].mxu0 %v4910
      %v5116 = vpop.f32.mrb[0].mxu0
      %v5117 = vadd.f32 0.0, %v5116
      %v5118 = vpop.f32.mrb[0].mxu0
      %v5119 = vpop.f32.mrb[0].mxu0
      %v5120 = vadd.f32 0.0, %v5119
      %v5121 = vpop.f32.mrb[0].mxu0
      %5122 = vmatprep.mubr.bf16.mxu0 0
      %5123 = vmatmul.mubr.bf16.gmra.mrb[0].mxu0 %v4911
      %v5124 = vpop.f32.mrb[0].mxu0
      %v5125 = vadd.f32 0.0, %v5124
      %v5126 = vpop.f32.mrb[0].mxu0
      %v5127 = vpop.f32.mrb[0].mxu0
      %v5128 = vadd.f32 0.0, %v5127
      %v5129 = vpop.f32.mrb[0].mxu0
      %5130 = vmatprep.mubr.bf16.mxu0 0
      %5131 = vmatmul.mubr.bf16.gmra.mrb[0].mxu0 %v4912
      %v5132 = vpop.f32.mrb[0].mxu0
      %v5133 = vadd.f32 0.0, %v5132
      %v5134 = vpop.f32.mrb[0].mxu0
      %v5135 = vpop.f32.mrb[0].mxu0
      %v5136 = vadd.f32 0.0, %v5135
      %v5137 = vpop.f32.mrb[0].mxu0
      %5138 = vdwg.mxu0
      %v5139 = vadd.f32 %v4832, %v5013
      %v5140 = vadd.f32 %v4833, %v5016
      %v5141 = vadd.f32 %v4834, %v5021
      %v5142 = vadd.f32 %v4835, %v5024
      %v5143 = vadd.f32 %v4836, %v5029
      %v5144 = vadd.f32 %v4837, %v5032
      %v5145 = vadd.f32 %v4838, %v5037
      %v5146 = vadd.f32 %v4839, %v5040
      %v5147 = vadd.f32 %v4840, %v5045
      %v5148 = vadd.f32 %v4841, %v5048
      %v5149 = vadd.f32 %v4842, %v5053
      %v5150 = vadd.f32 %v4843, %v5056
      %v5151 = vadd.f32 %v4844, %v5061
      %v5152 = vadd.f32 %v4845, %v5064
      %v5153 = vadd.f32 %v4846, %v5069
      %v5154 = vadd.f32 %v4847, %v5072
      %v5155 = vadd.f32 %v4848, %v5077
      %v5156 = vadd.f32 %v4849, %v5080
      %v5157 = vadd.f32 %v4850, %v5085
      %v5158 = vadd.f32 %v4851, %v5088
      %v5159 = vadd.f32 %v4852, %v5093
      %v5160 = vadd.f32 %v4853, %v5096
      %v5161 = vadd.f32 %v4854, %v5101
      %v5162 = vadd.f32 %v4855, %v5104
      %v5163 = vadd.f32 %v4856, %v5109
      %v5164 = vadd.f32 %v4857, %v5112
      %v5165 = vadd.f32 %v4858, %v5117
      %v5166 = vadd.f32 %v4859, %v5120
      %v5167 = vadd.f32 %v4860, %v5125
      %v5168 = vadd.f32 %v4861, %v5128
      %v5169 = vadd.f32 %v4862, %v5133
      %v5170 = vadd.f32 %v4863, %v5136
      %v5171 = vld [vmem:[%s4864 + $0x8] sm:$0xff]
      %v5172 = vld [vmem:[%s4864 + $0x10] sm:$0xff]
      %v5173 = vld [vmem:[%s4864 + $0x28] sm:$0xff]
      %v5174 = vld [vmem:[%s4864 + $0x30] sm:$0xff]
      %v5175 = vld [vmem:[%s4864 + $0x48] sm:$0xff]
      %v5176 = vld [vmem:[%s4864 + $0x50] sm:$0xff]
      %v5177 = vld [vmem:[%s4864 + $0x68] sm:$0xff]
      %v5178 = vld [vmem:[%s4864 + $0x70] sm:$0xff]
      %v5179 = vld [vmem:[%s4864 + $0x88] sm:$0xff]
      %v5180 = vld [vmem:[%s4864 + $0x90] sm:$0xff]
      %v5181 = vld [vmem:[%s4864 + $0xa8] sm:$0xff]
      %v5182 = vld [vmem:[%s4864 + $0xb0] sm:$0xff]
      %v5183 = vld [vmem:[%s4864 + $0xc8] sm:$0xff]
      %v5184 = vld [vmem:[%s4864 + $0xd0] sm:$0xff]
      %v5185 = vld [vmem:[%s4864 + $0xe8] sm:$0xff]
      %v5186 = vld [vmem:[%s4864 + $0xf0] sm:$0xff]
      %v5187 = vld [vmem:[%s4864 + $0x108] sm:$0xff]
      %v5188 = vld [vmem:[%s4864 + $0x110] sm:$0xff]
      %v5189 = vld [vmem:[%s4864 + $0x128] sm:$0xff]
      %v5190 = vld [vmem:[%s4864 + $0x130] sm:$0xff]
      %v5191 = vld [vmem:[%s4864 + $0x148] sm:$0xff]
      %v5192 = vld [vmem:[%s4864 + $0x150] sm:$0xff]
      %v5193 = vld [vmem:[%s4864 + $0x168] sm:$0xff]
      %v5194 = vld [vmem:[%s4864 + $0x170] sm:$0xff]
      %v5195 = vld [vmem:[%s4864 + $0x188] sm:$0xff]
      %v5196 = vld [vmem:[%s4864 + $0x190] sm:$0xff]
      %v5197 = vld [vmem:[%s4864 + $0x1a8] sm:$0xff]
      %v5198 = vld [vmem:[%s4864 + $0x1b0] sm:$0xff]
      %v5199 = vld [vmem:[%s4864 + $0x1c8] sm:$0xff]
      %v5200 = vld [vmem:[%s4864 + $0x1d0] sm:$0xff]
      %v5201 = vld [vmem:[%s4864 + $0x1e8] sm:$0xff]
      %v5202 = vld [vmem:[%s4864 + $0x1f0] sm:$0xff]
      %v5203 = vpack.c.bf16 %v5172, %v5171
      %v5204 = vpack.c.bf16 %v5174, %v5173
      %v5205 = vpack.c.bf16 %v5176, %v5175
      %v5206 = vpack.c.bf16 %v5178, %v5177
      %v5207 = vpack.c.bf16 %v5180, %v5179
      %v5208 = vpack.c.bf16 %v5182, %v5181
      %v5209 = vpack.c.bf16 %v5184, %v5183
      %v5210 = vpack.c.bf16 %v5186, %v5185
      %v5211 = vpack.c.bf16 %v5188, %v5187
      %v5212 = vpack.c.bf16 %v5190, %v5189
      %v5213 = vpack.c.bf16 %v5192, %v5191
      %v5214 = vpack.c.bf16 %v5194, %v5193
      %v5215 = vpack.c.bf16 %v5196, %v5195
      %v5216 = vpack.c.bf16 %v5198, %v5197
      %v5217 = vpack.c.bf16 %v5200, %v5199
      %v5218 = vpack.c.bf16 %v5202, %v5201
      %s5219 = scalar_lea.vmem %s3, 448
      %v5220 = vld [vmem:[%s5219] sm:$0xf]
      %v5221 = vld [vmem:[%s5219 + $0x4] sm:$0xf]
      %v5222 = vld [vmem:[%s5219 + $0x8] sm:$0xf]
      %v5223 = vld [vmem:[%s5219 + $0xc] sm:$0xf]
      %v5224 = vld [vmem:[%s5219 + $0x10] sm:$0xf]
      %v5225 = vld [vmem:[%s5219 + $0x14] sm:$0xf]
      %v5226 = vld [vmem:[%s5219 + $0x18] sm:$0xf]
      %v5227 = vld [vmem:[%s5219 + $0x1c] sm:$0xf]
      %v5228 = vld [vmem:[%s5219 + $0x20] sm:$0xf]
      %v5229 = vld [vmem:[%s5219 + $0x24] sm:$0xf]
      %v5230 = vld [vmem:[%s5219 + $0x28] sm:$0xf]
      %v5231 = vld [vmem:[%s5219 + $0x2c] sm:$0xf]
      %v5232 = vld [vmem:[%s5219 + $0x30] sm:$0xf]
      %v5233 = vld [vmem:[%s5219 + $0x34] sm:$0xf]
      %v5234 = vld [vmem:[%s5219 + $0x38] sm:$0xf]
      %v5235 = vld [vmem:[%s5219 + $0x3c] sm:$0xf]
      %v5252 = vunpack.c.l.b16 %v5220
      %v5253 = vunpack.c.l.b16 %v5221
      %v5254 = vunpack.c.l.b16 %v5222
      %v5255 = vunpack.c.l.b16 %v5223
      %v5256 = vunpack.c.l.b16 %v5224
      %v5257 = vunpack.c.l.b16 %v5225
      %v5258 = vunpack.c.l.b16 %v5226
      %v5259 = vunpack.c.l.b16 %v5227
      %v5260 = vunpack.c.l.b16 %v5228
      %v5261 = vunpack.c.l.b16 %v5229
      %v5262 = vunpack.c.l.b16 %v5230
      %v5263 = vunpack.c.l.b16 %v5231
      %v5264 = vunpack.c.l.b16 %v5232
      %v5265 = vunpack.c.l.b16 %v5233
      %v5266 = vunpack.c.l.b16 %v5234
      %v5267 = vunpack.c.l.b16 %v5235
      %v5268 = vpack.c.b16 %v5253, %v5252
      %v5269 = vpack.c.b16 %v5255, %v5254
      %v5270 = vpack.c.b16 %v5257, %v5256
      %v5271 = vpack.c.b16 %v5259, %v5258
      %v5272 = vpack.c.b16 %v5261, %v5260
      %v5273 = vpack.c.b16 %v5263, %v5262
      %v5274 = vpack.c.b16 %v5265, %v5264
      %v5275 = vpack.c.b16 %v5267, %v5266
      %5284 = vmatprep.subr.bf16.mxu0 0
      %5285 = vmatpush1.bf16.msra.mxu0 %v5268
      %5286 = vmatprep.subr.bf16.mxu0 0
      %5287 = vmatpush1.bf16.msra.mxu0 %v5269
      %5288 = vmatprep.subr.bf16.mxu0 0
      %5289 = vmatpush1.bf16.msra.mxu0 %v5270
      %5290 = vmatprep.subr.bf16.mxu0 0
      %5291 = vmatpush1.bf16.msra.mxu0 %v5271
      %5292 = vmatprep.subr.bf16.mxu0 0
      %5293 = vmatpush1.bf16.msra.mxu0 %v5272
      %5294 = vmatprep.subr.bf16.mxu0 0
      %5295 = vmatpush1.bf16.msra.mxu0 %v5273
      %5296 = vmatprep.subr.bf16.mxu0 0
      %5297 = vmatpush1.bf16.msra.mxu0 %v5274
      %5298 = vmatprep.subr.bf16.mxu0 0
      %5299 = vmatpush1.bf16.msra.mxu0 %v5275
      %5300 = vmatprep.subr.bf16.mxu0 0
      %5301 = vmatpush1.bf16.msra.mxu0 0
      %5302 = vmatprep.subr.bf16.mxu0 0
      %5303 = vmatpush1.bf16.msra.mxu0 0
      %5304 = vmatprep.subr.bf16.mxu0 0
      %5305 = vmatpush1.bf16.msra.mxu0 0
      %5306 = vmatprep.subr.bf16.mxu0 0
      %5307 = vmatpush1.bf16.msra.mxu0 0
      %5308 = vmatprep.subr.bf16.mxu0 0
      %5309 = vmatpush1.bf16.msra.mxu0 0
      %5310 = vmatprep.subr.bf16.mxu0 0
      %5311 = vmatpush1.bf16.msra.mxu0 0
      %5312 = vmatprep.subr.bf16.mxu0 0
      %5313 = vmatpush1.bf16.msra.mxu0 0
      %5314 = vmatprep.subr.bf16.mxu0 0
      %5315 = vmatpush1.bf16.msra.mxu0 0
      %5316 = vmatprep.mubr.bf16.mxu0 0
      %5317 = vmatmul.mubr.bf16.gmra.mrb[0].mxu0 %v5203
      %v5318 = vpop.f32.mrb[0].mxu0
      %v5319 = vadd.f32 0.0, %v5318
      %v5320 = vpop.f32.mrb[0].mxu0
      %v5321 = vpop.f32.mrb[0].mxu0
      %v5322 = vadd.f32 0.0, %v5321
      %v5323 = vpop.f32.mrb[0].mxu0
      %5324 = vmatprep.mubr.bf16.mxu0 0
      %5325 = vmatmul.mubr.bf16.gmra.mrb[0].mxu0 %v5204
      %v5326 = vpop.f32.mrb[0].mxu0
      %v5327 = vadd.f32 0.0, %v5326
      %v5328 = vpop.f32.mrb[0].mxu0
      %v5329 = vpop.f32.mrb[0].mxu0
      %v5330 = vadd.f32 0.0, %v5329
      %v5331 = vpop.f32.mrb[0].mxu0
      %5332 = vmatprep.mubr.bf16.mxu0 0
      %5333 = vmatmul.mubr.bf16.gmra.mrb[0].mxu0 %v5205
      %v5334 = vpop.f32.mrb[0].mxu0
      %v5335 = vadd.f32 0.0, %v5334
      %v5336 = vpop.f32.mrb[0].mxu0
      %v5337 = vpop.f32.mrb[0].mxu0
      %v5338 = vadd.f32 0.0, %v5337
      %v5339 = vpop.f32.mrb[0].mxu0
      %5340 = vmatprep.mubr.bf16.mxu0 0
      %5341 = vmatmul.mubr.bf16.gmra.mrb[0].mxu0 %v5206
      %v5342 = vpop.f32.mrb[0].mxu0
      %v5343 = vadd.f32 0.0, %v5342
      %v5344 = vpop.f32.mrb[0].mxu0
      %v5345 = vpop.f32.mrb[0].mxu0
      %v5346 = vadd.f32 0.0, %v5345
      %v5347 = vpop.f32.mrb[0].mxu0
      %5348 = vmatprep.mubr.bf16.mxu0 0
      %5349 = vmatmul.mubr.bf16.gmra.mrb[0].mxu0 %v5207
      %v5350 = vpop.f32.mrb[0].mxu0
      %v5351 = vadd.f32 0.0, %v5350
      %v5352 = vpop.f32.mrb[0].mxu0
      %v5353 = vpop.f32.mrb[0].mxu0
      %v5354 = vadd.f32 0.0, %v5353
      %v5355 = vpop.f32.mrb[0].mxu0
      %5356 = vmatprep.mubr.bf16.mxu0 0
      %5357 = vmatmul.mubr.bf16.gmra.mrb[0].mxu0 %v5208
      %v5358 = vpop.f32.mrb[0].mxu0
      %v5359 = vadd.f32 0.0, %v5358
      %v5360 = vpop.f32.mrb[0].mxu0
      %v5361 = vpop.f32.mrb[0].mxu0
      %v5362 = vadd.f32 0.0, %v5361
      %v5363 = vpop.f32.mrb[0].mxu0
      %5364 = vmatprep.mubr.bf16.mxu0 0
      %5365 = vmatmul.mubr.bf16.gmra.mrb[0].mxu0 %v5209
      %v5366 = vpop.f32.mrb[0].mxu0
      %v5367 = vadd.f32 0.0, %v5366
      %v5368 = vpop.f32.mrb[0].mxu0
      %v5369 = vpop.f32.mrb[0].mxu0
      %v5370 = vadd.f32 0.0, %v5369
      %v5371 = vpop.f32.mrb[0].mxu0
      %5372 = vmatprep.mubr.bf16.mxu0 0
      %5373 = vmatmul.mubr.bf16.gmra.mrb[0].mxu0 %v5210
      %v5374 = vpop.f32.mrb[0].mxu0
      %v5375 = vadd.f32 0.0, %v5374
      %v5376 = vpop.f32.mrb[0].mxu0
      %v5377 = vpop.f32.mrb[0].mxu0
      %v5378 = vadd.f32 0.0, %v5377
      %v5379 = vpop.f32.mrb[0].mxu0
      %5380 = vmatprep.mubr.bf16.mxu0 0
      %5381 = vmatmul.mubr.bf16.gmra.mrb[0].mxu0 %v5211
      %v5382 = vpop.f32.mrb[0].mxu0
      %v5383 = vadd.f32 0.0, %v5382
      %v5384 = vpop.f32.mrb[0].mxu0
      %v5385 = vpop.f32.mrb[0].mxu0
      %v5386 = vadd.f32 0.0, %v5385
      %v5387 = vpop.f32.mrb[0].mxu0
      %5388 = vmatprep.mubr.bf16.mxu0 0
      %5389 = vmatmul.mubr.bf16.gmra.mrb[0].mxu0 %v5212
      %v5390 = vpop.f32.mrb[0].mxu0
      %v5391 = vadd.f32 0.0, %v5390
      %v5392 = vpop.f32.mrb[0].mxu0
      %v5393 = vpop.f32.mrb[0].mxu0
      %v5394 = vadd.f32 0.0, %v5393
      %v5395 = vpop.f32.mrb[0].mxu0
      %5396 = vmatprep.mubr.bf16.mxu0 0
      %5397 = vmatmul.mubr.bf16.gmra.mrb[0].mxu0 %v5213
      %v5398 = vpop.f32.mrb[0].mxu0
      %v5399 = vadd.f32 0.0, %v5398
      %v5400 = vpop.f32.mrb[0].mxu0
      %v5401 = vpop.f32.mrb[0].mxu0
      %v5402 = vadd.f32 0.0, %v5401
      %v5403 = vpop.f32.mrb[0].mxu0
      %5404 = vmatprep.mubr.bf16.mxu0 0
      %5405 = vmatmul.mubr.bf16.gmra.mrb[0].mxu0 %v5214
      %v5406 = vpop.f32.mrb[0].mxu0
      %v5407 = vadd.f32 0.0, %v5406
      %v5408 = vpop.f32.mrb[0].mxu0
      %v5409 = vpop.f32.mrb[0].mxu0
      %v5410 = vadd.f32 0.0, %v5409
      %v5411 = vpop.f32.mrb[0].mxu0
      %5412 = vmatprep.mubr.bf16.mxu0 0
      %5413 = vmatmul.mubr.bf16.gmra.mrb[0].mxu0 %v5215
      %v5414 = vpop.f32.mrb[0].mxu0
      %v5415 = vadd.f32 0.0, %v5414
      %v5416 = vpop.f32.mrb[0].mxu0
      %v5417 = vpop.f32.mrb[0].mxu0
      %v5418 = vadd.f32 0.0, %v5417
      %v5419 = vpop.f32.mrb[0].mxu0
      %5420 = vmatprep.mubr.bf16.mxu0 0
      %5421 = vmatmul.mubr.bf16.gmra.mrb[0].mxu0 %v5216
      %v5422 = vpop.f32.mrb[0].mxu0
      %v5423 = vadd.f32 0.0, %v5422
      %v5424 = vpop.f32.mrb[0].mxu0
      %v5425 = vpop.f32.mrb[0].mxu0
      %v5426 = vadd.f32 0.0, %v5425
      %v5427 = vpop.f32.mrb[0].mxu0
      %5428 = vmatprep.mubr.bf16.mxu0 0
      %5429 = vmatmul.mubr.bf16.gmra.mrb[0].mxu0 %v5217
      %v5430 = vpop.f32.mrb[0].mxu0
      %v5431 = vadd.f32 0.0, %v5430
      %v5432 = vpop.f32.mrb[0].mxu0
      %v5433 = vpop.f32.mrb[0].mxu0
      %v5434 = vadd.f32 0.0, %v5433
      %v5435 = vpop.f32.mrb[0].mxu0
      %5436 = vmatprep.mubr.bf16.mxu0 0
      %5437 = vmatmul.mubr.bf16.gmra.mrb[0].mxu0 %v5218
      %v5438 = vpop.f32.mrb[0].mxu0
      %v5439 = vadd.f32 0.0, %v5438
      %v5440 = vpop.f32.mrb[0].mxu0
      %v5441 = vpop.f32.mrb[0].mxu0
      %v5442 = vadd.f32 0.0, %v5441
      %v5443 = vpop.f32.mrb[0].mxu0
      %5444 = vdwg.mxu0
      %v5445 = vadd.f32 %v5139, %v5319
      %v5446 = vadd.f32 %v5140, %v5322
      %v5447 = vadd.f32 %v5141, %v5327
      %v5448 = vadd.f32 %v5142, %v5330
      %v5449 = vadd.f32 %v5143, %v5335
      %v5450 = vadd.f32 %v5144, %v5338
      %v5451 = vadd.f32 %v5145, %v5343
      %v5452 = vadd.f32 %v5146, %v5346
      %v5453 = vadd.f32 %v5147, %v5351
      %v5454 = vadd.f32 %v5148, %v5354
      %v5455 = vadd.f32 %v5149, %v5359
      %v5456 = vadd.f32 %v5150, %v5362
      %v5457 = vadd.f32 %v5151, %v5367
      %v5458 = vadd.f32 %v5152, %v5370
      %v5459 = vadd.f32 %v5153, %v5375
      %v5460 = vadd.f32 %v5154, %v5378
      %v5461 = vadd.f32 %v5155, %v5383
      %v5462 = vadd.f32 %v5156, %v5386
      %v5463 = vadd.f32 %v5157, %v5391
      %v5464 = vadd.f32 %v5158, %v5394
      %v5465 = vadd.f32 %v5159, %v5399
      %v5466 = vadd.f32 %v5160, %v5402
      %v5467 = vadd.f32 %v5161, %v5407
      %v5468 = vadd.f32 %v5162, %v5410
      %v5469 = vadd.f32 %v5163, %v5415
      %v5470 = vadd.f32 %v5164, %v5418
      %v5471 = vadd.f32 %v5165, %v5423
      %v5472 = vadd.f32 %v5166, %v5426
      %v5473 = vadd.f32 %v5167, %v5431
      %v5474 = vadd.f32 %v5168, %v5434
      %v5475 = vadd.f32 %v5169, %v5439
      %v5476 = vadd.f32 %v5170, %v5442
      %v5477 = vld [vmem:[%s4864 + $0x9] sm:$0xff]
      %v5478 = vld [vmem:[%s4864 + $0x11] sm:$0xff]
      %v5479 = vld [vmem:[%s4864 + $0x29] sm:$0xff]
      %v5480 = vld [vmem:[%s4864 + $0x31] sm:$0xff]
      %v5481 = vld [vmem:[%s4864 + $0x49] sm:$0xff]
      %v5482 = vld [vmem:[%s4864 + $0x51] sm:$0xff]
      %v5483 = vld [vmem:[%s4864 + $0x69] sm:$0xff]
      %v5484 = vld [vmem:[%s4864 + $0x71] sm:$0xff]
      %v5485 = vld [vmem:[%s4864 + $0x89] sm:$0xff]
      %v5486 = vld [vmem:[%s4864 + $0x91] sm:$0xff]
      %v5487 = vld [vmem:[%s4864 + $0xa9] sm:$0xff]
      %v5488 = vld [vmem:[%s4864 + $0xb1] sm:$0xff]
      %v5489 = vld [vmem:[%s4864 + $0xc9] sm:$0xff]
      %v5490 = vld [vmem:[%s4864 + $0xd1] sm:$0xff]
      %v5491 = vld [vmem:[%s4864 + $0xe9] sm:$0xff]
      %v5492 = vld [vmem:[%s4864 + $0xf1] sm:$0xff]
      %v5493 = vld [vmem:[%s4864 + $0x109] sm:$0xff]
      %v5494 = vld [vmem:[%s4864 + $0x111] sm:$0xff]
      %v5495 = vld [vmem:[%s4864 + $0x129] sm:$0xff]
      %v5496 = vld [vmem:[%s4864 + $0x131] sm:$0xff]
      %v5497 = vld [vmem:[%s4864 + $0x149] sm:$0xff]
      %v5498 = vld [vmem:[%s4864 + $0x151] sm:$0xff]
      %v5499 = vld [vmem:[%s4864 + $0x169] sm:$0xff]
      %v5500 = vld [vmem:[%s4864 + $0x171] sm:$0xff]
      %v5501 = vld [vmem:[%s4864 + $0x189] sm:$0xff]
      %v5502 = vld [vmem:[%s4864 + $0x191] sm:$0xff]
      %v5503 = vld [vmem:[%s4864 + $0x1a9] sm:$0xff]
      %v5504 = vld [vmem:[%s4864 + $0x1b1] sm:$0xff]
      %v5505 = vld [vmem:[%s4864 + $0x1c9] sm:$0xff]
      %v5506 = vld [vmem:[%s4864 + $0x1d1] sm:$0xff]
      %v5507 = vld [vmem:[%s4864 + $0x1e9] sm:$0xff]
      %v5508 = vld [vmem:[%s4864 + $0x1f1] sm:$0xff]
      %v5509 = vpack.c.bf16 %v5478, %v5477
      %v5510 = vpack.c.bf16 %v5480, %v5479
      %v5511 = vpack.c.bf16 %v5482, %v5481
      %v5512 = vpack.c.bf16 %v5484, %v5483
      %v5513 = vpack.c.bf16 %v5486, %v5485
      %v5514 = vpack.c.bf16 %v5488, %v5487
      %v5515 = vpack.c.bf16 %v5490, %v5489
      %v5516 = vpack.c.bf16 %v5492, %v5491
      %v5517 = vpack.c.bf16 %v5494, %v5493
      %v5518 = vpack.c.bf16 %v5496, %v5495
      %v5519 = vpack.c.bf16 %v5498, %v5497
      %v5520 = vpack.c.bf16 %v5500, %v5499
      %v5521 = vpack.c.bf16 %v5502, %v5501
      %v5522 = vpack.c.bf16 %v5504, %v5503
      %v5523 = vpack.c.bf16 %v5506, %v5505
      %v5524 = vpack.c.bf16 %v5508, %v5507
      %s5525 = scalar_lea.vmem %s3, 512
      %v5526 = vld [vmem:[%s5525] sm:$0xf]
      %v5527 = vld [vmem:[%s5525 + $0x4] sm:$0xf]
      %v5528 = vld [vmem:[%s5525 + $0x8] sm:$0xf]
      %v5529 = vld [vmem:[%s5525 + $0xc] sm:$0xf]
      %v5530 = vld [vmem:[%s5525 + $0x10] sm:$0xf]
      %v5531 = vld [vmem:[%s5525 + $0x14] sm:$0xf]
      %v5532 = vld [vmem:[%s5525 + $0x18] sm:$0xf]
      %v5533 = vld [vmem:[%s5525 + $0x1c] sm:$0xf]
      %v5534 = vld [vmem:[%s5525 + $0x20] sm:$0xf]
      %v5535 = vld [vmem:[%s5525 + $0x24] sm:$0xf]
      %v5536 = vld [vmem:[%s5525 + $0x28] sm:$0xf]
      %v5537 = vld [vmem:[%s5525 + $0x2c] sm:$0xf]
      %v5538 = vld [vmem:[%s5525 + $0x30] sm:$0xf]
      %v5539 = vld [vmem:[%s5525 + $0x34] sm:$0xf]
      %v5540 = vld [vmem:[%s5525 + $0x38] sm:$0xf]
      %v5541 = vld [vmem:[%s5525 + $0x3c] sm:$0xf]
      %v5558 = vunpack.c.l.b16 %v5526
      %v5559 = vunpack.c.l.b16 %v5527
      %v5560 = vunpack.c.l.b16 %v5528
      %v5561 = vunpack.c.l.b16 %v5529
      %v5562 = vunpack.c.l.b16 %v5530
      %v5563 = vunpack.c.l.b16 %v5531
      %v5564 = vunpack.c.l.b16 %v5532
      %v5565 = vunpack.c.l.b16 %v5533
      %v5566 = vunpack.c.l.b16 %v5534
      %v5567 = vunpack.c.l.b16 %v5535
      %v5568 = vunpack.c.l.b16 %v5536
      %v5569 = vunpack.c.l.b16 %v5537
      %v5570 = vunpack.c.l.b16 %v5538
      %v5571 = vunpack.c.l.b16 %v5539
      %v5572 = vunpack.c.l.b16 %v5540
      %v5573 = vunpack.c.l.b16 %v5541
      %v5574 = vpack.c.b16 %v5559, %v5558
      %v5575 = vpack.c.b16 %v5561, %v5560
      %v5576 = vpack.c.b16 %v5563, %v5562
      %v5577 = vpack.c.b16 %v5565, %v5564
      %v5578 = vpack.c.b16 %v5567, %v5566
      %v5579 = vpack.c.b16 %v5569, %v5568
      %v5580 = vpack.c.b16 %v5571, %v5570
      %v5581 = vpack.c.b16 %v5573, %v5572
      %5590 = vmatprep.subr.bf16.mxu0 0
      %5591 = vmatpush1.bf16.msra.mxu0 %v5574
      %5592 = vmatprep.subr.bf16.mxu0 0
      %5593 = vmatpush1.bf16.msra.mxu0 %v5575
      %5594 = vmatprep.subr.bf16.mxu0 0
      %5595 = vmatpush1.bf16.msra.mxu0 %v5576
      %5596 = vmatprep.subr.bf16.mxu0 0
      %5597 = vmatpush1.bf16.msra.mxu0 %v5577
      %5598 = vmatprep.subr.bf16.mxu0 0
      %5599 = vmatpush1.bf16.msra.mxu0 %v5578
      %5600 = vmatprep.subr.bf16.mxu0 0
      %5601 = vmatpush1.bf16.msra.mxu0 %v5579
      %5602 = vmatprep.subr.bf16.mxu0 0
      %5603 = vmatpush1.bf16.msra.mxu0 %v5580
      %5604 = vmatprep.subr.bf16.mxu0 0
      %5605 = vmatpush1.bf16.msra.mxu0 %v5581
      %5606 = vmatprep.subr.bf16.mxu0 0
      %5607 = vmatpush1.bf16.msra.mxu0 0
      %5608 = vmatprep.subr.bf16.mxu0 0
      %5609 = vmatpush1.bf16.msra.mxu0 0
      %5610 = vmatprep.subr.bf16.mxu0 0
      %5611 = vmatpush1.bf16.msra.mxu0 0
      %5612 = vmatprep.subr.bf16.mxu0 0
      %5613 = vmatpush1.bf16.msra.mxu0 0
      %5614 = vmatprep.subr.bf16.mxu0 0
      %5615 = vmatpush1.bf16.msra.mxu0 0
      %5616 = vmatprep.subr.bf16.mxu0 0
      %5617 = vmatpush1.bf16.msra.mxu0 0
      %5618 = vmatprep.subr.bf16.mxu0 0
      %5619 = vmatpush1.bf16.msra.mxu0 0
      %5620 = vmatprep.subr.bf16.mxu0 0
      %5621 = vmatpush1.bf16.msra.mxu0 0
      %5622 = vmatprep.mubr.bf16.mxu0 0
      %5623 = vmatmul.mubr.bf16.gmra.mrb[0].mxu0 %v5509
      %v5624 = vpop.f32.mrb[0].mxu0
      %v5625 = vadd.f32 0.0, %v5624
      %v5626 = vpop.f32.mrb[0].mxu0
      %v5627 = vpop.f32.mrb[0].mxu0
      %v5628 = vadd.f32 0.0, %v5627
      %v5629 = vpop.f32.mrb[0].mxu0
      %5630 = vmatprep.mubr.bf16.mxu0 0
      %5631 = vmatmul.mubr.bf16.gmra.mrb[0].mxu0 %v5510
      %v5632 = vpop.f32.mrb[0].mxu0
      %v5633 = vadd.f32 0.0, %v5632
      %v5634 = vpop.f32.mrb[0].mxu0
      %v5635 = vpop.f32.mrb[0].mxu0
      %v5636 = vadd.f32 0.0, %v5635
      %v5637 = vpop.f32.mrb[0].mxu0
      %5638 = vmatprep.mubr.bf16.mxu0 0
      %5639 = vmatmul.mubr.bf16.gmra.mrb[0].mxu0 %v5511
      %v5640 = vpop.f32.mrb[0].mxu0
      %v5641 = vadd.f32 0.0, %v5640
      %v5642 = vpop.f32.mrb[0].mxu0
      %v5643 = vpop.f32.mrb[0].mxu0
      %v5644 = vadd.f32 0.0, %v5643
      %v5645 = vpop.f32.mrb[0].mxu0
      %5646 = vmatprep.mubr.bf16.mxu0 0
      %5647 = vmatmul.mubr.bf16.gmra.mrb[0].mxu0 %v5512
      %v5648 = vpop.f32.mrb[0].mxu0
      %v5649 = vadd.f32 0.0, %v5648
      %v5650 = vpop.f32.mrb[0].mxu0
      %v5651 = vpop.f32.mrb[0].mxu0
      %v5652 = vadd.f32 0.0, %v5651
      %v5653 = vpop.f32.mrb[0].mxu0
      %5654 = vmatprep.mubr.bf16.mxu0 0
      %5655 = vmatmul.mubr.bf16.gmra.mrb[0].mxu0 %v5513
      %v5656 = vpop.f32.mrb[0].mxu0
      %v5657 = vadd.f32 0.0, %v5656
      %v5658 = vpop.f32.mrb[0].mxu0
      %v5659 = vpop.f32.mrb[0].mxu0
      %v5660 = vadd.f32 0.0, %v5659
      %v5661 = vpop.f32.mrb[0].mxu0
      %5662 = vmatprep.mubr.bf16.mxu0 0
      %5663 = vmatmul.mubr.bf16.gmra.mrb[0].mxu0 %v5514
      %v5664 = vpop.f32.mrb[0].mxu0
      %v5665 = vadd.f32 0.0, %v5664
      %v5666 = vpop.f32.mrb[0].mxu0
      %v5667 = vpop.f32.mrb[0].mxu0
      %v5668 = vadd.f32 0.0, %v5667
      %v5669 = vpop.f32.mrb[0].mxu0
      %5670 = vmatprep.mubr.bf16.mxu0 0
      %5671 = vmatmul.mubr.bf16.gmra.mrb[0].mxu0 %v5515
      %v5672 = vpop.f32.mrb[0].mxu0
      %v5673 = vadd.f32 0.0, %v5672
      %v5674 = vpop.f32.mrb[0].mxu0
      %v5675 = vpop.f32.mrb[0].mxu0
      %v5676 = vadd.f32 0.0, %v5675
      %v5677 = vpop.f32.mrb[0].mxu0
      %5678 = vmatprep.mubr.bf16.mxu0 0
      %5679 = vmatmul.mubr.bf16.gmra.mrb[0].mxu0 %v5516
      %v5680 = vpop.f32.mrb[0].mxu0
      %v5681 = vadd.f32 0.0, %v5680
      %v5682 = vpop.f32.mrb[0].mxu0
      %v5683 = vpop.f32.mrb[0].mxu0
      %v5684 = vadd.f32 0.0, %v5683
      %v5685 = vpop.f32.mrb[0].mxu0
      %5686 = vmatprep.mubr.bf16.mxu0 0
      %5687 = vmatmul.mubr.bf16.gmra.mrb[0].mxu0 %v5517
      %v5688 = vpop.f32.mrb[0].mxu0
      %v5689 = vadd.f32 0.0, %v5688
      %v5690 = vpop.f32.mrb[0].mxu0
      %v5691 = vpop.f32.mrb[0].mxu0
      %v5692 = vadd.f32 0.0, %v5691
      %v5693 = vpop.f32.mrb[0].mxu0
      %5694 = vmatprep.mubr.bf16.mxu0 0
      %5695 = vmatmul.mubr.bf16.gmra.mrb[0].mxu0 %v5518
      %v5696 = vpop.f32.mrb[0].mxu0
      %v5697 = vadd.f32 0.0, %v5696
      %v5698 = vpop.f32.mrb[0].mxu0
      %v5699 = vpop.f32.mrb[0].mxu0
      %v5700 = vadd.f32 0.0, %v5699
      %v5701 = vpop.f32.mrb[0].mxu0
      %5702 = vmatprep.mubr.bf16.mxu0 0
      %5703 = vmatmul.mubr.bf16.gmra.mrb[0].mxu0 %v5519
      %v5704 = vpop.f32.mrb[0].mxu0
      %v5705 = vadd.f32 0.0, %v5704
      %v5706 = vpop.f32.mrb[0].mxu0
      %v5707 = vpop.f32.mrb[0].mxu0
      %v5708 = vadd.f32 0.0, %v5707
      %v5709 = vpop.f32.mrb[0].mxu0
      %5710 = vmatprep.mubr.bf16.mxu0 0
      %5711 = vmatmul.mubr.bf16.gmra.mrb[0].mxu0 %v5520
      %v5712 = vpop.f32.mrb[0].mxu0
      %v5713 = vadd.f32 0.0, %v5712
      %v5714 = vpop.f32.mrb[0].mxu0
      %v5715 = vpop.f32.mrb[0].mxu0
      %v5716 = vadd.f32 0.0, %v5715
      %v5717 = vpop.f32.mrb[0].mxu0
      %5718 = vmatprep.mubr.bf16.mxu0 0
      %5719 = vmatmul.mubr.bf16.gmra.mrb[0].mxu0 %v5521
      %v5720 = vpop.f32.mrb[0].mxu0
      %v5721 = vadd.f32 0.0, %v5720
      %v5722 = vpop.f32.mrb[0].mxu0
      %v5723 = vpop.f32.mrb[0].mxu0
      %v5724 = vadd.f32 0.0, %v5723
      %v5725 = vpop.f32.mrb[0].mxu0
      %5726 = vmatprep.mubr.bf16.mxu0 0
      %5727 = vmatmul.mubr.bf16.gmra.mrb[0].mxu0 %v5522
      %v5728 = vpop.f32.mrb[0].mxu0
      %v5729 = vadd.f32 0.0, %v5728
      %v5730 = vpop.f32.mrb[0].mxu0
      %v5731 = vpop.f32.mrb[0].mxu0
      %v5732 = vadd.f32 0.0, %v5731
      %v5733 = vpop.f32.mrb[0].mxu0
      %5734 = vmatprep.mubr.bf16.mxu0 0
      %5735 = vmatmul.mubr.bf16.gmra.mrb[0].mxu0 %v5523
      %v5736 = vpop.f32.mrb[0].mxu0
      %v5737 = vadd.f32 0.0, %v5736
      %v5738 = vpop.f32.mrb[0].mxu0
      %v5739 = vpop.f32.mrb[0].mxu0
      %v5740 = vadd.f32 0.0, %v5739
      %v5741 = vpop.f32.mrb[0].mxu0
      %5742 = vmatprep.mubr.bf16.mxu0 0
      %5743 = vmatmul.mubr.bf16.gmra.mrb[0].mxu0 %v5524
      %v5744 = vpop.f32.mrb[0].mxu0
      %v5745 = vadd.f32 0.0, %v5744
      %v5746 = vpop.f32.mrb[0].mxu0
      %v5747 = vpop.f32.mrb[0].mxu0
      %v5748 = vadd.f32 0.0, %v5747
      %v5749 = vpop.f32.mrb[0].mxu0
      %5750 = vdwg.mxu0
      %v5751 = vadd.f32 %v5445, %v5625
      %v5752 = vadd.f32 %v5446, %v5628
      %v5753 = vadd.f32 %v5447, %v5633
      %v5754 = vadd.f32 %v5448, %v5636
      %v5755 = vadd.f32 %v5449, %v5641
      %v5756 = vadd.f32 %v5450, %v5644
      %v5757 = vadd.f32 %v5451, %v5649
      %v5758 = vadd.f32 %v5452, %v5652
      %v5759 = vadd.f32 %v5453, %v5657
      %v5760 = vadd.f32 %v5454, %v5660
      %v5761 = vadd.f32 %v5455, %v5665
      %v5762 = vadd.f32 %v5456, %v5668
      %v5763 = vadd.f32 %v5457, %v5673
      %v5764 = vadd.f32 %v5458, %v5676
      %v5765 = vadd.f32 %v5459, %v5681
      %v5766 = vadd.f32 %v5460, %v5684
      %v5767 = vadd.f32 %v5461, %v5689
      %v5768 = vadd.f32 %v5462, %v5692
      %v5769 = vadd.f32 %v5463, %v5697
      %v5770 = vadd.f32 %v5464, %v5700
      %v5771 = vadd.f32 %v5465, %v5705
      %v5772 = vadd.f32 %v5466, %v5708
      %v5773 = vadd.f32 %v5467, %v5713
      %v5774 = vadd.f32 %v5468, %v5716
      %v5775 = vadd.f32 %v5469, %v5721
      %v5776 = vadd.f32 %v5470, %v5724
      %v5777 = vadd.f32 %v5471, %v5729
      %v5778 = vadd.f32 %v5472, %v5732
      %v5779 = vadd.f32 %v5473, %v5737
      %v5780 = vadd.f32 %v5474, %v5740
      %v5781 = vadd.f32 %v5475, %v5745
      %v5782 = vadd.f32 %v5476, %v5748
      %v5783 = vld [vmem:[%s4] sm:$0x1]
      %v5785 = vlaneseq
      %v5786 = vshrl.u32 %v5785, 7
      %v5787 = vsub.s32 0, %v5786
      %v5788 = vrot.slane %v5783, %v5787
      %v5790 = vadd.f32 %v5751, %v5788
      %v5791 = vadd.f32 %v5752, %v5788
      %v5792 = vadd.f32 %v5753, %v5788
      %v5793 = vadd.f32 %v5754, %v5788
      %v5794 = vadd.f32 %v5755, %v5788
      %v5795 = vadd.f32 %v5756, %v5788
      %v5796 = vadd.f32 %v5757, %v5788
      %v5797 = vadd.f32 %v5758, %v5788
      %v5798 = vadd.f32 %v5759, %v5788
      %v5799 = vadd.f32 %v5760, %v5788
      %v5800 = vadd.f32 %v5761, %v5788
      %v5801 = vadd.f32 %v5762, %v5788
      %v5802 = vadd.f32 %v5763, %v5788
      %v5803 = vadd.f32 %v5764, %v5788
      %v5804 = vadd.f32 %v5765, %v5788
      %v5805 = vadd.f32 %v5766, %v5788
      %v5806 = vadd.f32 %v5767, %v5788
      %v5807 = vadd.f32 %v5768, %v5788
      %v5808 = vadd.f32 %v5769, %v5788
      %v5809 = vadd.f32 %v5770, %v5788
      %v5810 = vadd.f32 %v5771, %v5788
      %v5811 = vadd.f32 %v5772, %v5788
      %v5812 = vadd.f32 %v5773, %v5788
      %v5813 = vadd.f32 %v5774, %v5788
      %v5814 = vadd.f32 %v5775, %v5788
      %v5815 = vadd.f32 %v5776, %v5788
      %v5816 = vadd.f32 %v5777, %v5788
      %v5817 = vadd.f32 %v5778, %v5788
      %v5818 = vadd.f32 %v5779, %v5788
      %v5819 = vadd.f32 %v5780, %v5788
      %v5820 = vadd.f32 %v5781, %v5788
      %v5821 = vadd.f32 %v5782, %v5788
      %v5822 = vld [vmem:[%s1079 + $0x1] sm:$0xff]
      %v5823 = vld [vmem:[%s1079 + $0x9] sm:$0xff]
      %v5824 = vld [vmem:[%s1079 + $0x19] sm:$0xff]
      %v5825 = vld [vmem:[%s1079 + $0x21] sm:$0xff]
      %v5826 = vld [vmem:[%s1079 + $0x31] sm:$0xff]
      %v5827 = vld [vmem:[%s1079 + $0x39] sm:$0xff]
      %v5828 = vld [vmem:[%s1079 + $0x49] sm:$0xff]
      %v5829 = vld [vmem:[%s1079 + $0x51] sm:$0xff]
      %v5830 = vld [vmem:[%s1079 + $0x61] sm:$0xff]
      %v5831 = vld [vmem:[%s1079 + $0x69] sm:$0xff]
      %v5832 = vld [vmem:[%s1079 + $0x79] sm:$0xff]
      %v5833 = vld [vmem:[%s1079 + $0x81] sm:$0xff]
      %v5834 = vld [vmem:[%s1079 + $0x91] sm:$0xff]
      %v5835 = vld [vmem:[%s1079 + $0x99] sm:$0xff]
      %v5836 = vld [vmem:[%s1079 + $0xa9] sm:$0xff]
      %v5837 = vld [vmem:[%s1079 + $0xb1] sm:$0xff]
      %v5838 = vld [vmem:[%s1079 + $0xc1] sm:$0xff]
      %v5839 = vld [vmem:[%s1079 + $0xc9] sm:$0xff]
      %v5840 = vld [vmem:[%s1079 + $0xd9] sm:$0xff]
      %v5841 = vld [vmem:[%s1079 + $0xe1] sm:$0xff]
      %v5842 = vld [vmem:[%s1079 + $0xf1] sm:$0xff]
      %v5843 = vld [vmem:[%s1079 + $0xf9] sm:$0xff]
      %v5844 = vld [vmem:[%s1079 + $0x109] sm:$0xff]
      %v5845 = vld [vmem:[%s1079 + $0x111] sm:$0xff]
      %v5846 = vld [vmem:[%s1079 + $0x121] sm:$0xff]
      %v5847 = vld [vmem:[%s1079 + $0x129] sm:$0xff]
      %v5848 = vld [vmem:[%s1079 + $0x139] sm:$0xff]
      %v5849 = vld [vmem:[%s1079 + $0x141] sm:$0xff]
      %v5850 = vld [vmem:[%s1079 + $0x151] sm:$0xff]
      %v5851 = vld [vmem:[%s1079 + $0x159] sm:$0xff]
      %v5852 = vld [vmem:[%s1079 + $0x169] sm:$0xff]
      %v5853 = vld [vmem:[%s1079 + $0x171] sm:$0xff]
      %v5854 = vadd.f32 %v5822, %v5790
      %v5855 = vadd.f32 %v5823, %v5791
      %v5856 = vadd.f32 %v5824, %v5792
      %v5857 = vadd.f32 %v5825, %v5793
      %v5858 = vadd.f32 %v5826, %v5794
      %v5859 = vadd.f32 %v5827, %v5795
      %v5860 = vadd.f32 %v5828, %v5796
      %v5861 = vadd.f32 %v5829, %v5797
      %v5862 = vadd.f32 %v5830, %v5798
      %v5863 = vadd.f32 %v5831, %v5799
      %v5864 = vadd.f32 %v5832, %v5800
      %v5865 = vadd.f32 %v5833, %v5801
      %v5866 = vadd.f32 %v5834, %v5802
      %v5867 = vadd.f32 %v5835, %v5803
      %v5868 = vadd.f32 %v5836, %v5804
      %v5869 = vadd.f32 %v5837, %v5805
      %v5870 = vadd.f32 %v5838, %v5806
      %v5871 = vadd.f32 %v5839, %v5807
      %v5872 = vadd.f32 %v5840, %v5808
      %v5873 = vadd.f32 %v5841, %v5809
      %v5874 = vadd.f32 %v5842, %v5810
      %v5875 = vadd.f32 %v5843, %v5811
      %v5876 = vadd.f32 %v5844, %v5812
      %v5877 = vadd.f32 %v5845, %v5813
      %v5878 = vadd.f32 %v5846, %v5814
      %v5879 = vadd.f32 %v5847, %v5815
      %v5880 = vadd.f32 %v5848, %v5816
      %v5881 = vadd.f32 %v5849, %v5817
      %v5882 = vadd.f32 %v5850, %v5818
      %v5883 = vadd.f32 %v5851, %v5819
      %v5884 = vadd.f32 %v5852, %v5820
      %v5885 = vadd.f32 %v5853, %v5821
      %v5886 = vmax.f32 %v5854, 0.0
      %v5887 = vmax.f32 %v5855, 0.0
      %v5888 = vmax.f32 %v5856, 0.0
      %v5889 = vmax.f32 %v5857, 0.0
      %v5890 = vmax.f32 %v5858, 0.0
      %v5891 = vmax.f32 %v5859, 0.0
      %v5892 = vmax.f32 %v5860, 0.0
      %v5893 = vmax.f32 %v5861, 0.0
      %v5894 = vmax.f32 %v5862, 0.0
      %v5895 = vmax.f32 %v5863, 0.0
      %v5896 = vmax.f32 %v5864, 0.0
      %v5897 = vmax.f32 %v5865, 0.0
      %v5898 = vmax.f32 %v5866, 0.0
      %v5899 = vmax.f32 %v5867, 0.0
      %v5900 = vmax.f32 %v5868, 0.0
      %v5901 = vmax.f32 %v5869, 0.0
      %v5902 = vmax.f32 %v5870, 0.0
      %v5903 = vmax.f32 %v5871, 0.0
      %v5904 = vmax.f32 %v5872, 0.0
      %v5905 = vmax.f32 %v5873, 0.0
      %v5906 = vmax.f32 %v5874, 0.0
      %v5907 = vmax.f32 %v5875, 0.0
      %v5908 = vmax.f32 %v5876, 0.0
      %v5909 = vmax.f32 %v5877, 0.0
      %v5910 = vmax.f32 %v5878, 0.0
      %v5911 = vmax.f32 %v5879, 0.0
      %v5912 = vmax.f32 %v5880, 0.0
      %v5913 = vmax.f32 %v5881, 0.0
      %v5914 = vmax.f32 %v5882, 0.0
      %v5915 = vmax.f32 %v5883, 0.0
      %v5916 = vmax.f32 %v5884, 0.0
      %v5917 = vmax.f32 %v5885, 0.0
      %5918 = vst [vmem:[%s224] sm:$0xff] %v5886
      %5919 = vst [vmem:[%s224 + $0x8] sm:$0xff] %v5887
      %5920 = vst [vmem:[%s224 + $0x10] sm:$0xff] %v5888
      %5921 = vst [vmem:[%s224 + $0x18] sm:$0xff] %v5889
      %5922 = vst [vmem:[%s224 + $0x20] sm:$0xff] %v5890
      %5923 = vst [vmem:[%s224 + $0x28] sm:$0xff] %v5891
      %5924 = vst [vmem:[%s224 + $0x30] sm:$0xff] %v5892
      %5925 = vst [vmem:[%s224 + $0x38] sm:$0xff] %v5893
      %5926 = vst [vmem:[%s224 + $0x40] sm:$0xff] %v5894
      %5927 = vst [vmem:[%s224 + $0x48] sm:$0xff] %v5895
      %5928 = vst [vmem:[%s224 + $0x50] sm:$0xff] %v5896
      %5929 = vst [vmem:[%s224 + $0x58] sm:$0xff] %v5897
      %5930 = vst [vmem:[%s224 + $0x60] sm:$0xff] %v5898
      %5931 = vst [vmem:[%s224 + $0x68] sm:$0xff] %v5899
      %5932 = vst [vmem:[%s224 + $0x70] sm:$0xff] %v5900
      %5933 = vst [vmem:[%s224 + $0x78] sm:$0xff] %v5901
      %5934 = vst [vmem:[%s224 + $0x80] sm:$0xff] %v5902
      %5935 = vst [vmem:[%s224 + $0x88] sm:$0xff] %v5903
      %5936 = vst [vmem:[%s224 + $0x90] sm:$0xff] %v5904
      %5937 = vst [vmem:[%s224 + $0x98] sm:$0xff] %v5905
      %5938 = vst [vmem:[%s224 + $0xa0] sm:$0xff] %v5906
      %5939 = vst [vmem:[%s224 + $0xa8] sm:$0xff] %v5907
      %5940 = vst [vmem:[%s224 + $0xb0] sm:$0xff] %v5908
      %5941 = vst [vmem:[%s224 + $0xb8] sm:$0xff] %v5909
      %5942 = vst [vmem:[%s224 + $0xc0] sm:$0xff] %v5910
      %5943 = vst [vmem:[%s224 + $0xc8] sm:$0xff] %v5911
      %5944 = vst [vmem:[%s224 + $0xd0] sm:$0xff] %v5912
      %5945 = vst [vmem:[%s224 + $0xd8] sm:$0xff] %v5913
      %5946 = vst [vmem:[%s224 + $0xe0] sm:$0xff] %v5914
      %5947 = vst [vmem:[%s224 + $0xe8] sm:$0xff] %v5915
      %5948 = vst [vmem:[%s224 + $0xf0] sm:$0xff] %v5916
      %5949 = vst [vmem:[%s224 + $0xf8] sm:$0xff] %v5917
      %p5950 = scmp.lt.s32.totalorder %s16, 1
      %s5951 = scalar_select %p5950, %s16, 1
      %s5952 = smul.addr %s5951, 32
      %s5953 = smul.addr %s5952, 8
      %s5954 = scalar_lea.vmem %s5, %s5953
      // Predicated region
      $region41: #{resnet_basic_block_forward.1} parent=39 // pred_check
        %p5955 = pneg %p144
      $region42: #{resnet_basic_block_forward.1} parent=39 // pred_check_branch
        %5957 = sbr.rel (%p5955) target = $region44
      $region43: #{resnet_basic_block_forward.1} parent=39 // pred_region
        _
      $region44: #{resnet_basic_block_forward.1} parent=39 // pred_fallthru
        _
    $region40: #{resnet_basic_block_forward.1} parent=5 // pred_fallthru
      _
    %p5958 = scmp.le.s32.totalorder 2, %s11
    // Predicated region
    $region45: #{resnet_basic_block_forward.1} parent=5 // pred_check
      %p5959 = pneg %p5958
    $region46: #{resnet_basic_block_forward.1} parent=5 // pred_check_branch
      %5961 = sbr.rel (%p5959) target = $region48
    $region47: #{resnet_basic_block_forward.1} parent=5 // pred_region
      %s5962 = ssub.s32 %s11, 2
      // Predicated region
      $region49: #{resnet_basic_block_forward.1} parent=47 // pred_check
        %p5963 = pneg %p150
      $region50: #{resnet_basic_block_forward.1} parent=47 // pred_check_branch
        %5965 = sbr.rel (%p5963) target = $region52
      $region51: #{resnet_basic_block_forward.1} parent=47 // pred_region
        %p5966 = scmp.lt.s32.totalorder %s17, 1
        %s5967 = scalar_select %p5966, %s17, 1
        %s5968 = smul.addr %s5967, 32
        %s5969 = smul.addr %s5968, 8
        %s5970 = scalar_lea.vmem %s5, %s5969
      $region52: #{resnet_basic_block_forward.1} parent=47 // pred_fallthru
        _
    $region48: #{resnet_basic_block_forward.1} parent=5 // pred_fallthru
      _
  $region6: #{resnet_basic_block_forward.1} parent=0 // loop_footer
    %s15 = sadd.s32 1, %s11
  $region7: #{resnet_basic_block_forward.1} parent=0 // loop_footer_branch
    %10 = sbr.rel target = $region3
  $region8: #{resnet_basic_block_forward.1} parent=0 // loop_exit
    _

</llo_original>
